<compile_context>
chip_gen: v7x
topology: tpu7x:2x2x1
jax: 0.10.0
libtpu: 0.0.40
codegen_flags: <defaults>
</compile_context>

<pallas_src>
import jax
import jax.numpy as jnp
import numpy as np
from jax.experimental import pallas as pl
from jax.experimental.pallas import tpu as pltpu


def outputhead_kernel(x_ref, wcol_ref, bnshift_ref, vw_ref, vb_ref, pw_ref, pb_ref,
                      value_ref, policy_ref, xpad_ref, xcol_ref):
    # x_ref:       (B, H, W, Cin)        NHWC input (unpadded)
    # wcol_ref:    (9*Cin, Cmid)         conv3x3 weight, tap-major, BN scale folded in
    # bnshift_ref: (1, Cmid)             folded BatchNorm (eval) shift
    # vw_ref:(Cmid,3)  vb_ref:(1,3)      value Linear (1/(H*W) folded into vw)
    # pw_ref:(1,Cmid)  pb_ref:(1,) SMEM  policy 1x1 conv weight row / scalar bias
    # value_ref:   (B, 3)
    # policy_ref:  (B, H*W)              lane-dense; reshaped to (B,H,W) by the wrapper
    # xpad_ref:    (B, H+2, W+2, Cin)    VMEM scratch: zero-padded input
    # xcol_ref:    (B*H*W, 9*Cin)        VMEM scratch: im2col matrix
    B, H, W, Cin = x_ref.shape
    Cmid = wcol_ref.shape[-1]
    HW = H * W

    # --- zero-pad (padding=1) into VMEM scratch: x stays a single HBM read ---
    xpad_ref[...] = jnp.zeros(xpad_ref.shape, xpad_ref.dtype)
    xpad_ref[:, 1:H + 1, 1:W + 1, :] = x_ref[...]
    xp = xpad_ref[...]                                  # hoist: load padded x once

    # --- im2col gather: 9 shifted taps packed along channels -> (B*H*W, 9*Cin) ---
    for t in range(9):                                  # static 9-tap unroll
        ky, kx = t // 3, t % 3
        tap = xp[:, ky:ky + H, kx:kx + W, :].reshape(B * HW, Cin)
        xcol_ref[:, t * Cin:(t + 1) * Cin] = tap

    # --- single MXU matmul (BN scale pre-folded), add shift, ReLU ---
    y = jnp.dot(xcol_ref[...], wcol_ref[...], preferred_element_type=jnp.float32)
    y = jnp.maximum(y + bnshift_ref[...], 0.0)          # (B*H*W, Cmid)
    y3 = y.reshape(B, HW, Cmid)

    # --- value head: spatial SUM (1/(H*W) folded into vw) then Linear(Cmid -> 3) ---
    vsum = jnp.sum(y3, axis=1)                          # (B, Cmid)
    value_ref[...] = (jnp.dot(vsum, vw_ref[...], preferred_element_type=jnp.float32)
                      + vb_ref[...])

    # --- policy head: per-pixel channel reduction -> lane-dense (B, H*W) ---
    policy_ref[...] = jnp.sum(y3 * pw_ref[...], axis=-1) + pb_ref[0]


def outputhead_forward(h_nchw, params):
    """h_nchw: (B, Cin, H, W) float32, params: dict of torch-layout weights."""
    B, Cin, H, W = h_nchw.shape
    Cmid = params["conv_w"].shape[0]
    eps = 1e-5

    # Fold BatchNorm2d (inference mode: running stats) into the conv weight + a shift.
    # NOTE: eval-mode BN; training-mode batch statistics are not reproduced.
    scale = params["bn_gamma"] / jnp.sqrt(params["bn_var"] + eps)       # (Cmid,)
    shift = params["bn_beta"] - params["bn_mean"] * scale               # (Cmid,)
    wconv = params["conv_w"] * scale[:, None, None, None]               # OIHW, scaled
    # OIHW (Cmid,Cin,3,3) -> (3,3,Cin,Cmid) -> (9*Cin, Cmid), tap-major rows
    wcol = jnp.transpose(wconv, (2, 3, 1, 0)).reshape(9 * Cin, Cmid)

    vw = params["value_w"].T / float(H * W)      # (Cmid,3), spatial mean folded in
    vb = params["value_b"].reshape(1, 3)
    pw = params["policy_w"].reshape(1, Cmid)     # 1x1 conv weight as a row vector
    pb = params["policy_b"].reshape(1)           # scalar bias -> SMEM

    # NCHW -> NHWC (single cheap transpose; padding happens inside the kernel).
    # TODO(synk): accept NHWC upstream to remove this materialization entirely.
    x = jnp.transpose(h_nchw, (0, 2, 3, 1))

    value, policy_flat = pl.pallas_call(
        outputhead_kernel,
        out_shape=(jax.ShapeDtypeStruct((B, 3), jnp.float32),
                   jax.ShapeDtypeStruct((B, H * W), jnp.float32)),
        in_specs=[pl.BlockSpec(memory_space=pltpu.MemorySpace.VMEM)] * 6
                 + [pl.BlockSpec(memory_space=pltpu.MemorySpace.SMEM)],
        out_specs=(pl.BlockSpec(memory_space=pltpu.MemorySpace.VMEM),
                   pl.BlockSpec(memory_space=pltpu.MemorySpace.VMEM)),
        scratch_shapes=[pltpu.VMEM((B, H + 2, W + 2, Cin), jnp.float32),
                        pltpu.VMEM((B * H * W, 9 * Cin), jnp.float32)],
    )(x, wcol, shift.reshape(1, Cmid), vw, vb, pw, pb)

    policy = policy_flat.reshape(B, H, W)
    return value, policy


def reference_forward(h_nchw, params):
    """Pure-JAX reference reproducing the PyTorch forward (eval-mode BN)."""
    eps = 1e-5
    y = jax.lax.conv_general_dilated(
        h_nchw, params["conv_w"], window_strides=(1, 1),
        padding=((1, 1), (1, 1)),
        dimension_numbers=("NCHW", "OIHW", "NCHW"))
    scale = params["bn_gamma"] / jnp.sqrt(params["bn_var"] + eps)
    shift = params["bn_beta"] - params["bn_mean"] * scale
    y = y * scale[None, :, None, None] + shift[None, :, None, None]
    y = jnp.maximum(y, 0.0)
    value = y.mean((2, 3)) @ params["value_w"].T + params["value_b"]
    policy = (jnp.einsum("bchw,c->bhw", y, params["policy_w"].reshape(-1))
              + params["policy_b"][0])
    return value, policy


def make_params(key, in_c, mid_c):
    ks = jax.random.split(key, 8)
    return {
        "conv_w":   0.2 * jax.random.normal(ks[0], (mid_c, in_c, 3, 3), jnp.float32),
        "bn_gamma": 1.0 + 0.1 * jax.random.normal(ks[1], (mid_c,), jnp.float32),
        "bn_beta":  0.1 * jax.random.normal(ks[2], (mid_c,), jnp.float32),
        "bn_mean":  0.1 * jax.random.normal(ks[3], (mid_c,), jnp.float32),
        "bn_var":   jax.random.uniform(ks[4], (mid_c,), jnp.float32, 0.5, 1.5),
        "value_w":  0.2 * jax.random.normal(ks[5], (3, mid_c), jnp.float32),
        "value_b":  0.1 * jax.random.normal(ks[6], (3,), jnp.float32),
        "policy_w": 0.2 * jax.random.normal(ks[7], (1, mid_c, 1, 1), jnp.float32),
        "policy_b": jnp.array([0.05], jnp.float32),
    }


if __name__ == "__main__":
    B, in_c, H, W = 2, 4, 16, 16   # module arg out_c == input channels of the head
    mid_c = 32                      # head_mid_c

    key = jax.random.PRNGKey(0)
    k_x, k_p = jax.random.split(key)
    h = jax.random.normal(k_x, (B, in_c, H, W), jnp.float32)
    params = make_params(k_p, in_c, mid_c)

    value, policy = jax.jit(outputhead_forward)(h, params)
    value = jax.block_until_ready(value)
    policy = jax.block_until_ready(policy)

    v_ref, p_ref = reference_forward(h, params)
    np.testing.assert_allclose(np.asarray(value), np.asarray(v_ref), rtol=1e-4, atol=1e-4)
    np.testing.assert_allclose(np.asarray(policy), np.asarray(p_ref), rtol=1e-4, atol=1e-4)

    assert value.shape == (B, 3) and policy.shape == (B, H, W)
    print("KERNEL_OK")
</pallas_src>

<mosaic_0001>
module attributes {stable_mosaic.version = 11 : i64} {
  func.func @outputhead_kernel(%arg0: memref<2x16x16x4xf32, #tpu.memory_space<vmem>>, %arg1: memref<36x32xf32, #tpu.memory_space<vmem>>, %arg2: memref<1x32xf32, #tpu.memory_space<vmem>>, %arg3: memref<32x3xf32, #tpu.memory_space<vmem>>, %arg4: memref<1x3xf32, #tpu.memory_space<vmem>>, %arg5: memref<1x32xf32, #tpu.memory_space<vmem>>, %arg6: memref<1xf32, #tpu.memory_space<smem>>, %arg7: memref<2x3xf32, #tpu.memory_space<vmem>>, %arg8: memref<2x256xf32, #tpu.memory_space<vmem>>, %arg9: memref<2x18x18x4xf32, #tpu.memory_space<vmem>>, %arg10: memref<512x36xf32, #tpu.memory_space<vmem>>) attributes {dimension_semantics = [], scalar_prefetch = 0 : i64, scratch_operands = 2 : i64, tpu.core_type = #tpu.core_type<tc>} {
    %cst = arith.constant 0.000000e+00 : f32
    %0 = vector.broadcast %cst : f32 to vector<2x18x18x4xf32>
    %c0 = arith.constant 0 : index
    %c0_0 = arith.constant 0 : index
    %c0_1 = arith.constant 0 : index
    %c0_2 = arith.constant 0 : index
    %1 = vector.load %arg9[%c0, %c0_0, %c0_1, %c0_2] : memref<2x18x18x4xf32, #tpu.memory_space<vmem>>, vector<2x18x18x4xf32>
    tpu.vector_store %arg9[%c0, %c0_0, %c0_1, %c0_2], %0 {strides = array<i32>} : memref<2x18x18x4xf32, #tpu.memory_space<vmem>>, vector<2x18x18x4xf32>,
    %c0_3 = arith.constant 0 : index
    %c0_4 = arith.constant 0 : index
    %c0_5 = arith.constant 0 : index
    %c0_6 = arith.constant 0 : index
    %2 = vector.load %arg0[%c0_3, %c0_4, %c0_5, %c0_6] : memref<2x16x16x4xf32, #tpu.memory_space<vmem>>, vector<2x16x16x4xf32>
    %c0_7 = arith.constant 0 : index
    %c1 = arith.constant 1 : index
    %c1_8 = arith.constant 1 : index
    %c0_9 = arith.constant 0 : index
    %3 = vector.load %arg9[%c0_7, %c1, %c1_8, %c0_9] : memref<2x18x18x4xf32, #tpu.memory_space<vmem>>, vector<2x16x16x4xf32>
    tpu.vector_store %arg9[%c0_7, %c1, %c1_8, %c0_9], %2 {strides = array<i32>} : memref<2x18x18x4xf32, #tpu.memory_space<vmem>>, vector<2x16x16x4xf32>,
    %c0_10 = arith.constant 0 : index
    %c0_11 = arith.constant 0 : index
    %c0_12 = arith.constant 0 : index
    %c0_13 = arith.constant 0 : index
    %4 = vector.load %arg9[%c0_10, %c0_11, %c0_12, %c0_13] : memref<2x18x18x4xf32, #tpu.memory_space<vmem>>, vector<2x18x18x4xf32>
    %5 = vector.extract_strided_slice %4 {offsets = [0, 0, 0, 0], sizes = [2, 16, 16, 4], strides = [1, 1, 1, 1]} : vector<2x18x18x4xf32> to vector<2x16x16x4xf32>
    %6 = vector.shape_cast %5 : vector<2x16x16x4xf32> to vector<512x4xf32>
    %c0_14 = arith.constant 0 : index
    %c0_15 = arith.constant 0 : index
    %7 = vector.load %arg10[%c0_14, %c0_15] : memref<512x36xf32, #tpu.memory_space<vmem>>, vector<512x4xf32>
    tpu.vector_store %arg10[%c0_14, %c0_15], %6 {strides = array<i32>} : memref<512x36xf32, #tpu.memory_space<vmem>>, vector<512x4xf32>,
    %8 = vector.extract_strided_slice %4 {offsets = [0, 0, 1, 0], sizes = [2, 16, 16, 4], strides = [1, 1, 1, 1]} : vector<2x18x18x4xf32> to vector<2x16x16x4xf32>
    %9 = vector.shape_cast %8 : vector<2x16x16x4xf32> to vector<512x4xf32>
    %c0_16 = arith.constant 0 : index
    %c4 = arith.constant 4 : index
    %10 = vector.load %arg10[%c0_16, %c4] : memref<512x36xf32, #tpu.memory_space<vmem>>, vector<512x4xf32>
    tpu.vector_store %arg10[%c0_16, %c4], %9 {strides = array<i32>} : memref<512x36xf32, #tpu.memory_space<vmem>>, vector<512x4xf32>,
    %11 = vector.extract_strided_slice %4 {offsets = [0, 0, 2, 0], sizes = [2, 16, 16, 4], strides = [1, 1, 1, 1]} : vector<2x18x18x4xf32> to vector<2x16x16x4xf32>
    %12 = vector.shape_cast %11 : vector<2x16x16x4xf32> to vector<512x4xf32>
    %c0_17 = arith.constant 0 : index
    %c8 = arith.constant 8 : index
    %13 = vector.load %arg10[%c0_17, %c8] : memref<512x36xf32, #tpu.memory_space<vmem>>, vector<512x4xf32>
    tpu.vector_store %arg10[%c0_17, %c8], %12 {strides = array<i32>} : memref<512x36xf32, #tpu.memory_space<vmem>>, vector<512x4xf32>,
    %14 = vector.extract_strided_slice %4 {offsets = [0, 1, 0, 0], sizes = [2, 16, 16, 4], strides = [1, 1, 1, 1]} : vector<2x18x18x4xf32> to vector<2x16x16x4xf32>
    %15 = vector.shape_cast %14 : vector<2x16x16x4xf32> to vector<512x4xf32>
    %c0_18 = arith.constant 0 : index
    %c12 = arith.constant 12 : index
    %16 = vector.load %arg10[%c0_18, %c12] : memref<512x36xf32, #tpu.memory_space<vmem>>, vector<512x4xf32>
    tpu.vector_store %arg10[%c0_18, %c12], %15 {strides = array<i32>} : memref<512x36xf32, #tpu.memory_space<vmem>>, vector<512x4xf32>,
    %17 = vector.extract_strided_slice %4 {offsets = [0, 1, 1, 0], sizes = [2, 16, 16, 4], strides = [1, 1, 1, 1]} : vector<2x18x18x4xf32> to vector<2x16x16x4xf32>
    %18 = vector.shape_cast %17 : vector<2x16x16x4xf32> to vector<512x4xf32>
    %c0_19 = arith.constant 0 : index
    %c16 = arith.constant 16 : index
    %19 = vector.load %arg10[%c0_19, %c16] : memref<512x36xf32, #tpu.memory_space<vmem>>, vector<512x4xf32>
    tpu.vector_store %arg10[%c0_19, %c16], %18 {strides = array<i32>} : memref<512x36xf32, #tpu.memory_space<vmem>>, vector<512x4xf32>,
    %20 = vector.extract_strided_slice %4 {offsets = [0, 1, 2, 0], sizes = [2, 16, 16, 4], strides = [1, 1, 1, 1]} : vector<2x18x18x4xf32> to vector<2x16x16x4xf32>
    %21 = vector.shape_cast %20 : vector<2x16x16x4xf32> to vector<512x4xf32>
    %c0_20 = arith.constant 0 : index
    %c20 = arith.constant 20 : index
    %22 = vector.load %arg10[%c0_20, %c20] : memref<512x36xf32, #tpu.memory_space<vmem>>, vector<512x4xf32>
    tpu.vector_store %arg10[%c0_20, %c20], %21 {strides = array<i32>} : memref<512x36xf32, #tpu.memory_space<vmem>>, vector<512x4xf32>,
    %23 = vector.extract_strided_slice %4 {offsets = [0, 2, 0, 0], sizes = [2, 16, 16, 4], strides = [1, 1, 1, 1]} : vector<2x18x18x4xf32> to vector<2x16x16x4xf32>
    %24 = vector.shape_cast %23 : vector<2x16x16x4xf32> to vector<512x4xf32>
    %c0_21 = arith.constant 0 : index
    %c24 = arith.constant 24 : index
    %25 = vector.load %arg10[%c0_21, %c24] : memref<512x36xf32, #tpu.memory_space<vmem>>, vector<512x4xf32>
    tpu.vector_store %arg10[%c0_21, %c24], %24 {strides = array<i32>} : memref<512x36xf32, #tpu.memory_space<vmem>>, vector<512x4xf32>,
    %26 = vector.extract_strided_slice %4 {offsets = [0, 2, 1, 0], sizes = [2, 16, 16, 4], strides = [1, 1, 1, 1]} : vector<2x18x18x4xf32> to vector<2x16x16x4xf32>
    %27 = vector.shape_cast %26 : vector<2x16x16x4xf32> to vector<512x4xf32>
    %c0_22 = arith.constant 0 : index
    %c28 = arith.constant 28 : index
    %28 = vector.load %arg10[%c0_22, %c28] : memref<512x36xf32, #tpu.memory_space<vmem>>, vector<512x4xf32>
    tpu.vector_store %arg10[%c0_22, %c28], %27 {strides = array<i32>} : memref<512x36xf32, #tpu.memory_space<vmem>>, vector<512x4xf32>,
    %29 = vector.extract_strided_slice %4 {offsets = [0, 2, 2, 0], sizes = [2, 16, 16, 4], strides = [1, 1, 1, 1]} : vector<2x18x18x4xf32> to vector<2x16x16x4xf32>
    %30 = vector.shape_cast %29 : vector<2x16x16x4xf32> to vector<512x4xf32>
    %c0_23 = arith.constant 0 : index
    %c32 = arith.constant 32 : index
    %31 = vector.load %arg10[%c0_23, %c32] : memref<512x36xf32, #tpu.memory_space<vmem>>, vector<512x4xf32>
    tpu.vector_store %arg10[%c0_23, %c32], %30 {strides = array<i32>} : memref<512x36xf32, #tpu.memory_space<vmem>>, vector<512x4xf32>,
    %c0_24 = arith.constant 0 : index
    %c0_25 = arith.constant 0 : index
    %32 = vector.load %arg10[%c0_24, %c0_25] : memref<512x36xf32, #tpu.memory_space<vmem>>, vector<512x36xf32>
    %c0_26 = arith.constant 0 : index
    %c0_27 = arith.constant 0 : index
    %33 = vector.load %arg1[%c0_26, %c0_27] : memref<36x32xf32, #tpu.memory_space<vmem>>, vector<36x32xf32>
    %cst_28 = arith.constant dense<0.000000e+00> : vector<512x32xf32>
    %34 = tpu.matmul %32, %33, %cst_28 {dimension_numbers = #tpu.dot_dimension_numbers<[1], [0], [0], [1], [0, 0, 1, 1], [], []>} : vector<512x36xf32>, vector<36x32xf32>, vector<512x32xf32> -> vector<512x32xf32>
    %c0_29 = arith.constant 0 : index
    %c0_30 = arith.constant 0 : index
    %35 = vector.load %arg2[%c0_29, %c0_30] : memref<1x32xf32, #tpu.memory_space<vmem>>, vector<1x32xf32>
    %36 = vector.broadcast %35 : vector<1x32xf32> to vector<512x32xf32>
    %37 = arith.addf %34, %36 : vector<512x32xf32>
    %cst_31 = arith.constant 0.000000e+00 : f32
    %38 = vector.broadcast %cst_31 : f32 to vector<512x32xf32>
    %39 = arith.maximumf %37, %38 : vector<512x32xf32>
    %40 = vector.shape_cast %39 : vector<512x32xf32> to vector<2x256x32xf32>
    %cst_32 = arith.constant dense<0.000000e+00> : vector<2x32xf32>
    %41 = vector.multi_reduction <add>, %40, %cst_32 [1] : vector<2x256x32xf32> to vector<2x32xf32>
    %c0_33 = arith.constant 0 : index
    %c0_34 = arith.constant 0 : index
    %42 = vector.load %arg3[%c0_33, %c0_34] : memref<32x3xf32, #tpu.memory_space<vmem>>, vector<32x3xf32>
    %cst_35 = arith.constant dense<0.000000e+00> : vector<2x3xf32>
    %43 = tpu.matmul %41, %42, %cst_35 {dimension_numbers = #tpu.dot_dimension_numbers<[1], [0], [0], [1], [0, 0, 1, 1], [], []>} : vector<2x32xf32>, vector<32x3xf32>, vector<2x3xf32> -> vector<2x3xf32>
    %c0_36 = arith.constant 0 : index
    %c0_37 = arith.constant 0 : index
    %44 = vector.load %arg4[%c0_36, %c0_37] : memref<1x3xf32, #tpu.memory_space<vmem>>, vector<1x3xf32>
    %45 = vector.broadcast %44 : vector<1x3xf32> to vector<2x3xf32>
    %46 = arith.addf %43, %45 : vector<2x3xf32>
    %c0_38 = arith.constant 0 : index
    %c0_39 = arith.constant 0 : index
    %47 = vector.load %arg7[%c0_38, %c0_39] : memref<2x3xf32, #tpu.memory_space<vmem>>, vector<2x3xf32>
    tpu.vector_store %arg7[%c0_38, %c0_39], %46 {strides = array<i32>} : memref<2x3xf32, #tpu.memory_space<vmem>>, vector<2x3xf32>,
    %c0_40 = arith.constant 0 : index
    %c0_41 = arith.constant 0 : index
    %48 = vector.load %arg5[%c0_40, %c0_41] : memref<1x32xf32, #tpu.memory_space<vmem>>, vector<1x32xf32>
    %49 = vector.shape_cast %48 : vector<1x32xf32> to vector<1x1x32xf32>
    %50 = vector.broadcast %49 : vector<1x1x32xf32> to vector<2x256x32xf32>
    %51 = arith.mulf %40, %50 : vector<2x256x32xf32>
    %cst_42 = arith.constant dense<0.000000e+00> : vector<2x256xf32>
    %52 = vector.multi_reduction <add>, %51, %cst_42 [2] : vector<2x256x32xf32> to vector<2x256xf32>
    %c0_43 = arith.constant 0 : index
    %53 = memref.load %arg6[%c0_43] : memref<1xf32, #tpu.memory_space<smem>>
    %54 = vector.broadcast %53 : f32 to vector<2x256xf32>
    %55 = arith.addf %52, %54 : vector<2x256xf32>
    %c0_44 = arith.constant 0 : index
    %c0_45 = arith.constant 0 : index
    %56 = vector.load %arg8[%c0_44, %c0_45] : memref<2x256xf32, #tpu.memory_space<vmem>>, vector<2x256xf32>
    tpu.vector_store %arg8[%c0_44, %c0_45], %55 {strides = array<i32>} : memref<2x256xf32, #tpu.memory_space<vmem>>, vector<2x256xf32>,
    return
  }
}

</mosaic_0001>

<llo_original>
// kernel: outputhead_forward.1
$region0: #{outputhead_forward.1}
  #allocation0 [shape = 'u32[]', space=smem, size = 0x4, offset = 0x4, fixed_abs, tag = 'smem constant byte address 0x4 - core index']
  #allocation1 [shape = 'u32[144,128]{1,0:T(1,128)}', space=vmem, size = 0x12000, scoped, tag = 'internal scratch']
  #allocation2 [shape = 'f32[2,18,18,4]{3,2,1,0:T(8,128)}', space=vmem, size = 0x6c000, scoped, tag = 'scratch operand']
  #allocation3 [shape = 'f32[512,36]{1,0:T(8,128)}', space=vmem, size = 0x40000, scoped, tag = 'scratch operand']
  #allocation4 [shape = 'f32[1]{0:T(128)S(6)}', space=smem, size = 0x200, scoped, tag = 'scoped memory for outputhead_forward.1']
  %s0 = inlined_call_operand.vmem [shape: f32[2,16,16,4], index: 0, kind: input, shape index: {}]
  %s1 = inlined_call_operand.vmem [shape: f32[36,32], index: 1, kind: input, shape index: {}]
  %s2 = inlined_call_operand.vmem [shape: f32[1,32], index: 2, kind: input, shape index: {}]
  %s3 = inlined_call_operand.vmem [shape: f32[32,3], index: 3, kind: input, shape index: {}]
  %s4 = inlined_call_operand.vmem [shape: f32[1,3], index: 4, kind: input, shape index: {}]
  %s5 = inlined_call_operand.vmem [shape: f32[1,32], index: 5, kind: input, shape index: {}]
  %s6 = inlined_call_operand.<no memory space> [shape: f32[1], index: 6, kind: input, shape index: {}]
  %s7 = inlined_call_operand.hbm [shape: f32[2,3], index: 7, kind: output, shape index: {0}]
  %s8 = inlined_call_operand.vmem [shape: f32[2,256], index: 8, kind: output, shape index: {1}]
  %9 = xla_tuple %s7, %s8
  %s10 = sld [smem:[#allocation0]]
  $region46: #{outputhead_forward.1} parent=0
    _
  %s12 = ssub.s32 1, %s10
  %s13 = scalar_select 0, %s12, %s10
  %14 = sst [smem:[#allocation4]] %s6
  $region1: #{outputhead_forward.1} parent=0
    #allocation5 [shape = 'u8[1024]{0}', space=vmem, size = 0x400, scoped, tag = 'output window, operand 0, single buffered']
    #allocation6 [shape = 's32[1]{0}', space=sflag, size = 0x4, scoped, tag = 'scoped memory for outputhead_forward.1']
    %15 = vsyncpa [#allocation6], 0
    // Predicated region
    $region2: #{outputhead_forward.1} parent=1 // pred_check
      _
    $region3: #{outputhead_forward.1} parent=1 // pred_check_branch
      %17 = sbr.rel (0) target = $region5
    $region4: #{outputhead_forward.1} parent=1 // pred_region
      _
    $region5: #{outputhead_forward.1} parent=1 // pred_fallthru
      _
    // Predicated region
    $region6: #{outputhead_forward.1} parent=1 // pred_check
      _
    $region7: #{outputhead_forward.1} parent=1 // pred_check_branch
      %19 = sbr.rel (0) target = $region9
    $region8: #{outputhead_forward.1} parent=1 // pred_region
      _
    $region9: #{outputhead_forward.1} parent=1 // pred_fallthru
      _
    // Predicated region
    $region10: #{outputhead_forward.1} parent=1 // pred_check
      _
    $region11: #{outputhead_forward.1} parent=1 // pred_check_branch
      %21 = sbr.rel (0) target = $region13
    $region12: #{outputhead_forward.1} parent=1 // pred_region
      _
    $region13: #{outputhead_forward.1} parent=1 // pred_fallthru
      _
    // Predicated region
    $region14: #{outputhead_forward.1} parent=1 // pred_check
      _
    $region15: #{outputhead_forward.1} parent=1 // pred_check_branch
      %23 = sbr.rel (0) target = $region17
    $region16: #{outputhead_forward.1} parent=1 // pred_region
      _
    $region17: #{outputhead_forward.1} parent=1 // pred_fallthru
      _
    // Predicated region
    $region18: #{outputhead_forward.1} parent=1 // pred_check
      _
    $region19: #{outputhead_forward.1} parent=1 // pred_check_branch
      %25 = sbr.rel (0) target = $region21
    $region20: #{outputhead_forward.1} parent=1 // pred_region
      _
    $region21: #{outputhead_forward.1} parent=1 // pred_fallthru
      _
    // Predicated region
    $region22: #{outputhead_forward.1} parent=1 // pred_check
      _
    $region23: #{outputhead_forward.1} parent=1 // pred_check_branch
      %27 = sbr.rel (0) target = $region25
    $region24: #{outputhead_forward.1} parent=1 // pred_region
      _
    $region25: #{outputhead_forward.1} parent=1 // pred_fallthru
      _
    // Predicated region
    $region26: #{outputhead_forward.1} parent=1 // pred_check
      _
    $region27: #{outputhead_forward.1} parent=1 // pred_check_branch
      %29 = sbr.rel (0) target = $region29
    $region28: #{outputhead_forward.1} parent=1 // pred_region
      _
    $region29: #{outputhead_forward.1} parent=1 // pred_fallthru
      _
    %vm30 = vcmask 31744
    %31 = vst.msk [vmem:[#allocation2] sm:$0xff] %vm30, 0.0
    %32 = vst.msk [vmem:[#allocation2 + $0x8] sm:$0xff] %vm30, 0.0
    %vm33 = vcmask 25600
    %34 = vst.msk [vmem:[#allocation2 + $0x10] sm:$0x3] %vm33, 0.0
    %35 = vst.msk [vmem:[#allocation2 + $0x18] sm:$0xff] %vm30, 0.0
    %36 = vst.msk [vmem:[#allocation2 + $0x20] sm:$0xff] %vm30, 0.0
    %37 = vst.msk [vmem:[#allocation2 + $0x28] sm:$0x3] %vm33, 0.0
    %38 = vst.msk [vmem:[#allocation2 + $0x30] sm:$0xff] %vm30, 0.0
    %39 = vst.msk [vmem:[#allocation2 + $0x38] sm:$0xff] %vm30, 0.0
    %40 = vst.msk [vmem:[#allocation2 + $0x40] sm:$0x3] %vm33, 0.0
    %41 = vst.msk [vmem:[#allocation2 + $0x48] sm:$0xff] %vm30, 0.0
    %42 = vst.msk [vmem:[#allocation2 + $0x50] sm:$0xff] %vm30, 0.0
    %43 = vst.msk [vmem:[#allocation2 + $0x58] sm:$0x3] %vm33, 0.0
    %44 = vst.msk [vmem:[#allocation2 + $0x60] sm:$0xff] %vm30, 0.0
    %45 = vst.msk [vmem:[#allocation2 + $0x68] sm:$0xff] %vm30, 0.0
    %46 = vst.msk [vmem:[#allocation2 + $0x70] sm:$0x3] %vm33, 0.0
    %47 = vst.msk [vmem:[#allocation2 + $0x78] sm:$0xff] %vm30, 0.0
    %48 = vst.msk [vmem:[#allocation2 + $0x80] sm:$0xff] %vm30, 0.0
    %49 = vst.msk [vmem:[#allocation2 + $0x88] sm:$0x3] %vm33, 0.0
    %50 = vst.msk [vmem:[#allocation2 + $0x90] sm:$0xff] %vm30, 0.0
    %51 = vst.msk [vmem:[#allocation2 + $0x98] sm:$0xff] %vm30, 0.0
    %52 = vst.msk [vmem:[#allocation2 + $0xa0] sm:$0x3] %vm33, 0.0
    %53 = vst.msk [vmem:[#allocation2 + $0xa8] sm:$0xff] %vm30, 0.0
    %54 = vst.msk [vmem:[#allocation2 + $0xb0] sm:$0xff] %vm30, 0.0
    %55 = vst.msk [vmem:[#allocation2 + $0xb8] sm:$0x3] %vm33, 0.0
    %56 = vst.msk [vmem:[#allocation2 + $0xc0] sm:$0xff] %vm30, 0.0
    %57 = vst.msk [vmem:[#allocation2 + $0xc8] sm:$0xff] %vm30, 0.0
    %58 = vst.msk [vmem:[#allocation2 + $0xd0] sm:$0x3] %vm33, 0.0
    %59 = vst.msk [vmem:[#allocation2 + $0xd8] sm:$0xff] %vm30, 0.0
    %60 = vst.msk [vmem:[#allocation2 + $0xe0] sm:$0xff] %vm30, 0.0
    %61 = vst.msk [vmem:[#allocation2 + $0xe8] sm:$0x3] %vm33, 0.0
    %62 = vst.msk [vmem:[#allocation2 + $0xf0] sm:$0xff] %vm30, 0.0
    %63 = vst.msk [vmem:[#allocation2 + $0xf8] sm:$0xff] %vm30, 0.0
    %64 = vst.msk [vmem:[#allocation2 + $0x100] sm:$0x3] %vm33, 0.0
    %65 = vst.msk [vmem:[#allocation2 + $0x108] sm:$0xff] %vm30, 0.0
    %66 = vst.msk [vmem:[#allocation2 + $0x110] sm:$0xff] %vm30, 0.0
    %67 = vst.msk [vmem:[#allocation2 + $0x118] sm:$0x3] %vm33, 0.0
    %68 = vst.msk [vmem:[#allocation2 + $0x120] sm:$0xff] %vm30, 0.0
    %69 = vst.msk [vmem:[#allocation2 + $0x128] sm:$0xff] %vm30, 0.0
    %70 = vst.msk [vmem:[#allocation2 + $0x130] sm:$0x3] %vm33, 0.0
    %71 = vst.msk [vmem:[#allocation2 + $0x138] sm:$0xff] %vm30, 0.0
    %72 = vst.msk [vmem:[#allocation2 + $0x140] sm:$0xff] %vm30, 0.0
    %73 = vst.msk [vmem:[#allocation2 + $0x148] sm:$0x3] %vm33, 0.0
    %74 = vst.msk [vmem:[#allocation2 + $0x150] sm:$0xff] %vm30, 0.0
    %75 = vst.msk [vmem:[#allocation2 + $0x158] sm:$0xff] %vm30, 0.0
    %76 = vst.msk [vmem:[#allocation2 + $0x160] sm:$0x3] %vm33, 0.0
    %77 = vst.msk [vmem:[#allocation2 + $0x168] sm:$0xff] %vm30, 0.0
    %78 = vst.msk [vmem:[#allocation2 + $0x170] sm:$0xff] %vm30, 0.0
    %79 = vst.msk [vmem:[#allocation2 + $0x178] sm:$0x3] %vm33, 0.0
    %80 = vst.msk [vmem:[#allocation2 + $0x180] sm:$0xff] %vm30, 0.0
    %81 = vst.msk [vmem:[#allocation2 + $0x188] sm:$0xff] %vm30, 0.0
    %82 = vst.msk [vmem:[#allocation2 + $0x190] sm:$0x3] %vm33, 0.0
    %83 = vst.msk [vmem:[#allocation2 + $0x198] sm:$0xff] %vm30, 0.0
    %84 = vst.msk [vmem:[#allocation2 + $0x1a0] sm:$0xff] %vm30, 0.0
    %85 = vst.msk [vmem:[#allocation2 + $0x1a8] sm:$0x3] %vm33, 0.0
    %86 = vst.msk [vmem:[#allocation2 + $0x1b0] sm:$0xff] %vm30, 0.0
    %87 = vst.msk [vmem:[#allocation2 + $0x1b8] sm:$0xff] %vm30, 0.0
    %88 = vst.msk [vmem:[#allocation2 + $0x1c0] sm:$0x3] %vm33, 0.0
    %89 = vst.msk [vmem:[#allocation2 + $0x1c8] sm:$0xff] %vm30, 0.0
    %90 = vst.msk [vmem:[#allocation2 + $0x1d0] sm:$0xff] %vm30, 0.0
    %91 = vst.msk [vmem:[#allocation2 + $0x1d8] sm:$0x3] %vm33, 0.0
    %92 = vst.msk [vmem:[#allocation2 + $0x1e0] sm:$0xff] %vm30, 0.0
    %93 = vst.msk [vmem:[#allocation2 + $0x1e8] sm:$0xff] %vm30, 0.0
    %94 = vst.msk [vmem:[#allocation2 + $0x1f0] sm:$0x3] %vm33, 0.0
    %95 = vst.msk [vmem:[#allocation2 + $0x1f8] sm:$0xff] %vm30, 0.0
    %96 = vst.msk [vmem:[#allocation2 + $0x200] sm:$0xff] %vm30, 0.0
    %97 = vst.msk [vmem:[#allocation2 + $0x208] sm:$0x3] %vm33, 0.0
    %98 = vst.msk [vmem:[#allocation2 + $0x210] sm:$0xff] %vm30, 0.0
    %99 = vst.msk [vmem:[#allocation2 + $0x218] sm:$0xff] %vm30, 0.0
    %100 = vst.msk [vmem:[#allocation2 + $0x220] sm:$0x3] %vm33, 0.0
    %101 = vst.msk [vmem:[#allocation2 + $0x228] sm:$0xff] %vm30, 0.0
    %102 = vst.msk [vmem:[#allocation2 + $0x230] sm:$0xff] %vm30, 0.0
    %103 = vst.msk [vmem:[#allocation2 + $0x238] sm:$0x3] %vm33, 0.0
    %104 = vst.msk [vmem:[#allocation2 + $0x240] sm:$0xff] %vm30, 0.0
    %105 = vst.msk [vmem:[#allocation2 + $0x248] sm:$0xff] %vm30, 0.0
    %106 = vst.msk [vmem:[#allocation2 + $0x250] sm:$0x3] %vm33, 0.0
    %107 = vst.msk [vmem:[#allocation2 + $0x258] sm:$0xff] %vm30, 0.0
    %108 = vst.msk [vmem:[#allocation2 + $0x260] sm:$0xff] %vm30, 0.0
    %109 = vst.msk [vmem:[#allocation2 + $0x268] sm:$0x3] %vm33, 0.0
    %110 = vst.msk [vmem:[#allocation2 + $0x270] sm:$0xff] %vm30, 0.0
    %111 = vst.msk [vmem:[#allocation2 + $0x278] sm:$0xff] %vm30, 0.0
    %112 = vst.msk [vmem:[#allocation2 + $0x280] sm:$0x3] %vm33, 0.0
    %113 = vst.msk [vmem:[#allocation2 + $0x288] sm:$0xff] %vm30, 0.0
    %114 = vst.msk [vmem:[#allocation2 + $0x290] sm:$0xff] %vm30, 0.0
    %115 = vst.msk [vmem:[#allocation2 + $0x298] sm:$0x3] %vm33, 0.0
    %116 = vst.msk [vmem:[#allocation2 + $0x2a0] sm:$0xff] %vm30, 0.0
    %117 = vst.msk [vmem:[#allocation2 + $0x2a8] sm:$0xff] %vm30, 0.0
    %118 = vst.msk [vmem:[#allocation2 + $0x2b0] sm:$0x3] %vm33, 0.0
    %119 = vst.msk [vmem:[#allocation2 + $0x2b8] sm:$0xff] %vm30, 0.0
    %120 = vst.msk [vmem:[#allocation2 + $0x2c0] sm:$0xff] %vm30, 0.0
    %121 = vst.msk [vmem:[#allocation2 + $0x2c8] sm:$0x3] %vm33, 0.0
    %122 = vst.msk [vmem:[#allocation2 + $0x2d0] sm:$0xff] %vm30, 0.0
    %123 = vst.msk [vmem:[#allocation2 + $0x2d8] sm:$0xff] %vm30, 0.0
    %124 = vst.msk [vmem:[#allocation2 + $0x2e0] sm:$0x3] %vm33, 0.0
    %125 = vst.msk [vmem:[#allocation2 + $0x2e8] sm:$0xff] %vm30, 0.0
    %126 = vst.msk [vmem:[#allocation2 + $0x2f0] sm:$0xff] %vm30, 0.0
    %127 = vst.msk [vmem:[#allocation2 + $0x2f8] sm:$0x3] %vm33, 0.0
    %128 = vst.msk [vmem:[#allocation2 + $0x300] sm:$0xff] %vm30, 0.0
    %129 = vst.msk [vmem:[#allocation2 + $0x308] sm:$0xff] %vm30, 0.0
    %130 = vst.msk [vmem:[#allocation2 + $0x310] sm:$0x3] %vm33, 0.0
    %131 = vst.msk [vmem:[#allocation2 + $0x318] sm:$0xff] %vm30, 0.0
    %132 = vst.msk [vmem:[#allocation2 + $0x320] sm:$0xff] %vm30, 0.0
    %133 = vst.msk [vmem:[#allocation2 + $0x328] sm:$0x3] %vm33, 0.0
    %134 = vst.msk [vmem:[#allocation2 + $0x330] sm:$0xff] %vm30, 0.0
    %135 = vst.msk [vmem:[#allocation2 + $0x338] sm:$0xff] %vm30, 0.0
    %136 = vst.msk [vmem:[#allocation2 + $0x340] sm:$0x3] %vm33, 0.0
    %137 = vst.msk [vmem:[#allocation2 + $0x348] sm:$0xff] %vm30, 0.0
    %138 = vst.msk [vmem:[#allocation2 + $0x350] sm:$0xff] %vm30, 0.0
    %139 = vst.msk [vmem:[#allocation2 + $0x358] sm:$0x3] %vm33, 0.0
    %v140 = vld [vmem:[%s0] sm:$0xff]
    %v141 = vld [vmem:[%s0 + $0x8] sm:$0xff]
    %v142 = vld [vmem:[%s0 + $0x10] sm:$0xff]
    %v143 = vld [vmem:[%s0 + $0x18] sm:$0xff]
    %v144 = vld [vmem:[%s0 + $0x20] sm:$0xff]
    %v145 = vld [vmem:[%s0 + $0x28] sm:$0xff]
    %v146 = vld [vmem:[%s0 + $0x30] sm:$0xff]
    %v147 = vld [vmem:[%s0 + $0x38] sm:$0xff]
    %v148 = vld [vmem:[%s0 + $0x40] sm:$0xff]
    %v149 = vld [vmem:[%s0 + $0x48] sm:$0xff]
    %v150 = vld [vmem:[%s0 + $0x50] sm:$0xff]
    %v151 = vld [vmem:[%s0 + $0x58] sm:$0xff]
    %v152 = vld [vmem:[%s0 + $0x60] sm:$0xff]
    %v153 = vld [vmem:[%s0 + $0x68] sm:$0xff]
    %v154 = vld [vmem:[%s0 + $0x70] sm:$0xff]
    %v155 = vld [vmem:[%s0 + $0x78] sm:$0xff]
    %v156 = vld [vmem:[%s0 + $0x80] sm:$0xff]
    %v157 = vld [vmem:[%s0 + $0x88] sm:$0xff]
    %v158 = vld [vmem:[%s0 + $0x90] sm:$0xff]
    %v159 = vld [vmem:[%s0 + $0x98] sm:$0xff]
    %v160 = vld [vmem:[%s0 + $0xa0] sm:$0xff]
    %v161 = vld [vmem:[%s0 + $0xa8] sm:$0xff]
    %v162 = vld [vmem:[%s0 + $0xb0] sm:$0xff]
    %v163 = vld [vmem:[%s0 + $0xb8] sm:$0xff]
    %v164 = vld [vmem:[%s0 + $0xc0] sm:$0xff]
    %v165 = vld [vmem:[%s0 + $0xc8] sm:$0xff]
    %v166 = vld [vmem:[%s0 + $0xd0] sm:$0xff]
    %v167 = vld [vmem:[%s0 + $0xd8] sm:$0xff]
    %v168 = vld [vmem:[%s0 + $0xe0] sm:$0xff]
    %v169 = vld [vmem:[%s0 + $0xe8] sm:$0xff]
    %v170 = vld [vmem:[%s0 + $0xf0] sm:$0xff]
    %v171 = vld [vmem:[%s0 + $0xf8] sm:$0xff]
    %v172 = vld [vmem:[%s0 + $0x100] sm:$0xff]
    %v173 = vld [vmem:[%s0 + $0x108] sm:$0xff]
    %v174 = vld [vmem:[%s0 + $0x110] sm:$0xff]
    %v175 = vld [vmem:[%s0 + $0x118] sm:$0xff]
    %v176 = vld [vmem:[%s0 + $0x120] sm:$0xff]
    %v177 = vld [vmem:[%s0 + $0x128] sm:$0xff]
    %v178 = vld [vmem:[%s0 + $0x130] sm:$0xff]
    %v179 = vld [vmem:[%s0 + $0x138] sm:$0xff]
    %v180 = vld [vmem:[%s0 + $0x140] sm:$0xff]
    %v181 = vld [vmem:[%s0 + $0x148] sm:$0xff]
    %v182 = vld [vmem:[%s0 + $0x150] sm:$0xff]
    %v183 = vld [vmem:[%s0 + $0x158] sm:$0xff]
    %v184 = vld [vmem:[%s0 + $0x160] sm:$0xff]
    %v185 = vld [vmem:[%s0 + $0x168] sm:$0xff]
    %v186 = vld [vmem:[%s0 + $0x170] sm:$0xff]
    %v187 = vld [vmem:[%s0 + $0x178] sm:$0xff]
    %v188 = vld [vmem:[%s0 + $0x180] sm:$0xff]
    %v189 = vld [vmem:[%s0 + $0x188] sm:$0xff]
    %v190 = vld [vmem:[%s0 + $0x190] sm:$0xff]
    %v191 = vld [vmem:[%s0 + $0x198] sm:$0xff]
    %v192 = vld [vmem:[%s0 + $0x1a0] sm:$0xff]
    %v193 = vld [vmem:[%s0 + $0x1a8] sm:$0xff]
    %v194 = vld [vmem:[%s0 + $0x1b0] sm:$0xff]
    %v195 = vld [vmem:[%s0 + $0x1b8] sm:$0xff]
    %v196 = vld [vmem:[%s0 + $0x1c0] sm:$0xff]
    %v197 = vld [vmem:[%s0 + $0x1c8] sm:$0xff]
    %v198 = vld [vmem:[%s0 + $0x1d0] sm:$0xff]
    %v199 = vld [vmem:[%s0 + $0x1d8] sm:$0xff]
    %v200 = vld [vmem:[%s0 + $0x1e0] sm:$0xff]
    %v201 = vld [vmem:[%s0 + $0x1e8] sm:$0xff]
    %v202 = vld [vmem:[%s0 + $0x1f0] sm:$0xff]
    %v203 = vld [vmem:[%s0 + $0x1f8] sm:$0xff]
    %s204 = scalar_lea.vmem [#allocation2], 24
    %205 = vst.msk [vmem:[%s204 + $0x1] sm:$0xff] %vm30, %v140
    %206 = vst.msk [vmem:[%s204 + $0x9] sm:$0xff] %vm30, %v141
    %207 = vst.msk [vmem:[%s204 + $0x19] sm:$0xff] %vm30, %v142
    %208 = vst.msk [vmem:[%s204 + $0x21] sm:$0xff] %vm30, %v143
    %209 = vst.msk [vmem:[%s204 + $0x31] sm:$0xff] %vm30, %v144
    %210 = vst.msk [vmem:[%s204 + $0x39] sm:$0xff] %vm30, %v145
    %211 = vst.msk [vmem:[%s204 + $0x49] sm:$0xff] %vm30, %v146
    %212 = vst.msk [vmem:[%s204 + $0x51] sm:$0xff] %vm30, %v147
    %213 = vst.msk [vmem:[%s204 + $0x61] sm:$0xff] %vm30, %v148
    %214 = vst.msk [vmem:[%s204 + $0x69] sm:$0xff] %vm30, %v149
    %215 = vst.msk [vmem:[%s204 + $0x79] sm:$0xff] %vm30, %v150
    %216 = vst.msk [vmem:[%s204 + $0x81] sm:$0xff] %vm30, %v151
    %217 = vst.msk [vmem:[%s204 + $0x91] sm:$0xff] %vm30, %v152
    %218 = vst.msk [vmem:[%s204 + $0x99] sm:$0xff] %vm30, %v153
    %219 = vst.msk [vmem:[%s204 + $0xa9] sm:$0xff] %vm30, %v154
    %220 = vst.msk [vmem:[%s204 + $0xb1] sm:$0xff] %vm30, %v155
    %221 = vst.msk [vmem:[%s204 + $0xc1] sm:$0xff] %vm30, %v156
    %222 = vst.msk [vmem:[%s204 + $0xc9] sm:$0xff] %vm30, %v157
    %223 = vst.msk [vmem:[%s204 + $0xd9] sm:$0xff] %vm30, %v158
    %224 = vst.msk [vmem:[%s204 + $0xe1] sm:$0xff] %vm30, %v159
    %225 = vst.msk [vmem:[%s204 + $0xf1] sm:$0xff] %vm30, %v160
    %226 = vst.msk [vmem:[%s204 + $0xf9] sm:$0xff] %vm30, %v161
    %227 = vst.msk [vmem:[%s204 + $0x109] sm:$0xff] %vm30, %v162
    %228 = vst.msk [vmem:[%s204 + $0x111] sm:$0xff] %vm30, %v163
    %229 = vst.msk [vmem:[%s204 + $0x121] sm:$0xff] %vm30, %v164
    %230 = vst.msk [vmem:[%s204 + $0x129] sm:$0xff] %vm30, %v165
    %231 = vst.msk [vmem:[%s204 + $0x139] sm:$0xff] %vm30, %v166
    %232 = vst.msk [vmem:[%s204 + $0x141] sm:$0xff] %vm30, %v167
    %233 = vst.msk [vmem:[%s204 + $0x151] sm:$0xff] %vm30, %v168
    %234 = vst.msk [vmem:[%s204 + $0x159] sm:$0xff] %vm30, %v169
    %235 = vst.msk [vmem:[%s204 + $0x169] sm:$0xff] %vm30, %v170
    %236 = vst.msk [vmem:[%s204 + $0x171] sm:$0xff] %vm30, %v171
    %237 = vst.msk [vmem:[%s204 + $0x1b1] sm:$0xff] %vm30, %v172
    %238 = vst.msk [vmem:[%s204 + $0x1b9] sm:$0xff] %vm30, %v173
    %239 = vst.msk [vmem:[%s204 + $0x1c9] sm:$0xff] %vm30, %v174
    %240 = vst.msk [vmem:[%s204 + $0x1d1] sm:$0xff] %vm30, %v175
    %241 = vst.msk [vmem:[%s204 + $0x1e1] sm:$0xff] %vm30, %v176
    %242 = vst.msk [vmem:[%s204 + $0x1e9] sm:$0xff] %vm30, %v177
    %243 = vst.msk [vmem:[%s204 + $0x1f9] sm:$0xff] %vm30, %v178
    %244 = vst.msk [vmem:[%s204 + $0x201] sm:$0xff] %vm30, %v179
    %245 = vst.msk [vmem:[%s204 + $0x211] sm:$0xff] %vm30, %v180
    %246 = vst.msk [vmem:[%s204 + $0x219] sm:$0xff] %vm30, %v181
    %247 = vst.msk [vmem:[%s204 + $0x229] sm:$0xff] %vm30, %v182
    %248 = vst.msk [vmem:[%s204 + $0x231] sm:$0xff] %vm30, %v183
    %249 = vst.msk [vmem:[%s204 + $0x241] sm:$0xff] %vm30, %v184
    %250 = vst.msk [vmem:[%s204 + $0x249] sm:$0xff] %vm30, %v185
    %251 = vst.msk [vmem:[%s204 + $0x259] sm:$0xff] %vm30, %v186
    %252 = vst.msk [vmem:[%s204 + $0x261] sm:$0xff] %vm30, %v187
    %253 = vst.msk [vmem:[%s204 + $0x271] sm:$0xff] %vm30, %v188
    %254 = vst.msk [vmem:[%s204 + $0x279] sm:$0xff] %vm30, %v189
    %255 = vst.msk [vmem:[%s204 + $0x289] sm:$0xff] %vm30, %v190
    %256 = vst.msk [vmem:[%s204 + $0x291] sm:$0xff] %vm30, %v191
    %257 = vst.msk [vmem:[%s204 + $0x2a1] sm:$0xff] %vm30, %v192
    %258 = vst.msk [vmem:[%s204 + $0x2a9] sm:$0xff] %vm30, %v193
    %259 = vst.msk [vmem:[%s204 + $0x2b9] sm:$0xff] %vm30, %v194
    %260 = vst.msk [vmem:[%s204 + $0x2c1] sm:$0xff] %vm30, %v195
    %261 = vst.msk [vmem:[%s204 + $0x2d1] sm:$0xff] %vm30, %v196
    %262 = vst.msk [vmem:[%s204 + $0x2d9] sm:$0xff] %vm30, %v197
    %263 = vst.msk [vmem:[%s204 + $0x2e9] sm:$0xff] %vm30, %v198
    %264 = vst.msk [vmem:[%s204 + $0x2f1] sm:$0xff] %vm30, %v199
    %265 = vst.msk [vmem:[%s204 + $0x301] sm:$0xff] %vm30, %v200
    %266 = vst.msk [vmem:[%s204 + $0x309] sm:$0xff] %vm30, %v201
    %267 = vst.msk [vmem:[%s204 + $0x319] sm:$0xff] %vm30, %v202
    %268 = vst.msk [vmem:[%s204 + $0x321] sm:$0xff] %vm30, %v203
    %v269 = vld [vmem:[#allocation2] sm:$0xff]
    %v270 = vld [vmem:[#allocation2 + $0x8] sm:$0xff]
    %v271 = vld [vmem:[#allocation2 + $0x10] sm:$0x3]
    %v272 = vld [vmem:[#allocation2 + $0x18] sm:$0xff]
    %v273 = vld [vmem:[#allocation2 + $0x20] sm:$0xff]
    %v274 = vld [vmem:[#allocation2 + $0x28] sm:$0x3]
    %v275 = vld [vmem:[#allocation2 + $0x30] sm:$0xff]
    %v276 = vld [vmem:[#allocation2 + $0x38] sm:$0xff]
    %v277 = vld [vmem:[#allocation2 + $0x40] sm:$0x3]
    %v278 = vld [vmem:[#allocation2 + $0x48] sm:$0xff]
    %v279 = vld [vmem:[#allocation2 + $0x50] sm:$0xff]
    %v280 = vld [vmem:[#allocation2 + $0x58] sm:$0x3]
    %v281 = vld [vmem:[#allocation2 + $0x60] sm:$0xff]
    %v282 = vld [vmem:[#allocation2 + $0x68] sm:$0xff]
    %v283 = vld [vmem:[#allocation2 + $0x70] sm:$0x3]
    %v284 = vld [vmem:[#allocation2 + $0x78] sm:$0xff]
    %v285 = vld [vmem:[#allocation2 + $0x80] sm:$0xff]
    %v286 = vld [vmem:[#allocation2 + $0x88] sm:$0x3]
    %v287 = vld [vmem:[#allocation2 + $0x90] sm:$0xff]
    %v288 = vld [vmem:[#allocation2 + $0x98] sm:$0xff]
    %v289 = vld [vmem:[#allocation2 + $0xa0] sm:$0x3]
    %v290 = vld [vmem:[#allocation2 + $0xa8] sm:$0xff]
    %v291 = vld [vmem:[#allocation2 + $0xb0] sm:$0xff]
    %v292 = vld [vmem:[#allocation2 + $0xb8] sm:$0x3]
    %v293 = vld [vmem:[#allocation2 + $0xc0] sm:$0xff]
    %v294 = vld [vmem:[#allocation2 + $0xc8] sm:$0xff]
    %v295 = vld [vmem:[#allocation2 + $0xd0] sm:$0x3]
    %v296 = vld [vmem:[#allocation2 + $0xd8] sm:$0xff]
    %v297 = vld [vmem:[#allocation2 + $0xe0] sm:$0xff]
    %v298 = vld [vmem:[#allocation2 + $0xe8] sm:$0x3]
    %v299 = vld [vmem:[#allocation2 + $0xf0] sm:$0xff]
    %v300 = vld [vmem:[#allocation2 + $0xf8] sm:$0xff]
    %v301 = vld [vmem:[#allocation2 + $0x100] sm:$0x3]
    %v302 = vld [vmem:[#allocation2 + $0x108] sm:$0xff]
    %v303 = vld [vmem:[#allocation2 + $0x110] sm:$0xff]
    %v304 = vld [vmem:[#allocation2 + $0x118] sm:$0x3]
    %v305 = vld [vmem:[#allocation2 + $0x120] sm:$0xff]
    %v306 = vld [vmem:[#allocation2 + $0x128] sm:$0xff]
    %v307 = vld [vmem:[#allocation2 + $0x130] sm:$0x3]
    %v308 = vld [vmem:[#allocation2 + $0x138] sm:$0xff]
    %v309 = vld [vmem:[#allocation2 + $0x140] sm:$0xff]
    %v310 = vld [vmem:[#allocation2 + $0x148] sm:$0x3]
    %v311 = vld [vmem:[#allocation2 + $0x150] sm:$0xff]
    %v312 = vld [vmem:[#allocation2 + $0x158] sm:$0xff]
    %v313 = vld [vmem:[#allocation2 + $0x160] sm:$0x3]
    %v314 = vld [vmem:[#allocation2 + $0x168] sm:$0xff]
    %v315 = vld [vmem:[#allocation2 + $0x170] sm:$0xff]
    %v316 = vld [vmem:[#allocation2 + $0x178] sm:$0x3]
    %v317 = vld [vmem:[#allocation2 + $0x180] sm:$0xff]
    %v318 = vld [vmem:[#allocation2 + $0x188] sm:$0xff]
    %v319 = vld [vmem:[#allocation2 + $0x190] sm:$0x3]
    %v320 = vld [vmem:[#allocation2 + $0x198] sm:$0xff]
    %v321 = vld [vmem:[#allocation2 + $0x1a0] sm:$0xff]
    %v322 = vld [vmem:[#allocation2 + $0x1a8] sm:$0x3]
    %v323 = vld [vmem:[#allocation2 + $0x1b0] sm:$0xff]
    %v324 = vld [vmem:[#allocation2 + $0x1b8] sm:$0xff]
    %v325 = vld [vmem:[#allocation2 + $0x1c0] sm:$0x3]
    %v326 = vld [vmem:[#allocation2 + $0x1c8] sm:$0xff]
    %v327 = vld [vmem:[#allocation2 + $0x1d0] sm:$0xff]
    %v328 = vld [vmem:[#allocation2 + $0x1d8] sm:$0x3]
    %v329 = vld [vmem:[#allocation2 + $0x1e0] sm:$0xff]
    %v330 = vld [vmem:[#allocation2 + $0x1e8] sm:$0xff]
    %v331 = vld [vmem:[#allocation2 + $0x1f0] sm:$0x3]
    %v332 = vld [vmem:[#allocation2 + $0x1f8] sm:$0xff]
    %v333 = vld [vmem:[#allocation2 + $0x200] sm:$0xff]
    %v334 = vld [vmem:[#allocation2 + $0x208] sm:$0x3]
    %v335 = vld [vmem:[#allocation2 + $0x210] sm:$0xff]
    %v336 = vld [vmem:[#allocation2 + $0x218] sm:$0xff]
    %v337 = vld [vmem:[#allocation2 + $0x220] sm:$0x3]
    %v338 = vld [vmem:[#allocation2 + $0x228] sm:$0xff]
    %v339 = vld [vmem:[#allocation2 + $0x230] sm:$0xff]
    %v340 = vld [vmem:[#allocation2 + $0x238] sm:$0x3]
    %v341 = vld [vmem:[#allocation2 + $0x240] sm:$0xff]
    %v342 = vld [vmem:[#allocation2 + $0x248] sm:$0xff]
    %v343 = vld [vmem:[#allocation2 + $0x250] sm:$0x3]
    %v344 = vld [vmem:[#allocation2 + $0x258] sm:$0xff]
    %v345 = vld [vmem:[#allocation2 + $0x260] sm:$0xff]
    %v346 = vld [vmem:[#allocation2 + $0x268] sm:$0x3]
    %v347 = vld [vmem:[#allocation2 + $0x270] sm:$0xff]
    %v348 = vld [vmem:[#allocation2 + $0x278] sm:$0xff]
    %v349 = vld [vmem:[#allocation2 + $0x280] sm:$0x3]
    %v350 = vld [vmem:[#allocation2 + $0x288] sm:$0xff]
    %v351 = vld [vmem:[#allocation2 + $0x290] sm:$0xff]
    %v352 = vld [vmem:[#allocation2 + $0x298] sm:$0x3]
    %v353 = vld [vmem:[#allocation2 + $0x2a0] sm:$0xff]
    %v354 = vld [vmem:[#allocation2 + $0x2a8] sm:$0xff]
    %v355 = vld [vmem:[#allocation2 + $0x2b0] sm:$0x3]
    %v356 = vld [vmem:[#allocation2 + $0x2b8] sm:$0xff]
    %v357 = vld [vmem:[#allocation2 + $0x2c0] sm:$0xff]
    %v358 = vld [vmem:[#allocation2 + $0x2c8] sm:$0x3]
    %v359 = vld [vmem:[#allocation2 + $0x2d0] sm:$0xff]
    %v360 = vld [vmem:[#allocation2 + $0x2d8] sm:$0xff]
    %v361 = vld [vmem:[#allocation2 + $0x2e0] sm:$0x3]
    %v362 = vld [vmem:[#allocation2 + $0x2e8] sm:$0xff]
    %v363 = vld [vmem:[#allocation2 + $0x2f0] sm:$0xff]
    %v364 = vld [vmem:[#allocation2 + $0x2f8] sm:$0x3]
    %v365 = vld [vmem:[#allocation2 + $0x300] sm:$0xff]
    %v366 = vld [vmem:[#allocation2 + $0x308] sm:$0xff]
    %v367 = vld [vmem:[#allocation2 + $0x310] sm:$0x3]
    %v368 = vld [vmem:[#allocation2 + $0x318] sm:$0xff]
    %v369 = vld [vmem:[#allocation2 + $0x320] sm:$0xff]
    %v370 = vld [vmem:[#allocation2 + $0x328] sm:$0x3]
    %v371 = vld [vmem:[#allocation2 + $0x330] sm:$0xff]
    %v372 = vld [vmem:[#allocation2 + $0x338] sm:$0xff]
    %v373 = vld [vmem:[#allocation2 + $0x340] sm:$0x3]
    %v374 = vld [vmem:[#allocation2 + $0x348] sm:$0xff]
    %v375 = vld [vmem:[#allocation2 + $0x350] sm:$0xff]
    %v376 = vld [vmem:[#allocation2 + $0x358] sm:$0x3]
    %377 = vst.msk [vmem:[#allocation3] sm:$0xff] %vm30, %v269
    %378 = vst.msk [vmem:[#allocation3 + $0x8] sm:$0xff] %vm30, %v270
    %379 = vst.msk [vmem:[#allocation3 + $0x10] sm:$0xff] %vm30, %v272
    %380 = vst.msk [vmem:[#allocation3 + $0x18] sm:$0xff] %vm30, %v273
    %381 = vst.msk [vmem:[#allocation3 + $0x20] sm:$0xff] %vm30, %v275
    %382 = vst.msk [vmem:[#allocation3 + $0x28] sm:$0xff] %vm30, %v276
    %383 = vst.msk [vmem:[#allocation3 + $0x30] sm:$0xff] %vm30, %v278
    %384 = vst.msk [vmem:[#allocation3 + $0x38] sm:$0xff] %vm30, %v279
    %385 = vst.msk [vmem:[#allocation3 + $0x40] sm:$0xff] %vm30, %v281
    %386 = vst.msk [vmem:[#allocation3 + $0x48] sm:$0xff] %vm30, %v282
    %387 = vst.msk [vmem:[#allocation3 + $0x50] sm:$0xff] %vm30, %v284
    %388 = vst.msk [vmem:[#allocation3 + $0x58] sm:$0xff] %vm30, %v285
    %389 = vst.msk [vmem:[#allocation3 + $0x60] sm:$0xff] %vm30, %v287
    %390 = vst.msk [vmem:[#allocation3 + $0x68] sm:$0xff] %vm30, %v288
    %391 = vst.msk [vmem:[#allocation3 + $0x70] sm:$0xff] %vm30, %v290
    %392 = vst.msk [vmem:[#allocation3 + $0x78] sm:$0xff] %vm30, %v291
    %393 = vst.msk [vmem:[#allocation3 + $0x80] sm:$0xff] %vm30, %v293
    %394 = vst.msk [vmem:[#allocation3 + $0x88] sm:$0xff] %vm30, %v294
    %395 = vst.msk [vmem:[#allocation3 + $0x90] sm:$0xff] %vm30, %v296
    %396 = vst.msk [vmem:[#allocation3 + $0x98] sm:$0xff] %vm30, %v297
    %397 = vst.msk [vmem:[#allocation3 + $0xa0] sm:$0xff] %vm30, %v299
    %398 = vst.msk [vmem:[#allocation3 + $0xa8] sm:$0xff] %vm30, %v300
    %399 = vst.msk [vmem:[#allocation3 + $0xb0] sm:$0xff] %vm30, %v302
    %400 = vst.msk [vmem:[#allocation3 + $0xb8] sm:$0xff] %vm30, %v303
    %401 = vst.msk [vmem:[#allocation3 + $0xc0] sm:$0xff] %vm30, %v305
    %402 = vst.msk [vmem:[#allocation3 + $0xc8] sm:$0xff] %vm30, %v306
    %403 = vst.msk [vmem:[#allocation3 + $0xd0] sm:$0xff] %vm30, %v308
    %404 = vst.msk [vmem:[#allocation3 + $0xd8] sm:$0xff] %vm30, %v309
    %405 = vst.msk [vmem:[#allocation3 + $0xe0] sm:$0xff] %vm30, %v311
    %406 = vst.msk [vmem:[#allocation3 + $0xe8] sm:$0xff] %vm30, %v312
    %407 = vst.msk [vmem:[#allocation3 + $0xf0] sm:$0xff] %vm30, %v314
    %408 = vst.msk [vmem:[#allocation3 + $0xf8] sm:$0xff] %vm30, %v315
    %409 = vst.msk [vmem:[#allocation3 + $0x100] sm:$0xff] %vm30, %v323
    %410 = vst.msk [vmem:[#allocation3 + $0x108] sm:$0xff] %vm30, %v324
    %411 = vst.msk [vmem:[#allocation3 + $0x110] sm:$0xff] %vm30, %v326
    %412 = vst.msk [vmem:[#allocation3 + $0x118] sm:$0xff] %vm30, %v327
    %413 = vst.msk [vmem:[#allocation3 + $0x120] sm:$0xff] %vm30, %v329
    %414 = vst.msk [vmem:[#allocation3 + $0x128] sm:$0xff] %vm30, %v330
    %415 = vst.msk [vmem:[#allocation3 + $0x130] sm:$0xff] %vm30, %v332
    %416 = vst.msk [vmem:[#allocation3 + $0x138] sm:$0xff] %vm30, %v333
    %417 = vst.msk [vmem:[#allocation3 + $0x140] sm:$0xff] %vm30, %v335
    %418 = vst.msk [vmem:[#allocation3 + $0x148] sm:$0xff] %vm30, %v336
    %419 = vst.msk [vmem:[#allocation3 + $0x150] sm:$0xff] %vm30, %v338
    %420 = vst.msk [vmem:[#allocation3 + $0x158] sm:$0xff] %vm30, %v339
    %421 = vst.msk [vmem:[#allocation3 + $0x160] sm:$0xff] %vm30, %v341
    %422 = vst.msk [vmem:[#allocation3 + $0x168] sm:$0xff] %vm30, %v342
    %423 = vst.msk [vmem:[#allocation3 + $0x170] sm:$0xff] %vm30, %v344
    %424 = vst.msk [vmem:[#allocation3 + $0x178] sm:$0xff] %vm30, %v345
    %425 = vst.msk [vmem:[#allocation3 + $0x180] sm:$0xff] %vm30, %v347
    %426 = vst.msk [vmem:[#allocation3 + $0x188] sm:$0xff] %vm30, %v348
    %427 = vst.msk [vmem:[#allocation3 + $0x190] sm:$0xff] %vm30, %v350
    %428 = vst.msk [vmem:[#allocation3 + $0x198] sm:$0xff] %vm30, %v351
    %429 = vst.msk [vmem:[#allocation3 + $0x1a0] sm:$0xff] %vm30, %v353
    %430 = vst.msk [vmem:[#allocation3 + $0x1a8] sm:$0xff] %vm30, %v354
    %431 = vst.msk [vmem:[#allocation3 + $0x1b0] sm:$0xff] %vm30, %v356
    %432 = vst.msk [vmem:[#allocation3 + $0x1b8] sm:$0xff] %vm30, %v357
    %433 = vst.msk [vmem:[#allocation3 + $0x1c0] sm:$0xff] %vm30, %v359
    %434 = vst.msk [vmem:[#allocation3 + $0x1c8] sm:$0xff] %vm30, %v360
    %435 = vst.msk [vmem:[#allocation3 + $0x1d0] sm:$0xff] %vm30, %v362
    %436 = vst.msk [vmem:[#allocation3 + $0x1d8] sm:$0xff] %vm30, %v363
    %437 = vst.msk [vmem:[#allocation3 + $0x1e0] sm:$0xff] %vm30, %v365
    %438 = vst.msk [vmem:[#allocation3 + $0x1e8] sm:$0xff] %vm30, %v366
    %439 = vst.msk [vmem:[#allocation3 + $0x1f0] sm:$0xff] %vm30, %v368
    %440 = vst.msk [vmem:[#allocation3 + $0x1f8] sm:$0xff] %vm30, %v369
    %vm537 = vcmask 1046528
    %v538 = vrot.slane %v269, 1
    %v539 = vrot.slane %v270, 1
    %v540 = vsel %vm537, %v538, %v539
    %v541 = vrot.slane %v271, 1
    %v542 = vsel %vm537, %v539, %v541
    %v543 = vrot.slane %v272, 1
    %v544 = vrot.slane %v273, 1
    %v545 = vsel %vm537, %v543, %v544
    %v546 = vrot.slane %v274, 1
    %v547 = vsel %vm537, %v544, %v546
    %v548 = vrot.slane %v275, 1
    %v549 = vrot.slane %v276, 1
    %v550 = vsel %vm537, %v548, %v549
    %v551 = vrot.slane %v277, 1
    %v552 = vsel %vm537, %v549, %v551
    %v553 = vrot.slane %v278, 1
    %v554 = vrot.slane %v279, 1
    %v555 = vsel %vm537, %v553, %v554
    %v556 = vrot.slane %v280, 1
    %v557 = vsel %vm537, %v554, %v556
    %v558 = vrot.slane %v281, 1
    %v559 = vrot.slane %v282, 1
    %v560 = vsel %vm537, %v558, %v559
    %v561 = vrot.slane %v283, 1
    %v562 = vsel %vm537, %v559, %v561
    %v563 = vrot.slane %v284, 1
    %v564 = vrot.slane %v285, 1
    %v565 = vsel %vm537, %v563, %v564
    %v566 = vrot.slane %v286, 1
    %v567 = vsel %vm537, %v564, %v566
    %v568 = vrot.slane %v287, 1
    %v569 = vrot.slane %v288, 1
    %v570 = vsel %vm537, %v568, %v569
    %v571 = vrot.slane %v289, 1
    %v572 = vsel %vm537, %v569, %v571
    %v573 = vrot.slane %v290, 1
    %v574 = vrot.slane %v291, 1
    %v575 = vsel %vm537, %v573, %v574
    %v576 = vrot.slane %v292, 1
    %v577 = vsel %vm537, %v574, %v576
    %v578 = vrot.slane %v293, 1
    %v579 = vrot.slane %v294, 1
    %v580 = vsel %vm537, %v578, %v579
    %v581 = vrot.slane %v295, 1
    %v582 = vsel %vm537, %v579, %v581
    %v583 = vrot.slane %v296, 1
    %v584 = vrot.slane %v297, 1
    %v585 = vsel %vm537, %v583, %v584
    %v586 = vrot.slane %v298, 1
    %v587 = vsel %vm537, %v584, %v586
    %v588 = vrot.slane %v299, 1
    %v589 = vrot.slane %v300, 1
    %v590 = vsel %vm537, %v588, %v589
    %v591 = vrot.slane %v301, 1
    %v592 = vsel %vm537, %v589, %v591
    %v593 = vrot.slane %v302, 1
    %v594 = vrot.slane %v303, 1
    %v595 = vsel %vm537, %v593, %v594
    %v596 = vrot.slane %v304, 1
    %v597 = vsel %vm537, %v594, %v596
    %v598 = vrot.slane %v305, 1
    %v599 = vrot.slane %v306, 1
    %v600 = vsel %vm537, %v598, %v599
    %v601 = vrot.slane %v307, 1
    %v602 = vsel %vm537, %v599, %v601
    %v603 = vrot.slane %v308, 1
    %v604 = vrot.slane %v309, 1
    %v605 = vsel %vm537, %v603, %v604
    %v606 = vrot.slane %v310, 1
    %v607 = vsel %vm537, %v604, %v606
    %v608 = vrot.slane %v311, 1
    %v609 = vrot.slane %v312, 1
    %v610 = vsel %vm537, %v608, %v609
    %v611 = vrot.slane %v313, 1
    %v612 = vsel %vm537, %v609, %v611
    %v613 = vrot.slane %v314, 1
    %v614 = vrot.slane %v315, 1
    %v615 = vsel %vm537, %v613, %v614
    %v616 = vrot.slane %v316, 1
    %v617 = vsel %vm537, %v614, %v616
    %v618 = vrot.slane %v323, 1
    %v619 = vrot.slane %v324, 1
    %v620 = vsel %vm537, %v618, %v619
    %v621 = vrot.slane %v325, 1
    %v622 = vsel %vm537, %v619, %v621
    %v623 = vrot.slane %v326, 1
    %v624 = vrot.slane %v327, 1
    %v625 = vsel %vm537, %v623, %v624
    %v626 = vrot.slane %v328, 1
    %v627 = vsel %vm537, %v624, %v626
    %v628 = vrot.slane %v329, 1
    %v629 = vrot.slane %v330, 1
    %v630 = vsel %vm537, %v628, %v629
    %v631 = vrot.slane %v331, 1
    %v632 = vsel %vm537, %v629, %v631
    %v633 = vrot.slane %v332, 1
    %v634 = vrot.slane %v333, 1
    %v635 = vsel %vm537, %v633, %v634
    %v636 = vrot.slane %v334, 1
    %v637 = vsel %vm537, %v634, %v636
    %v638 = vrot.slane %v335, 1
    %v639 = vrot.slane %v336, 1
    %v640 = vsel %vm537, %v638, %v639
    %v641 = vrot.slane %v337, 1
    %v642 = vsel %vm537, %v639, %v641
    %v643 = vrot.slane %v338, 1
    %v644 = vrot.slane %v339, 1
    %v645 = vsel %vm537, %v643, %v644
    %v646 = vrot.slane %v340, 1
    %v647 = vsel %vm537, %v644, %v646
    %v648 = vrot.slane %v341, 1
    %v649 = vrot.slane %v342, 1
    %v650 = vsel %vm537, %v648, %v649
    %v651 = vrot.slane %v343, 1
    %v652 = vsel %vm537, %v649, %v651
    %v653 = vrot.slane %v344, 1
    %v654 = vrot.slane %v345, 1
    %v655 = vsel %vm537, %v653, %v654
    %v656 = vrot.slane %v346, 1
    %v657 = vsel %vm537, %v654, %v656
    %v658 = vrot.slane %v347, 1
    %v659 = vrot.slane %v348, 1
    %v660 = vsel %vm537, %v658, %v659
    %v661 = vrot.slane %v349, 1
    %v662 = vsel %vm537, %v659, %v661
    %v663 = vrot.slane %v350, 1
    %v664 = vrot.slane %v351, 1
    %v665 = vsel %vm537, %v663, %v664
    %v666 = vrot.slane %v352, 1
    %v667 = vsel %vm537, %v664, %v666
    %v668 = vrot.slane %v353, 1
    %v669 = vrot.slane %v354, 1
    %v670 = vsel %vm537, %v668, %v669
    %v671 = vrot.slane %v355, 1
    %v672 = vsel %vm537, %v669, %v671
    %v673 = vrot.slane %v356, 1
    %v674 = vrot.slane %v357, 1
    %v675 = vsel %vm537, %v673, %v674
    %v676 = vrot.slane %v358, 1
    %v677 = vsel %vm537, %v674, %v676
    %v678 = vrot.slane %v359, 1
    %v679 = vrot.slane %v360, 1
    %v680 = vsel %vm537, %v678, %v679
    %v681 = vrot.slane %v361, 1
    %v682 = vsel %vm537, %v679, %v681
    %v683 = vrot.slane %v362, 1
    %v684 = vrot.slane %v363, 1
    %v685 = vsel %vm537, %v683, %v684
    %v686 = vrot.slane %v364, 1
    %v687 = vsel %vm537, %v684, %v686
    %v688 = vrot.slane %v365, 1
    %v689 = vrot.slane %v366, 1
    %v690 = vsel %vm537, %v688, %v689
    %v691 = vrot.slane %v367, 1
    %v692 = vsel %vm537, %v689, %v691
    %v693 = vrot.slane %v368, 1
    %v694 = vrot.slane %v369, 1
    %v695 = vsel %vm537, %v693, %v694
    %v696 = vrot.slane %v370, 1
    %v697 = vsel %vm537, %v694, %v696
    %698 = vrot.lane.b32.xlu0 %v540, 4
    %v699 = vpop.permute.xlu0 %698
    %700 = vrot.lane.b32.xlu0 %v542, 4
    %v701 = vpop.permute.xlu0 %700
    %702 = vrot.lane.b32.xlu0 %v545, 4
    %v703 = vpop.permute.xlu0 %702
    %704 = vrot.lane.b32.xlu0 %v547, 4
    %v705 = vpop.permute.xlu0 %704
    %706 = vrot.lane.b32.xlu0 %v550, 4
    %v707 = vpop.permute.xlu0 %706
    %708 = vrot.lane.b32.xlu0 %v552, 4
    %v709 = vpop.permute.xlu0 %708
    %710 = vrot.lane.b32.xlu0 %v555, 4
    %v711 = vpop.permute.xlu0 %710
    %712 = vrot.lane.b32.xlu0 %v557, 4
    %v713 = vpop.permute.xlu0 %712
    %714 = vrot.lane.b32.xlu0 %v560, 4
    %v715 = vpop.permute.xlu0 %714
    %716 = vrot.lane.b32.xlu0 %v562, 4
    %v717 = vpop.permute.xlu0 %716
    %718 = vrot.lane.b32.xlu0 %v565, 4
    %v719 = vpop.permute.xlu0 %718
    %720 = vrot.lane.b32.xlu0 %v567, 4
    %v721 = vpop.permute.xlu0 %720
    %722 = vrot.lane.b32.xlu0 %v570, 4
    %v723 = vpop.permute.xlu0 %722
    %724 = vrot.lane.b32.xlu0 %v572, 4
    %v725 = vpop.permute.xlu0 %724
    %726 = vrot.lane.b32.xlu0 %v575, 4
    %v727 = vpop.permute.xlu0 %726
    %728 = vrot.lane.b32.xlu0 %v577, 4
    %v729 = vpop.permute.xlu0 %728
    %730 = vrot.lane.b32.xlu0 %v580, 4
    %v731 = vpop.permute.xlu0 %730
    %732 = vrot.lane.b32.xlu0 %v582, 4
    %v733 = vpop.permute.xlu0 %732
    %734 = vrot.lane.b32.xlu0 %v585, 4
    %v735 = vpop.permute.xlu0 %734
    %736 = vrot.lane.b32.xlu0 %v587, 4
    %v737 = vpop.permute.xlu0 %736
    %738 = vrot.lane.b32.xlu0 %v590, 4
    %v739 = vpop.permute.xlu0 %738
    %740 = vrot.lane.b32.xlu0 %v592, 4
    %v741 = vpop.permute.xlu0 %740
    %742 = vrot.lane.b32.xlu0 %v595, 4
    %v743 = vpop.permute.xlu0 %742
    %744 = vrot.lane.b32.xlu0 %v597, 4
    %v745 = vpop.permute.xlu0 %744
    %746 = vrot.lane.b32.xlu0 %v600, 4
    %v747 = vpop.permute.xlu0 %746
    %748 = vrot.lane.b32.xlu0 %v602, 4
    %v749 = vpop.permute.xlu0 %748
    %750 = vrot.lane.b32.xlu0 %v605, 4
    %v751 = vpop.permute.xlu0 %750
    %752 = vrot.lane.b32.xlu0 %v607, 4
    %v753 = vpop.permute.xlu0 %752
    %754 = vrot.lane.b32.xlu0 %v610, 4
    %v755 = vpop.permute.xlu0 %754
    %756 = vrot.lane.b32.xlu0 %v612, 4
    %v757 = vpop.permute.xlu0 %756
    %758 = vrot.lane.b32.xlu0 %v615, 4
    %v759 = vpop.permute.xlu0 %758
    %760 = vrot.lane.b32.xlu0 %v617, 4
    %v761 = vpop.permute.xlu0 %760
    %762 = vrot.lane.b32.xlu0 %v620, 4
    %v763 = vpop.permute.xlu0 %762
    %764 = vrot.lane.b32.xlu0 %v622, 4
    %v765 = vpop.permute.xlu0 %764
    %766 = vrot.lane.b32.xlu0 %v625, 4
    %v767 = vpop.permute.xlu0 %766
    %768 = vrot.lane.b32.xlu0 %v627, 4
    %v769 = vpop.permute.xlu0 %768
    %770 = vrot.lane.b32.xlu0 %v630, 4
    %v771 = vpop.permute.xlu0 %770
    %772 = vrot.lane.b32.xlu0 %v632, 4
    %v773 = vpop.permute.xlu0 %772
    %774 = vrot.lane.b32.xlu0 %v635, 4
    %v775 = vpop.permute.xlu0 %774
    %776 = vrot.lane.b32.xlu0 %v637, 4
    %v777 = vpop.permute.xlu0 %776
    %778 = vrot.lane.b32.xlu0 %v640, 4
    %v779 = vpop.permute.xlu0 %778
    %780 = vrot.lane.b32.xlu0 %v642, 4
    %v781 = vpop.permute.xlu0 %780
    %782 = vrot.lane.b32.xlu0 %v645, 4
    %v783 = vpop.permute.xlu0 %782
    %784 = vrot.lane.b32.xlu0 %v647, 4
    %v785 = vpop.permute.xlu0 %784
    %786 = vrot.lane.b32.xlu0 %v650, 4
    %v787 = vpop.permute.xlu0 %786
    %788 = vrot.lane.b32.xlu0 %v652, 4
    %v789 = vpop.permute.xlu0 %788
    %790 = vrot.lane.b32.xlu0 %v655, 4
    %v791 = vpop.permute.xlu0 %790
    %792 = vrot.lane.b32.xlu0 %v657, 4
    %v793 = vpop.permute.xlu0 %792
    %794 = vrot.lane.b32.xlu0 %v660, 4
    %v795 = vpop.permute.xlu0 %794
    %796 = vrot.lane.b32.xlu0 %v662, 4
    %v797 = vpop.permute.xlu0 %796
    %798 = vrot.lane.b32.xlu0 %v665, 4
    %v799 = vpop.permute.xlu0 %798
    %800 = vrot.lane.b32.xlu0 %v667, 4
    %v801 = vpop.permute.xlu0 %800
    %802 = vrot.lane.b32.xlu0 %v670, 4
    %v803 = vpop.permute.xlu0 %802
    %804 = vrot.lane.b32.xlu0 %v672, 4
    %v805 = vpop.permute.xlu0 %804
    %806 = vrot.lane.b32.xlu0 %v675, 4
    %v807 = vpop.permute.xlu0 %806
    %808 = vrot.lane.b32.xlu0 %v677, 4
    %v809 = vpop.permute.xlu0 %808
    %810 = vrot.lane.b32.xlu0 %v680, 4
    %v811 = vpop.permute.xlu0 %810
    %812 = vrot.lane.b32.xlu0 %v682, 4
    %v813 = vpop.permute.xlu0 %812
    %814 = vrot.lane.b32.xlu0 %v685, 4
    %v815 = vpop.permute.xlu0 %814
    %816 = vrot.lane.b32.xlu0 %v687, 4
    %v817 = vpop.permute.xlu0 %816
    %818 = vrot.lane.b32.xlu0 %v690, 4
    %v819 = vpop.permute.xlu0 %818
    %820 = vrot.lane.b32.xlu0 %v692, 4
    %v821 = vpop.permute.xlu0 %820
    %822 = vrot.lane.b32.xlu0 %v695, 4
    %v823 = vpop.permute.xlu0 %822
    %824 = vrot.lane.b32.xlu0 %v697, 4
    %v825 = vpop.permute.xlu0 %824
    %vm890 = vcmask 64544
    %891 = vst.msk [vmem:[#allocation3] sm:$0xff] %vm890, %v699
    %892 = vst.msk [vmem:[#allocation3 + $0x8] sm:$0xff] %vm890, %v701
    %893 = vst.msk [vmem:[#allocation3 + $0x10] sm:$0xff] %vm890, %v703
    %894 = vst.msk [vmem:[#allocation3 + $0x18] sm:$0xff] %vm890, %v705
    %895 = vst.msk [vmem:[#allocation3 + $0x20] sm:$0xff] %vm890, %v707
    %896 = vst.msk [vmem:[#allocation3 + $0x28] sm:$0xff] %vm890, %v709
    %897 = vst.msk [vmem:[#allocation3 + $0x30] sm:$0xff] %vm890, %v711
    %898 = vst.msk [vmem:[#allocation3 + $0x38] sm:$0xff] %vm890, %v713
    %899 = vst.msk [vmem:[#allocation3 + $0x40] sm:$0xff] %vm890, %v715
    %900 = vst.msk [vmem:[#allocation3 + $0x48] sm:$0xff] %vm890, %v717
    %901 = vst.msk [vmem:[#allocation3 + $0x50] sm:$0xff] %vm890, %v719
    %902 = vst.msk [vmem:[#allocation3 + $0x58] sm:$0xff] %vm890, %v721
    %903 = vst.msk [vmem:[#allocation3 + $0x60] sm:$0xff] %vm890, %v723
    %904 = vst.msk [vmem:[#allocation3 + $0x68] sm:$0xff] %vm890, %v725
    %905 = vst.msk [vmem:[#allocation3 + $0x70] sm:$0xff] %vm890, %v727
    %906 = vst.msk [vmem:[#allocation3 + $0x78] sm:$0xff] %vm890, %v729
    %907 = vst.msk [vmem:[#allocation3 + $0x80] sm:$0xff] %vm890, %v731
    %908 = vst.msk [vmem:[#allocation3 + $0x88] sm:$0xff] %vm890, %v733
    %909 = vst.msk [vmem:[#allocation3 + $0x90] sm:$0xff] %vm890, %v735
    %910 = vst.msk [vmem:[#allocation3 + $0x98] sm:$0xff] %vm890, %v737
    %911 = vst.msk [vmem:[#allocation3 + $0xa0] sm:$0xff] %vm890, %v739
    %912 = vst.msk [vmem:[#allocation3 + $0xa8] sm:$0xff] %vm890, %v741
    %913 = vst.msk [vmem:[#allocation3 + $0xb0] sm:$0xff] %vm890, %v743
    %914 = vst.msk [vmem:[#allocation3 + $0xb8] sm:$0xff] %vm890, %v745
    %915 = vst.msk [vmem:[#allocation3 + $0xc0] sm:$0xff] %vm890, %v747
    %916 = vst.msk [vmem:[#allocation3 + $0xc8] sm:$0xff] %vm890, %v749
    %917 = vst.msk [vmem:[#allocation3 + $0xd0] sm:$0xff] %vm890, %v751
    %918 = vst.msk [vmem:[#allocation3 + $0xd8] sm:$0xff] %vm890, %v753
    %919 = vst.msk [vmem:[#allocation3 + $0xe0] sm:$0xff] %vm890, %v755
    %920 = vst.msk [vmem:[#allocation3 + $0xe8] sm:$0xff] %vm890, %v757
    %921 = vst.msk [vmem:[#allocation3 + $0xf0] sm:$0xff] %vm890, %v759
    %922 = vst.msk [vmem:[#allocation3 + $0xf8] sm:$0xff] %vm890, %v761
    %923 = vst.msk [vmem:[#allocation3 + $0x100] sm:$0xff] %vm890, %v763
    %924 = vst.msk [vmem:[#allocation3 + $0x108] sm:$0xff] %vm890, %v765
    %925 = vst.msk [vmem:[#allocation3 + $0x110] sm:$0xff] %vm890, %v767
    %926 = vst.msk [vmem:[#allocation3 + $0x118] sm:$0xff] %vm890, %v769
    %927 = vst.msk [vmem:[#allocation3 + $0x120] sm:$0xff] %vm890, %v771
    %928 = vst.msk [vmem:[#allocation3 + $0x128] sm:$0xff] %vm890, %v773
    %929 = vst.msk [vmem:[#allocation3 + $0x130] sm:$0xff] %vm890, %v775
    %930 = vst.msk [vmem:[#allocation3 + $0x138] sm:$0xff] %vm890, %v777
    %931 = vst.msk [vmem:[#allocation3 + $0x140] sm:$0xff] %vm890, %v779
    %932 = vst.msk [vmem:[#allocation3 + $0x148] sm:$0xff] %vm890, %v781
    %933 = vst.msk [vmem:[#allocation3 + $0x150] sm:$0xff] %vm890, %v783
    %934 = vst.msk [vmem:[#allocation3 + $0x158] sm:$0xff] %vm890, %v785
    %935 = vst.msk [vmem:[#allocation3 + $0x160] sm:$0xff] %vm890, %v787
    %936 = vst.msk [vmem:[#allocation3 + $0x168] sm:$0xff] %vm890, %v789
    %937 = vst.msk [vmem:[#allocation3 + $0x170] sm:$0xff] %vm890, %v791
    %938 = vst.msk [vmem:[#allocation3 + $0x178] sm:$0xff] %vm890, %v793
    %939 = vst.msk [vmem:[#allocation3 + $0x180] sm:$0xff] %vm890, %v795
    %940 = vst.msk [vmem:[#allocation3 + $0x188] sm:$0xff] %vm890, %v797
    %941 = vst.msk [vmem:[#allocation3 + $0x190] sm:$0xff] %vm890, %v799
    %942 = vst.msk [vmem:[#allocation3 + $0x198] sm:$0xff] %vm890, %v801
    %943 = vst.msk [vmem:[#allocation3 + $0x1a0] sm:$0xff] %vm890, %v803
    %944 = vst.msk [vmem:[#allocation3 + $0x1a8] sm:$0xff] %vm890, %v805
    %945 = vst.msk [vmem:[#allocation3 + $0x1b0] sm:$0xff] %vm890, %v807
    %946 = vst.msk [vmem:[#allocation3 + $0x1b8] sm:$0xff] %vm890, %v809
    %947 = vst.msk [vmem:[#allocation3 + $0x1c0] sm:$0xff] %vm890, %v811
    %948 = vst.msk [vmem:[#allocation3 + $0x1c8] sm:$0xff] %vm890, %v813
    %949 = vst.msk [vmem:[#allocation3 + $0x1d0] sm:$0xff] %vm890, %v815
    %950 = vst.msk [vmem:[#allocation3 + $0x1d8] sm:$0xff] %vm890, %v817
    %951 = vst.msk [vmem:[#allocation3 + $0x1e0] sm:$0xff] %vm890, %v819
    %952 = vst.msk [vmem:[#allocation3 + $0x1e8] sm:$0xff] %vm890, %v821
    %953 = vst.msk [vmem:[#allocation3 + $0x1f0] sm:$0xff] %vm890, %v823
    %954 = vst.msk [vmem:[#allocation3 + $0x1f8] sm:$0xff] %vm890, %v825
    %vm955 = vcmask 1045504
    %v956 = vrot.slane %v269, 2
    %v957 = vrot.slane %v270, 2
    %v958 = vsel %vm955, %v956, %v957
    %v959 = vrot.slane %v271, 2
    %v960 = vsel %vm955, %v957, %v959
    %v961 = vrot.slane %v272, 2
    %v962 = vrot.slane %v273, 2
    %v963 = vsel %vm955, %v961, %v962
    %v964 = vrot.slane %v274, 2
    %v965 = vsel %vm955, %v962, %v964
    %v966 = vrot.slane %v275, 2
    %v967 = vrot.slane %v276, 2
    %v968 = vsel %vm955, %v966, %v967
    %v969 = vrot.slane %v277, 2
    %v970 = vsel %vm955, %v967, %v969
    %v971 = vrot.slane %v278, 2
    %v972 = vrot.slane %v279, 2
    %v973 = vsel %vm955, %v971, %v972
    %v974 = vrot.slane %v280, 2
    %v975 = vsel %vm955, %v972, %v974
    %v976 = vrot.slane %v281, 2
    %v977 = vrot.slane %v282, 2
    %v978 = vsel %vm955, %v976, %v977
    %v979 = vrot.slane %v283, 2
    %v980 = vsel %vm955, %v977, %v979
    %v981 = vrot.slane %v284, 2
    %v982 = vrot.slane %v285, 2
    %v983 = vsel %vm955, %v981, %v982
    %v984 = vrot.slane %v286, 2
    %v985 = vsel %vm955, %v982, %v984
    %v986 = vrot.slane %v287, 2
    %v987 = vrot.slane %v288, 2
    %v988 = vsel %vm955, %v986, %v987
    %v989 = vrot.slane %v289, 2
    %v990 = vsel %vm955, %v987, %v989
    %v991 = vrot.slane %v290, 2
    %v992 = vrot.slane %v291, 2
    %v993 = vsel %vm955, %v991, %v992
    %v994 = vrot.slane %v292, 2
    %v995 = vsel %vm955, %v992, %v994
    %v996 = vrot.slane %v293, 2
    %v997 = vrot.slane %v294, 2
    %v998 = vsel %vm955, %v996, %v997
    %v999 = vrot.slane %v295, 2
    %v1000 = vsel %vm955, %v997, %v999
    %v1001 = vrot.slane %v296, 2
    %v1002 = vrot.slane %v297, 2
    %v1003 = vsel %vm955, %v1001, %v1002
    %v1004 = vrot.slane %v298, 2
    %v1005 = vsel %vm955, %v1002, %v1004
    %v1006 = vrot.slane %v299, 2
    %v1007 = vrot.slane %v300, 2
    %v1008 = vsel %vm955, %v1006, %v1007
    %v1009 = vrot.slane %v301, 2
    %v1010 = vsel %vm955, %v1007, %v1009
    %v1011 = vrot.slane %v302, 2
    %v1012 = vrot.slane %v303, 2
    %v1013 = vsel %vm955, %v1011, %v1012
    %v1014 = vrot.slane %v304, 2
    %v1015 = vsel %vm955, %v1012, %v1014
    %v1016 = vrot.slane %v305, 2
    %v1017 = vrot.slane %v306, 2
    %v1018 = vsel %vm955, %v1016, %v1017
    %v1019 = vrot.slane %v307, 2
    %v1020 = vsel %vm955, %v1017, %v1019
    %v1021 = vrot.slane %v308, 2
    %v1022 = vrot.slane %v309, 2
    %v1023 = vsel %vm955, %v1021, %v1022
    %v1024 = vrot.slane %v310, 2
    %v1025 = vsel %vm955, %v1022, %v1024
    %v1026 = vrot.slane %v311, 2
    %v1027 = vrot.slane %v312, 2
    %v1028 = vsel %vm955, %v1026, %v1027
    %v1029 = vrot.slane %v313, 2
    %v1030 = vsel %vm955, %v1027, %v1029
    %v1031 = vrot.slane %v314, 2
    %v1032 = vrot.slane %v315, 2
    %v1033 = vsel %vm955, %v1031, %v1032
    %v1034 = vrot.slane %v316, 2
    %v1035 = vsel %vm955, %v1032, %v1034
    %v1036 = vrot.slane %v323, 2
    %v1037 = vrot.slane %v324, 2
    %v1038 = vsel %vm955, %v1036, %v1037
    %v1039 = vrot.slane %v325, 2
    %v1040 = vsel %vm955, %v1037, %v1039
    %v1041 = vrot.slane %v326, 2
    %v1042 = vrot.slane %v327, 2
    %v1043 = vsel %vm955, %v1041, %v1042
    %v1044 = vrot.slane %v328, 2
    %v1045 = vsel %vm955, %v1042, %v1044
    %v1046 = vrot.slane %v329, 2
    %v1047 = vrot.slane %v330, 2
    %v1048 = vsel %vm955, %v1046, %v1047
    %v1049 = vrot.slane %v331, 2
    %v1050 = vsel %vm955, %v1047, %v1049
    %v1051 = vrot.slane %v332, 2
    %v1052 = vrot.slane %v333, 2
    %v1053 = vsel %vm955, %v1051, %v1052
    %v1054 = vrot.slane %v334, 2
    %v1055 = vsel %vm955, %v1052, %v1054
    %v1056 = vrot.slane %v335, 2
    %v1057 = vrot.slane %v336, 2
    %v1058 = vsel %vm955, %v1056, %v1057
    %v1059 = vrot.slane %v337, 2
    %v1060 = vsel %vm955, %v1057, %v1059
    %v1061 = vrot.slane %v338, 2
    %v1062 = vrot.slane %v339, 2
    %v1063 = vsel %vm955, %v1061, %v1062
    %v1064 = vrot.slane %v340, 2
    %v1065 = vsel %vm955, %v1062, %v1064
    %v1066 = vrot.slane %v341, 2
    %v1067 = vrot.slane %v342, 2
    %v1068 = vsel %vm955, %v1066, %v1067
    %v1069 = vrot.slane %v343, 2
    %v1070 = vsel %vm955, %v1067, %v1069
    %v1071 = vrot.slane %v344, 2
    %v1072 = vrot.slane %v345, 2
    %v1073 = vsel %vm955, %v1071, %v1072
    %v1074 = vrot.slane %v346, 2
    %v1075 = vsel %vm955, %v1072, %v1074
    %v1076 = vrot.slane %v347, 2
    %v1077 = vrot.slane %v348, 2
    %v1078 = vsel %vm955, %v1076, %v1077
    %v1079 = vrot.slane %v349, 2
    %v1080 = vsel %vm955, %v1077, %v1079
    %v1081 = vrot.slane %v350, 2
    %v1082 = vrot.slane %v351, 2
    %v1083 = vsel %vm955, %v1081, %v1082
    %v1084 = vrot.slane %v352, 2
    %v1085 = vsel %vm955, %v1082, %v1084
    %v1086 = vrot.slane %v353, 2
    %v1087 = vrot.slane %v354, 2
    %v1088 = vsel %vm955, %v1086, %v1087
    %v1089 = vrot.slane %v355, 2
    %v1090 = vsel %vm955, %v1087, %v1089
    %v1091 = vrot.slane %v356, 2
    %v1092 = vrot.slane %v357, 2
    %v1093 = vsel %vm955, %v1091, %v1092
    %v1094 = vrot.slane %v358, 2
    %v1095 = vsel %vm955, %v1092, %v1094
    %v1096 = vrot.slane %v359, 2
    %v1097 = vrot.slane %v360, 2
    %v1098 = vsel %vm955, %v1096, %v1097
    %v1099 = vrot.slane %v361, 2
    %v1100 = vsel %vm955, %v1097, %v1099
    %v1101 = vrot.slane %v362, 2
    %v1102 = vrot.slane %v363, 2
    %v1103 = vsel %vm955, %v1101, %v1102
    %v1104 = vrot.slane %v364, 2
    %v1105 = vsel %vm955, %v1102, %v1104
    %v1106 = vrot.slane %v365, 2
    %v1107 = vrot.slane %v366, 2
    %v1108 = vsel %vm955, %v1106, %v1107
    %v1109 = vrot.slane %v367, 2
    %v1110 = vsel %vm955, %v1107, %v1109
    %v1111 = vrot.slane %v368, 2
    %v1112 = vrot.slane %v369, 2
    %v1113 = vsel %vm955, %v1111, %v1112
    %v1114 = vrot.slane %v370, 2
    %v1115 = vsel %vm955, %v1112, %v1114
    %1116 = vrot.lane.b32.xlu0 %v958, 8
    %v1117 = vpop.permute.xlu0 %1116
    %1118 = vrot.lane.b32.xlu0 %v960, 8
    %v1119 = vpop.permute.xlu0 %1118
    %1120 = vrot.lane.b32.xlu0 %v963, 8
    %v1121 = vpop.permute.xlu0 %1120
    %1122 = vrot.lane.b32.xlu0 %v965, 8
    %v1123 = vpop.permute.xlu0 %1122
    %1124 = vrot.lane.b32.xlu0 %v968, 8
    %v1125 = vpop.permute.xlu0 %1124
    %1126 = vrot.lane.b32.xlu0 %v970, 8
    %v1127 = vpop.permute.xlu0 %1126
    %1128 = vrot.lane.b32.xlu0 %v973, 8
    %v1129 = vpop.permute.xlu0 %1128
    %1130 = vrot.lane.b32.xlu0 %v975, 8
    %v1131 = vpop.permute.xlu0 %1130
    %1132 = vrot.lane.b32.xlu0 %v978, 8
    %v1133 = vpop.permute.xlu0 %1132
    %1134 = vrot.lane.b32.xlu0 %v980, 8
    %v1135 = vpop.permute.xlu0 %1134
    %1136 = vrot.lane.b32.xlu0 %v983, 8
    %v1137 = vpop.permute.xlu0 %1136
    %1138 = vrot.lane.b32.xlu0 %v985, 8
    %v1139 = vpop.permute.xlu0 %1138
    %1140 = vrot.lane.b32.xlu0 %v988, 8
    %v1141 = vpop.permute.xlu0 %1140
    %1142 = vrot.lane.b32.xlu0 %v990, 8
    %v1143 = vpop.permute.xlu0 %1142
    %1144 = vrot.lane.b32.xlu0 %v993, 8
    %v1145 = vpop.permute.xlu0 %1144
    %1146 = vrot.lane.b32.xlu0 %v995, 8
    %v1147 = vpop.permute.xlu0 %1146
    %1148 = vrot.lane.b32.xlu0 %v998, 8
    %v1149 = vpop.permute.xlu0 %1148
    %1150 = vrot.lane.b32.xlu0 %v1000, 8
    %v1151 = vpop.permute.xlu0 %1150
    %1152 = vrot.lane.b32.xlu0 %v1003, 8
    %v1153 = vpop.permute.xlu0 %1152
    %1154 = vrot.lane.b32.xlu0 %v1005, 8
    %v1155 = vpop.permute.xlu0 %1154
    %1156 = vrot.lane.b32.xlu0 %v1008, 8
    %v1157 = vpop.permute.xlu0 %1156
    %1158 = vrot.lane.b32.xlu0 %v1010, 8
    %v1159 = vpop.permute.xlu0 %1158
    %1160 = vrot.lane.b32.xlu0 %v1013, 8
    %v1161 = vpop.permute.xlu0 %1160
    %1162 = vrot.lane.b32.xlu0 %v1015, 8
    %v1163 = vpop.permute.xlu0 %1162
    %1164 = vrot.lane.b32.xlu0 %v1018, 8
    %v1165 = vpop.permute.xlu0 %1164
    %1166 = vrot.lane.b32.xlu0 %v1020, 8
    %v1167 = vpop.permute.xlu0 %1166
    %1168 = vrot.lane.b32.xlu0 %v1023, 8
    %v1169 = vpop.permute.xlu0 %1168
    %1170 = vrot.lane.b32.xlu0 %v1025, 8
    %v1171 = vpop.permute.xlu0 %1170
    %1172 = vrot.lane.b32.xlu0 %v1028, 8
    %v1173 = vpop.permute.xlu0 %1172
    %1174 = vrot.lane.b32.xlu0 %v1030, 8
    %v1175 = vpop.permute.xlu0 %1174
    %1176 = vrot.lane.b32.xlu0 %v1033, 8
    %v1177 = vpop.permute.xlu0 %1176
    %1178 = vrot.lane.b32.xlu0 %v1035, 8
    %v1179 = vpop.permute.xlu0 %1178
    %1180 = vrot.lane.b32.xlu0 %v1038, 8
    %v1181 = vpop.permute.xlu0 %1180
    %1182 = vrot.lane.b32.xlu0 %v1040, 8
    %v1183 = vpop.permute.xlu0 %1182
    %1184 = vrot.lane.b32.xlu0 %v1043, 8
    %v1185 = vpop.permute.xlu0 %1184
    %1186 = vrot.lane.b32.xlu0 %v1045, 8
    %v1187 = vpop.permute.xlu0 %1186
    %1188 = vrot.lane.b32.xlu0 %v1048, 8
    %v1189 = vpop.permute.xlu0 %1188
    %1190 = vrot.lane.b32.xlu0 %v1050, 8
    %v1191 = vpop.permute.xlu0 %1190
    %1192 = vrot.lane.b32.xlu0 %v1053, 8
    %v1193 = vpop.permute.xlu0 %1192
    %1194 = vrot.lane.b32.xlu0 %v1055, 8
    %v1195 = vpop.permute.xlu0 %1194
    %1196 = vrot.lane.b32.xlu0 %v1058, 8
    %v1197 = vpop.permute.xlu0 %1196
    %1198 = vrot.lane.b32.xlu0 %v1060, 8
    %v1199 = vpop.permute.xlu0 %1198
    %1200 = vrot.lane.b32.xlu0 %v1063, 8
    %v1201 = vpop.permute.xlu0 %1200
    %1202 = vrot.lane.b32.xlu0 %v1065, 8
    %v1203 = vpop.permute.xlu0 %1202
    %1204 = vrot.lane.b32.xlu0 %v1068, 8
    %v1205 = vpop.permute.xlu0 %1204
    %1206 = vrot.lane.b32.xlu0 %v1070, 8
    %v1207 = vpop.permute.xlu0 %1206
    %1208 = vrot.lane.b32.xlu0 %v1073, 8
    %v1209 = vpop.permute.xlu0 %1208
    %1210 = vrot.lane.b32.xlu0 %v1075, 8
    %v1211 = vpop.permute.xlu0 %1210
    %1212 = vrot.lane.b32.xlu0 %v1078, 8
    %v1213 = vpop.permute.xlu0 %1212
    %1214 = vrot.lane.b32.xlu0 %v1080, 8
    %v1215 = vpop.permute.xlu0 %1214
    %1216 = vrot.lane.b32.xlu0 %v1083, 8
    %v1217 = vpop.permute.xlu0 %1216
    %1218 = vrot.lane.b32.xlu0 %v1085, 8
    %v1219 = vpop.permute.xlu0 %1218
    %1220 = vrot.lane.b32.xlu0 %v1088, 8
    %v1221 = vpop.permute.xlu0 %1220
    %1222 = vrot.lane.b32.xlu0 %v1090, 8
    %v1223 = vpop.permute.xlu0 %1222
    %1224 = vrot.lane.b32.xlu0 %v1093, 8
    %v1225 = vpop.permute.xlu0 %1224
    %1226 = vrot.lane.b32.xlu0 %v1095, 8
    %v1227 = vpop.permute.xlu0 %1226
    %1228 = vrot.lane.b32.xlu0 %v1098, 8
    %v1229 = vpop.permute.xlu0 %1228
    %1230 = vrot.lane.b32.xlu0 %v1100, 8
    %v1231 = vpop.permute.xlu0 %1230
    %1232 = vrot.lane.b32.xlu0 %v1103, 8
    %v1233 = vpop.permute.xlu0 %1232
    %1234 = vrot.lane.b32.xlu0 %v1105, 8
    %v1235 = vpop.permute.xlu0 %1234
    %1236 = vrot.lane.b32.xlu0 %v1108, 8
    %v1237 = vpop.permute.xlu0 %1236
    %1238 = vrot.lane.b32.xlu0 %v1110, 8
    %v1239 = vpop.permute.xlu0 %1238
    %1240 = vrot.lane.b32.xlu0 %v1113, 8
    %v1241 = vpop.permute.xlu0 %1240
    %1242 = vrot.lane.b32.xlu0 %v1115, 8
    %v1243 = vpop.permute.xlu0 %1242
    %vm1308 = vcmask 97344
    %1309 = vst.msk [vmem:[#allocation3] sm:$0xff] %vm1308, %v1117
    %1310 = vst.msk [vmem:[#allocation3 + $0x8] sm:$0xff] %vm1308, %v1119
    %1311 = vst.msk [vmem:[#allocation3 + $0x10] sm:$0xff] %vm1308, %v1121
    %1312 = vst.msk [vmem:[#allocation3 + $0x18] sm:$0xff] %vm1308, %v1123
    %1313 = vst.msk [vmem:[#allocation3 + $0x20] sm:$0xff] %vm1308, %v1125
    %1314 = vst.msk [vmem:[#allocation3 + $0x28] sm:$0xff] %vm1308, %v1127
    %1315 = vst.msk [vmem:[#allocation3 + $0x30] sm:$0xff] %vm1308, %v1129
    %1316 = vst.msk [vmem:[#allocation3 + $0x38] sm:$0xff] %vm1308, %v1131
    %1317 = vst.msk [vmem:[#allocation3 + $0x40] sm:$0xff] %vm1308, %v1133
    %1318 = vst.msk [vmem:[#allocation3 + $0x48] sm:$0xff] %vm1308, %v1135
    %1319 = vst.msk [vmem:[#allocation3 + $0x50] sm:$0xff] %vm1308, %v1137
    %1320 = vst.msk [vmem:[#allocation3 + $0x58] sm:$0xff] %vm1308, %v1139
    %1321 = vst.msk [vmem:[#allocation3 + $0x60] sm:$0xff] %vm1308, %v1141
    %1322 = vst.msk [vmem:[#allocation3 + $0x68] sm:$0xff] %vm1308, %v1143
    %1323 = vst.msk [vmem:[#allocation3 + $0x70] sm:$0xff] %vm1308, %v1145
    %1324 = vst.msk [vmem:[#allocation3 + $0x78] sm:$0xff] %vm1308, %v1147
    %1325 = vst.msk [vmem:[#allocation3 + $0x80] sm:$0xff] %vm1308, %v1149
    %1326 = vst.msk [vmem:[#allocation3 + $0x88] sm:$0xff] %vm1308, %v1151
    %1327 = vst.msk [vmem:[#allocation3 + $0x90] sm:$0xff] %vm1308, %v1153
    %1328 = vst.msk [vmem:[#allocation3 + $0x98] sm:$0xff] %vm1308, %v1155
    %1329 = vst.msk [vmem:[#allocation3 + $0xa0] sm:$0xff] %vm1308, %v1157
    %1330 = vst.msk [vmem:[#allocation3 + $0xa8] sm:$0xff] %vm1308, %v1159
    %1331 = vst.msk [vmem:[#allocation3 + $0xb0] sm:$0xff] %vm1308, %v1161
    %1332 = vst.msk [vmem:[#allocation3 + $0xb8] sm:$0xff] %vm1308, %v1163
    %1333 = vst.msk [vmem:[#allocation3 + $0xc0] sm:$0xff] %vm1308, %v1165
    %1334 = vst.msk [vmem:[#allocation3 + $0xc8] sm:$0xff] %vm1308, %v1167
    %1335 = vst.msk [vmem:[#allocation3 + $0xd0] sm:$0xff] %vm1308, %v1169
    %1336 = vst.msk [vmem:[#allocation3 + $0xd8] sm:$0xff] %vm1308, %v1171
    %1337 = vst.msk [vmem:[#allocation3 + $0xe0] sm:$0xff] %vm1308, %v1173
    %1338 = vst.msk [vmem:[#allocation3 + $0xe8] sm:$0xff] %vm1308, %v1175
    %1339 = vst.msk [vmem:[#allocation3 + $0xf0] sm:$0xff] %vm1308, %v1177
    %1340 = vst.msk [vmem:[#allocation3 + $0xf8] sm:$0xff] %vm1308, %v1179
    %1341 = vst.msk [vmem:[#allocation3 + $0x100] sm:$0xff] %vm1308, %v1181
    %1342 = vst.msk [vmem:[#allocation3 + $0x108] sm:$0xff] %vm1308, %v1183
    %1343 = vst.msk [vmem:[#allocation3 + $0x110] sm:$0xff] %vm1308, %v1185
    %1344 = vst.msk [vmem:[#allocation3 + $0x118] sm:$0xff] %vm1308, %v1187
    %1345 = vst.msk [vmem:[#allocation3 + $0x120] sm:$0xff] %vm1308, %v1189
    %1346 = vst.msk [vmem:[#allocation3 + $0x128] sm:$0xff] %vm1308, %v1191
    %1347 = vst.msk [vmem:[#allocation3 + $0x130] sm:$0xff] %vm1308, %v1193
    %1348 = vst.msk [vmem:[#allocation3 + $0x138] sm:$0xff] %vm1308, %v1195
    %1349 = vst.msk [vmem:[#allocation3 + $0x140] sm:$0xff] %vm1308, %v1197
    %1350 = vst.msk [vmem:[#allocation3 + $0x148] sm:$0xff] %vm1308, %v1199
    %1351 = vst.msk [vmem:[#allocation3 + $0x150] sm:$0xff] %vm1308, %v1201
    %1352 = vst.msk [vmem:[#allocation3 + $0x158] sm:$0xff] %vm1308, %v1203
    %1353 = vst.msk [vmem:[#allocation3 + $0x160] sm:$0xff] %vm1308, %v1205
    %1354 = vst.msk [vmem:[#allocation3 + $0x168] sm:$0xff] %vm1308, %v1207
    %1355 = vst.msk [vmem:[#allocation3 + $0x170] sm:$0xff] %vm1308, %v1209
    %1356 = vst.msk [vmem:[#allocation3 + $0x178] sm:$0xff] %vm1308, %v1211
    %1357 = vst.msk [vmem:[#allocation3 + $0x180] sm:$0xff] %vm1308, %v1213
    %1358 = vst.msk [vmem:[#allocation3 + $0x188] sm:$0xff] %vm1308, %v1215
    %1359 = vst.msk [vmem:[#allocation3 + $0x190] sm:$0xff] %vm1308, %v1217
    %1360 = vst.msk [vmem:[#allocation3 + $0x198] sm:$0xff] %vm1308, %v1219
    %1361 = vst.msk [vmem:[#allocation3 + $0x1a0] sm:$0xff] %vm1308, %v1221
    %1362 = vst.msk [vmem:[#allocation3 + $0x1a8] sm:$0xff] %vm1308, %v1223
    %1363 = vst.msk [vmem:[#allocation3 + $0x1b0] sm:$0xff] %vm1308, %v1225
    %1364 = vst.msk [vmem:[#allocation3 + $0x1b8] sm:$0xff] %vm1308, %v1227
    %1365 = vst.msk [vmem:[#allocation3 + $0x1c0] sm:$0xff] %vm1308, %v1229
    %1366 = vst.msk [vmem:[#allocation3 + $0x1c8] sm:$0xff] %vm1308, %v1231
    %1367 = vst.msk [vmem:[#allocation3 + $0x1d0] sm:$0xff] %vm1308, %v1233
    %1368 = vst.msk [vmem:[#allocation3 + $0x1d8] sm:$0xff] %vm1308, %v1235
    %1369 = vst.msk [vmem:[#allocation3 + $0x1e0] sm:$0xff] %vm1308, %v1237
    %1370 = vst.msk [vmem:[#allocation3 + $0x1e8] sm:$0xff] %vm1308, %v1239
    %1371 = vst.msk [vmem:[#allocation3 + $0x1f0] sm:$0xff] %vm1308, %v1241
    %1372 = vst.msk [vmem:[#allocation3 + $0x1f8] sm:$0xff] %vm1308, %v1243
    %1377 = vrot.lane.b32.xlu0 %v272, 12
    %v1378 = vpop.permute.xlu0 %1377
    %1379 = vrot.lane.b32.xlu0 %v273, 12
    %v1380 = vpop.permute.xlu0 %1379
    %1381 = vrot.lane.b32.xlu0 %v275, 12
    %v1382 = vpop.permute.xlu0 %1381
    %1383 = vrot.lane.b32.xlu0 %v276, 12
    %v1384 = vpop.permute.xlu0 %1383
    %1385 = vrot.lane.b32.xlu0 %v278, 12
    %v1386 = vpop.permute.xlu0 %1385
    %1387 = vrot.lane.b32.xlu0 %v279, 12
    %v1388 = vpop.permute.xlu0 %1387
    %1389 = vrot.lane.b32.xlu0 %v281, 12
    %v1390 = vpop.permute.xlu0 %1389
    %1391 = vrot.lane.b32.xlu0 %v282, 12
    %v1392 = vpop.permute.xlu0 %1391
    %1393 = vrot.lane.b32.xlu0 %v284, 12
    %v1394 = vpop.permute.xlu0 %1393
    %1395 = vrot.lane.b32.xlu0 %v285, 12
    %v1396 = vpop.permute.xlu0 %1395
    %1397 = vrot.lane.b32.xlu0 %v287, 12
    %v1398 = vpop.permute.xlu0 %1397
    %1399 = vrot.lane.b32.xlu0 %v288, 12
    %v1400 = vpop.permute.xlu0 %1399
    %1401 = vrot.lane.b32.xlu0 %v290, 12
    %v1402 = vpop.permute.xlu0 %1401
    %1403 = vrot.lane.b32.xlu0 %v291, 12
    %v1404 = vpop.permute.xlu0 %1403
    %1405 = vrot.lane.b32.xlu0 %v293, 12
    %v1406 = vpop.permute.xlu0 %1405
    %1407 = vrot.lane.b32.xlu0 %v294, 12
    %v1408 = vpop.permute.xlu0 %1407
    %1409 = vrot.lane.b32.xlu0 %v296, 12
    %v1410 = vpop.permute.xlu0 %1409
    %1411 = vrot.lane.b32.xlu0 %v297, 12
    %v1412 = vpop.permute.xlu0 %1411
    %1413 = vrot.lane.b32.xlu0 %v299, 12
    %v1414 = vpop.permute.xlu0 %1413
    %1415 = vrot.lane.b32.xlu0 %v300, 12
    %v1416 = vpop.permute.xlu0 %1415
    %1417 = vrot.lane.b32.xlu0 %v302, 12
    %v1418 = vpop.permute.xlu0 %1417
    %1419 = vrot.lane.b32.xlu0 %v303, 12
    %v1420 = vpop.permute.xlu0 %1419
    %1421 = vrot.lane.b32.xlu0 %v305, 12
    %v1422 = vpop.permute.xlu0 %1421
    %1423 = vrot.lane.b32.xlu0 %v306, 12
    %v1424 = vpop.permute.xlu0 %1423
    %1425 = vrot.lane.b32.xlu0 %v308, 12
    %v1426 = vpop.permute.xlu0 %1425
    %1427 = vrot.lane.b32.xlu0 %v309, 12
    %v1428 = vpop.permute.xlu0 %1427
    %1429 = vrot.lane.b32.xlu0 %v311, 12
    %v1430 = vpop.permute.xlu0 %1429
    %1431 = vrot.lane.b32.xlu0 %v312, 12
    %v1432 = vpop.permute.xlu0 %1431
    %1433 = vrot.lane.b32.xlu0 %v314, 12
    %v1434 = vpop.permute.xlu0 %1433
    %1435 = vrot.lane.b32.xlu0 %v315, 12
    %v1436 = vpop.permute.xlu0 %1435
    %1437 = vrot.lane.b32.xlu0 %v317, 12
    %v1438 = vpop.permute.xlu0 %1437
    %1439 = vrot.lane.b32.xlu0 %v318, 12
    %v1440 = vpop.permute.xlu0 %1439
    %1441 = vrot.lane.b32.xlu0 %v326, 12
    %v1442 = vpop.permute.xlu0 %1441
    %1443 = vrot.lane.b32.xlu0 %v327, 12
    %v1444 = vpop.permute.xlu0 %1443
    %1445 = vrot.lane.b32.xlu0 %v329, 12
    %v1446 = vpop.permute.xlu0 %1445
    %1447 = vrot.lane.b32.xlu0 %v330, 12
    %v1448 = vpop.permute.xlu0 %1447
    %1449 = vrot.lane.b32.xlu0 %v332, 12
    %v1450 = vpop.permute.xlu0 %1449
    %1451 = vrot.lane.b32.xlu0 %v333, 12
    %v1452 = vpop.permute.xlu0 %1451
    %1453 = vrot.lane.b32.xlu0 %v335, 12
    %v1454 = vpop.permute.xlu0 %1453
    %1455 = vrot.lane.b32.xlu0 %v336, 12
    %v1456 = vpop.permute.xlu0 %1455
    %1457 = vrot.lane.b32.xlu0 %v338, 12
    %v1458 = vpop.permute.xlu0 %1457
    %1459 = vrot.lane.b32.xlu0 %v339, 12
    %v1460 = vpop.permute.xlu0 %1459
    %1461 = vrot.lane.b32.xlu0 %v341, 12
    %v1462 = vpop.permute.xlu0 %1461
    %1463 = vrot.lane.b32.xlu0 %v342, 12
    %v1464 = vpop.permute.xlu0 %1463
    %1465 = vrot.lane.b32.xlu0 %v344, 12
    %v1466 = vpop.permute.xlu0 %1465
    %1467 = vrot.lane.b32.xlu0 %v345, 12
    %v1468 = vpop.permute.xlu0 %1467
    %1469 = vrot.lane.b32.xlu0 %v347, 12
    %v1470 = vpop.permute.xlu0 %1469
    %1471 = vrot.lane.b32.xlu0 %v348, 12
    %v1472 = vpop.permute.xlu0 %1471
    %1473 = vrot.lane.b32.xlu0 %v350, 12
    %v1474 = vpop.permute.xlu0 %1473
    %1475 = vrot.lane.b32.xlu0 %v351, 12
    %v1476 = vpop.permute.xlu0 %1475
    %1477 = vrot.lane.b32.xlu0 %v353, 12
    %v1478 = vpop.permute.xlu0 %1477
    %1479 = vrot.lane.b32.xlu0 %v354, 12
    %v1480 = vpop.permute.xlu0 %1479
    %1481 = vrot.lane.b32.xlu0 %v356, 12
    %v1482 = vpop.permute.xlu0 %1481
    %1483 = vrot.lane.b32.xlu0 %v357, 12
    %v1484 = vpop.permute.xlu0 %1483
    %1485 = vrot.lane.b32.xlu0 %v359, 12
    %v1486 = vpop.permute.xlu0 %1485
    %1487 = vrot.lane.b32.xlu0 %v360, 12
    %v1488 = vpop.permute.xlu0 %1487
    %1489 = vrot.lane.b32.xlu0 %v362, 12
    %v1490 = vpop.permute.xlu0 %1489
    %1491 = vrot.lane.b32.xlu0 %v363, 12
    %v1492 = vpop.permute.xlu0 %1491
    %1493 = vrot.lane.b32.xlu0 %v365, 12
    %v1494 = vpop.permute.xlu0 %1493
    %1495 = vrot.lane.b32.xlu0 %v366, 12
    %v1496 = vpop.permute.xlu0 %1495
    %1497 = vrot.lane.b32.xlu0 %v368, 12
    %v1498 = vpop.permute.xlu0 %1497
    %1499 = vrot.lane.b32.xlu0 %v369, 12
    %v1500 = vpop.permute.xlu0 %1499
    %1501 = vrot.lane.b32.xlu0 %v371, 12
    %v1502 = vpop.permute.xlu0 %1501
    %1503 = vrot.lane.b32.xlu0 %v372, 12
    %v1504 = vpop.permute.xlu0 %1503
    %vm1569 = vcmask 130144
    %1570 = vst.msk [vmem:[#allocation3] sm:$0xff] %vm1569, %v1378
    %1571 = vst.msk [vmem:[#allocation3 + $0x8] sm:$0xff] %vm1569, %v1380
    %1572 = vst.msk [vmem:[#allocation3 + $0x10] sm:$0xff] %vm1569, %v1382
    %1573 = vst.msk [vmem:[#allocation3 + $0x18] sm:$0xff] %vm1569, %v1384
    %1574 = vst.msk [vmem:[#allocation3 + $0x20] sm:$0xff] %vm1569, %v1386
    %1575 = vst.msk [vmem:[#allocation3 + $0x28] sm:$0xff] %vm1569, %v1388
    %1576 = vst.msk [vmem:[#allocation3 + $0x30] sm:$0xff] %vm1569, %v1390
    %1577 = vst.msk [vmem:[#allocation3 + $0x38] sm:$0xff] %vm1569, %v1392
    %1578 = vst.msk [vmem:[#allocation3 + $0x40] sm:$0xff] %vm1569, %v1394
    %1579 = vst.msk [vmem:[#allocation3 + $0x48] sm:$0xff] %vm1569, %v1396
    %1580 = vst.msk [vmem:[#allocation3 + $0x50] sm:$0xff] %vm1569, %v1398
    %1581 = vst.msk [vmem:[#allocation3 + $0x58] sm:$0xff] %vm1569, %v1400
    %1582 = vst.msk [vmem:[#allocation3 + $0x60] sm:$0xff] %vm1569, %v1402
    %1583 = vst.msk [vmem:[#allocation3 + $0x68] sm:$0xff] %vm1569, %v1404
    %1584 = vst.msk [vmem:[#allocation3 + $0x70] sm:$0xff] %vm1569, %v1406
    %1585 = vst.msk [vmem:[#allocation3 + $0x78] sm:$0xff] %vm1569, %v1408
    %1586 = vst.msk [vmem:[#allocation3 + $0x80] sm:$0xff] %vm1569, %v1410
    %1587 = vst.msk [vmem:[#allocation3 + $0x88] sm:$0xff] %vm1569, %v1412
    %1588 = vst.msk [vmem:[#allocation3 + $0x90] sm:$0xff] %vm1569, %v1414
    %1589 = vst.msk [vmem:[#allocation3 + $0x98] sm:$0xff] %vm1569, %v1416
    %1590 = vst.msk [vmem:[#allocation3 + $0xa0] sm:$0xff] %vm1569, %v1418
    %1591 = vst.msk [vmem:[#allocation3 + $0xa8] sm:$0xff] %vm1569, %v1420
    %1592 = vst.msk [vmem:[#allocation3 + $0xb0] sm:$0xff] %vm1569, %v1422
    %1593 = vst.msk [vmem:[#allocation3 + $0xb8] sm:$0xff] %vm1569, %v1424
    %1594 = vst.msk [vmem:[#allocation3 + $0xc0] sm:$0xff] %vm1569, %v1426
    %1595 = vst.msk [vmem:[#allocation3 + $0xc8] sm:$0xff] %vm1569, %v1428
    %1596 = vst.msk [vmem:[#allocation3 + $0xd0] sm:$0xff] %vm1569, %v1430
    %1597 = vst.msk [vmem:[#allocation3 + $0xd8] sm:$0xff] %vm1569, %v1432
    %1598 = vst.msk [vmem:[#allocation3 + $0xe0] sm:$0xff] %vm1569, %v1434
    %1599 = vst.msk [vmem:[#allocation3 + $0xe8] sm:$0xff] %vm1569, %v1436
    %1600 = vst.msk [vmem:[#allocation3 + $0xf0] sm:$0xff] %vm1569, %v1438
    %1601 = vst.msk [vmem:[#allocation3 + $0xf8] sm:$0xff] %vm1569, %v1440
    %1602 = vst.msk [vmem:[#allocation3 + $0x100] sm:$0xff] %vm1569, %v1442
    %1603 = vst.msk [vmem:[#allocation3 + $0x108] sm:$0xff] %vm1569, %v1444
    %1604 = vst.msk [vmem:[#allocation3 + $0x110] sm:$0xff] %vm1569, %v1446
    %1605 = vst.msk [vmem:[#allocation3 + $0x118] sm:$0xff] %vm1569, %v1448
    %1606 = vst.msk [vmem:[#allocation3 + $0x120] sm:$0xff] %vm1569, %v1450
    %1607 = vst.msk [vmem:[#allocation3 + $0x128] sm:$0xff] %vm1569, %v1452
    %1608 = vst.msk [vmem:[#allocation3 + $0x130] sm:$0xff] %vm1569, %v1454
    %1609 = vst.msk [vmem:[#allocation3 + $0x138] sm:$0xff] %vm1569, %v1456
    %1610 = vst.msk [vmem:[#allocation3 + $0x140] sm:$0xff] %vm1569, %v1458
    %1611 = vst.msk [vmem:[#allocation3 + $0x148] sm:$0xff] %vm1569, %v1460
    %1612 = vst.msk [vmem:[#allocation3 + $0x150] sm:$0xff] %vm1569, %v1462
    %1613 = vst.msk [vmem:[#allocation3 + $0x158] sm:$0xff] %vm1569, %v1464
    %1614 = vst.msk [vmem:[#allocation3 + $0x160] sm:$0xff] %vm1569, %v1466
    %1615 = vst.msk [vmem:[#allocation3 + $0x168] sm:$0xff] %vm1569, %v1468
    %1616 = vst.msk [vmem:[#allocation3 + $0x170] sm:$0xff] %vm1569, %v1470
    %1617 = vst.msk [vmem:[#allocation3 + $0x178] sm:$0xff] %vm1569, %v1472
    %1618 = vst.msk [vmem:[#allocation3 + $0x180] sm:$0xff] %vm1569, %v1474
    %1619 = vst.msk [vmem:[#allocation3 + $0x188] sm:$0xff] %vm1569, %v1476
    %1620 = vst.msk [vmem:[#allocation3 + $0x190] sm:$0xff] %vm1569, %v1478
    %1621 = vst.msk [vmem:[#allocation3 + $0x198] sm:$0xff] %vm1569, %v1480
    %1622 = vst.msk [vmem:[#allocation3 + $0x1a0] sm:$0xff] %vm1569, %v1482
    %1623 = vst.msk [vmem:[#allocation3 + $0x1a8] sm:$0xff] %vm1569, %v1484
    %1624 = vst.msk [vmem:[#allocation3 + $0x1b0] sm:$0xff] %vm1569, %v1486
    %1625 = vst.msk [vmem:[#allocation3 + $0x1b8] sm:$0xff] %vm1569, %v1488
    %1626 = vst.msk [vmem:[#allocation3 + $0x1c0] sm:$0xff] %vm1569, %v1490
    %1627 = vst.msk [vmem:[#allocation3 + $0x1c8] sm:$0xff] %vm1569, %v1492
    %1628 = vst.msk [vmem:[#allocation3 + $0x1d0] sm:$0xff] %vm1569, %v1494
    %1629 = vst.msk [vmem:[#allocation3 + $0x1d8] sm:$0xff] %vm1569, %v1496
    %1630 = vst.msk [vmem:[#allocation3 + $0x1e0] sm:$0xff] %vm1569, %v1498
    %1631 = vst.msk [vmem:[#allocation3 + $0x1e8] sm:$0xff] %vm1569, %v1500
    %1632 = vst.msk [vmem:[#allocation3 + $0x1f0] sm:$0xff] %vm1569, %v1502
    %1633 = vst.msk [vmem:[#allocation3 + $0x1f8] sm:$0xff] %vm1569, %v1504
    %v1636 = vrot.slane %v317, 1
    %v1637 = vrot.slane %v318, 1
    %v1638 = vsel %vm537, %v1636, %v1637
    %v1639 = vrot.slane %v319, 1
    %v1640 = vsel %vm537, %v1637, %v1639
    %v1641 = vrot.slane %v371, 1
    %v1642 = vrot.slane %v372, 1
    %v1643 = vsel %vm537, %v1641, %v1642
    %v1644 = vrot.slane %v373, 1
    %v1645 = vsel %vm537, %v1642, %v1644
    %1646 = vrot.lane.b32.xlu0 %v545, 16
    %v1647 = vpop.permute.xlu0 %1646
    %1648 = vrot.lane.b32.xlu0 %v547, 16
    %v1649 = vpop.permute.xlu0 %1648
    %1650 = vrot.lane.b32.xlu0 %v550, 16
    %v1651 = vpop.permute.xlu0 %1650
    %1652 = vrot.lane.b32.xlu0 %v552, 16
    %v1653 = vpop.permute.xlu0 %1652
    %1654 = vrot.lane.b32.xlu0 %v555, 16
    %v1655 = vpop.permute.xlu0 %1654
    %1656 = vrot.lane.b32.xlu0 %v557, 16
    %v1657 = vpop.permute.xlu0 %1656
    %1658 = vrot.lane.b32.xlu0 %v560, 16
    %v1659 = vpop.permute.xlu0 %1658
    %1660 = vrot.lane.b32.xlu0 %v562, 16
    %v1661 = vpop.permute.xlu0 %1660
    %1662 = vrot.lane.b32.xlu0 %v565, 16
    %v1663 = vpop.permute.xlu0 %1662
    %1664 = vrot.lane.b32.xlu0 %v567, 16
    %v1665 = vpop.permute.xlu0 %1664
    %1666 = vrot.lane.b32.xlu0 %v570, 16
    %v1667 = vpop.permute.xlu0 %1666
    %1668 = vrot.lane.b32.xlu0 %v572, 16
    %v1669 = vpop.permute.xlu0 %1668
    %1670 = vrot.lane.b32.xlu0 %v575, 16
    %v1671 = vpop.permute.xlu0 %1670
    %1672 = vrot.lane.b32.xlu0 %v577, 16
    %v1673 = vpop.permute.xlu0 %1672
    %1674 = vrot.lane.b32.xlu0 %v580, 16
    %v1675 = vpop.permute.xlu0 %1674
    %1676 = vrot.lane.b32.xlu0 %v582, 16
    %v1677 = vpop.permute.xlu0 %1676
    %1678 = vrot.lane.b32.xlu0 %v585, 16
    %v1679 = vpop.permute.xlu0 %1678
    %1680 = vrot.lane.b32.xlu0 %v587, 16
    %v1681 = vpop.permute.xlu0 %1680
    %1682 = vrot.lane.b32.xlu0 %v590, 16
    %v1683 = vpop.permute.xlu0 %1682
    %1684 = vrot.lane.b32.xlu0 %v592, 16
    %v1685 = vpop.permute.xlu0 %1684
    %1686 = vrot.lane.b32.xlu0 %v595, 16
    %v1687 = vpop.permute.xlu0 %1686
    %1688 = vrot.lane.b32.xlu0 %v597, 16
    %v1689 = vpop.permute.xlu0 %1688
    %1690 = vrot.lane.b32.xlu0 %v600, 16
    %v1691 = vpop.permute.xlu0 %1690
    %1692 = vrot.lane.b32.xlu0 %v602, 16
    %v1693 = vpop.permute.xlu0 %1692
    %1694 = vrot.lane.b32.xlu0 %v605, 16
    %v1695 = vpop.permute.xlu0 %1694
    %1696 = vrot.lane.b32.xlu0 %v607, 16
    %v1697 = vpop.permute.xlu0 %1696
    %1698 = vrot.lane.b32.xlu0 %v610, 16
    %v1699 = vpop.permute.xlu0 %1698
    %1700 = vrot.lane.b32.xlu0 %v612, 16
    %v1701 = vpop.permute.xlu0 %1700
    %1702 = vrot.lane.b32.xlu0 %v615, 16
    %v1703 = vpop.permute.xlu0 %1702
    %1704 = vrot.lane.b32.xlu0 %v617, 16
    %v1705 = vpop.permute.xlu0 %1704
    %1706 = vrot.lane.b32.xlu0 %v1638, 16
    %v1707 = vpop.permute.xlu0 %1706
    %1708 = vrot.lane.b32.xlu0 %v1640, 16
    %v1709 = vpop.permute.xlu0 %1708
    %1710 = vrot.lane.b32.xlu0 %v625, 16
    %v1711 = vpop.permute.xlu0 %1710
    %1712 = vrot.lane.b32.xlu0 %v627, 16
    %v1713 = vpop.permute.xlu0 %1712
    %1714 = vrot.lane.b32.xlu0 %v630, 16
    %v1715 = vpop.permute.xlu0 %1714
    %1716 = vrot.lane.b32.xlu0 %v632, 16
    %v1717 = vpop.permute.xlu0 %1716
    %1718 = vrot.lane.b32.xlu0 %v635, 16
    %v1719 = vpop.permute.xlu0 %1718
    %1720 = vrot.lane.b32.xlu0 %v637, 16
    %v1721 = vpop.permute.xlu0 %1720
    %1722 = vrot.lane.b32.xlu0 %v640, 16
    %v1723 = vpop.permute.xlu0 %1722
    %1724 = vrot.lane.b32.xlu0 %v642, 16
    %v1725 = vpop.permute.xlu0 %1724
    %1726 = vrot.lane.b32.xlu0 %v645, 16
    %v1727 = vpop.permute.xlu0 %1726
    %1728 = vrot.lane.b32.xlu0 %v647, 16
    %v1729 = vpop.permute.xlu0 %1728
    %1730 = vrot.lane.b32.xlu0 %v650, 16
    %v1731 = vpop.permute.xlu0 %1730
    %1732 = vrot.lane.b32.xlu0 %v652, 16
    %v1733 = vpop.permute.xlu0 %1732
    %1734 = vrot.lane.b32.xlu0 %v655, 16
    %v1735 = vpop.permute.xlu0 %1734
    %1736 = vrot.lane.b32.xlu0 %v657, 16
    %v1737 = vpop.permute.xlu0 %1736
    %1738 = vrot.lane.b32.xlu0 %v660, 16
    %v1739 = vpop.permute.xlu0 %1738
    %1740 = vrot.lane.b32.xlu0 %v662, 16
    %v1741 = vpop.permute.xlu0 %1740
    %1742 = vrot.lane.b32.xlu0 %v665, 16
    %v1743 = vpop.permute.xlu0 %1742
    %1744 = vrot.lane.b32.xlu0 %v667, 16
    %v1745 = vpop.permute.xlu0 %1744
    %1746 = vrot.lane.b32.xlu0 %v670, 16
    %v1747 = vpop.permute.xlu0 %1746
    %1748 = vrot.lane.b32.xlu0 %v672, 16
    %v1749 = vpop.permute.xlu0 %1748
    %1750 = vrot.lane.b32.xlu0 %v675, 16
    %v1751 = vpop.permute.xlu0 %1750
    %1752 = vrot.lane.b32.xlu0 %v677, 16
    %v1753 = vpop.permute.xlu0 %1752
    %1754 = vrot.lane.b32.xlu0 %v680, 16
    %v1755 = vpop.permute.xlu0 %1754
    %1756 = vrot.lane.b32.xlu0 %v682, 16
    %v1757 = vpop.permute.xlu0 %1756
    %1758 = vrot.lane.b32.xlu0 %v685, 16
    %v1759 = vpop.permute.xlu0 %1758
    %1760 = vrot.lane.b32.xlu0 %v687, 16
    %v1761 = vpop.permute.xlu0 %1760
    %1762 = vrot.lane.b32.xlu0 %v690, 16
    %v1763 = vpop.permute.xlu0 %1762
    %1764 = vrot.lane.b32.xlu0 %v692, 16
    %v1765 = vpop.permute.xlu0 %1764
    %1766 = vrot.lane.b32.xlu0 %v695, 16
    %v1767 = vpop.permute.xlu0 %1766
    %1768 = vrot.lane.b32.xlu0 %v697, 16
    %v1769 = vpop.permute.xlu0 %1768
    %1770 = vrot.lane.b32.xlu0 %v1643, 16
    %v1771 = vpop.permute.xlu0 %1770
    %1772 = vrot.lane.b32.xlu0 %v1645, 16
    %v1773 = vpop.permute.xlu0 %1772
    %vm1838 = vcmask 162944
    %1839 = vst.msk [vmem:[#allocation3] sm:$0xff] %vm1838, %v1647
    %1840 = vst.msk [vmem:[#allocation3 + $0x8] sm:$0xff] %vm1838, %v1649
    %1841 = vst.msk [vmem:[#allocation3 + $0x10] sm:$0xff] %vm1838, %v1651
    %1842 = vst.msk [vmem:[#allocation3 + $0x18] sm:$0xff] %vm1838, %v1653
    %1843 = vst.msk [vmem:[#allocation3 + $0x20] sm:$0xff] %vm1838, %v1655
    %1844 = vst.msk [vmem:[#allocation3 + $0x28] sm:$0xff] %vm1838, %v1657
    %1845 = vst.msk [vmem:[#allocation3 + $0x30] sm:$0xff] %vm1838, %v1659
    %1846 = vst.msk [vmem:[#allocation3 + $0x38] sm:$0xff] %vm1838, %v1661
    %1847 = vst.msk [vmem:[#allocation3 + $0x40] sm:$0xff] %vm1838, %v1663
    %1848 = vst.msk [vmem:[#allocation3 + $0x48] sm:$0xff] %vm1838, %v1665
    %1849 = vst.msk [vmem:[#allocation3 + $0x50] sm:$0xff] %vm1838, %v1667
    %1850 = vst.msk [vmem:[#allocation3 + $0x58] sm:$0xff] %vm1838, %v1669
    %1851 = vst.msk [vmem:[#allocation3 + $0x60] sm:$0xff] %vm1838, %v1671
    %1852 = vst.msk [vmem:[#allocation3 + $0x68] sm:$0xff] %vm1838, %v1673
    %1853 = vst.msk [vmem:[#allocation3 + $0x70] sm:$0xff] %vm1838, %v1675
    %1854 = vst.msk [vmem:[#allocation3 + $0x78] sm:$0xff] %vm1838, %v1677
    %1855 = vst.msk [vmem:[#allocation3 + $0x80] sm:$0xff] %vm1838, %v1679
    %1856 = vst.msk [vmem:[#allocation3 + $0x88] sm:$0xff] %vm1838, %v1681
    %1857 = vst.msk [vmem:[#allocation3 + $0x90] sm:$0xff] %vm1838, %v1683
    %1858 = vst.msk [vmem:[#allocation3 + $0x98] sm:$0xff] %vm1838, %v1685
    %1859 = vst.msk [vmem:[#allocation3 + $0xa0] sm:$0xff] %vm1838, %v1687
    %1860 = vst.msk [vmem:[#allocation3 + $0xa8] sm:$0xff] %vm1838, %v1689
    %1861 = vst.msk [vmem:[#allocation3 + $0xb0] sm:$0xff] %vm1838, %v1691
    %1862 = vst.msk [vmem:[#allocation3 + $0xb8] sm:$0xff] %vm1838, %v1693
    %1863 = vst.msk [vmem:[#allocation3 + $0xc0] sm:$0xff] %vm1838, %v1695
    %1864 = vst.msk [vmem:[#allocation3 + $0xc8] sm:$0xff] %vm1838, %v1697
    %1865 = vst.msk [vmem:[#allocation3 + $0xd0] sm:$0xff] %vm1838, %v1699
    %1866 = vst.msk [vmem:[#allocation3 + $0xd8] sm:$0xff] %vm1838, %v1701
    %1867 = vst.msk [vmem:[#allocation3 + $0xe0] sm:$0xff] %vm1838, %v1703
    %1868 = vst.msk [vmem:[#allocation3 + $0xe8] sm:$0xff] %vm1838, %v1705
    %1869 = vst.msk [vmem:[#allocation3 + $0xf0] sm:$0xff] %vm1838, %v1707
    %1870 = vst.msk [vmem:[#allocation3 + $0xf8] sm:$0xff] %vm1838, %v1709
    %1871 = vst.msk [vmem:[#allocation3 + $0x100] sm:$0xff] %vm1838, %v1711
    %1872 = vst.msk [vmem:[#allocation3 + $0x108] sm:$0xff] %vm1838, %v1713
    %1873 = vst.msk [vmem:[#allocation3 + $0x110] sm:$0xff] %vm1838, %v1715
    %1874 = vst.msk [vmem:[#allocation3 + $0x118] sm:$0xff] %vm1838, %v1717
    %1875 = vst.msk [vmem:[#allocation3 + $0x120] sm:$0xff] %vm1838, %v1719
    %1876 = vst.msk [vmem:[#allocation3 + $0x128] sm:$0xff] %vm1838, %v1721
    %1877 = vst.msk [vmem:[#allocation3 + $0x130] sm:$0xff] %vm1838, %v1723
    %1878 = vst.msk [vmem:[#allocation3 + $0x138] sm:$0xff] %vm1838, %v1725
    %1879 = vst.msk [vmem:[#allocation3 + $0x140] sm:$0xff] %vm1838, %v1727
    %1880 = vst.msk [vmem:[#allocation3 + $0x148] sm:$0xff] %vm1838, %v1729
    %1881 = vst.msk [vmem:[#allocation3 + $0x150] sm:$0xff] %vm1838, %v1731
    %1882 = vst.msk [vmem:[#allocation3 + $0x158] sm:$0xff] %vm1838, %v1733
    %1883 = vst.msk [vmem:[#allocation3 + $0x160] sm:$0xff] %vm1838, %v1735
    %1884 = vst.msk [vmem:[#allocation3 + $0x168] sm:$0xff] %vm1838, %v1737
    %1885 = vst.msk [vmem:[#allocation3 + $0x170] sm:$0xff] %vm1838, %v1739
    %1886 = vst.msk [vmem:[#allocation3 + $0x178] sm:$0xff] %vm1838, %v1741
    %1887 = vst.msk [vmem:[#allocation3 + $0x180] sm:$0xff] %vm1838, %v1743
    %1888 = vst.msk [vmem:[#allocation3 + $0x188] sm:$0xff] %vm1838, %v1745
    %1889 = vst.msk [vmem:[#allocation3 + $0x190] sm:$0xff] %vm1838, %v1747
    %1890 = vst.msk [vmem:[#allocation3 + $0x198] sm:$0xff] %vm1838, %v1749
    %1891 = vst.msk [vmem:[#allocation3 + $0x1a0] sm:$0xff] %vm1838, %v1751
    %1892 = vst.msk [vmem:[#allocation3 + $0x1a8] sm:$0xff] %vm1838, %v1753
    %1893 = vst.msk [vmem:[#allocation3 + $0x1b0] sm:$0xff] %vm1838, %v1755
    %1894 = vst.msk [vmem:[#allocation3 + $0x1b8] sm:$0xff] %vm1838, %v1757
    %1895 = vst.msk [vmem:[#allocation3 + $0x1c0] sm:$0xff] %vm1838, %v1759
    %1896 = vst.msk [vmem:[#allocation3 + $0x1c8] sm:$0xff] %vm1838, %v1761
    %1897 = vst.msk [vmem:[#allocation3 + $0x1d0] sm:$0xff] %vm1838, %v1763
    %1898 = vst.msk [vmem:[#allocation3 + $0x1d8] sm:$0xff] %vm1838, %v1765
    %1899 = vst.msk [vmem:[#allocation3 + $0x1e0] sm:$0xff] %vm1838, %v1767
    %1900 = vst.msk [vmem:[#allocation3 + $0x1e8] sm:$0xff] %vm1838, %v1769
    %1901 = vst.msk [vmem:[#allocation3 + $0x1f0] sm:$0xff] %vm1838, %v1771
    %1902 = vst.msk [vmem:[#allocation3 + $0x1f8] sm:$0xff] %vm1838, %v1773
    %v1903 = vrot.slane %v317, 2
    %v1904 = vrot.slane %v318, 2
    %v1905 = vsel %vm955, %v1903, %v1904
    %v1906 = vrot.slane %v319, 2
    %v1907 = vsel %vm955, %v1904, %v1906
    %v1908 = vrot.slane %v371, 2
    %v1909 = vrot.slane %v372, 2
    %v1910 = vsel %vm955, %v1908, %v1909
    %v1911 = vrot.slane %v373, 2
    %v1912 = vsel %vm955, %v1909, %v1911
    %1913 = vrot.lane.b32.xlu0 %v963, 20
    %v1914 = vpop.permute.xlu0 %1913
    %1915 = vrot.lane.b32.xlu0 %v965, 20
    %v1916 = vpop.permute.xlu0 %1915
    %1917 = vrot.lane.b32.xlu0 %v968, 20
    %v1918 = vpop.permute.xlu0 %1917
    %1919 = vrot.lane.b32.xlu0 %v970, 20
    %v1920 = vpop.permute.xlu0 %1919
    %1921 = vrot.lane.b32.xlu0 %v973, 20
    %v1922 = vpop.permute.xlu0 %1921
    %1923 = vrot.lane.b32.xlu0 %v975, 20
    %v1924 = vpop.permute.xlu0 %1923
    %1925 = vrot.lane.b32.xlu0 %v978, 20
    %v1926 = vpop.permute.xlu0 %1925
    %1927 = vrot.lane.b32.xlu0 %v980, 20
    %v1928 = vpop.permute.xlu0 %1927
    %1929 = vrot.lane.b32.xlu0 %v983, 20
    %v1930 = vpop.permute.xlu0 %1929
    %1931 = vrot.lane.b32.xlu0 %v985, 20
    %v1932 = vpop.permute.xlu0 %1931
    %1933 = vrot.lane.b32.xlu0 %v988, 20
    %v1934 = vpop.permute.xlu0 %1933
    %1935 = vrot.lane.b32.xlu0 %v990, 20
    %v1936 = vpop.permute.xlu0 %1935
    %1937 = vrot.lane.b32.xlu0 %v993, 20
    %v1938 = vpop.permute.xlu0 %1937
    %1939 = vrot.lane.b32.xlu0 %v995, 20
    %v1940 = vpop.permute.xlu0 %1939
    %1941 = vrot.lane.b32.xlu0 %v998, 20
    %v1942 = vpop.permute.xlu0 %1941
    %1943 = vrot.lane.b32.xlu0 %v1000, 20
    %v1944 = vpop.permute.xlu0 %1943
    %1945 = vrot.lane.b32.xlu0 %v1003, 20
    %v1946 = vpop.permute.xlu0 %1945
    %1947 = vrot.lane.b32.xlu0 %v1005, 20
    %v1948 = vpop.permute.xlu0 %1947
    %1949 = vrot.lane.b32.xlu0 %v1008, 20
    %v1950 = vpop.permute.xlu0 %1949
    %1951 = vrot.lane.b32.xlu0 %v1010, 20
    %v1952 = vpop.permute.xlu0 %1951
    %1953 = vrot.lane.b32.xlu0 %v1013, 20
    %v1954 = vpop.permute.xlu0 %1953
    %1955 = vrot.lane.b32.xlu0 %v1015, 20
    %v1956 = vpop.permute.xlu0 %1955
    %1957 = vrot.lane.b32.xlu0 %v1018, 20
    %v1958 = vpop.permute.xlu0 %1957
    %1959 = vrot.lane.b32.xlu0 %v1020, 20
    %v1960 = vpop.permute.xlu0 %1959
    %1961 = vrot.lane.b32.xlu0 %v1023, 20
    %v1962 = vpop.permute.xlu0 %1961
    %1963 = vrot.lane.b32.xlu0 %v1025, 20
    %v1964 = vpop.permute.xlu0 %1963
    %1965 = vrot.lane.b32.xlu0 %v1028, 20
    %v1966 = vpop.permute.xlu0 %1965
    %1967 = vrot.lane.b32.xlu0 %v1030, 20
    %v1968 = vpop.permute.xlu0 %1967
    %1969 = vrot.lane.b32.xlu0 %v1033, 20
    %v1970 = vpop.permute.xlu0 %1969
    %1971 = vrot.lane.b32.xlu0 %v1035, 20
    %v1972 = vpop.permute.xlu0 %1971
    %1973 = vrot.lane.b32.xlu0 %v1905, 20
    %v1974 = vpop.permute.xlu0 %1973
    %1975 = vrot.lane.b32.xlu0 %v1907, 20
    %v1976 = vpop.permute.xlu0 %1975
    %1977 = vrot.lane.b32.xlu0 %v1043, 20
    %v1978 = vpop.permute.xlu0 %1977
    %1979 = vrot.lane.b32.xlu0 %v1045, 20
    %v1980 = vpop.permute.xlu0 %1979
    %1981 = vrot.lane.b32.xlu0 %v1048, 20
    %v1982 = vpop.permute.xlu0 %1981
    %1983 = vrot.lane.b32.xlu0 %v1050, 20
    %v1984 = vpop.permute.xlu0 %1983
    %1985 = vrot.lane.b32.xlu0 %v1053, 20
    %v1986 = vpop.permute.xlu0 %1985
    %1987 = vrot.lane.b32.xlu0 %v1055, 20
    %v1988 = vpop.permute.xlu0 %1987
    %1989 = vrot.lane.b32.xlu0 %v1058, 20
    %v1990 = vpop.permute.xlu0 %1989
    %1991 = vrot.lane.b32.xlu0 %v1060, 20
    %v1992 = vpop.permute.xlu0 %1991
    %1993 = vrot.lane.b32.xlu0 %v1063, 20
    %v1994 = vpop.permute.xlu0 %1993
    %1995 = vrot.lane.b32.xlu0 %v1065, 20
    %v1996 = vpop.permute.xlu0 %1995
    %1997 = vrot.lane.b32.xlu0 %v1068, 20
    %v1998 = vpop.permute.xlu0 %1997
    %1999 = vrot.lane.b32.xlu0 %v1070, 20
    %v2000 = vpop.permute.xlu0 %1999
    %2001 = vrot.lane.b32.xlu0 %v1073, 20
    %v2002 = vpop.permute.xlu0 %2001
    %2003 = vrot.lane.b32.xlu0 %v1075, 20
    %v2004 = vpop.permute.xlu0 %2003
    %2005 = vrot.lane.b32.xlu0 %v1078, 20
    %v2006 = vpop.permute.xlu0 %2005
    %2007 = vrot.lane.b32.xlu0 %v1080, 20
    %v2008 = vpop.permute.xlu0 %2007
    %2009 = vrot.lane.b32.xlu0 %v1083, 20
    %v2010 = vpop.permute.xlu0 %2009
    %2011 = vrot.lane.b32.xlu0 %v1085, 20
    %v2012 = vpop.permute.xlu0 %2011
    %2013 = vrot.lane.b32.xlu0 %v1088, 20
    %v2014 = vpop.permute.xlu0 %2013
    %2015 = vrot.lane.b32.xlu0 %v1090, 20
    %v2016 = vpop.permute.xlu0 %2015
    %2017 = vrot.lane.b32.xlu0 %v1093, 20
    %v2018 = vpop.permute.xlu0 %2017
    %2019 = vrot.lane.b32.xlu0 %v1095, 20
    %v2020 = vpop.permute.xlu0 %2019
    %2021 = vrot.lane.b32.xlu0 %v1098, 20
    %v2022 = vpop.permute.xlu0 %2021
    %2023 = vrot.lane.b32.xlu0 %v1100, 20
    %v2024 = vpop.permute.xlu0 %2023
    %2025 = vrot.lane.b32.xlu0 %v1103, 20
    %v2026 = vpop.permute.xlu0 %2025
    %2027 = vrot.lane.b32.xlu0 %v1105, 20
    %v2028 = vpop.permute.xlu0 %2027
    %2029 = vrot.lane.b32.xlu0 %v1108, 20
    %v2030 = vpop.permute.xlu0 %2029
    %2031 = vrot.lane.b32.xlu0 %v1110, 20
    %v2032 = vpop.permute.xlu0 %2031
    %2033 = vrot.lane.b32.xlu0 %v1113, 20
    %v2034 = vpop.permute.xlu0 %2033
    %2035 = vrot.lane.b32.xlu0 %v1115, 20
    %v2036 = vpop.permute.xlu0 %2035
    %2037 = vrot.lane.b32.xlu0 %v1910, 20
    %v2038 = vpop.permute.xlu0 %2037
    %2039 = vrot.lane.b32.xlu0 %v1912, 20
    %v2040 = vpop.permute.xlu0 %2039
    %vm2105 = vcmask 195744
    %2106 = vst.msk [vmem:[#allocation3] sm:$0xff] %vm2105, %v1914
    %2107 = vst.msk [vmem:[#allocation3 + $0x8] sm:$0xff] %vm2105, %v1916
    %2108 = vst.msk [vmem:[#allocation3 + $0x10] sm:$0xff] %vm2105, %v1918
    %2109 = vst.msk [vmem:[#allocation3 + $0x18] sm:$0xff] %vm2105, %v1920
    %2110 = vst.msk [vmem:[#allocation3 + $0x20] sm:$0xff] %vm2105, %v1922
    %2111 = vst.msk [vmem:[#allocation3 + $0x28] sm:$0xff] %vm2105, %v1924
    %2112 = vst.msk [vmem:[#allocation3 + $0x30] sm:$0xff] %vm2105, %v1926
    %2113 = vst.msk [vmem:[#allocation3 + $0x38] sm:$0xff] %vm2105, %v1928
    %2114 = vst.msk [vmem:[#allocation3 + $0x40] sm:$0xff] %vm2105, %v1930
    %2115 = vst.msk [vmem:[#allocation3 + $0x48] sm:$0xff] %vm2105, %v1932
    %2116 = vst.msk [vmem:[#allocation3 + $0x50] sm:$0xff] %vm2105, %v1934
    %2117 = vst.msk [vmem:[#allocation3 + $0x58] sm:$0xff] %vm2105, %v1936
    %2118 = vst.msk [vmem:[#allocation3 + $0x60] sm:$0xff] %vm2105, %v1938
    %2119 = vst.msk [vmem:[#allocation3 + $0x68] sm:$0xff] %vm2105, %v1940
    %2120 = vst.msk [vmem:[#allocation3 + $0x70] sm:$0xff] %vm2105, %v1942
    %2121 = vst.msk [vmem:[#allocation3 + $0x78] sm:$0xff] %vm2105, %v1944
    %2122 = vst.msk [vmem:[#allocation3 + $0x80] sm:$0xff] %vm2105, %v1946
    %2123 = vst.msk [vmem:[#allocation3 + $0x88] sm:$0xff] %vm2105, %v1948
    %2124 = vst.msk [vmem:[#allocation3 + $0x90] sm:$0xff] %vm2105, %v1950
    %2125 = vst.msk [vmem:[#allocation3 + $0x98] sm:$0xff] %vm2105, %v1952
    %2126 = vst.msk [vmem:[#allocation3 + $0xa0] sm:$0xff] %vm2105, %v1954
    %2127 = vst.msk [vmem:[#allocation3 + $0xa8] sm:$0xff] %vm2105, %v1956
    %2128 = vst.msk [vmem:[#allocation3 + $0xb0] sm:$0xff] %vm2105, %v1958
    %2129 = vst.msk [vmem:[#allocation3 + $0xb8] sm:$0xff] %vm2105, %v1960
    %2130 = vst.msk [vmem:[#allocation3 + $0xc0] sm:$0xff] %vm2105, %v1962
    %2131 = vst.msk [vmem:[#allocation3 + $0xc8] sm:$0xff] %vm2105, %v1964
    %2132 = vst.msk [vmem:[#allocation3 + $0xd0] sm:$0xff] %vm2105, %v1966
    %2133 = vst.msk [vmem:[#allocation3 + $0xd8] sm:$0xff] %vm2105, %v1968
    %2134 = vst.msk [vmem:[#allocation3 + $0xe0] sm:$0xff] %vm2105, %v1970
    %2135 = vst.msk [vmem:[#allocation3 + $0xe8] sm:$0xff] %vm2105, %v1972
    %2136 = vst.msk [vmem:[#allocation3 + $0xf0] sm:$0xff] %vm2105, %v1974
    %2137 = vst.msk [vmem:[#allocation3 + $0xf8] sm:$0xff] %vm2105, %v1976
    %2138 = vst.msk [vmem:[#allocation3 + $0x100] sm:$0xff] %vm2105, %v1978
    %2139 = vst.msk [vmem:[#allocation3 + $0x108] sm:$0xff] %vm2105, %v1980
    %2140 = vst.msk [vmem:[#allocation3 + $0x110] sm:$0xff] %vm2105, %v1982
    %2141 = vst.msk [vmem:[#allocation3 + $0x118] sm:$0xff] %vm2105, %v1984
    %2142 = vst.msk [vmem:[#allocation3 + $0x120] sm:$0xff] %vm2105, %v1986
    %2143 = vst.msk [vmem:[#allocation3 + $0x128] sm:$0xff] %vm2105, %v1988
    %2144 = vst.msk [vmem:[#allocation3 + $0x130] sm:$0xff] %vm2105, %v1990
    %2145 = vst.msk [vmem:[#allocation3 + $0x138] sm:$0xff] %vm2105, %v1992
    %2146 = vst.msk [vmem:[#allocation3 + $0x140] sm:$0xff] %vm2105, %v1994
    %2147 = vst.msk [vmem:[#allocation3 + $0x148] sm:$0xff] %vm2105, %v1996
    %2148 = vst.msk [vmem:[#allocation3 + $0x150] sm:$0xff] %vm2105, %v1998
    %2149 = vst.msk [vmem:[#allocation3 + $0x158] sm:$0xff] %vm2105, %v2000
    %2150 = vst.msk [vmem:[#allocation3 + $0x160] sm:$0xff] %vm2105, %v2002
    %2151 = vst.msk [vmem:[#allocation3 + $0x168] sm:$0xff] %vm2105, %v2004
    %2152 = vst.msk [vmem:[#allocation3 + $0x170] sm:$0xff] %vm2105, %v2006
    %2153 = vst.msk [vmem:[#allocation3 + $0x178] sm:$0xff] %vm2105, %v2008
    %2154 = vst.msk [vmem:[#allocation3 + $0x180] sm:$0xff] %vm2105, %v2010
    %2155 = vst.msk [vmem:[#allocation3 + $0x188] sm:$0xff] %vm2105, %v2012
    %2156 = vst.msk [vmem:[#allocation3 + $0x190] sm:$0xff] %vm2105, %v2014
    %2157 = vst.msk [vmem:[#allocation3 + $0x198] sm:$0xff] %vm2105, %v2016
    %2158 = vst.msk [vmem:[#allocation3 + $0x1a0] sm:$0xff] %vm2105, %v2018
    %2159 = vst.msk [vmem:[#allocation3 + $0x1a8] sm:$0xff] %vm2105, %v2020
    %2160 = vst.msk [vmem:[#allocation3 + $0x1b0] sm:$0xff] %vm2105, %v2022
    %2161 = vst.msk [vmem:[#allocation3 + $0x1b8] sm:$0xff] %vm2105, %v2024
    %2162 = vst.msk [vmem:[#allocation3 + $0x1c0] sm:$0xff] %vm2105, %v2026
    %2163 = vst.msk [vmem:[#allocation3 + $0x1c8] sm:$0xff] %vm2105, %v2028
    %2164 = vst.msk [vmem:[#allocation3 + $0x1d0] sm:$0xff] %vm2105, %v2030
    %2165 = vst.msk [vmem:[#allocation3 + $0x1d8] sm:$0xff] %vm2105, %v2032
    %2166 = vst.msk [vmem:[#allocation3 + $0x1e0] sm:$0xff] %vm2105, %v2034
    %2167 = vst.msk [vmem:[#allocation3 + $0x1e8] sm:$0xff] %vm2105, %v2036
    %2168 = vst.msk [vmem:[#allocation3 + $0x1f0] sm:$0xff] %vm2105, %v2038
    %2169 = vst.msk [vmem:[#allocation3 + $0x1f8] sm:$0xff] %vm2105, %v2040
    %2174 = vrot.lane.b32.xlu0 %v275, 24
    %v2175 = vpop.permute.xlu0 %2174
    %2176 = vrot.lane.b32.xlu0 %v276, 24
    %v2177 = vpop.permute.xlu0 %2176
    %2178 = vrot.lane.b32.xlu0 %v278, 24
    %v2179 = vpop.permute.xlu0 %2178
    %2180 = vrot.lane.b32.xlu0 %v279, 24
    %v2181 = vpop.permute.xlu0 %2180
    %2182 = vrot.lane.b32.xlu0 %v281, 24
    %v2183 = vpop.permute.xlu0 %2182
    %2184 = vrot.lane.b32.xlu0 %v282, 24
    %v2185 = vpop.permute.xlu0 %2184
    %2186 = vrot.lane.b32.xlu0 %v284, 24
    %v2187 = vpop.permute.xlu0 %2186
    %2188 = vrot.lane.b32.xlu0 %v285, 24
    %v2189 = vpop.permute.xlu0 %2188
    %2190 = vrot.lane.b32.xlu0 %v287, 24
    %v2191 = vpop.permute.xlu0 %2190
    %2192 = vrot.lane.b32.xlu0 %v288, 24
    %v2193 = vpop.permute.xlu0 %2192
    %2194 = vrot.lane.b32.xlu0 %v290, 24
    %v2195 = vpop.permute.xlu0 %2194
    %2196 = vrot.lane.b32.xlu0 %v291, 24
    %v2197 = vpop.permute.xlu0 %2196
    %2198 = vrot.lane.b32.xlu0 %v293, 24
    %v2199 = vpop.permute.xlu0 %2198
    %2200 = vrot.lane.b32.xlu0 %v294, 24
    %v2201 = vpop.permute.xlu0 %2200
    %2202 = vrot.lane.b32.xlu0 %v296, 24
    %v2203 = vpop.permute.xlu0 %2202
    %2204 = vrot.lane.b32.xlu0 %v297, 24
    %v2205 = vpop.permute.xlu0 %2204
    %2206 = vrot.lane.b32.xlu0 %v299, 24
    %v2207 = vpop.permute.xlu0 %2206
    %2208 = vrot.lane.b32.xlu0 %v300, 24
    %v2209 = vpop.permute.xlu0 %2208
    %2210 = vrot.lane.b32.xlu0 %v302, 24
    %v2211 = vpop.permute.xlu0 %2210
    %2212 = vrot.lane.b32.xlu0 %v303, 24
    %v2213 = vpop.permute.xlu0 %2212
    %2214 = vrot.lane.b32.xlu0 %v305, 24
    %v2215 = vpop.permute.xlu0 %2214
    %2216 = vrot.lane.b32.xlu0 %v306, 24
    %v2217 = vpop.permute.xlu0 %2216
    %2218 = vrot.lane.b32.xlu0 %v308, 24
    %v2219 = vpop.permute.xlu0 %2218
    %2220 = vrot.lane.b32.xlu0 %v309, 24
    %v2221 = vpop.permute.xlu0 %2220
    %2222 = vrot.lane.b32.xlu0 %v311, 24
    %v2223 = vpop.permute.xlu0 %2222
    %2224 = vrot.lane.b32.xlu0 %v312, 24
    %v2225 = vpop.permute.xlu0 %2224
    %2226 = vrot.lane.b32.xlu0 %v314, 24
    %v2227 = vpop.permute.xlu0 %2226
    %2228 = vrot.lane.b32.xlu0 %v315, 24
    %v2229 = vpop.permute.xlu0 %2228
    %2230 = vrot.lane.b32.xlu0 %v317, 24
    %v2231 = vpop.permute.xlu0 %2230
    %2232 = vrot.lane.b32.xlu0 %v318, 24
    %v2233 = vpop.permute.xlu0 %2232
    %2234 = vrot.lane.b32.xlu0 %v320, 24
    %v2235 = vpop.permute.xlu0 %2234
    %2236 = vrot.lane.b32.xlu0 %v321, 24
    %v2237 = vpop.permute.xlu0 %2236
    %2238 = vrot.lane.b32.xlu0 %v329, 24
    %v2239 = vpop.permute.xlu0 %2238
    %2240 = vrot.lane.b32.xlu0 %v330, 24
    %v2241 = vpop.permute.xlu0 %2240
    %2242 = vrot.lane.b32.xlu0 %v332, 24
    %v2243 = vpop.permute.xlu0 %2242
    %2244 = vrot.lane.b32.xlu0 %v333, 24
    %v2245 = vpop.permute.xlu0 %2244
    %2246 = vrot.lane.b32.xlu0 %v335, 24
    %v2247 = vpop.permute.xlu0 %2246
    %2248 = vrot.lane.b32.xlu0 %v336, 24
    %v2249 = vpop.permute.xlu0 %2248
    %2250 = vrot.lane.b32.xlu0 %v338, 24
    %v2251 = vpop.permute.xlu0 %2250
    %2252 = vrot.lane.b32.xlu0 %v339, 24
    %v2253 = vpop.permute.xlu0 %2252
    %2254 = vrot.lane.b32.xlu0 %v341, 24
    %v2255 = vpop.permute.xlu0 %2254
    %2256 = vrot.lane.b32.xlu0 %v342, 24
    %v2257 = vpop.permute.xlu0 %2256
    %2258 = vrot.lane.b32.xlu0 %v344, 24
    %v2259 = vpop.permute.xlu0 %2258
    %2260 = vrot.lane.b32.xlu0 %v345, 24
    %v2261 = vpop.permute.xlu0 %2260
    %2262 = vrot.lane.b32.xlu0 %v347, 24
    %v2263 = vpop.permute.xlu0 %2262
    %2264 = vrot.lane.b32.xlu0 %v348, 24
    %v2265 = vpop.permute.xlu0 %2264
    %2266 = vrot.lane.b32.xlu0 %v350, 24
    %v2267 = vpop.permute.xlu0 %2266
    %2268 = vrot.lane.b32.xlu0 %v351, 24
    %v2269 = vpop.permute.xlu0 %2268
    %2270 = vrot.lane.b32.xlu0 %v353, 24
    %v2271 = vpop.permute.xlu0 %2270
    %2272 = vrot.lane.b32.xlu0 %v354, 24
    %v2273 = vpop.permute.xlu0 %2272
    %2274 = vrot.lane.b32.xlu0 %v356, 24
    %v2275 = vpop.permute.xlu0 %2274
    %2276 = vrot.lane.b32.xlu0 %v357, 24
    %v2277 = vpop.permute.xlu0 %2276
    %2278 = vrot.lane.b32.xlu0 %v359, 24
    %v2279 = vpop.permute.xlu0 %2278
    %2280 = vrot.lane.b32.xlu0 %v360, 24
    %v2281 = vpop.permute.xlu0 %2280
    %2282 = vrot.lane.b32.xlu0 %v362, 24
    %v2283 = vpop.permute.xlu0 %2282
    %2284 = vrot.lane.b32.xlu0 %v363, 24
    %v2285 = vpop.permute.xlu0 %2284
    %2286 = vrot.lane.b32.xlu0 %v365, 24
    %v2287 = vpop.permute.xlu0 %2286
    %2288 = vrot.lane.b32.xlu0 %v366, 24
    %v2289 = vpop.permute.xlu0 %2288
    %2290 = vrot.lane.b32.xlu0 %v368, 24
    %v2291 = vpop.permute.xlu0 %2290
    %2292 = vrot.lane.b32.xlu0 %v369, 24
    %v2293 = vpop.permute.xlu0 %2292
    %2294 = vrot.lane.b32.xlu0 %v371, 24
    %v2295 = vpop.permute.xlu0 %2294
    %2296 = vrot.lane.b32.xlu0 %v372, 24
    %v2297 = vpop.permute.xlu0 %2296
    %2298 = vrot.lane.b32.xlu0 %v374, 24
    %v2299 = vpop.permute.xlu0 %2298
    %2300 = vrot.lane.b32.xlu0 %v375, 24
    %v2301 = vpop.permute.xlu0 %2300
    %vm2366 = vcmask 228544
    %2367 = vst.msk [vmem:[#allocation3] sm:$0xff] %vm2366, %v2175
    %2368 = vst.msk [vmem:[#allocation3 + $0x8] sm:$0xff] %vm2366, %v2177
    %2369 = vst.msk [vmem:[#allocation3 + $0x10] sm:$0xff] %vm2366, %v2179
    %2370 = vst.msk [vmem:[#allocation3 + $0x18] sm:$0xff] %vm2366, %v2181
    %2371 = vst.msk [vmem:[#allocation3 + $0x20] sm:$0xff] %vm2366, %v2183
    %2372 = vst.msk [vmem:[#allocation3 + $0x28] sm:$0xff] %vm2366, %v2185
    %2373 = vst.msk [vmem:[#allocation3 + $0x30] sm:$0xff] %vm2366, %v2187
    %2374 = vst.msk [vmem:[#allocation3 + $0x38] sm:$0xff] %vm2366, %v2189
    %2375 = vst.msk [vmem:[#allocation3 + $0x40] sm:$0xff] %vm2366, %v2191
    %2376 = vst.msk [vmem:[#allocation3 + $0x48] sm:$0xff] %vm2366, %v2193
    %2377 = vst.msk [vmem:[#allocation3 + $0x50] sm:$0xff] %vm2366, %v2195
    %2378 = vst.msk [vmem:[#allocation3 + $0x58] sm:$0xff] %vm2366, %v2197
    %2379 = vst.msk [vmem:[#allocation3 + $0x60] sm:$0xff] %vm2366, %v2199
    %2380 = vst.msk [vmem:[#allocation3 + $0x68] sm:$0xff] %vm2366, %v2201
    %2381 = vst.msk [vmem:[#allocation3 + $0x70] sm:$0xff] %vm2366, %v2203
    %2382 = vst.msk [vmem:[#allocation3 + $0x78] sm:$0xff] %vm2366, %v2205
    %2383 = vst.msk [vmem:[#allocation3 + $0x80] sm:$0xff] %vm2366, %v2207
    %2384 = vst.msk [vmem:[#allocation3 + $0x88] sm:$0xff] %vm2366, %v2209
    %2385 = vst.msk [vmem:[#allocation3 + $0x90] sm:$0xff] %vm2366, %v2211
    %2386 = vst.msk [vmem:[#allocation3 + $0x98] sm:$0xff] %vm2366, %v2213
    %2387 = vst.msk [vmem:[#allocation3 + $0xa0] sm:$0xff] %vm2366, %v2215
    %2388 = vst.msk [vmem:[#allocation3 + $0xa8] sm:$0xff] %vm2366, %v2217
    %2389 = vst.msk [vmem:[#allocation3 + $0xb0] sm:$0xff] %vm2366, %v2219
    %2390 = vst.msk [vmem:[#allocation3 + $0xb8] sm:$0xff] %vm2366, %v2221
    %2391 = vst.msk [vmem:[#allocation3 + $0xc0] sm:$0xff] %vm2366, %v2223
    %2392 = vst.msk [vmem:[#allocation3 + $0xc8] sm:$0xff] %vm2366, %v2225
    %2393 = vst.msk [vmem:[#allocation3 + $0xd0] sm:$0xff] %vm2366, %v2227
    %2394 = vst.msk [vmem:[#allocation3 + $0xd8] sm:$0xff] %vm2366, %v2229
    %2395 = vst.msk [vmem:[#allocation3 + $0xe0] sm:$0xff] %vm2366, %v2231
    %2396 = vst.msk [vmem:[#allocation3 + $0xe8] sm:$0xff] %vm2366, %v2233
    %2397 = vst.msk [vmem:[#allocation3 + $0xf0] sm:$0xff] %vm2366, %v2235
    %2398 = vst.msk [vmem:[#allocation3 + $0xf8] sm:$0xff] %vm2366, %v2237
    %2399 = vst.msk [vmem:[#allocation3 + $0x100] sm:$0xff] %vm2366, %v2239
    %2400 = vst.msk [vmem:[#allocation3 + $0x108] sm:$0xff] %vm2366, %v2241
    %2401 = vst.msk [vmem:[#allocation3 + $0x110] sm:$0xff] %vm2366, %v2243
    %2402 = vst.msk [vmem:[#allocation3 + $0x118] sm:$0xff] %vm2366, %v2245
    %2403 = vst.msk [vmem:[#allocation3 + $0x120] sm:$0xff] %vm2366, %v2247
    %2404 = vst.msk [vmem:[#allocation3 + $0x128] sm:$0xff] %vm2366, %v2249
    %2405 = vst.msk [vmem:[#allocation3 + $0x130] sm:$0xff] %vm2366, %v2251
    %2406 = vst.msk [vmem:[#allocation3 + $0x138] sm:$0xff] %vm2366, %v2253
    %2407 = vst.msk [vmem:[#allocation3 + $0x140] sm:$0xff] %vm2366, %v2255
    %2408 = vst.msk [vmem:[#allocation3 + $0x148] sm:$0xff] %vm2366, %v2257
    %2409 = vst.msk [vmem:[#allocation3 + $0x150] sm:$0xff] %vm2366, %v2259
    %2410 = vst.msk [vmem:[#allocation3 + $0x158] sm:$0xff] %vm2366, %v2261
    %2411 = vst.msk [vmem:[#allocation3 + $0x160] sm:$0xff] %vm2366, %v2263
    %2412 = vst.msk [vmem:[#allocation3 + $0x168] sm:$0xff] %vm2366, %v2265
    %2413 = vst.msk [vmem:[#allocation3 + $0x170] sm:$0xff] %vm2366, %v2267
    %2414 = vst.msk [vmem:[#allocation3 + $0x178] sm:$0xff] %vm2366, %v2269
    %2415 = vst.msk [vmem:[#allocation3 + $0x180] sm:$0xff] %vm2366, %v2271
    %2416 = vst.msk [vmem:[#allocation3 + $0x188] sm:$0xff] %vm2366, %v2273
    %2417 = vst.msk [vmem:[#allocation3 + $0x190] sm:$0xff] %vm2366, %v2275
    %2418 = vst.msk [vmem:[#allocation3 + $0x198] sm:$0xff] %vm2366, %v2277
    %2419 = vst.msk [vmem:[#allocation3 + $0x1a0] sm:$0xff] %vm2366, %v2279
    %2420 = vst.msk [vmem:[#allocation3 + $0x1a8] sm:$0xff] %vm2366, %v2281
    %2421 = vst.msk [vmem:[#allocation3 + $0x1b0] sm:$0xff] %vm2366, %v2283
    %2422 = vst.msk [vmem:[#allocation3 + $0x1b8] sm:$0xff] %vm2366, %v2285
    %2423 = vst.msk [vmem:[#allocation3 + $0x1c0] sm:$0xff] %vm2366, %v2287
    %2424 = vst.msk [vmem:[#allocation3 + $0x1c8] sm:$0xff] %vm2366, %v2289
    %2425 = vst.msk [vmem:[#allocation3 + $0x1d0] sm:$0xff] %vm2366, %v2291
    %2426 = vst.msk [vmem:[#allocation3 + $0x1d8] sm:$0xff] %vm2366, %v2293
    %2427 = vst.msk [vmem:[#allocation3 + $0x1e0] sm:$0xff] %vm2366, %v2295
    %2428 = vst.msk [vmem:[#allocation3 + $0x1e8] sm:$0xff] %vm2366, %v2297
    %2429 = vst.msk [vmem:[#allocation3 + $0x1f0] sm:$0xff] %vm2366, %v2299
    %2430 = vst.msk [vmem:[#allocation3 + $0x1f8] sm:$0xff] %vm2366, %v2301
    %v2433 = vrot.slane %v320, 1
    %v2434 = vrot.slane %v321, 1
    %v2435 = vsel %vm537, %v2433, %v2434
    %v2436 = vrot.slane %v322, 1
    %v2437 = vsel %vm537, %v2434, %v2436
    %v2438 = vrot.slane %v374, 1
    %v2439 = vrot.slane %v375, 1
    %v2440 = vsel %vm537, %v2438, %v2439
    %v2441 = vrot.slane %v376, 1
    %v2442 = vsel %vm537, %v2439, %v2441
    %2443 = vrot.lane.b32.xlu0 %v550, 28
    %v2444 = vpop.permute.xlu0 %2443
    %2445 = vrot.lane.b32.xlu0 %v552, 28
    %v2446 = vpop.permute.xlu0 %2445
    %2447 = vrot.lane.b32.xlu0 %v555, 28
    %v2448 = vpop.permute.xlu0 %2447
    %2449 = vrot.lane.b32.xlu0 %v557, 28
    %v2450 = vpop.permute.xlu0 %2449
    %2451 = vrot.lane.b32.xlu0 %v560, 28
    %v2452 = vpop.permute.xlu0 %2451
    %2453 = vrot.lane.b32.xlu0 %v562, 28
    %v2454 = vpop.permute.xlu0 %2453
    %2455 = vrot.lane.b32.xlu0 %v565, 28
    %v2456 = vpop.permute.xlu0 %2455
    %2457 = vrot.lane.b32.xlu0 %v567, 28
    %v2458 = vpop.permute.xlu0 %2457
    %2459 = vrot.lane.b32.xlu0 %v570, 28
    %v2460 = vpop.permute.xlu0 %2459
    %2461 = vrot.lane.b32.xlu0 %v572, 28
    %v2462 = vpop.permute.xlu0 %2461
    %2463 = vrot.lane.b32.xlu0 %v575, 28
    %v2464 = vpop.permute.xlu0 %2463
    %2465 = vrot.lane.b32.xlu0 %v577, 28
    %v2466 = vpop.permute.xlu0 %2465
    %2467 = vrot.lane.b32.xlu0 %v580, 28
    %v2468 = vpop.permute.xlu0 %2467
    %2469 = vrot.lane.b32.xlu0 %v582, 28
    %v2470 = vpop.permute.xlu0 %2469
    %2471 = vrot.lane.b32.xlu0 %v585, 28
    %v2472 = vpop.permute.xlu0 %2471
    %2473 = vrot.lane.b32.xlu0 %v587, 28
    %v2474 = vpop.permute.xlu0 %2473
    %2475 = vrot.lane.b32.xlu0 %v590, 28
    %v2476 = vpop.permute.xlu0 %2475
    %2477 = vrot.lane.b32.xlu0 %v592, 28
    %v2478 = vpop.permute.xlu0 %2477
    %2479 = vrot.lane.b32.xlu0 %v595, 28
    %v2480 = vpop.permute.xlu0 %2479
    %2481 = vrot.lane.b32.xlu0 %v597, 28
    %v2482 = vpop.permute.xlu0 %2481
    %2483 = vrot.lane.b32.xlu0 %v600, 28
    %v2484 = vpop.permute.xlu0 %2483
    %2485 = vrot.lane.b32.xlu0 %v602, 28
    %v2486 = vpop.permute.xlu0 %2485
    %2487 = vrot.lane.b32.xlu0 %v605, 28
    %v2488 = vpop.permute.xlu0 %2487
    %2489 = vrot.lane.b32.xlu0 %v607, 28
    %v2490 = vpop.permute.xlu0 %2489
    %2491 = vrot.lane.b32.xlu0 %v610, 28
    %v2492 = vpop.permute.xlu0 %2491
    %2493 = vrot.lane.b32.xlu0 %v612, 28
    %v2494 = vpop.permute.xlu0 %2493
    %2495 = vrot.lane.b32.xlu0 %v615, 28
    %v2496 = vpop.permute.xlu0 %2495
    %2497 = vrot.lane.b32.xlu0 %v617, 28
    %v2498 = vpop.permute.xlu0 %2497
    %2499 = vrot.lane.b32.xlu0 %v1638, 28
    %v2500 = vpop.permute.xlu0 %2499
    %2501 = vrot.lane.b32.xlu0 %v1640, 28
    %v2502 = vpop.permute.xlu0 %2501
    %2503 = vrot.lane.b32.xlu0 %v2435, 28
    %v2504 = vpop.permute.xlu0 %2503
    %2505 = vrot.lane.b32.xlu0 %v2437, 28
    %v2506 = vpop.permute.xlu0 %2505
    %2507 = vrot.lane.b32.xlu0 %v630, 28
    %v2508 = vpop.permute.xlu0 %2507
    %2509 = vrot.lane.b32.xlu0 %v632, 28
    %v2510 = vpop.permute.xlu0 %2509
    %2511 = vrot.lane.b32.xlu0 %v635, 28
    %v2512 = vpop.permute.xlu0 %2511
    %2513 = vrot.lane.b32.xlu0 %v637, 28
    %v2514 = vpop.permute.xlu0 %2513
    %2515 = vrot.lane.b32.xlu0 %v640, 28
    %v2516 = vpop.permute.xlu0 %2515
    %2517 = vrot.lane.b32.xlu0 %v642, 28
    %v2518 = vpop.permute.xlu0 %2517
    %2519 = vrot.lane.b32.xlu0 %v645, 28
    %v2520 = vpop.permute.xlu0 %2519
    %2521 = vrot.lane.b32.xlu0 %v647, 28
    %v2522 = vpop.permute.xlu0 %2521
    %2523 = vrot.lane.b32.xlu0 %v650, 28
    %v2524 = vpop.permute.xlu0 %2523
    %2525 = vrot.lane.b32.xlu0 %v652, 28
    %v2526 = vpop.permute.xlu0 %2525
    %2527 = vrot.lane.b32.xlu0 %v655, 28
    %v2528 = vpop.permute.xlu0 %2527
    %2529 = vrot.lane.b32.xlu0 %v657, 28
    %v2530 = vpop.permute.xlu0 %2529
    %2531 = vrot.lane.b32.xlu0 %v660, 28
    %v2532 = vpop.permute.xlu0 %2531
    %2533 = vrot.lane.b32.xlu0 %v662, 28
    %v2534 = vpop.permute.xlu0 %2533
    %2535 = vrot.lane.b32.xlu0 %v665, 28
    %v2536 = vpop.permute.xlu0 %2535
    %2537 = vrot.lane.b32.xlu0 %v667, 28
    %v2538 = vpop.permute.xlu0 %2537
    %2539 = vrot.lane.b32.xlu0 %v670, 28
    %v2540 = vpop.permute.xlu0 %2539
    %2541 = vrot.lane.b32.xlu0 %v672, 28
    %v2542 = vpop.permute.xlu0 %2541
    %2543 = vrot.lane.b32.xlu0 %v675, 28
    %v2544 = vpop.permute.xlu0 %2543
    %2545 = vrot.lane.b32.xlu0 %v677, 28
    %v2546 = vpop.permute.xlu0 %2545
    %2547 = vrot.lane.b32.xlu0 %v680, 28
    %v2548 = vpop.permute.xlu0 %2547
    %2549 = vrot.lane.b32.xlu0 %v682, 28
    %v2550 = vpop.permute.xlu0 %2549
    %2551 = vrot.lane.b32.xlu0 %v685, 28
    %v2552 = vpop.permute.xlu0 %2551
    %2553 = vrot.lane.b32.xlu0 %v687, 28
    %v2554 = vpop.permute.xlu0 %2553
    %2555 = vrot.lane.b32.xlu0 %v690, 28
    %v2556 = vpop.permute.xlu0 %2555
    %2557 = vrot.lane.b32.xlu0 %v692, 28
    %v2558 = vpop.permute.xlu0 %2557
    %2559 = vrot.lane.b32.xlu0 %v695, 28
    %v2560 = vpop.permute.xlu0 %2559
    %2561 = vrot.lane.b32.xlu0 %v697, 28
    %v2562 = vpop.permute.xlu0 %2561
    %2563 = vrot.lane.b32.xlu0 %v1643, 28
    %v2564 = vpop.permute.xlu0 %2563
    %2565 = vrot.lane.b32.xlu0 %v1645, 28
    %v2566 = vpop.permute.xlu0 %2565
    %2567 = vrot.lane.b32.xlu0 %v2440, 28
    %v2568 = vpop.permute.xlu0 %2567
    %2569 = vrot.lane.b32.xlu0 %v2442, 28
    %v2570 = vpop.permute.xlu0 %2569
    %vm2635 = vcmask 261344
    %2636 = vst.msk [vmem:[#allocation3] sm:$0xff] %vm2635, %v2444
    %2637 = vst.msk [vmem:[#allocation3 + $0x8] sm:$0xff] %vm2635, %v2446
    %2638 = vst.msk [vmem:[#allocation3 + $0x10] sm:$0xff] %vm2635, %v2448
    %2639 = vst.msk [vmem:[#allocation3 + $0x18] sm:$0xff] %vm2635, %v2450
    %2640 = vst.msk [vmem:[#allocation3 + $0x20] sm:$0xff] %vm2635, %v2452
    %2641 = vst.msk [vmem:[#allocation3 + $0x28] sm:$0xff] %vm2635, %v2454
    %2642 = vst.msk [vmem:[#allocation3 + $0x30] sm:$0xff] %vm2635, %v2456
    %2643 = vst.msk [vmem:[#allocation3 + $0x38] sm:$0xff] %vm2635, %v2458
    %2644 = vst.msk [vmem:[#allocation3 + $0x40] sm:$0xff] %vm2635, %v2460
    %2645 = vst.msk [vmem:[#allocation3 + $0x48] sm:$0xff] %vm2635, %v2462
    %2646 = vst.msk [vmem:[#allocation3 + $0x50] sm:$0xff] %vm2635, %v2464
    %2647 = vst.msk [vmem:[#allocation3 + $0x58] sm:$0xff] %vm2635, %v2466
    %2648 = vst.msk [vmem:[#allocation3 + $0x60] sm:$0xff] %vm2635, %v2468
    %2649 = vst.msk [vmem:[#allocation3 + $0x68] sm:$0xff] %vm2635, %v2470
    %2650 = vst.msk [vmem:[#allocation3 + $0x70] sm:$0xff] %vm2635, %v2472
    %2651 = vst.msk [vmem:[#allocation3 + $0x78] sm:$0xff] %vm2635, %v2474
    %2652 = vst.msk [vmem:[#allocation3 + $0x80] sm:$0xff] %vm2635, %v2476
    %2653 = vst.msk [vmem:[#allocation3 + $0x88] sm:$0xff] %vm2635, %v2478
    %2654 = vst.msk [vmem:[#allocation3 + $0x90] sm:$0xff] %vm2635, %v2480
    %2655 = vst.msk [vmem:[#allocation3 + $0x98] sm:$0xff] %vm2635, %v2482
    %2656 = vst.msk [vmem:[#allocation3 + $0xa0] sm:$0xff] %vm2635, %v2484
    %2657 = vst.msk [vmem:[#allocation3 + $0xa8] sm:$0xff] %vm2635, %v2486
    %2658 = vst.msk [vmem:[#allocation3 + $0xb0] sm:$0xff] %vm2635, %v2488
    %2659 = vst.msk [vmem:[#allocation3 + $0xb8] sm:$0xff] %vm2635, %v2490
    %2660 = vst.msk [vmem:[#allocation3 + $0xc0] sm:$0xff] %vm2635, %v2492
    %2661 = vst.msk [vmem:[#allocation3 + $0xc8] sm:$0xff] %vm2635, %v2494
    %2662 = vst.msk [vmem:[#allocation3 + $0xd0] sm:$0xff] %vm2635, %v2496
    %2663 = vst.msk [vmem:[#allocation3 + $0xd8] sm:$0xff] %vm2635, %v2498
    %2664 = vst.msk [vmem:[#allocation3 + $0xe0] sm:$0xff] %vm2635, %v2500
    %2665 = vst.msk [vmem:[#allocation3 + $0xe8] sm:$0xff] %vm2635, %v2502
    %2666 = vst.msk [vmem:[#allocation3 + $0xf0] sm:$0xff] %vm2635, %v2504
    %2667 = vst.msk [vmem:[#allocation3 + $0xf8] sm:$0xff] %vm2635, %v2506
    %2668 = vst.msk [vmem:[#allocation3 + $0x100] sm:$0xff] %vm2635, %v2508
    %2669 = vst.msk [vmem:[#allocation3 + $0x108] sm:$0xff] %vm2635, %v2510
    %2670 = vst.msk [vmem:[#allocation3 + $0x110] sm:$0xff] %vm2635, %v2512
    %2671 = vst.msk [vmem:[#allocation3 + $0x118] sm:$0xff] %vm2635, %v2514
    %2672 = vst.msk [vmem:[#allocation3 + $0x120] sm:$0xff] %vm2635, %v2516
    %2673 = vst.msk [vmem:[#allocation3 + $0x128] sm:$0xff] %vm2635, %v2518
    %2674 = vst.msk [vmem:[#allocation3 + $0x130] sm:$0xff] %vm2635, %v2520
    %2675 = vst.msk [vmem:[#allocation3 + $0x138] sm:$0xff] %vm2635, %v2522
    %2676 = vst.msk [vmem:[#allocation3 + $0x140] sm:$0xff] %vm2635, %v2524
    %2677 = vst.msk [vmem:[#allocation3 + $0x148] sm:$0xff] %vm2635, %v2526
    %2678 = vst.msk [vmem:[#allocation3 + $0x150] sm:$0xff] %vm2635, %v2528
    %2679 = vst.msk [vmem:[#allocation3 + $0x158] sm:$0xff] %vm2635, %v2530
    %2680 = vst.msk [vmem:[#allocation3 + $0x160] sm:$0xff] %vm2635, %v2532
    %2681 = vst.msk [vmem:[#allocation3 + $0x168] sm:$0xff] %vm2635, %v2534
    %2682 = vst.msk [vmem:[#allocation3 + $0x170] sm:$0xff] %vm2635, %v2536
    %2683 = vst.msk [vmem:[#allocation3 + $0x178] sm:$0xff] %vm2635, %v2538
    %2684 = vst.msk [vmem:[#allocation3 + $0x180] sm:$0xff] %vm2635, %v2540
    %2685 = vst.msk [vmem:[#allocation3 + $0x188] sm:$0xff] %vm2635, %v2542
    %2686 = vst.msk [vmem:[#allocation3 + $0x190] sm:$0xff] %vm2635, %v2544
    %2687 = vst.msk [vmem:[#allocation3 + $0x198] sm:$0xff] %vm2635, %v2546
    %2688 = vst.msk [vmem:[#allocation3 + $0x1a0] sm:$0xff] %vm2635, %v2548
    %2689 = vst.msk [vmem:[#allocation3 + $0x1a8] sm:$0xff] %vm2635, %v2550
    %2690 = vst.msk [vmem:[#allocation3 + $0x1b0] sm:$0xff] %vm2635, %v2552
    %2691 = vst.msk [vmem:[#allocation3 + $0x1b8] sm:$0xff] %vm2635, %v2554
    %2692 = vst.msk [vmem:[#allocation3 + $0x1c0] sm:$0xff] %vm2635, %v2556
    %2693 = vst.msk [vmem:[#allocation3 + $0x1c8] sm:$0xff] %vm2635, %v2558
    %2694 = vst.msk [vmem:[#allocation3 + $0x1d0] sm:$0xff] %vm2635, %v2560
    %2695 = vst.msk [vmem:[#allocation3 + $0x1d8] sm:$0xff] %vm2635, %v2562
    %2696 = vst.msk [vmem:[#allocation3 + $0x1e0] sm:$0xff] %vm2635, %v2564
    %2697 = vst.msk [vmem:[#allocation3 + $0x1e8] sm:$0xff] %vm2635, %v2566
    %2698 = vst.msk [vmem:[#allocation3 + $0x1f0] sm:$0xff] %vm2635, %v2568
    %2699 = vst.msk [vmem:[#allocation3 + $0x1f8] sm:$0xff] %vm2635, %v2570
    %v2700 = vrot.slane %v320, 2
    %v2701 = vrot.slane %v321, 2
    %v2702 = vsel %vm955, %v2700, %v2701
    %v2703 = vrot.slane %v322, 2
    %v2704 = vsel %vm955, %v2701, %v2703
    %v2705 = vrot.slane %v374, 2
    %v2706 = vrot.slane %v375, 2
    %v2707 = vsel %vm955, %v2705, %v2706
    %v2708 = vrot.slane %v376, 2
    %v2709 = vsel %vm955, %v2706, %v2708
    %2710 = vrot.lane.b32.xlu0 %v968, 32
    %v2711 = vpop.permute.xlu0 %2710
    %2712 = vrot.lane.b32.xlu0 %v970, 32
    %v2713 = vpop.permute.xlu0 %2712
    %2714 = vrot.lane.b32.xlu0 %v973, 32
    %v2715 = vpop.permute.xlu0 %2714
    %2716 = vrot.lane.b32.xlu0 %v975, 32
    %v2717 = vpop.permute.xlu0 %2716
    %2718 = vrot.lane.b32.xlu0 %v978, 32
    %v2719 = vpop.permute.xlu0 %2718
    %2720 = vrot.lane.b32.xlu0 %v980, 32
    %v2721 = vpop.permute.xlu0 %2720
    %2722 = vrot.lane.b32.xlu0 %v983, 32
    %v2723 = vpop.permute.xlu0 %2722
    %2724 = vrot.lane.b32.xlu0 %v985, 32
    %v2725 = vpop.permute.xlu0 %2724
    %2726 = vrot.lane.b32.xlu0 %v988, 32
    %v2727 = vpop.permute.xlu0 %2726
    %2728 = vrot.lane.b32.xlu0 %v990, 32
    %v2729 = vpop.permute.xlu0 %2728
    %2730 = vrot.lane.b32.xlu0 %v993, 32
    %v2731 = vpop.permute.xlu0 %2730
    %2732 = vrot.lane.b32.xlu0 %v995, 32
    %v2733 = vpop.permute.xlu0 %2732
    %2734 = vrot.lane.b32.xlu0 %v998, 32
    %v2735 = vpop.permute.xlu0 %2734
    %2736 = vrot.lane.b32.xlu0 %v1000, 32
    %v2737 = vpop.permute.xlu0 %2736
    %2738 = vrot.lane.b32.xlu0 %v1003, 32
    %v2739 = vpop.permute.xlu0 %2738
    %2740 = vrot.lane.b32.xlu0 %v1005, 32
    %v2741 = vpop.permute.xlu0 %2740
    %2742 = vrot.lane.b32.xlu0 %v1008, 32
    %v2743 = vpop.permute.xlu0 %2742
    %2744 = vrot.lane.b32.xlu0 %v1010, 32
    %v2745 = vpop.permute.xlu0 %2744
    %2746 = vrot.lane.b32.xlu0 %v1013, 32
    %v2747 = vpop.permute.xlu0 %2746
    %2748 = vrot.lane.b32.xlu0 %v1015, 32
    %v2749 = vpop.permute.xlu0 %2748
    %2750 = vrot.lane.b32.xlu0 %v1018, 32
    %v2751 = vpop.permute.xlu0 %2750
    %2752 = vrot.lane.b32.xlu0 %v1020, 32
    %v2753 = vpop.permute.xlu0 %2752
    %2754 = vrot.lane.b32.xlu0 %v1023, 32
    %v2755 = vpop.permute.xlu0 %2754
    %2756 = vrot.lane.b32.xlu0 %v1025, 32
    %v2757 = vpop.permute.xlu0 %2756
    %2758 = vrot.lane.b32.xlu0 %v1028, 32
    %v2759 = vpop.permute.xlu0 %2758
    %2760 = vrot.lane.b32.xlu0 %v1030, 32
    %v2761 = vpop.permute.xlu0 %2760
    %2762 = vrot.lane.b32.xlu0 %v1033, 32
    %v2763 = vpop.permute.xlu0 %2762
    %2764 = vrot.lane.b32.xlu0 %v1035, 32
    %v2765 = vpop.permute.xlu0 %2764
    %2766 = vrot.lane.b32.xlu0 %v1905, 32
    %v2767 = vpop.permute.xlu0 %2766
    %2768 = vrot.lane.b32.xlu0 %v1907, 32
    %v2769 = vpop.permute.xlu0 %2768
    %2770 = vrot.lane.b32.xlu0 %v2702, 32
    %v2771 = vpop.permute.xlu0 %2770
    %2772 = vrot.lane.b32.xlu0 %v2704, 32
    %v2773 = vpop.permute.xlu0 %2772
    %2774 = vrot.lane.b32.xlu0 %v1048, 32
    %v2775 = vpop.permute.xlu0 %2774
    %2776 = vrot.lane.b32.xlu0 %v1050, 32
    %v2777 = vpop.permute.xlu0 %2776
    %2778 = vrot.lane.b32.xlu0 %v1053, 32
    %v2779 = vpop.permute.xlu0 %2778
    %2780 = vrot.lane.b32.xlu0 %v1055, 32
    %v2781 = vpop.permute.xlu0 %2780
    %2782 = vrot.lane.b32.xlu0 %v1058, 32
    %v2783 = vpop.permute.xlu0 %2782
    %2784 = vrot.lane.b32.xlu0 %v1060, 32
    %v2785 = vpop.permute.xlu0 %2784
    %2786 = vrot.lane.b32.xlu0 %v1063, 32
    %v2787 = vpop.permute.xlu0 %2786
    %2788 = vrot.lane.b32.xlu0 %v1065, 32
    %v2789 = vpop.permute.xlu0 %2788
    %2790 = vrot.lane.b32.xlu0 %v1068, 32
    %v2791 = vpop.permute.xlu0 %2790
    %2792 = vrot.lane.b32.xlu0 %v1070, 32
    %v2793 = vpop.permute.xlu0 %2792
    %2794 = vrot.lane.b32.xlu0 %v1073, 32
    %v2795 = vpop.permute.xlu0 %2794
    %2796 = vrot.lane.b32.xlu0 %v1075, 32
    %v2797 = vpop.permute.xlu0 %2796
    %2798 = vrot.lane.b32.xlu0 %v1078, 32
    %v2799 = vpop.permute.xlu0 %2798
    %2800 = vrot.lane.b32.xlu0 %v1080, 32
    %v2801 = vpop.permute.xlu0 %2800
    %2802 = vrot.lane.b32.xlu0 %v1083, 32
    %v2803 = vpop.permute.xlu0 %2802
    %2804 = vrot.lane.b32.xlu0 %v1085, 32
    %v2805 = vpop.permute.xlu0 %2804
    %2806 = vrot.lane.b32.xlu0 %v1088, 32
    %v2807 = vpop.permute.xlu0 %2806
    %2808 = vrot.lane.b32.xlu0 %v1090, 32
    %v2809 = vpop.permute.xlu0 %2808
    %2810 = vrot.lane.b32.xlu0 %v1093, 32
    %v2811 = vpop.permute.xlu0 %2810
    %2812 = vrot.lane.b32.xlu0 %v1095, 32
    %v2813 = vpop.permute.xlu0 %2812
    %2814 = vrot.lane.b32.xlu0 %v1098, 32
    %v2815 = vpop.permute.xlu0 %2814
    %2816 = vrot.lane.b32.xlu0 %v1100, 32
    %v2817 = vpop.permute.xlu0 %2816
    %2818 = vrot.lane.b32.xlu0 %v1103, 32
    %v2819 = vpop.permute.xlu0 %2818
    %2820 = vrot.lane.b32.xlu0 %v1105, 32
    %v2821 = vpop.permute.xlu0 %2820
    %2822 = vrot.lane.b32.xlu0 %v1108, 32
    %v2823 = vpop.permute.xlu0 %2822
    %2824 = vrot.lane.b32.xlu0 %v1110, 32
    %v2825 = vpop.permute.xlu0 %2824
    %2826 = vrot.lane.b32.xlu0 %v1113, 32
    %v2827 = vpop.permute.xlu0 %2826
    %2828 = vrot.lane.b32.xlu0 %v1115, 32
    %v2829 = vpop.permute.xlu0 %2828
    %2830 = vrot.lane.b32.xlu0 %v1910, 32
    %v2831 = vpop.permute.xlu0 %2830
    %2832 = vrot.lane.b32.xlu0 %v1912, 32
    %v2833 = vpop.permute.xlu0 %2832
    %2834 = vrot.lane.b32.xlu0 %v2707, 32
    %v2835 = vpop.permute.xlu0 %2834
    %2836 = vrot.lane.b32.xlu0 %v2709, 32
    %v2837 = vpop.permute.xlu0 %2836
    %vm2902 = vcmask 294144
    %2903 = vst.msk [vmem:[#allocation3] sm:$0xff] %vm2902, %v2711
    %2904 = vst.msk [vmem:[#allocation3 + $0x8] sm:$0xff] %vm2902, %v2713
    %2905 = vst.msk [vmem:[#allocation3 + $0x10] sm:$0xff] %vm2902, %v2715
    %2906 = vst.msk [vmem:[#allocation3 + $0x18] sm:$0xff] %vm2902, %v2717
    %2907 = vst.msk [vmem:[#allocation3 + $0x20] sm:$0xff] %vm2902, %v2719
    %2908 = vst.msk [vmem:[#allocation3 + $0x28] sm:$0xff] %vm2902, %v2721
    %2909 = vst.msk [vmem:[#allocation3 + $0x30] sm:$0xff] %vm2902, %v2723
    %2910 = vst.msk [vmem:[#allocation3 + $0x38] sm:$0xff] %vm2902, %v2725
    %2911 = vst.msk [vmem:[#allocation3 + $0x40] sm:$0xff] %vm2902, %v2727
    %2912 = vst.msk [vmem:[#allocation3 + $0x48] sm:$0xff] %vm2902, %v2729
    %2913 = vst.msk [vmem:[#allocation3 + $0x50] sm:$0xff] %vm2902, %v2731
    %2914 = vst.msk [vmem:[#allocation3 + $0x58] sm:$0xff] %vm2902, %v2733
    %2915 = vst.msk [vmem:[#allocation3 + $0x60] sm:$0xff] %vm2902, %v2735
    %2916 = vst.msk [vmem:[#allocation3 + $0x68] sm:$0xff] %vm2902, %v2737
    %2917 = vst.msk [vmem:[#allocation3 + $0x70] sm:$0xff] %vm2902, %v2739
    %2918 = vst.msk [vmem:[#allocation3 + $0x78] sm:$0xff] %vm2902, %v2741
    %2919 = vst.msk [vmem:[#allocation3 + $0x80] sm:$0xff] %vm2902, %v2743
    %2920 = vst.msk [vmem:[#allocation3 + $0x88] sm:$0xff] %vm2902, %v2745
    %2921 = vst.msk [vmem:[#allocation3 + $0x90] sm:$0xff] %vm2902, %v2747
    %2922 = vst.msk [vmem:[#allocation3 + $0x98] sm:$0xff] %vm2902, %v2749
    %2923 = vst.msk [vmem:[#allocation3 + $0xa0] sm:$0xff] %vm2902, %v2751
    %2924 = vst.msk [vmem:[#allocation3 + $0xa8] sm:$0xff] %vm2902, %v2753
    %2925 = vst.msk [vmem:[#allocation3 + $0xb0] sm:$0xff] %vm2902, %v2755
    %2926 = vst.msk [vmem:[#allocation3 + $0xb8] sm:$0xff] %vm2902, %v2757
    %2927 = vst.msk [vmem:[#allocation3 + $0xc0] sm:$0xff] %vm2902, %v2759
    %2928 = vst.msk [vmem:[#allocation3 + $0xc8] sm:$0xff] %vm2902, %v2761
    %2929 = vst.msk [vmem:[#allocation3 + $0xd0] sm:$0xff] %vm2902, %v2763
    %2930 = vst.msk [vmem:[#allocation3 + $0xd8] sm:$0xff] %vm2902, %v2765
    %2931 = vst.msk [vmem:[#allocation3 + $0xe0] sm:$0xff] %vm2902, %v2767
    %2932 = vst.msk [vmem:[#allocation3 + $0xe8] sm:$0xff] %vm2902, %v2769
    %2933 = vst.msk [vmem:[#allocation3 + $0xf0] sm:$0xff] %vm2902, %v2771
    %2934 = vst.msk [vmem:[#allocation3 + $0xf8] sm:$0xff] %vm2902, %v2773
    %2935 = vst.msk [vmem:[#allocation3 + $0x100] sm:$0xff] %vm2902, %v2775
    %2936 = vst.msk [vmem:[#allocation3 + $0x108] sm:$0xff] %vm2902, %v2777
    %2937 = vst.msk [vmem:[#allocation3 + $0x110] sm:$0xff] %vm2902, %v2779
    %2938 = vst.msk [vmem:[#allocation3 + $0x118] sm:$0xff] %vm2902, %v2781
    %2939 = vst.msk [vmem:[#allocation3 + $0x120] sm:$0xff] %vm2902, %v2783
    %2940 = vst.msk [vmem:[#allocation3 + $0x128] sm:$0xff] %vm2902, %v2785
    %2941 = vst.msk [vmem:[#allocation3 + $0x130] sm:$0xff] %vm2902, %v2787
    %2942 = vst.msk [vmem:[#allocation3 + $0x138] sm:$0xff] %vm2902, %v2789
    %2943 = vst.msk [vmem:[#allocation3 + $0x140] sm:$0xff] %vm2902, %v2791
    %2944 = vst.msk [vmem:[#allocation3 + $0x148] sm:$0xff] %vm2902, %v2793
    %2945 = vst.msk [vmem:[#allocation3 + $0x150] sm:$0xff] %vm2902, %v2795
    %2946 = vst.msk [vmem:[#allocation3 + $0x158] sm:$0xff] %vm2902, %v2797
    %2947 = vst.msk [vmem:[#allocation3 + $0x160] sm:$0xff] %vm2902, %v2799
    %2948 = vst.msk [vmem:[#allocation3 + $0x168] sm:$0xff] %vm2902, %v2801
    %2949 = vst.msk [vmem:[#allocation3 + $0x170] sm:$0xff] %vm2902, %v2803
    %2950 = vst.msk [vmem:[#allocation3 + $0x178] sm:$0xff] %vm2902, %v2805
    %2951 = vst.msk [vmem:[#allocation3 + $0x180] sm:$0xff] %vm2902, %v2807
    %2952 = vst.msk [vmem:[#allocation3 + $0x188] sm:$0xff] %vm2902, %v2809
    %2953 = vst.msk [vmem:[#allocation3 + $0x190] sm:$0xff] %vm2902, %v2811
    %2954 = vst.msk [vmem:[#allocation3 + $0x198] sm:$0xff] %vm2902, %v2813
    %2955 = vst.msk [vmem:[#allocation3 + $0x1a0] sm:$0xff] %vm2902, %v2815
    %2956 = vst.msk [vmem:[#allocation3 + $0x1a8] sm:$0xff] %vm2902, %v2817
    %2957 = vst.msk [vmem:[#allocation3 + $0x1b0] sm:$0xff] %vm2902, %v2819
    %2958 = vst.msk [vmem:[#allocation3 + $0x1b8] sm:$0xff] %vm2902, %v2821
    %2959 = vst.msk [vmem:[#allocation3 + $0x1c0] sm:$0xff] %vm2902, %v2823
    %2960 = vst.msk [vmem:[#allocation3 + $0x1c8] sm:$0xff] %vm2902, %v2825
    %2961 = vst.msk [vmem:[#allocation3 + $0x1d0] sm:$0xff] %vm2902, %v2827
    %2962 = vst.msk [vmem:[#allocation3 + $0x1d8] sm:$0xff] %vm2902, %v2829
    %2963 = vst.msk [vmem:[#allocation3 + $0x1e0] sm:$0xff] %vm2902, %v2831
    %2964 = vst.msk [vmem:[#allocation3 + $0x1e8] sm:$0xff] %vm2902, %v2833
    %2965 = vst.msk [vmem:[#allocation3 + $0x1f0] sm:$0xff] %vm2902, %v2835
    %2966 = vst.msk [vmem:[#allocation3 + $0x1f8] sm:$0xff] %vm2902, %v2837
    %v2967 = vld [vmem:[#allocation3] sm:$0xff]
    %v2968 = vld [vmem:[#allocation3 + $0x8] sm:$0xff]
    %v2969 = vld [vmem:[#allocation3 + $0x10] sm:$0xff]
    %v2970 = vld [vmem:[#allocation3 + $0x18] sm:$0xff]
    %v2971 = vld [vmem:[#allocation3 + $0x20] sm:$0xff]
    %v2972 = vld [vmem:[#allocation3 + $0x28] sm:$0xff]
    %v2973 = vld [vmem:[#allocation3 + $0x30] sm:$0xff]
    %v2974 = vld [vmem:[#allocation3 + $0x38] sm:$0xff]
    %v2975 = vld [vmem:[#allocation3 + $0x40] sm:$0xff]
    %v2976 = vld [vmem:[#allocation3 + $0x48] sm:$0xff]
    %v2977 = vld [vmem:[#allocation3 + $0x50] sm:$0xff]
    %v2978 = vld [vmem:[#allocation3 + $0x58] sm:$0xff]
    %v2979 = vld [vmem:[#allocation3 + $0x60] sm:$0xff]
    %v2980 = vld [vmem:[#allocation3 + $0x68] sm:$0xff]
    %v2981 = vld [vmem:[#allocation3 + $0x70] sm:$0xff]
    %v2982 = vld [vmem:[#allocation3 + $0x78] sm:$0xff]
    %v2983 = vld [vmem:[#allocation3 + $0x80] sm:$0xff]
    %v2984 = vld [vmem:[#allocation3 + $0x88] sm:$0xff]
    %v2985 = vld [vmem:[#allocation3 + $0x90] sm:$0xff]
    %v2986 = vld [vmem:[#allocation3 + $0x98] sm:$0xff]
    %v2987 = vld [vmem:[#allocation3 + $0xa0] sm:$0xff]
    %v2988 = vld [vmem:[#allocation3 + $0xa8] sm:$0xff]
    %v2989 = vld [vmem:[#allocation3 + $0xb0] sm:$0xff]
    %v2990 = vld [vmem:[#allocation3 + $0xb8] sm:$0xff]
    %v2991 = vld [vmem:[#allocation3 + $0xc0] sm:$0xff]
    %v2992 = vld [vmem:[#allocation3 + $0xc8] sm:$0xff]
    %v2993 = vld [vmem:[#allocation3 + $0xd0] sm:$0xff]
    %v2994 = vld [vmem:[#allocation3 + $0xd8] sm:$0xff]
    %v2995 = vld [vmem:[#allocation3 + $0xe0] sm:$0xff]
    %v2996 = vld [vmem:[#allocation3 + $0xe8] sm:$0xff]
    %v2997 = vld [vmem:[#allocation3 + $0xf0] sm:$0xff]
    %v2998 = vld [vmem:[#allocation3 + $0xf8] sm:$0xff]
    %v2999 = vld [vmem:[#allocation3 + $0x100] sm:$0xff]
    %v3000 = vld [vmem:[#allocation3 + $0x108] sm:$0xff]
    %v3001 = vld [vmem:[#allocation3 + $0x110] sm:$0xff]
    %v3002 = vld [vmem:[#allocation3 + $0x118] sm:$0xff]
    %v3003 = vld [vmem:[#allocation3 + $0x120] sm:$0xff]
    %v3004 = vld [vmem:[#allocation3 + $0x128] sm:$0xff]
    %v3005 = vld [vmem:[#allocation3 + $0x130] sm:$0xff]
    %v3006 = vld [vmem:[#allocation3 + $0x138] sm:$0xff]
    %v3007 = vld [vmem:[#allocation3 + $0x140] sm:$0xff]
    %v3008 = vld [vmem:[#allocation3 + $0x148] sm:$0xff]
    %v3009 = vld [vmem:[#allocation3 + $0x150] sm:$0xff]
    %v3010 = vld [vmem:[#allocation3 + $0x158] sm:$0xff]
    %v3011 = vld [vmem:[#allocation3 + $0x160] sm:$0xff]
    %v3012 = vld [vmem:[#allocation3 + $0x168] sm:$0xff]
    %v3013 = vld [vmem:[#allocation3 + $0x170] sm:$0xff]
    %v3014 = vld [vmem:[#allocation3 + $0x178] sm:$0xff]
    %v3015 = vld [vmem:[#allocation3 + $0x180] sm:$0xff]
    %v3016 = vld [vmem:[#allocation3 + $0x188] sm:$0xff]
    %v3017 = vld [vmem:[#allocation3 + $0x190] sm:$0xff]
    %v3018 = vld [vmem:[#allocation3 + $0x198] sm:$0xff]
    %v3019 = vld [vmem:[#allocation3 + $0x1a0] sm:$0xff]
    %v3020 = vld [vmem:[#allocation3 + $0x1a8] sm:$0xff]
    %v3021 = vld [vmem:[#allocation3 + $0x1b0] sm:$0xff]
    %v3022 = vld [vmem:[#allocation3 + $0x1b8] sm:$0xff]
    %v3023 = vld [vmem:[#allocation3 + $0x1c0] sm:$0xff]
    %v3024 = vld [vmem:[#allocation3 + $0x1c8] sm:$0xff]
    %v3025 = vld [vmem:[#allocation3 + $0x1d0] sm:$0xff]
    %v3026 = vld [vmem:[#allocation3 + $0x1d8] sm:$0xff]
    %v3027 = vld [vmem:[#allocation3 + $0x1e0] sm:$0xff]
    %v3028 = vld [vmem:[#allocation3 + $0x1e8] sm:$0xff]
    %v3029 = vld [vmem:[#allocation3 + $0x1f0] sm:$0xff]
    %v3030 = vld [vmem:[#allocation3 + $0x1f8] sm:$0xff]
    %v3031 = vld [vmem:[%s1] sm:$0xff]
    %v3032 = vld [vmem:[%s1 + $0x8] sm:$0xff]
    %v3033 = vld [vmem:[%s1 + $0x10] sm:$0xff]
    %v3034 = vld [vmem:[%s1 + $0x18] sm:$0xff]
    %v3035 = vld [vmem:[%s1 + $0x20] sm:$0xf]
    %v3036 = vld [vmem:[%s2] sm:$0x1]
    %v3038 = vlaneseq
    %v3039 = vshrl.u32 %v3038, 7
    %v3040 = vsub.s32 0, %v3039
    %v3041 = vrot.slane %v3036, %v3040
    %vm3043 = vcmask 293888
    %v3045 = vsel %vm3043, %v2967, 0
    %v3048 = vsel %vm3043, %v2968, 0
    %v3051 = vsel %vm3043, %v2969, 0
    %v3054 = vsel %vm3043, %v2970, 0
    %v3057 = vsel %vm3043, %v2971, 0
    %v3060 = vsel %vm3043, %v2972, 0
    %v3063 = vsel %vm3043, %v2973, 0
    %v3066 = vsel %vm3043, %v2974, 0
    %v3069 = vsel %vm3043, %v2975, 0
    %v3072 = vsel %vm3043, %v2976, 0
    %v3075 = vsel %vm3043, %v2977, 0
    %v3078 = vsel %vm3043, %v2978, 0
    %v3081 = vsel %vm3043, %v2979, 0
    %v3084 = vsel %vm3043, %v2980, 0
    %v3087 = vsel %vm3043, %v2981, 0
    %v3090 = vsel %vm3043, %v2982, 0
    %v3093 = vsel %vm3043, %v2983, 0
    %v3096 = vsel %vm3043, %v2984, 0
    %v3099 = vsel %vm3043, %v2985, 0
    %v3102 = vsel %vm3043, %v2986, 0
    %v3105 = vsel %vm3043, %v2987, 0
    %v3108 = vsel %vm3043, %v2988, 0
    %v3111 = vsel %vm3043, %v2989, 0
    %v3114 = vsel %vm3043, %v2990, 0
    %v3117 = vsel %vm3043, %v2991, 0
    %v3120 = vsel %vm3043, %v2992, 0
    %v3123 = vsel %vm3043, %v2993, 0
    %v3126 = vsel %vm3043, %v2994, 0
    %v3129 = vsel %vm3043, %v2995, 0
    %v3132 = vsel %vm3043, %v2996, 0
    %v3135 = vsel %vm3043, %v2997, 0
    %v3138 = vsel %vm3043, %v2998, 0
    %v3141 = vsel %vm3043, %v2999, 0
    %v3144 = vsel %vm3043, %v3000, 0
    %v3147 = vsel %vm3043, %v3001, 0
    %v3150 = vsel %vm3043, %v3002, 0
    %v3153 = vsel %vm3043, %v3003, 0
    %v3156 = vsel %vm3043, %v3004, 0
    %v3159 = vsel %vm3043, %v3005, 0
    %v3162 = vsel %vm3043, %v3006, 0
    %v3165 = vsel %vm3043, %v3007, 0
    %v3168 = vsel %vm3043, %v3008, 0
    %v3171 = vsel %vm3043, %v3009, 0
    %v3174 = vsel %vm3043, %v3010, 0
    %v3177 = vsel %vm3043, %v3011, 0
    %v3180 = vsel %vm3043, %v3012, 0
    %v3183 = vsel %vm3043, %v3013, 0
    %v3186 = vsel %vm3043, %v3014, 0
    %v3189 = vsel %vm3043, %v3015, 0
    %v3192 = vsel %vm3043, %v3016, 0
    %v3195 = vsel %vm3043, %v3017, 0
    %v3198 = vsel %vm3043, %v3018, 0
    %v3201 = vsel %vm3043, %v3019, 0
    %v3204 = vsel %vm3043, %v3020, 0
    %v3207 = vsel %vm3043, %v3021, 0
    %v3210 = vsel %vm3043, %v3022, 0
    %v3213 = vsel %vm3043, %v3023, 0
    %v3216 = vsel %vm3043, %v3024, 0
    %v3219 = vsel %vm3043, %v3025, 0
    %v3222 = vsel %vm3043, %v3026, 0
    %v3225 = vsel %vm3043, %v3027, 0
    %v3228 = vsel %vm3043, %v3028, 0
    %v3231 = vsel %vm3043, %v3029, 0
    %v3234 = vsel %vm3043, %v3030, 0
    %vm3236 = vcmask 1043456
    %v3238 = vsel %vm3236, %v3035, 0
    %3240 = vmatprep.subr.mxu0 0.0
    %3241 = vmatpush1.msra.mxu0 %v3031
    %3242 = vmatprep.subr.mxu0 0.0
    %3243 = vmatpush1.msra.mxu0 %v3032
    %3244 = vmatprep.subr.mxu0 0.0
    %3245 = vmatpush1.msra.mxu0 %v3033
    %3246 = vmatprep.subr.mxu0 0.0
    %3247 = vmatpush1.msra.mxu0 %v3034
    %3248 = vmatprep.subr.mxu0 0.0
    %3249 = vmatpush1.msra.mxu0 %v3238
    %3250 = vmatprep.subr.mxu0 0.0
    %3251 = vmatpush1.msra.mxu0 0.0
    %3252 = vmatprep.subr.mxu0 0.0
    %3253 = vmatpush1.msra.mxu0 0.0
    %3254 = vmatprep.subr.mxu0 0.0
    %3255 = vmatpush1.msra.mxu0 0.0
    %3256 = vmatprep.subr.mxu0 0.0
    %3257 = vmatpush1.msra.mxu0 0.0
    %3258 = vmatprep.subr.mxu0 0.0
    %3259 = vmatpush1.msra.mxu0 0.0
    %3260 = vmatprep.subr.mxu0 0.0
    %3261 = vmatpush1.msra.mxu0 0.0
    %3262 = vmatprep.subr.mxu0 0.0
    %3263 = vmatpush1.msra.mxu0 0.0
    %3264 = vmatprep.subr.mxu0 0.0
    %3265 = vmatpush1.msra.mxu0 0.0
    %3266 = vmatprep.subr.mxu0 0.0
    %3267 = vmatpush1.msra.mxu0 0.0
    %3268 = vmatprep.subr.mxu0 0.0
    %3269 = vmatpush1.msra.mxu0 0.0
    %3270 = vmatprep.subr.mxu0 0.0
    %3271 = vmatpush1.msra.mxu0 0.0
    %3272 = vmatprep.subr.mxu0 0.0
    %3273 = vmatpush1.msra.mxu0 0.0
    %3274 = vmatprep.subr.mxu0 0.0
    %3275 = vmatpush1.msra.mxu0 0.0
    %3276 = vmatprep.subr.mxu0 0.0
    %3277 = vmatpush1.msra.mxu0 0.0
    %3278 = vmatprep.subr.mxu0 0.0
    %3279 = vmatpush1.msra.mxu0 0.0
    %3280 = vmatprep.subr.mxu0 0.0
    %3281 = vmatpush1.msra.mxu0 0.0
    %3282 = vmatprep.subr.mxu0 0.0
    %3283 = vmatpush1.msra.mxu0 0.0
    %3284 = vmatprep.subr.mxu0 0.0
    %3285 = vmatpush1.msra.mxu0 0.0
    %3286 = vmatprep.subr.mxu0 0.0
    %3287 = vmatpush1.msra.mxu0 0.0
    %3288 = vmatprep.subr.mxu0 0.0
    %3289 = vmatpush1.msra.mxu0 0.0
    %3290 = vmatprep.subr.mxu0 0.0
    %3291 = vmatpush1.msra.mxu0 0.0
    %3292 = vmatprep.subr.mxu0 0.0
    %3293 = vmatpush1.msra.mxu0 0.0
    %3294 = vmatprep.subr.mxu0 0.0
    %3295 = vmatpush1.msra.mxu0 0.0
    %3296 = vmatprep.subr.mxu0 0.0
    %3297 = vmatpush1.msra.mxu0 0.0
    %3298 = vmatprep.subr.mxu0 0.0
    %3299 = vmatpush1.msra.mxu0 0.0
    %3300 = vmatprep.subr.mxu0 0.0
    %3301 = vmatpush1.msra.mxu0 0.0
    %3302 = vmatprep.subr.mxu0 0.0
    %3303 = vmatpush1.msra.mxu0 0.0
    %3304 = vmatprep.mubr.f32.mxu0 0.0
    %3305 = vmatmul.mubr.f32.gmra.mrb[0].mxu0 %v3045
    %v3306 = vpop.f32.mrb[0].mxu0
    %v3307 = vadd.f32 %v3041, %v3306
    %v3308 = vpop.f32.mrb[0].mxu0
    %3309 = vmatprep.mubr.f32.mxu0 0.0
    %3310 = vmatmul.mubr.f32.gmra.mrb[0].mxu0 %v3048
    %v3311 = vpop.f32.mrb[0].mxu0
    %v3312 = vadd.f32 %v3041, %v3311
    %v3313 = vpop.f32.mrb[0].mxu0
    %3314 = vmatprep.mubr.f32.mxu0 0.0
    %3315 = vmatmul.mubr.f32.gmra.mrb[0].mxu0 %v3051
    %v3316 = vpop.f32.mrb[0].mxu0
    %v3317 = vadd.f32 %v3041, %v3316
    %v3318 = vpop.f32.mrb[0].mxu0
    %3319 = vmatprep.mubr.f32.mxu0 0.0
    %3320 = vmatmul.mubr.f32.gmra.mrb[0].mxu0 %v3054
    %v3321 = vpop.f32.mrb[0].mxu0
    %v3322 = vadd.f32 %v3041, %v3321
    %v3323 = vpop.f32.mrb[0].mxu0
    %3324 = vmatprep.mubr.f32.mxu0 0.0
    %3325 = vmatmul.mubr.f32.gmra.mrb[0].mxu0 %v3057
    %v3326 = vpop.f32.mrb[0].mxu0
    %v3327 = vadd.f32 %v3041, %v3326
    %v3328 = vpop.f32.mrb[0].mxu0
    %3329 = vmatprep.mubr.f32.mxu0 0.0
    %3330 = vmatmul.mubr.f32.gmra.mrb[0].mxu0 %v3060
    %v3331 = vpop.f32.mrb[0].mxu0
    %v3332 = vadd.f32 %v3041, %v3331
    %v3333 = vpop.f32.mrb[0].mxu0
    %3334 = vmatprep.mubr.f32.mxu0 0.0
    %3335 = vmatmul.mubr.f32.gmra.mrb[0].mxu0 %v3063
    %v3336 = vpop.f32.mrb[0].mxu0
    %v3337 = vadd.f32 %v3041, %v3336
    %v3338 = vpop.f32.mrb[0].mxu0
    %3339 = vmatprep.mubr.f32.mxu0 0.0
    %3340 = vmatmul.mubr.f32.gmra.mrb[0].mxu0 %v3066
    %v3341 = vpop.f32.mrb[0].mxu0
    %v3342 = vadd.f32 %v3041, %v3341
    %v3343 = vpop.f32.mrb[0].mxu0
    %3344 = vmatprep.mubr.f32.mxu0 0.0
    %3345 = vmatmul.mubr.f32.gmra.mrb[0].mxu0 %v3069
    %v3346 = vpop.f32.mrb[0].mxu0
    %v3347 = vadd.f32 %v3041, %v3346
    %v3348 = vpop.f32.mrb[0].mxu0
    %3349 = vmatprep.mubr.f32.mxu0 0.0
    %3350 = vmatmul.mubr.f32.gmra.mrb[0].mxu0 %v3072
    %v3351 = vpop.f32.mrb[0].mxu0
    %v3352 = vadd.f32 %v3041, %v3351
    %v3353 = vpop.f32.mrb[0].mxu0
    %3354 = vmatprep.mubr.f32.mxu0 0.0
    %3355 = vmatmul.mubr.f32.gmra.mrb[0].mxu0 %v3075
    %v3356 = vpop.f32.mrb[0].mxu0
    %v3357 = vadd.f32 %v3041, %v3356
    %v3358 = vpop.f32.mrb[0].mxu0
    %3359 = vmatprep.mubr.f32.mxu0 0.0
    %3360 = vmatmul.mubr.f32.gmra.mrb[0].mxu0 %v3078
    %v3361 = vpop.f32.mrb[0].mxu0
    %v3362 = vadd.f32 %v3041, %v3361
    %v3363 = vpop.f32.mrb[0].mxu0
    %3364 = vmatprep.mubr.f32.mxu0 0.0
    %3365 = vmatmul.mubr.f32.gmra.mrb[0].mxu0 %v3081
    %v3366 = vpop.f32.mrb[0].mxu0
    %v3367 = vadd.f32 %v3041, %v3366
    %v3368 = vpop.f32.mrb[0].mxu0
    %3369 = vmatprep.mubr.f32.mxu0 0.0
    %3370 = vmatmul.mubr.f32.gmra.mrb[0].mxu0 %v3084
    %v3371 = vpop.f32.mrb[0].mxu0
    %v3372 = vadd.f32 %v3041, %v3371
    %v3373 = vpop.f32.mrb[0].mxu0
    %3374 = vmatprep.mubr.f32.mxu0 0.0
    %3375 = vmatmul.mubr.f32.gmra.mrb[0].mxu0 %v3087
    %v3376 = vpop.f32.mrb[0].mxu0
    %v3377 = vadd.f32 %v3041, %v3376
    %v3378 = vpop.f32.mrb[0].mxu0
    %3379 = vmatprep.mubr.f32.mxu0 0.0
    %3380 = vmatmul.mubr.f32.gmra.mrb[0].mxu0 %v3090
    %v3381 = vpop.f32.mrb[0].mxu0
    %v3382 = vadd.f32 %v3041, %v3381
    %v3383 = vpop.f32.mrb[0].mxu0
    %3384 = vmatprep.mubr.f32.mxu0 0.0
    %3385 = vmatmul.mubr.f32.gmra.mrb[0].mxu0 %v3093
    %v3386 = vpop.f32.mrb[0].mxu0
    %v3387 = vadd.f32 %v3041, %v3386
    %v3388 = vpop.f32.mrb[0].mxu0
    %3389 = vmatprep.mubr.f32.mxu0 0.0
    %3390 = vmatmul.mubr.f32.gmra.mrb[0].mxu0 %v3096
    %v3391 = vpop.f32.mrb[0].mxu0
    %v3392 = vadd.f32 %v3041, %v3391
    %v3393 = vpop.f32.mrb[0].mxu0
    %3394 = vmatprep.mubr.f32.mxu0 0.0
    %3395 = vmatmul.mubr.f32.gmra.mrb[0].mxu0 %v3099
    %v3396 = vpop.f32.mrb[0].mxu0
    %v3397 = vadd.f32 %v3041, %v3396
    %v3398 = vpop.f32.mrb[0].mxu0
    %3399 = vmatprep.mubr.f32.mxu0 0.0
    %3400 = vmatmul.mubr.f32.gmra.mrb[0].mxu0 %v3102
    %v3401 = vpop.f32.mrb[0].mxu0
    %v3402 = vadd.f32 %v3041, %v3401
    %v3403 = vpop.f32.mrb[0].mxu0
    %3404 = vmatprep.mubr.f32.mxu0 0.0
    %3405 = vmatmul.mubr.f32.gmra.mrb[0].mxu0 %v3105
    %v3406 = vpop.f32.mrb[0].mxu0
    %v3407 = vadd.f32 %v3041, %v3406
    %v3408 = vpop.f32.mrb[0].mxu0
    %3409 = vmatprep.mubr.f32.mxu0 0.0
    %3410 = vmatmul.mubr.f32.gmra.mrb[0].mxu0 %v3108
    %v3411 = vpop.f32.mrb[0].mxu0
    %v3412 = vadd.f32 %v3041, %v3411
    %v3413 = vpop.f32.mrb[0].mxu0
    %3414 = vmatprep.mubr.f32.mxu0 0.0
    %3415 = vmatmul.mubr.f32.gmra.mrb[0].mxu0 %v3111
    %v3416 = vpop.f32.mrb[0].mxu0
    %v3417 = vadd.f32 %v3041, %v3416
    %v3418 = vpop.f32.mrb[0].mxu0
    %3419 = vmatprep.mubr.f32.mxu0 0.0
    %3420 = vmatmul.mubr.f32.gmra.mrb[0].mxu0 %v3114
    %v3421 = vpop.f32.mrb[0].mxu0
    %v3422 = vadd.f32 %v3041, %v3421
    %v3423 = vpop.f32.mrb[0].mxu0
    %3424 = vmatprep.mubr.f32.mxu0 0.0
    %3425 = vmatmul.mubr.f32.gmra.mrb[0].mxu0 %v3117
    %v3426 = vpop.f32.mrb[0].mxu0
    %v3427 = vadd.f32 %v3041, %v3426
    %v3428 = vpop.f32.mrb[0].mxu0
    %3429 = vmatprep.mubr.f32.mxu0 0.0
    %3430 = vmatmul.mubr.f32.gmra.mrb[0].mxu0 %v3120
    %v3431 = vpop.f32.mrb[0].mxu0
    %v3432 = vadd.f32 %v3041, %v3431
    %v3433 = vpop.f32.mrb[0].mxu0
    %3434 = vmatprep.mubr.f32.mxu0 0.0
    %3435 = vmatmul.mubr.f32.gmra.mrb[0].mxu0 %v3123
    %v3436 = vpop.f32.mrb[0].mxu0
    %v3437 = vadd.f32 %v3041, %v3436
    %v3438 = vpop.f32.mrb[0].mxu0
    %3439 = vmatprep.mubr.f32.mxu0 0.0
    %3440 = vmatmul.mubr.f32.gmra.mrb[0].mxu0 %v3126
    %v3441 = vpop.f32.mrb[0].mxu0
    %v3442 = vadd.f32 %v3041, %v3441
    %v3443 = vpop.f32.mrb[0].mxu0
    %3444 = vmatprep.mubr.f32.mxu0 0.0
    %3445 = vmatmul.mubr.f32.gmra.mrb[0].mxu0 %v3129
    %v3446 = vpop.f32.mrb[0].mxu0
    %v3447 = vadd.f32 %v3041, %v3446
    %v3448 = vpop.f32.mrb[0].mxu0
    %3449 = vmatprep.mubr.f32.mxu0 0.0
    %3450 = vmatmul.mubr.f32.gmra.mrb[0].mxu0 %v3132
    %v3451 = vpop.f32.mrb[0].mxu0
    %v3452 = vadd.f32 %v3041, %v3451
    %v3453 = vpop.f32.mrb[0].mxu0
    %3454 = vmatprep.mubr.f32.mxu0 0.0
    %3455 = vmatmul.mubr.f32.gmra.mrb[0].mxu0 %v3135
    %v3456 = vpop.f32.mrb[0].mxu0
    %v3457 = vadd.f32 %v3041, %v3456
    %v3458 = vpop.f32.mrb[0].mxu0
    %3459 = vmatprep.mubr.f32.mxu0 0.0
    %3460 = vmatmul.mubr.f32.gmra.mrb[0].mxu0 %v3138
    %v3461 = vpop.f32.mrb[0].mxu0
    %v3462 = vadd.f32 %v3041, %v3461
    %v3463 = vpop.f32.mrb[0].mxu0
    %3464 = vmatprep.mubr.f32.mxu0 0.0
    %3465 = vmatmul.mubr.f32.gmra.mrb[0].mxu0 %v3141
    %v3466 = vpop.f32.mrb[0].mxu0
    %v3467 = vadd.f32 %v3041, %v3466
    %v3468 = vpop.f32.mrb[0].mxu0
    %3469 = vmatprep.mubr.f32.mxu0 0.0
    %3470 = vmatmul.mubr.f32.gmra.mrb[0].mxu0 %v3144
    %v3471 = vpop.f32.mrb[0].mxu0
    %v3472 = vadd.f32 %v3041, %v3471
    %v3473 = vpop.f32.mrb[0].mxu0
    %3474 = vmatprep.mubr.f32.mxu0 0.0
    %3475 = vmatmul.mubr.f32.gmra.mrb[0].mxu0 %v3147
    %v3476 = vpop.f32.mrb[0].mxu0
    %v3477 = vadd.f32 %v3041, %v3476
    %v3478 = vpop.f32.mrb[0].mxu0
    %3479 = vmatprep.mubr.f32.mxu0 0.0
    %3480 = vmatmul.mubr.f32.gmra.mrb[0].mxu0 %v3150
    %v3481 = vpop.f32.mrb[0].mxu0
    %v3482 = vadd.f32 %v3041, %v3481
    %v3483 = vpop.f32.mrb[0].mxu0
    %3484 = vmatprep.mubr.f32.mxu0 0.0
    %3485 = vmatmul.mubr.f32.gmra.mrb[0].mxu0 %v3153
    %v3486 = vpop.f32.mrb[0].mxu0
    %v3487 = vadd.f32 %v3041, %v3486
    %v3488 = vpop.f32.mrb[0].mxu0
    %3489 = vmatprep.mubr.f32.mxu0 0.0
    %3490 = vmatmul.mubr.f32.gmra.mrb[0].mxu0 %v3156
    %v3491 = vpop.f32.mrb[0].mxu0
    %v3492 = vadd.f32 %v3041, %v3491
    %v3493 = vpop.f32.mrb[0].mxu0
    %3494 = vmatprep.mubr.f32.mxu0 0.0
    %3495 = vmatmul.mubr.f32.gmra.mrb[0].mxu0 %v3159
    %v3496 = vpop.f32.mrb[0].mxu0
    %v3497 = vadd.f32 %v3041, %v3496
    %v3498 = vpop.f32.mrb[0].mxu0
    %3499 = vmatprep.mubr.f32.mxu0 0.0
    %3500 = vmatmul.mubr.f32.gmra.mrb[0].mxu0 %v3162
    %v3501 = vpop.f32.mrb[0].mxu0
    %v3502 = vadd.f32 %v3041, %v3501
    %v3503 = vpop.f32.mrb[0].mxu0
    %3504 = vmatprep.mubr.f32.mxu0 0.0
    %3505 = vmatmul.mubr.f32.gmra.mrb[0].mxu0 %v3165
    %v3506 = vpop.f32.mrb[0].mxu0
    %v3507 = vadd.f32 %v3041, %v3506
    %v3508 = vpop.f32.mrb[0].mxu0
    %3509 = vmatprep.mubr.f32.mxu0 0.0
    %3510 = vmatmul.mubr.f32.gmra.mrb[0].mxu0 %v3168
    %v3511 = vpop.f32.mrb[0].mxu0
    %v3512 = vadd.f32 %v3041, %v3511
    %v3513 = vpop.f32.mrb[0].mxu0
    %3514 = vmatprep.mubr.f32.mxu0 0.0
    %3515 = vmatmul.mubr.f32.gmra.mrb[0].mxu0 %v3171
    %v3516 = vpop.f32.mrb[0].mxu0
    %v3517 = vadd.f32 %v3041, %v3516
    %v3518 = vpop.f32.mrb[0].mxu0
    %3519 = vmatprep.mubr.f32.mxu0 0.0
    %3520 = vmatmul.mubr.f32.gmra.mrb[0].mxu0 %v3174
    %v3521 = vpop.f32.mrb[0].mxu0
    %v3522 = vadd.f32 %v3041, %v3521
    %v3523 = vpop.f32.mrb[0].mxu0
    %3524 = vmatprep.mubr.f32.mxu0 0.0
    %3525 = vmatmul.mubr.f32.gmra.mrb[0].mxu0 %v3177
    %v3526 = vpop.f32.mrb[0].mxu0
    %v3527 = vadd.f32 %v3041, %v3526
    %v3528 = vpop.f32.mrb[0].mxu0
    %3529 = vmatprep.mubr.f32.mxu0 0.0
    %3530 = vmatmul.mubr.f32.gmra.mrb[0].mxu0 %v3180
    %v3531 = vpop.f32.mrb[0].mxu0
    %v3532 = vadd.f32 %v3041, %v3531
    %v3533 = vpop.f32.mrb[0].mxu0
    %3534 = vmatprep.mubr.f32.mxu0 0.0
    %3535 = vmatmul.mubr.f32.gmra.mrb[0].mxu0 %v3183
    %v3536 = vpop.f32.mrb[0].mxu0
    %v3537 = vadd.f32 %v3041, %v3536
    %v3538 = vpop.f32.mrb[0].mxu0
    %3539 = vmatprep.mubr.f32.mxu0 0.0
    %3540 = vmatmul.mubr.f32.gmra.mrb[0].mxu0 %v3186
    %v3541 = vpop.f32.mrb[0].mxu0
    %v3542 = vadd.f32 %v3041, %v3541
    %v3543 = vpop.f32.mrb[0].mxu0
    %3544 = vmatprep.mubr.f32.mxu0 0.0
    %3545 = vmatmul.mubr.f32.gmra.mrb[0].mxu0 %v3189
    %v3546 = vpop.f32.mrb[0].mxu0
    %v3547 = vadd.f32 %v3041, %v3546
    %v3548 = vpop.f32.mrb[0].mxu0
    %3549 = vmatprep.mubr.f32.mxu0 0.0
    %3550 = vmatmul.mubr.f32.gmra.mrb[0].mxu0 %v3192
    %v3551 = vpop.f32.mrb[0].mxu0
    %v3552 = vadd.f32 %v3041, %v3551
    %v3553 = vpop.f32.mrb[0].mxu0
    %3554 = vmatprep.mubr.f32.mxu0 0.0
    %3555 = vmatmul.mubr.f32.gmra.mrb[0].mxu0 %v3195
    %v3556 = vpop.f32.mrb[0].mxu0
    %v3557 = vadd.f32 %v3041, %v3556
    %v3558 = vpop.f32.mrb[0].mxu0
    %3559 = vmatprep.mubr.f32.mxu0 0.0
    %3560 = vmatmul.mubr.f32.gmra.mrb[0].mxu0 %v3198
    %v3561 = vpop.f32.mrb[0].mxu0
    %v3562 = vadd.f32 %v3041, %v3561
    %v3563 = vpop.f32.mrb[0].mxu0
    %3564 = vmatprep.mubr.f32.mxu0 0.0
    %3565 = vmatmul.mubr.f32.gmra.mrb[0].mxu0 %v3201
    %v3566 = vpop.f32.mrb[0].mxu0
    %v3567 = vadd.f32 %v3041, %v3566
    %v3568 = vpop.f32.mrb[0].mxu0
    %3569 = vmatprep.mubr.f32.mxu0 0.0
    %3570 = vmatmul.mubr.f32.gmra.mrb[0].mxu0 %v3204
    %v3571 = vpop.f32.mrb[0].mxu0
    %v3572 = vadd.f32 %v3041, %v3571
    %v3573 = vpop.f32.mrb[0].mxu0
    %3574 = vmatprep.mubr.f32.mxu0 0.0
    %3575 = vmatmul.mubr.f32.gmra.mrb[0].mxu0 %v3207
    %v3576 = vpop.f32.mrb[0].mxu0
    %v3577 = vadd.f32 %v3041, %v3576
    %v3578 = vpop.f32.mrb[0].mxu0
    %3579 = vmatprep.mubr.f32.mxu0 0.0
    %3580 = vmatmul.mubr.f32.gmra.mrb[0].mxu0 %v3210
    %v3581 = vpop.f32.mrb[0].mxu0
    %v3582 = vadd.f32 %v3041, %v3581
    %v3583 = vpop.f32.mrb[0].mxu0
    %3584 = vmatprep.mubr.f32.mxu0 0.0
    %3585 = vmatmul.mubr.f32.gmra.mrb[0].mxu0 %v3213
    %v3586 = vpop.f32.mrb[0].mxu0
    %v3587 = vadd.f32 %v3041, %v3586
    %v3588 = vpop.f32.mrb[0].mxu0
    %3589 = vmatprep.mubr.f32.mxu0 0.0
    %3590 = vmatmul.mubr.f32.gmra.mrb[0].mxu0 %v3216
    %v3591 = vpop.f32.mrb[0].mxu0
    %v3592 = vadd.f32 %v3041, %v3591
    %v3593 = vpop.f32.mrb[0].mxu0
    %3594 = vmatprep.mubr.f32.mxu0 0.0
    %3595 = vmatmul.mubr.f32.gmra.mrb[0].mxu0 %v3219
    %v3596 = vpop.f32.mrb[0].mxu0
    %v3597 = vadd.f32 %v3041, %v3596
    %v3598 = vpop.f32.mrb[0].mxu0
    %3599 = vmatprep.mubr.f32.mxu0 0.0
    %3600 = vmatmul.mubr.f32.gmra.mrb[0].mxu0 %v3222
    %v3601 = vpop.f32.mrb[0].mxu0
    %v3602 = vadd.f32 %v3041, %v3601
    %v3603 = vpop.f32.mrb[0].mxu0
    %3604 = vmatprep.mubr.f32.mxu0 0.0
    %3605 = vmatmul.mubr.f32.gmra.mrb[0].mxu0 %v3225
    %v3606 = vpop.f32.mrb[0].mxu0
    %v3607 = vadd.f32 %v3041, %v3606
    %v3608 = vpop.f32.mrb[0].mxu0
    %3609 = vmatprep.mubr.f32.mxu0 0.0
    %3610 = vmatmul.mubr.f32.gmra.mrb[0].mxu0 %v3228
    %v3611 = vpop.f32.mrb[0].mxu0
    %v3612 = vadd.f32 %v3041, %v3611
    %v3613 = vpop.f32.mrb[0].mxu0
    %3614 = vmatprep.mubr.f32.mxu0 0.0
    %3615 = vmatmul.mubr.f32.gmra.mrb[0].mxu0 %v3231
    %v3616 = vpop.f32.mrb[0].mxu0
    %v3617 = vadd.f32 %v3041, %v3616
    %v3618 = vpop.f32.mrb[0].mxu0
    %3619 = vmatprep.mubr.f32.mxu0 0.0
    %3620 = vmatmul.mubr.f32.gmra.mrb[0].mxu0 %v3234
    %v3621 = vpop.f32.mrb[0].mxu0
    %v3622 = vadd.f32 %v3041, %v3621
    %v3623 = vpop.f32.mrb[0].mxu0
    %3624 = vdwg.mxu0
    %v3625 = vmax.f32 %v3307, 0.0
    %v3626 = vmax.f32 %v3312, 0.0
    %v3627 = vmax.f32 %v3317, 0.0
    %v3628 = vmax.f32 %v3322, 0.0
    %v3629 = vmax.f32 %v3327, 0.0
    %v3630 = vmax.f32 %v3332, 0.0
    %v3631 = vmax.f32 %v3337, 0.0
    %v3632 = vmax.f32 %v3342, 0.0
    %v3633 = vmax.f32 %v3347, 0.0
    %v3634 = vmax.f32 %v3352, 0.0
    %v3635 = vmax.f32 %v3357, 0.0
    %v3636 = vmax.f32 %v3362, 0.0
    %v3637 = vmax.f32 %v3367, 0.0
    %v3638 = vmax.f32 %v3372, 0.0
    %v3639 = vmax.f32 %v3377, 0.0
    %v3640 = vmax.f32 %v3382, 0.0
    %v3641 = vmax.f32 %v3387, 0.0
    %v3642 = vmax.f32 %v3392, 0.0
    %v3643 = vmax.f32 %v3397, 0.0
    %v3644 = vmax.f32 %v3402, 0.0
    %v3645 = vmax.f32 %v3407, 0.0
    %v3646 = vmax.f32 %v3412, 0.0
    %v3647 = vmax.f32 %v3417, 0.0
    %v3648 = vmax.f32 %v3422, 0.0
    %v3649 = vmax.f32 %v3427, 0.0
    %v3650 = vmax.f32 %v3432, 0.0
    %v3651 = vmax.f32 %v3437, 0.0
    %v3652 = vmax.f32 %v3442, 0.0
    %v3653 = vmax.f32 %v3447, 0.0
    %v3654 = vmax.f32 %v3452, 0.0
    %v3655 = vmax.f32 %v3457, 0.0
    %v3656 = vmax.f32 %v3462, 0.0
    %v3657 = vmax.f32 %v3467, 0.0
    %v3658 = vmax.f32 %v3472, 0.0
    %v3659 = vmax.f32 %v3477, 0.0
    %v3660 = vmax.f32 %v3482, 0.0
    %v3661 = vmax.f32 %v3487, 0.0
    %v3662 = vmax.f32 %v3492, 0.0
    %v3663 = vmax.f32 %v3497, 0.0
    %v3664 = vmax.f32 %v3502, 0.0
    %v3665 = vmax.f32 %v3507, 0.0
    %v3666 = vmax.f32 %v3512, 0.0
    %v3667 = vmax.f32 %v3517, 0.0
    %v3668 = vmax.f32 %v3522, 0.0
    %v3669 = vmax.f32 %v3527, 0.0
    %v3670 = vmax.f32 %v3532, 0.0
    %v3671 = vmax.f32 %v3537, 0.0
    %v3672 = vmax.f32 %v3542, 0.0
    %v3673 = vmax.f32 %v3547, 0.0
    %v3674 = vmax.f32 %v3552, 0.0
    %v3675 = vmax.f32 %v3557, 0.0
    %v3676 = vmax.f32 %v3562, 0.0
    %v3677 = vmax.f32 %v3567, 0.0
    %v3678 = vmax.f32 %v3572, 0.0
    %v3679 = vmax.f32 %v3577, 0.0
    %v3680 = vmax.f32 %v3582, 0.0
    %v3681 = vmax.f32 %v3587, 0.0
    %v3682 = vmax.f32 %v3592, 0.0
    %v3683 = vmax.f32 %v3597, 0.0
    %v3684 = vmax.f32 %v3602, 0.0
    %v3685 = vmax.f32 %v3607, 0.0
    %v3686 = vmax.f32 %v3612, 0.0
    %v3687 = vmax.f32 %v3617, 0.0
    %v3688 = vmax.f32 %v3622, 0.0
    %vm3689 = vcmask 261120
    %v3690 = vsel %vm3689, %v3625, 0.0
    %v3691 = vsel %vm3689, %v3626, 0.0
    %v3692 = vadd.f32 %v3690, %v3691
    %v3693 = vsel %vm3689, %v3627, 0.0
    %v3694 = vadd.f32 %v3692, %v3693
    %v3695 = vsel %vm3689, %v3628, 0.0
    %v3696 = vadd.f32 %v3694, %v3695
    %v3697 = vsel %vm3689, %v3629, 0.0
    %v3698 = vadd.f32 %v3696, %v3697
    %v3699 = vsel %vm3689, %v3630, 0.0
    %v3700 = vadd.f32 %v3698, %v3699
    %v3701 = vsel %vm3689, %v3631, 0.0
    %v3702 = vadd.f32 %v3700, %v3701
    %v3703 = vsel %vm3689, %v3632, 0.0
    %v3704 = vadd.f32 %v3702, %v3703
    %v3705 = vsel %vm3689, %v3633, 0.0
    %v3706 = vadd.f32 %v3704, %v3705
    %v3707 = vsel %vm3689, %v3634, 0.0
    %v3708 = vadd.f32 %v3706, %v3707
    %v3709 = vsel %vm3689, %v3635, 0.0
    %v3710 = vadd.f32 %v3708, %v3709
    %v3711 = vsel %vm3689, %v3636, 0.0
    %v3712 = vadd.f32 %v3710, %v3711
    %v3713 = vsel %vm3689, %v3637, 0.0
    %v3714 = vadd.f32 %v3712, %v3713
    %v3715 = vsel %vm3689, %v3638, 0.0
    %v3716 = vadd.f32 %v3714, %v3715
    %v3717 = vsel %vm3689, %v3639, 0.0
    %v3718 = vadd.f32 %v3716, %v3717
    %v3719 = vsel %vm3689, %v3640, 0.0
    %v3720 = vadd.f32 %v3718, %v3719
    %v3721 = vsel %vm3689, %v3641, 0.0
    %v3722 = vadd.f32 %v3720, %v3721
    %v3723 = vsel %vm3689, %v3642, 0.0
    %v3724 = vadd.f32 %v3722, %v3723
    %v3725 = vsel %vm3689, %v3643, 0.0
    %v3726 = vadd.f32 %v3724, %v3725
    %v3727 = vsel %vm3689, %v3644, 0.0
    %v3728 = vadd.f32 %v3726, %v3727
    %v3729 = vsel %vm3689, %v3645, 0.0
    %v3730 = vadd.f32 %v3728, %v3729
    %v3731 = vsel %vm3689, %v3646, 0.0
    %v3732 = vadd.f32 %v3730, %v3731
    %v3733 = vsel %vm3689, %v3647, 0.0
    %v3734 = vadd.f32 %v3732, %v3733
    %v3735 = vsel %vm3689, %v3648, 0.0
    %v3736 = vadd.f32 %v3734, %v3735
    %v3737 = vsel %vm3689, %v3649, 0.0
    %v3738 = vadd.f32 %v3736, %v3737
    %v3739 = vsel %vm3689, %v3650, 0.0
    %v3740 = vadd.f32 %v3738, %v3739
    %v3741 = vsel %vm3689, %v3651, 0.0
    %v3742 = vadd.f32 %v3740, %v3741
    %v3743 = vsel %vm3689, %v3652, 0.0
    %v3744 = vadd.f32 %v3742, %v3743
    %v3745 = vsel %vm3689, %v3653, 0.0
    %v3746 = vadd.f32 %v3744, %v3745
    %v3747 = vsel %vm3689, %v3654, 0.0
    %v3748 = vadd.f32 %v3746, %v3747
    %v3749 = vsel %vm3689, %v3655, 0.0
    %v3750 = vadd.f32 %v3748, %v3749
    %v3751 = vsel %vm3689, %v3656, 0.0
    %v3752 = vadd.f32 %v3750, %v3751
    %v3753 = vrot.slane %v3752, 4
    %v3754 = vadd.f32 %v3752, %v3753
    %v3755 = vrot.slane %v3754, 2
    %v3756 = vadd.f32 %v3754, %v3755
    %v3757 = vrot.slane %v3756, 1
    %v3758 = vadd.f32 %v3756, %v3757
    %v3759 = vsel %vm3689, %v3657, 0.0
    %v3760 = vsel %vm3689, %v3658, 0.0
    %v3761 = vadd.f32 %v3759, %v3760
    %v3762 = vsel %vm3689, %v3659, 0.0
    %v3763 = vadd.f32 %v3761, %v3762
    %v3764 = vsel %vm3689, %v3660, 0.0
    %v3765 = vadd.f32 %v3763, %v3764
    %v3766 = vsel %vm3689, %v3661, 0.0
    %v3767 = vadd.f32 %v3765, %v3766
    %v3768 = vsel %vm3689, %v3662, 0.0
    %v3769 = vadd.f32 %v3767, %v3768
    %v3770 = vsel %vm3689, %v3663, 0.0
    %v3771 = vadd.f32 %v3769, %v3770
    %v3772 = vsel %vm3689, %v3664, 0.0
    %v3773 = vadd.f32 %v3771, %v3772
    %v3774 = vsel %vm3689, %v3665, 0.0
    %v3775 = vadd.f32 %v3773, %v3774
    %v3776 = vsel %vm3689, %v3666, 0.0
    %v3777 = vadd.f32 %v3775, %v3776
    %v3778 = vsel %vm3689, %v3667, 0.0
    %v3779 = vadd.f32 %v3777, %v3778
    %v3780 = vsel %vm3689, %v3668, 0.0
    %v3781 = vadd.f32 %v3779, %v3780
    %v3782 = vsel %vm3689, %v3669, 0.0
    %v3783 = vadd.f32 %v3781, %v3782
    %v3784 = vsel %vm3689, %v3670, 0.0
    %v3785 = vadd.f32 %v3783, %v3784
    %v3786 = vsel %vm3689, %v3671, 0.0
    %v3787 = vadd.f32 %v3785, %v3786
    %v3788 = vsel %vm3689, %v3672, 0.0
    %v3789 = vadd.f32 %v3787, %v3788
    %v3790 = vsel %vm3689, %v3673, 0.0
    %v3791 = vadd.f32 %v3789, %v3790
    %v3792 = vsel %vm3689, %v3674, 0.0
    %v3793 = vadd.f32 %v3791, %v3792
    %v3794 = vsel %vm3689, %v3675, 0.0
    %v3795 = vadd.f32 %v3793, %v3794
    %v3796 = vsel %vm3689, %v3676, 0.0
    %v3797 = vadd.f32 %v3795, %v3796
    %v3798 = vsel %vm3689, %v3677, 0.0
    %v3799 = vadd.f32 %v3797, %v3798
    %v3800 = vsel %vm3689, %v3678, 0.0
    %v3801 = vadd.f32 %v3799, %v3800
    %v3802 = vsel %vm3689, %v3679, 0.0
    %v3803 = vadd.f32 %v3801, %v3802
    %v3804 = vsel %vm3689, %v3680, 0.0
    %v3805 = vadd.f32 %v3803, %v3804
    %v3806 = vsel %vm3689, %v3681, 0.0
    %v3807 = vadd.f32 %v3805, %v3806
    %v3808 = vsel %vm3689, %v3682, 0.0
    %v3809 = vadd.f32 %v3807, %v3808
    %v3810 = vsel %vm3689, %v3683, 0.0
    %v3811 = vadd.f32 %v3809, %v3810
    %v3812 = vsel %vm3689, %v3684, 0.0
    %v3813 = vadd.f32 %v3811, %v3812
    %v3814 = vsel %vm3689, %v3685, 0.0
    %v3815 = vadd.f32 %v3813, %v3814
    %v3816 = vsel %vm3689, %v3686, 0.0
    %v3817 = vadd.f32 %v3815, %v3816
    %v3818 = vsel %vm3689, %v3687, 0.0
    %v3819 = vadd.f32 %v3817, %v3818
    %v3820 = vsel %vm3689, %v3688, 0.0
    %v3821 = vadd.f32 %v3819, %v3820
    %v3822 = vrot.slane %v3821, 4
    %v3823 = vadd.f32 %v3821, %v3822
    %v3824 = vrot.slane %v3823, 2
    %v3825 = vadd.f32 %v3823, %v3824
    %v3826 = vrot.slane %v3825, 1
    %v3827 = vadd.f32 %v3825, %v3826
    %v3828 = vld [vmem:[%s3] sm:$0xff]
    %v3829 = vld [vmem:[%s3 + $0x8] sm:$0xff]
    %v3830 = vld [vmem:[%s3 + $0x10] sm:$0xff]
    %v3831 = vld [vmem:[%s3 + $0x18] sm:$0xff]
    %v3832 = vld [vmem:[%s4] sm:$0x1]
    %v3834 = vlaneseq
    %v3835 = vshrl.u32 %v3834, 7
    %v3836 = vsub.s32 0, %v3835
    %v3837 = vrot.slane %v3832, %v3836
    %vm3841 = vcmask 1041409
    %v3842 = vsel %vm3841, %v3827, %v3758
    %v3843 = vsel %vm3689, %v3842, 0
    %3845 = vmatprep.subr.mxu0 0.0
    %3846 = vmatpush1.msra.mxu0 %v3828
    %3847 = vmatprep.subr.mxu0 0.0
    %3848 = vmatpush1.msra.mxu0 %v3829
    %3849 = vmatprep.subr.mxu0 0.0
    %3850 = vmatpush1.msra.mxu0 %v3830
    %3851 = vmatprep.subr.mxu0 0.0
    %3852 = vmatpush1.msra.mxu0 %v3831
    %3853 = vmatprep.subr.mxu0 0.0
    %3854 = vmatpush1.msra.mxu0 0.0
    %3855 = vmatprep.subr.mxu0 0.0
    %3856 = vmatpush1.msra.mxu0 0.0
    %3857 = vmatprep.subr.mxu0 0.0
    %3858 = vmatpush1.msra.mxu0 0.0
    %3859 = vmatprep.subr.mxu0 0.0
    %3860 = vmatpush1.msra.mxu0 0.0
    %3861 = vmatprep.subr.mxu0 0.0
    %3862 = vmatpush1.msra.mxu0 0.0
    %3863 = vmatprep.subr.mxu0 0.0
    %3864 = vmatpush1.msra.mxu0 0.0
    %3865 = vmatprep.subr.mxu0 0.0
    %3866 = vmatpush1.msra.mxu0 0.0
    %3867 = vmatprep.subr.mxu0 0.0
    %3868 = vmatpush1.msra.mxu0 0.0
    %3869 = vmatprep.subr.mxu0 0.0
    %3870 = vmatpush1.msra.mxu0 0.0
    %3871 = vmatprep.subr.mxu0 0.0
    %3872 = vmatpush1.msra.mxu0 0.0
    %3873 = vmatprep.subr.mxu0 0.0
    %3874 = vmatpush1.msra.mxu0 0.0
    %3875 = vmatprep.subr.mxu0 0.0
    %3876 = vmatpush1.msra.mxu0 0.0
    %3877 = vmatprep.subr.mxu0 0.0
    %3878 = vmatpush1.msra.mxu0 0.0
    %3879 = vmatprep.subr.mxu0 0.0
    %3880 = vmatpush1.msra.mxu0 0.0
    %3881 = vmatprep.subr.mxu0 0.0
    %3882 = vmatpush1.msra.mxu0 0.0
    %3883 = vmatprep.subr.mxu0 0.0
    %3884 = vmatpush1.msra.mxu0 0.0
    %3885 = vmatprep.subr.mxu0 0.0
    %3886 = vmatpush1.msra.mxu0 0.0
    %3887 = vmatprep.subr.mxu0 0.0
    %3888 = vmatpush1.msra.mxu0 0.0
    %3889 = vmatprep.subr.mxu0 0.0
    %3890 = vmatpush1.msra.mxu0 0.0
    %3891 = vmatprep.subr.mxu0 0.0
    %3892 = vmatpush1.msra.mxu0 0.0
    %3893 = vmatprep.subr.mxu0 0.0
    %3894 = vmatpush1.msra.mxu0 0.0
    %3895 = vmatprep.subr.mxu0 0.0
    %3896 = vmatpush1.msra.mxu0 0.0
    %3897 = vmatprep.subr.mxu0 0.0
    %3898 = vmatpush1.msra.mxu0 0.0
    %3899 = vmatprep.subr.mxu0 0.0
    %3900 = vmatpush1.msra.mxu0 0.0
    %3901 = vmatprep.subr.mxu0 0.0
    %3902 = vmatpush1.msra.mxu0 0.0
    %3903 = vmatprep.subr.mxu0 0.0
    %3904 = vmatpush1.msra.mxu0 0.0
    %3905 = vmatprep.subr.mxu0 0.0
    %3906 = vmatpush1.msra.mxu0 0.0
    %3907 = vmatprep.subr.mxu0 0.0
    %3908 = vmatpush1.msra.mxu0 0.0
    %3909 = vmatprep.mubr.f32.mxu0 0.0
    %3910 = vmatmul.mubr.f32.gmra.mrb[0].mxu0 %v3843
    %v3911 = vpop.f32.mrb[0].mxu0
    %v3912 = vadd.f32 %v3837, %v3911
    %v3913 = vpop.f32.mrb[0].mxu0
    %3914 = vdwg.mxu0
    %vm3915 = vcmask 17408
    %3916 = vst.msk [vmem:[#allocation5] sm:$0x3] %vm3915, %v3912
    %v3917 = vld [vmem:[%s5] sm:$0x1]
    %v3919 = vlaneseq
    %v3920 = vshrl.u32 %v3919, 7
    %v3921 = vsub.s32 0, %v3920
    %v3922 = vrot.slane %v3917, %v3921
    %v3924 = vmul.f32 %v3625, %v3922
    %v3925 = vmul.f32 %v3626, %v3922
    %v3926 = vmul.f32 %v3627, %v3922
    %v3927 = vmul.f32 %v3628, %v3922
    %v3928 = vmul.f32 %v3629, %v3922
    %v3929 = vmul.f32 %v3630, %v3922
    %v3930 = vmul.f32 %v3631, %v3922
    %v3931 = vmul.f32 %v3632, %v3922
    %v3932 = vmul.f32 %v3633, %v3922
    %v3933 = vmul.f32 %v3634, %v3922
    %v3934 = vmul.f32 %v3635, %v3922
    %v3935 = vmul.f32 %v3636, %v3922
    %v3936 = vmul.f32 %v3637, %v3922
    %v3937 = vmul.f32 %v3638, %v3922
    %v3938 = vmul.f32 %v3639, %v3922
    %v3939 = vmul.f32 %v3640, %v3922
    %v3940 = vmul.f32 %v3641, %v3922
    %v3941 = vmul.f32 %v3642, %v3922
    %v3942 = vmul.f32 %v3643, %v3922
    %v3943 = vmul.f32 %v3644, %v3922
    %v3944 = vmul.f32 %v3645, %v3922
    %v3945 = vmul.f32 %v3646, %v3922
    %v3946 = vmul.f32 %v3647, %v3922
    %v3947 = vmul.f32 %v3648, %v3922
    %v3948 = vmul.f32 %v3649, %v3922
    %v3949 = vmul.f32 %v3650, %v3922
    %v3950 = vmul.f32 %v3651, %v3922
    %v3951 = vmul.f32 %v3652, %v3922
    %v3952 = vmul.f32 %v3653, %v3922
    %v3953 = vmul.f32 %v3654, %v3922
    %v3954 = vmul.f32 %v3655, %v3922
    %v3955 = vmul.f32 %v3656, %v3922
    %v3956 = vmul.f32 %v3657, %v3922
    %v3957 = vmul.f32 %v3658, %v3922
    %v3958 = vmul.f32 %v3659, %v3922
    %v3959 = vmul.f32 %v3660, %v3922
    %v3960 = vmul.f32 %v3661, %v3922
    %v3961 = vmul.f32 %v3662, %v3922
    %v3962 = vmul.f32 %v3663, %v3922
    %v3963 = vmul.f32 %v3664, %v3922
    %v3964 = vmul.f32 %v3665, %v3922
    %v3965 = vmul.f32 %v3666, %v3922
    %v3966 = vmul.f32 %v3667, %v3922
    %v3967 = vmul.f32 %v3668, %v3922
    %v3968 = vmul.f32 %v3669, %v3922
    %v3969 = vmul.f32 %v3670, %v3922
    %v3970 = vmul.f32 %v3671, %v3922
    %v3971 = vmul.f32 %v3672, %v3922
    %v3972 = vmul.f32 %v3673, %v3922
    %v3973 = vmul.f32 %v3674, %v3922
    %v3974 = vmul.f32 %v3675, %v3922
    %v3975 = vmul.f32 %v3676, %v3922
    %v3976 = vmul.f32 %v3677, %v3922
    %v3977 = vmul.f32 %v3678, %v3922
    %v3978 = vmul.f32 %v3679, %v3922
    %v3979 = vmul.f32 %v3680, %v3922
    %v3980 = vmul.f32 %v3681, %v3922
    %v3981 = vmul.f32 %v3682, %v3922
    %v3982 = vmul.f32 %v3683, %v3922
    %v3983 = vmul.f32 %v3684, %v3922
    %v3984 = vmul.f32 %v3685, %v3922
    %v3985 = vmul.f32 %v3686, %v3922
    %v3986 = vmul.f32 %v3687, %v3922
    %v3987 = vmul.f32 %v3688, %v3922
    %v3988 = vsel %vm3689, %v3924, 0.0
    %3989 = vadd.xlane.f32.xlu0 %v3988
    %v3990 = vpop.xlane.xlu0 %3989
    %v3991 = vsel %vm3689, %v3925, 0.0
    %3992 = vadd.xlane.f32.xlu0 %v3991
    %v3993 = vpop.xlane.xlu0 %3992
    %v3994 = vsel %vm3689, %v3926, 0.0
    %3995 = vadd.xlane.f32.xlu0 %v3994
    %v3996 = vpop.xlane.xlu0 %3995
    %v3997 = vsel %vm3689, %v3927, 0.0
    %3998 = vadd.xlane.f32.xlu0 %v3997
    %v3999 = vpop.xlane.xlu0 %3998
    %v4000 = vsel %vm3689, %v3928, 0.0
    %4001 = vadd.xlane.f32.xlu0 %v4000
    %v4002 = vpop.xlane.xlu0 %4001
    %v4003 = vsel %vm3689, %v3929, 0.0
    %4004 = vadd.xlane.f32.xlu0 %v4003
    %v4005 = vpop.xlane.xlu0 %4004
    %v4006 = vsel %vm3689, %v3930, 0.0
    %4007 = vadd.xlane.f32.xlu0 %v4006
    %v4008 = vpop.xlane.xlu0 %4007
    %v4009 = vsel %vm3689, %v3931, 0.0
    %4010 = vadd.xlane.f32.xlu0 %v4009
    %v4011 = vpop.xlane.xlu0 %4010
    %v4012 = vsel %vm3689, %v3932, 0.0
    %4013 = vadd.xlane.f32.xlu0 %v4012
    %v4014 = vpop.xlane.xlu0 %4013
    %v4015 = vsel %vm3689, %v3933, 0.0
    %4016 = vadd.xlane.f32.xlu0 %v4015
    %v4017 = vpop.xlane.xlu0 %4016
    %v4018 = vsel %vm3689, %v3934, 0.0
    %4019 = vadd.xlane.f32.xlu0 %v4018
    %v4020 = vpop.xlane.xlu0 %4019
    %v4021 = vsel %vm3689, %v3935, 0.0
    %4022 = vadd.xlane.f32.xlu0 %v4021
    %v4023 = vpop.xlane.xlu0 %4022
    %v4024 = vsel %vm3689, %v3936, 0.0
    %4025 = vadd.xlane.f32.xlu0 %v4024
    %v4026 = vpop.xlane.xlu0 %4025
    %v4027 = vsel %vm3689, %v3937, 0.0
    %4028 = vadd.xlane.f32.xlu0 %v4027
    %v4029 = vpop.xlane.xlu0 %4028
    %v4030 = vsel %vm3689, %v3938, 0.0
    %4031 = vadd.xlane.f32.xlu0 %v4030
    %v4032 = vpop.xlane.xlu0 %4031
    %v4033 = vsel %vm3689, %v3939, 0.0
    %4034 = vadd.xlane.f32.xlu0 %v4033
    %v4035 = vpop.xlane.xlu0 %4034
    %v4036 = vsel %vm3689, %v3940, 0.0
    %4037 = vadd.xlane.f32.xlu0 %v4036
    %v4038 = vpop.xlane.xlu0 %4037
    %v4039 = vsel %vm3689, %v3941, 0.0
    %4040 = vadd.xlane.f32.xlu0 %v4039
    %v4041 = vpop.xlane.xlu0 %4040
    %v4042 = vsel %vm3689, %v3942, 0.0
    %4043 = vadd.xlane.f32.xlu0 %v4042
    %v4044 = vpop.xlane.xlu0 %4043
    %v4045 = vsel %vm3689, %v3943, 0.0
    %4046 = vadd.xlane.f32.xlu0 %v4045
    %v4047 = vpop.xlane.xlu0 %4046
    %v4048 = vsel %vm3689, %v3944, 0.0
    %4049 = vadd.xlane.f32.xlu0 %v4048
    %v4050 = vpop.xlane.xlu0 %4049
    %v4051 = vsel %vm3689, %v3945, 0.0
    %4052 = vadd.xlane.f32.xlu0 %v4051
    %v4053 = vpop.xlane.xlu0 %4052
    %v4054 = vsel %vm3689, %v3946, 0.0
    %4055 = vadd.xlane.f32.xlu0 %v4054
    %v4056 = vpop.xlane.xlu0 %4055
    %v4057 = vsel %vm3689, %v3947, 0.0
    %4058 = vadd.xlane.f32.xlu0 %v4057
    %v4059 = vpop.xlane.xlu0 %4058
    %v4060 = vsel %vm3689, %v3948, 0.0
    %4061 = vadd.xlane.f32.xlu0 %v4060
    %v4062 = vpop.xlane.xlu0 %4061
    %v4063 = vsel %vm3689, %v3949, 0.0
    %4064 = vadd.xlane.f32.xlu0 %v4063
    %v4065 = vpop.xlane.xlu0 %4064
    %v4066 = vsel %vm3689, %v3950, 0.0
    %4067 = vadd.xlane.f32.xlu0 %v4066
    %v4068 = vpop.xlane.xlu0 %4067
    %v4069 = vsel %vm3689, %v3951, 0.0
    %4070 = vadd.xlane.f32.xlu0 %v4069
    %v4071 = vpop.xlane.xlu0 %4070
    %v4072 = vsel %vm3689, %v3952, 0.0
    %4073 = vadd.xlane.f32.xlu0 %v4072
    %v4074 = vpop.xlane.xlu0 %4073
    %v4075 = vsel %vm3689, %v3953, 0.0
    %4076 = vadd.xlane.f32.xlu0 %v4075
    %v4077 = vpop.xlane.xlu0 %4076
    %v4078 = vsel %vm3689, %v3954, 0.0
    %4079 = vadd.xlane.f32.xlu0 %v4078
    %v4080 = vpop.xlane.xlu0 %4079
    %v4081 = vsel %vm3689, %v3955, 0.0
    %4082 = vadd.xlane.f32.xlu0 %v4081
    %v4083 = vpop.xlane.xlu0 %4082
    %v4084 = vsel %vm3689, %v3956, 0.0
    %4085 = vadd.xlane.f32.xlu0 %v4084
    %v4086 = vpop.xlane.xlu0 %4085
    %v4087 = vsel %vm3689, %v3957, 0.0
    %4088 = vadd.xlane.f32.xlu0 %v4087
    %v4089 = vpop.xlane.xlu0 %4088
    %v4090 = vsel %vm3689, %v3958, 0.0
    %4091 = vadd.xlane.f32.xlu0 %v4090
    %v4092 = vpop.xlane.xlu0 %4091
    %v4093 = vsel %vm3689, %v3959, 0.0
    %4094 = vadd.xlane.f32.xlu0 %v4093
    %v4095 = vpop.xlane.xlu0 %4094
    %v4096 = vsel %vm3689, %v3960, 0.0
    %4097 = vadd.xlane.f32.xlu0 %v4096
    %v4098 = vpop.xlane.xlu0 %4097
    %v4099 = vsel %vm3689, %v3961, 0.0
    %4100 = vadd.xlane.f32.xlu0 %v4099
    %v4101 = vpop.xlane.xlu0 %4100
    %v4102 = vsel %vm3689, %v3962, 0.0
    %4103 = vadd.xlane.f32.xlu0 %v4102
    %v4104 = vpop.xlane.xlu0 %4103
    %v4105 = vsel %vm3689, %v3963, 0.0
    %4106 = vadd.xlane.f32.xlu0 %v4105
    %v4107 = vpop.xlane.xlu0 %4106
    %v4108 = vsel %vm3689, %v3964, 0.0
    %4109 = vadd.xlane.f32.xlu0 %v4108
    %v4110 = vpop.xlane.xlu0 %4109
    %v4111 = vsel %vm3689, %v3965, 0.0
    %4112 = vadd.xlane.f32.xlu0 %v4111
    %v4113 = vpop.xlane.xlu0 %4112
    %v4114 = vsel %vm3689, %v3966, 0.0
    %4115 = vadd.xlane.f32.xlu0 %v4114
    %v4116 = vpop.xlane.xlu0 %4115
    %v4117 = vsel %vm3689, %v3967, 0.0
    %4118 = vadd.xlane.f32.xlu0 %v4117
    %v4119 = vpop.xlane.xlu0 %4118
    %v4120 = vsel %vm3689, %v3968, 0.0
    %4121 = vadd.xlane.f32.xlu0 %v4120
    %v4122 = vpop.xlane.xlu0 %4121
    %v4123 = vsel %vm3689, %v3969, 0.0
    %4124 = vadd.xlane.f32.xlu0 %v4123
    %v4125 = vpop.xlane.xlu0 %4124
    %v4126 = vsel %vm3689, %v3970, 0.0
    %4127 = vadd.xlane.f32.xlu0 %v4126
    %v4128 = vpop.xlane.xlu0 %4127
    %v4129 = vsel %vm3689, %v3971, 0.0
    %4130 = vadd.xlane.f32.xlu0 %v4129
    %v4131 = vpop.xlane.xlu0 %4130
    %v4132 = vsel %vm3689, %v3972, 0.0
    %4133 = vadd.xlane.f32.xlu0 %v4132
    %v4134 = vpop.xlane.xlu0 %4133
    %v4135 = vsel %vm3689, %v3973, 0.0
    %4136 = vadd.xlane.f32.xlu0 %v4135
    %v4137 = vpop.xlane.xlu0 %4136
    %v4138 = vsel %vm3689, %v3974, 0.0
    %4139 = vadd.xlane.f32.xlu0 %v4138
    %v4140 = vpop.xlane.xlu0 %4139
    %v4141 = vsel %vm3689, %v3975, 0.0
    %4142 = vadd.xlane.f32.xlu0 %v4141
    %v4143 = vpop.xlane.xlu0 %4142
    %v4144 = vsel %vm3689, %v3976, 0.0
    %4145 = vadd.xlane.f32.xlu0 %v4144
    %v4146 = vpop.xlane.xlu0 %4145
    %v4147 = vsel %vm3689, %v3977, 0.0
    %4148 = vadd.xlane.f32.xlu0 %v4147
    %v4149 = vpop.xlane.xlu0 %4148
    %v4150 = vsel %vm3689, %v3978, 0.0
    %4151 = vadd.xlane.f32.xlu0 %v4150
    %v4152 = vpop.xlane.xlu0 %4151
    %v4153 = vsel %vm3689, %v3979, 0.0
    %4154 = vadd.xlane.f32.xlu0 %v4153
    %v4155 = vpop.xlane.xlu0 %4154
    %v4156 = vsel %vm3689, %v3980, 0.0
    %4157 = vadd.xlane.f32.xlu0 %v4156
    %v4158 = vpop.xlane.xlu0 %4157
    %v4159 = vsel %vm3689, %v3981, 0.0
    %4160 = vadd.xlane.f32.xlu0 %v4159
    %v4161 = vpop.xlane.xlu0 %4160
    %v4162 = vsel %vm3689, %v3982, 0.0
    %4163 = vadd.xlane.f32.xlu0 %v4162
    %v4164 = vpop.xlane.xlu0 %4163
    %v4165 = vsel %vm3689, %v3983, 0.0
    %4166 = vadd.xlane.f32.xlu0 %v4165
    %v4167 = vpop.xlane.xlu0 %4166
    %v4168 = vsel %vm3689, %v3984, 0.0
    %4169 = vadd.xlane.f32.xlu0 %v4168
    %v4170 = vpop.xlane.xlu0 %4169
    %v4171 = vsel %vm3689, %v3985, 0.0
    %4172 = vadd.xlane.f32.xlu0 %v4171
    %v4173 = vpop.xlane.xlu0 %4172
    %v4174 = vsel %vm3689, %v3986, 0.0
    %4175 = vadd.xlane.f32.xlu0 %v4174
    %v4176 = vpop.xlane.xlu0 %4175
    %v4177 = vsel %vm3689, %v3987, 0.0
    %4178 = vadd.xlane.f32.xlu0 %v4177
    %v4179 = vpop.xlane.xlu0 %4178
    %s4180 = sld [smem:[#allocation4]]
    %v4181 = vstv %s4180
    %v4182 = vadd.f32 %v3990, %v4181
    %v4183 = vadd.f32 %v3993, %v4181
    %v4184 = vadd.f32 %v3996, %v4181
    %v4185 = vadd.f32 %v3999, %v4181
    %v4186 = vadd.f32 %v4002, %v4181
    %v4187 = vadd.f32 %v4005, %v4181
    %v4188 = vadd.f32 %v4008, %v4181
    %v4189 = vadd.f32 %v4011, %v4181
    %v4190 = vadd.f32 %v4014, %v4181
    %v4191 = vadd.f32 %v4017, %v4181
    %v4192 = vadd.f32 %v4020, %v4181
    %v4193 = vadd.f32 %v4023, %v4181
    %v4194 = vadd.f32 %v4026, %v4181
    %v4195 = vadd.f32 %v4029, %v4181
    %v4196 = vadd.f32 %v4032, %v4181
    %v4197 = vadd.f32 %v4035, %v4181
    %v4198 = vadd.f32 %v4038, %v4181
    %v4199 = vadd.f32 %v4041, %v4181
    %v4200 = vadd.f32 %v4044, %v4181
    %v4201 = vadd.f32 %v4047, %v4181
    %v4202 = vadd.f32 %v4050, %v4181
    %v4203 = vadd.f32 %v4053, %v4181
    %v4204 = vadd.f32 %v4056, %v4181
    %v4205 = vadd.f32 %v4059, %v4181
    %v4206 = vadd.f32 %v4062, %v4181
    %v4207 = vadd.f32 %v4065, %v4181
    %v4208 = vadd.f32 %v4068, %v4181
    %v4209 = vadd.f32 %v4071, %v4181
    %v4210 = vadd.f32 %v4074, %v4181
    %v4211 = vadd.f32 %v4077, %v4181
    %v4212 = vadd.f32 %v4080, %v4181
    %v4213 = vadd.f32 %v4083, %v4181
    %v4214 = vadd.f32 %v4086, %v4181
    %v4215 = vadd.f32 %v4089, %v4181
    %v4216 = vadd.f32 %v4092, %v4181
    %v4217 = vadd.f32 %v4095, %v4181
    %v4218 = vadd.f32 %v4098, %v4181
    %v4219 = vadd.f32 %v4101, %v4181
    %v4220 = vadd.f32 %v4104, %v4181
    %v4221 = vadd.f32 %v4107, %v4181
    %v4222 = vadd.f32 %v4110, %v4181
    %v4223 = vadd.f32 %v4113, %v4181
    %v4224 = vadd.f32 %v4116, %v4181
    %v4225 = vadd.f32 %v4119, %v4181
    %v4226 = vadd.f32 %v4122, %v4181
    %v4227 = vadd.f32 %v4125, %v4181
    %v4228 = vadd.f32 %v4128, %v4181
    %v4229 = vadd.f32 %v4131, %v4181
    %v4230 = vadd.f32 %v4134, %v4181
    %v4231 = vadd.f32 %v4137, %v4181
    %v4232 = vadd.f32 %v4140, %v4181
    %v4233 = vadd.f32 %v4143, %v4181
    %v4234 = vadd.f32 %v4146, %v4181
    %v4235 = vadd.f32 %v4149, %v4181
    %v4236 = vadd.f32 %v4152, %v4181
    %v4237 = vadd.f32 %v4155, %v4181
    %v4238 = vadd.f32 %v4158, %v4181
    %v4239 = vadd.f32 %v4161, %v4181
    %v4240 = vadd.f32 %v4164, %v4181
    %v4241 = vadd.f32 %v4167, %v4181
    %v4242 = vadd.f32 %v4170, %v4181
    %v4243 = vadd.f32 %v4173, %v4181
    %v4244 = vadd.f32 %v4176, %v4181
    %v4245 = vadd.f32 %v4179, %v4181
    %v4311 = vunpack.c.l.s4 269488144
    %v4312 = vunpack.c.0.s8 %v4311
    %v4313 = vlaneseq
    %v4314 = vshrl.u32 %v4313, 7
    %v4315 = vsub.s32 %v4312, %v4314
    %v4316 = vrot.slane %v4182, %v4315
    %v4318 = vunpack.c.l.s4 842150450
    %v4319 = vunpack.c.0.s8 %v4318
    %v4320 = vlaneseq
    %v4321 = vshrl.u32 %v4320, 7
    %v4322 = vsub.s32 %v4319, %v4321
    %v4323 = vrot.slane %v4182, %v4322
    %v4325 = vunpack.c.l.s4 1414812756
    %v4326 = vunpack.c.0.s8 %v4325
    %v4327 = vlaneseq
    %v4328 = vshrl.u32 %v4327, 7
    %v4329 = vsub.s32 %v4326, %v4328
    %v4330 = vrot.slane %v4182, %v4329
    %v4332 = vunpack.c.l.s4 1987475062
    %v4333 = vunpack.c.0.s8 %v4332
    %v4334 = vlaneseq
    %v4335 = vshrl.u32 %v4334, 7
    %v4336 = vsub.s32 %v4333, %v4335
    %v4337 = vrot.slane %v4182, %v4336
    %v4339 = vunpack.c.l.s4 269488144
    %v4340 = vunpack.c.0.s8 %v4339
    %v4341 = vlaneseq
    %v4342 = vshrl.u32 %v4341, 7
    %v4343 = vsub.s32 %v4340, %v4342
    %v4344 = vrot.slane %v4183, %v4343
    %v4346 = vunpack.c.l.s4 842150450
    %v4347 = vunpack.c.0.s8 %v4346
    %v4348 = vlaneseq
    %v4349 = vshrl.u32 %v4348, 7
    %v4350 = vsub.s32 %v4347, %v4349
    %v4351 = vrot.slane %v4183, %v4350
    %v4353 = vunpack.c.l.s4 1414812756
    %v4354 = vunpack.c.0.s8 %v4353
    %v4355 = vlaneseq
    %v4356 = vshrl.u32 %v4355, 7
    %v4357 = vsub.s32 %v4354, %v4356
    %v4358 = vrot.slane %v4183, %v4357
    %v4360 = vunpack.c.l.s4 1987475062
    %v4361 = vunpack.c.0.s8 %v4360
    %v4362 = vlaneseq
    %v4363 = vshrl.u32 %v4362, 7
    %v4364 = vsub.s32 %v4361, %v4363
    %v4365 = vrot.slane %v4183, %v4364
    %v4367 = vunpack.c.l.s4 269488144
    %v4368 = vunpack.c.0.s8 %v4367
    %v4369 = vlaneseq
    %v4370 = vshrl.u32 %v4369, 7
    %v4371 = vsub.s32 %v4368, %v4370
    %v4372 = vrot.slane %v4184, %v4371
    %v4374 = vunpack.c.l.s4 842150450
    %v4375 = vunpack.c.0.s8 %v4374
    %v4376 = vlaneseq
    %v4377 = vshrl.u32 %v4376, 7
    %v4378 = vsub.s32 %v4375, %v4377
    %v4379 = vrot.slane %v4184, %v4378
    %v4381 = vunpack.c.l.s4 1414812756
    %v4382 = vunpack.c.0.s8 %v4381
    %v4383 = vlaneseq
    %v4384 = vshrl.u32 %v4383, 7
    %v4385 = vsub.s32 %v4382, %v4384
    %v4386 = vrot.slane %v4184, %v4385
    %v4388 = vunpack.c.l.s4 1987475062
    %v4389 = vunpack.c.0.s8 %v4388
    %v4390 = vlaneseq
    %v4391 = vshrl.u32 %v4390, 7
    %v4392 = vsub.s32 %v4389, %v4391
    %v4393 = vrot.slane %v4184, %v4392
    %v4395 = vunpack.c.l.s4 269488144
    %v4396 = vunpack.c.0.s8 %v4395
    %v4397 = vlaneseq
    %v4398 = vshrl.u32 %v4397, 7
    %v4399 = vsub.s32 %v4396, %v4398
    %v4400 = vrot.slane %v4185, %v4399
    %v4402 = vunpack.c.l.s4 842150450
    %v4403 = vunpack.c.0.s8 %v4402
    %v4404 = vlaneseq
    %v4405 = vshrl.u32 %v4404, 7
    %v4406 = vsub.s32 %v4403, %v4405
    %v4407 = vrot.slane %v4185, %v4406
    %v4409 = vunpack.c.l.s4 1414812756
    %v4410 = vunpack.c.0.s8 %v4409
    %v4411 = vlaneseq
    %v4412 = vshrl.u32 %v4411, 7
    %v4413 = vsub.s32 %v4410, %v4412
    %v4414 = vrot.slane %v4185, %v4413
    %v4416 = vunpack.c.l.s4 1987475062
    %v4417 = vunpack.c.0.s8 %v4416
    %v4418 = vlaneseq
    %v4419 = vshrl.u32 %v4418, 7
    %v4420 = vsub.s32 %v4417, %v4419
    %v4421 = vrot.slane %v4185, %v4420
    %v4423 = vunpack.c.l.s4 269488144
    %v4424 = vunpack.c.0.s8 %v4423
    %v4425 = vlaneseq
    %v4426 = vshrl.u32 %v4425, 7
    %v4427 = vsub.s32 %v4424, %v4426
    %v4428 = vrot.slane %v4186, %v4427
    %v4430 = vunpack.c.l.s4 842150450
    %v4431 = vunpack.c.0.s8 %v4430
    %v4432 = vlaneseq
    %v4433 = vshrl.u32 %v4432, 7
    %v4434 = vsub.s32 %v4431, %v4433
    %v4435 = vrot.slane %v4186, %v4434
    %v4437 = vunpack.c.l.s4 1414812756
    %v4438 = vunpack.c.0.s8 %v4437
    %v4439 = vlaneseq
    %v4440 = vshrl.u32 %v4439, 7
    %v4441 = vsub.s32 %v4438, %v4440
    %v4442 = vrot.slane %v4186, %v4441
    %v4444 = vunpack.c.l.s4 1987475062
    %v4445 = vunpack.c.0.s8 %v4444
    %v4446 = vlaneseq
    %v4447 = vshrl.u32 %v4446, 7
    %v4448 = vsub.s32 %v4445, %v4447
    %v4449 = vrot.slane %v4186, %v4448
    %v4451 = vunpack.c.l.s4 269488144
    %v4452 = vunpack.c.0.s8 %v4451
    %v4453 = vlaneseq
    %v4454 = vshrl.u32 %v4453, 7
    %v4455 = vsub.s32 %v4452, %v4454
    %v4456 = vrot.slane %v4187, %v4455
    %v4458 = vunpack.c.l.s4 842150450
    %v4459 = vunpack.c.0.s8 %v4458
    %v4460 = vlaneseq
    %v4461 = vshrl.u32 %v4460, 7
    %v4462 = vsub.s32 %v4459, %v4461
    %v4463 = vrot.slane %v4187, %v4462
    %v4465 = vunpack.c.l.s4 1414812756
    %v4466 = vunpack.c.0.s8 %v4465
    %v4467 = vlaneseq
    %v4468 = vshrl.u32 %v4467, 7
    %v4469 = vsub.s32 %v4466, %v4468
    %v4470 = vrot.slane %v4187, %v4469
    %v4472 = vunpack.c.l.s4 1987475062
    %v4473 = vunpack.c.0.s8 %v4472
    %v4474 = vlaneseq
    %v4475 = vshrl.u32 %v4474, 7
    %v4476 = vsub.s32 %v4473, %v4475
    %v4477 = vrot.slane %v4187, %v4476
    %v4479 = vunpack.c.l.s4 269488144
    %v4480 = vunpack.c.0.s8 %v4479
    %v4481 = vlaneseq
    %v4482 = vshrl.u32 %v4481, 7
    %v4483 = vsub.s32 %v4480, %v4482
    %v4484 = vrot.slane %v4188, %v4483
    %v4486 = vunpack.c.l.s4 842150450
    %v4487 = vunpack.c.0.s8 %v4486
    %v4488 = vlaneseq
    %v4489 = vshrl.u32 %v4488, 7
    %v4490 = vsub.s32 %v4487, %v4489
    %v4491 = vrot.slane %v4188, %v4490
    %v4493 = vunpack.c.l.s4 1414812756
    %v4494 = vunpack.c.0.s8 %v4493
    %v4495 = vlaneseq
    %v4496 = vshrl.u32 %v4495, 7
    %v4497 = vsub.s32 %v4494, %v4496
    %v4498 = vrot.slane %v4188, %v4497
    %v4500 = vunpack.c.l.s4 1987475062
    %v4501 = vunpack.c.0.s8 %v4500
    %v4502 = vlaneseq
    %v4503 = vshrl.u32 %v4502, 7
    %v4504 = vsub.s32 %v4501, %v4503
    %v4505 = vrot.slane %v4188, %v4504
    %v4507 = vunpack.c.l.s4 269488144
    %v4508 = vunpack.c.0.s8 %v4507
    %v4509 = vlaneseq
    %v4510 = vshrl.u32 %v4509, 7
    %v4511 = vsub.s32 %v4508, %v4510
    %v4512 = vrot.slane %v4189, %v4511
    %v4514 = vunpack.c.l.s4 842150450
    %v4515 = vunpack.c.0.s8 %v4514
    %v4516 = vlaneseq
    %v4517 = vshrl.u32 %v4516, 7
    %v4518 = vsub.s32 %v4515, %v4517
    %v4519 = vrot.slane %v4189, %v4518
    %v4521 = vunpack.c.l.s4 1414812756
    %v4522 = vunpack.c.0.s8 %v4521
    %v4523 = vlaneseq
    %v4524 = vshrl.u32 %v4523, 7
    %v4525 = vsub.s32 %v4522, %v4524
    %v4526 = vrot.slane %v4189, %v4525
    %v4528 = vunpack.c.l.s4 1987475062
    %v4529 = vunpack.c.0.s8 %v4528
    %v4530 = vlaneseq
    %v4531 = vshrl.u32 %v4530, 7
    %v4532 = vsub.s32 %v4529, %v4531
    %v4533 = vrot.slane %v4189, %v4532
    %v4535 = vunpack.c.l.s4 269488144
    %v4536 = vunpack.c.0.s8 %v4535
    %v4537 = vlaneseq
    %v4538 = vshrl.u32 %v4537, 7
    %v4539 = vsub.s32 %v4536, %v4538
    %v4540 = vrot.slane %v4190, %v4539
    %v4542 = vunpack.c.l.s4 842150450
    %v4543 = vunpack.c.0.s8 %v4542
    %v4544 = vlaneseq
    %v4545 = vshrl.u32 %v4544, 7
    %v4546 = vsub.s32 %v4543, %v4545
    %v4547 = vrot.slane %v4190, %v4546
    %v4549 = vunpack.c.l.s4 1414812756
    %v4550 = vunpack.c.0.s8 %v4549
    %v4551 = vlaneseq
    %v4552 = vshrl.u32 %v4551, 7
    %v4553 = vsub.s32 %v4550, %v4552
    %v4554 = vrot.slane %v4190, %v4553
    %v4556 = vunpack.c.l.s4 1987475062
    %v4557 = vunpack.c.0.s8 %v4556
    %v4558 = vlaneseq
    %v4559 = vshrl.u32 %v4558, 7
    %v4560 = vsub.s32 %v4557, %v4559
    %v4561 = vrot.slane %v4190, %v4560
    %v4563 = vunpack.c.l.s4 269488144
    %v4564 = vunpack.c.0.s8 %v4563
    %v4565 = vlaneseq
    %v4566 = vshrl.u32 %v4565, 7
    %v4567 = vsub.s32 %v4564, %v4566
    %v4568 = vrot.slane %v4191, %v4567
    %v4570 = vunpack.c.l.s4 842150450
    %v4571 = vunpack.c.0.s8 %v4570
    %v4572 = vlaneseq
    %v4573 = vshrl.u32 %v4572, 7
    %v4574 = vsub.s32 %v4571, %v4573
    %v4575 = vrot.slane %v4191, %v4574
    %v4577 = vunpack.c.l.s4 1414812756
    %v4578 = vunpack.c.0.s8 %v4577
    %v4579 = vlaneseq
    %v4580 = vshrl.u32 %v4579, 7
    %v4581 = vsub.s32 %v4578, %v4580
    %v4582 = vrot.slane %v4191, %v4581
    %v4584 = vunpack.c.l.s4 1987475062
    %v4585 = vunpack.c.0.s8 %v4584
    %v4586 = vlaneseq
    %v4587 = vshrl.u32 %v4586, 7
    %v4588 = vsub.s32 %v4585, %v4587
    %v4589 = vrot.slane %v4191, %v4588
    %v4591 = vunpack.c.l.s4 269488144
    %v4592 = vunpack.c.0.s8 %v4591
    %v4593 = vlaneseq
    %v4594 = vshrl.u32 %v4593, 7
    %v4595 = vsub.s32 %v4592, %v4594
    %v4596 = vrot.slane %v4192, %v4595
    %v4598 = vunpack.c.l.s4 842150450
    %v4599 = vunpack.c.0.s8 %v4598
    %v4600 = vlaneseq
    %v4601 = vshrl.u32 %v4600, 7
    %v4602 = vsub.s32 %v4599, %v4601
    %v4603 = vrot.slane %v4192, %v4602
    %v4605 = vunpack.c.l.s4 1414812756
    %v4606 = vunpack.c.0.s8 %v4605
    %v4607 = vlaneseq
    %v4608 = vshrl.u32 %v4607, 7
    %v4609 = vsub.s32 %v4606, %v4608
    %v4610 = vrot.slane %v4192, %v4609
    %v4612 = vunpack.c.l.s4 1987475062
    %v4613 = vunpack.c.0.s8 %v4612
    %v4614 = vlaneseq
    %v4615 = vshrl.u32 %v4614, 7
    %v4616 = vsub.s32 %v4613, %v4615
    %v4617 = vrot.slane %v4192, %v4616
    %v4619 = vunpack.c.l.s4 269488144
    %v4620 = vunpack.c.0.s8 %v4619
    %v4621 = vlaneseq
    %v4622 = vshrl.u32 %v4621, 7
    %v4623 = vsub.s32 %v4620, %v4622
    %v4624 = vrot.slane %v4193, %v4623
    %v4626 = vunpack.c.l.s4 842150450
    %v4627 = vunpack.c.0.s8 %v4626
    %v4628 = vlaneseq
    %v4629 = vshrl.u32 %v4628, 7
    %v4630 = vsub.s32 %v4627, %v4629
    %v4631 = vrot.slane %v4193, %v4630
    %v4633 = vunpack.c.l.s4 1414812756
    %v4634 = vunpack.c.0.s8 %v4633
    %v4635 = vlaneseq
    %v4636 = vshrl.u32 %v4635, 7
    %v4637 = vsub.s32 %v4634, %v4636
    %v4638 = vrot.slane %v4193, %v4637
    %v4640 = vunpack.c.l.s4 1987475062
    %v4641 = vunpack.c.0.s8 %v4640
    %v4642 = vlaneseq
    %v4643 = vshrl.u32 %v4642, 7
    %v4644 = vsub.s32 %v4641, %v4643
    %v4645 = vrot.slane %v4193, %v4644
    %v4647 = vunpack.c.l.s4 269488144
    %v4648 = vunpack.c.0.s8 %v4647
    %v4649 = vlaneseq
    %v4650 = vshrl.u32 %v4649, 7
    %v4651 = vsub.s32 %v4648, %v4650
    %v4652 = vrot.slane %v4194, %v4651
    %v4654 = vunpack.c.l.s4 842150450
    %v4655 = vunpack.c.0.s8 %v4654
    %v4656 = vlaneseq
    %v4657 = vshrl.u32 %v4656, 7
    %v4658 = vsub.s32 %v4655, %v4657
    %v4659 = vrot.slane %v4194, %v4658
    %v4661 = vunpack.c.l.s4 1414812756
    %v4662 = vunpack.c.0.s8 %v4661
    %v4663 = vlaneseq
    %v4664 = vshrl.u32 %v4663, 7
    %v4665 = vsub.s32 %v4662, %v4664
    %v4666 = vrot.slane %v4194, %v4665
    %v4668 = vunpack.c.l.s4 1987475062
    %v4669 = vunpack.c.0.s8 %v4668
    %v4670 = vlaneseq
    %v4671 = vshrl.u32 %v4670, 7
    %v4672 = vsub.s32 %v4669, %v4671
    %v4673 = vrot.slane %v4194, %v4672
    %v4675 = vunpack.c.l.s4 269488144
    %v4676 = vunpack.c.0.s8 %v4675
    %v4677 = vlaneseq
    %v4678 = vshrl.u32 %v4677, 7
    %v4679 = vsub.s32 %v4676, %v4678
    %v4680 = vrot.slane %v4195, %v4679
    %v4682 = vunpack.c.l.s4 842150450
    %v4683 = vunpack.c.0.s8 %v4682
    %v4684 = vlaneseq
    %v4685 = vshrl.u32 %v4684, 7
    %v4686 = vsub.s32 %v4683, %v4685
    %v4687 = vrot.slane %v4195, %v4686
    %v4689 = vunpack.c.l.s4 1414812756
    %v4690 = vunpack.c.0.s8 %v4689
    %v4691 = vlaneseq
    %v4692 = vshrl.u32 %v4691, 7
    %v4693 = vsub.s32 %v4690, %v4692
    %v4694 = vrot.slane %v4195, %v4693
    %v4696 = vunpack.c.l.s4 1987475062
    %v4697 = vunpack.c.0.s8 %v4696
    %v4698 = vlaneseq
    %v4699 = vshrl.u32 %v4698, 7
    %v4700 = vsub.s32 %v4697, %v4699
    %v4701 = vrot.slane %v4195, %v4700
    %v4703 = vunpack.c.l.s4 269488144
    %v4704 = vunpack.c.0.s8 %v4703
    %v4705 = vlaneseq
    %v4706 = vshrl.u32 %v4705, 7
    %v4707 = vsub.s32 %v4704, %v4706
    %v4708 = vrot.slane %v4196, %v4707
    %v4710 = vunpack.c.l.s4 842150450
    %v4711 = vunpack.c.0.s8 %v4710
    %v4712 = vlaneseq
    %v4713 = vshrl.u32 %v4712, 7
    %v4714 = vsub.s32 %v4711, %v4713
    %v4715 = vrot.slane %v4196, %v4714
    %v4717 = vunpack.c.l.s4 1414812756
    %v4718 = vunpack.c.0.s8 %v4717
    %v4719 = vlaneseq
    %v4720 = vshrl.u32 %v4719, 7
    %v4721 = vsub.s32 %v4718, %v4720
    %v4722 = vrot.slane %v4196, %v4721
    %v4724 = vunpack.c.l.s4 1987475062
    %v4725 = vunpack.c.0.s8 %v4724
    %v4726 = vlaneseq
    %v4727 = vshrl.u32 %v4726, 7
    %v4728 = vsub.s32 %v4725, %v4727
    %v4729 = vrot.slane %v4196, %v4728
    %v4731 = vunpack.c.l.s4 269488144
    %v4732 = vunpack.c.0.s8 %v4731
    %v4733 = vlaneseq
    %v4734 = vshrl.u32 %v4733, 7
    %v4735 = vsub.s32 %v4732, %v4734
    %v4736 = vrot.slane %v4197, %v4735
    %v4738 = vunpack.c.l.s4 842150450
    %v4739 = vunpack.c.0.s8 %v4738
    %v4740 = vlaneseq
    %v4741 = vshrl.u32 %v4740, 7
    %v4742 = vsub.s32 %v4739, %v4741
    %v4743 = vrot.slane %v4197, %v4742
    %v4745 = vunpack.c.l.s4 1414812756
    %v4746 = vunpack.c.0.s8 %v4745
    %v4747 = vlaneseq
    %v4748 = vshrl.u32 %v4747, 7
    %v4749 = vsub.s32 %v4746, %v4748
    %v4750 = vrot.slane %v4197, %v4749
    %v4752 = vunpack.c.l.s4 1987475062
    %v4753 = vunpack.c.0.s8 %v4752
    %v4754 = vlaneseq
    %v4755 = vshrl.u32 %v4754, 7
    %v4756 = vsub.s32 %v4753, %v4755
    %v4757 = vrot.slane %v4197, %v4756
    %v4759 = vunpack.c.l.s4 269488144
    %v4760 = vunpack.c.0.s8 %v4759
    %v4761 = vlaneseq
    %v4762 = vshrl.u32 %v4761, 7
    %v4763 = vsub.s32 %v4760, %v4762
    %v4764 = vrot.slane %v4198, %v4763
    %v4766 = vunpack.c.l.s4 842150450
    %v4767 = vunpack.c.0.s8 %v4766
    %v4768 = vlaneseq
    %v4769 = vshrl.u32 %v4768, 7
    %v4770 = vsub.s32 %v4767, %v4769
    %v4771 = vrot.slane %v4198, %v4770
    %v4773 = vunpack.c.l.s4 1414812756
    %v4774 = vunpack.c.0.s8 %v4773
    %v4775 = vlaneseq
    %v4776 = vshrl.u32 %v4775, 7
    %v4777 = vsub.s32 %v4774, %v4776
    %v4778 = vrot.slane %v4198, %v4777
    %v4780 = vunpack.c.l.s4 1987475062
    %v4781 = vunpack.c.0.s8 %v4780
    %v4782 = vlaneseq
    %v4783 = vshrl.u32 %v4782, 7
    %v4784 = vsub.s32 %v4781, %v4783
    %v4785 = vrot.slane %v4198, %v4784
    %v4787 = vunpack.c.l.s4 269488144
    %v4788 = vunpack.c.0.s8 %v4787
    %v4789 = vlaneseq
    %v4790 = vshrl.u32 %v4789, 7
    %v4791 = vsub.s32 %v4788, %v4790
    %v4792 = vrot.slane %v4199, %v4791
    %v4794 = vunpack.c.l.s4 842150450
    %v4795 = vunpack.c.0.s8 %v4794
    %v4796 = vlaneseq
    %v4797 = vshrl.u32 %v4796, 7
    %v4798 = vsub.s32 %v4795, %v4797
    %v4799 = vrot.slane %v4199, %v4798
    %v4801 = vunpack.c.l.s4 1414812756
    %v4802 = vunpack.c.0.s8 %v4801
    %v4803 = vlaneseq
    %v4804 = vshrl.u32 %v4803, 7
    %v4805 = vsub.s32 %v4802, %v4804
    %v4806 = vrot.slane %v4199, %v4805
    %v4808 = vunpack.c.l.s4 1987475062
    %v4809 = vunpack.c.0.s8 %v4808
    %v4810 = vlaneseq
    %v4811 = vshrl.u32 %v4810, 7
    %v4812 = vsub.s32 %v4809, %v4811
    %v4813 = vrot.slane %v4199, %v4812
    %v4815 = vunpack.c.l.s4 269488144
    %v4816 = vunpack.c.0.s8 %v4815
    %v4817 = vlaneseq
    %v4818 = vshrl.u32 %v4817, 7
    %v4819 = vsub.s32 %v4816, %v4818
    %v4820 = vrot.slane %v4200, %v4819
    %v4822 = vunpack.c.l.s4 842150450
    %v4823 = vunpack.c.0.s8 %v4822
    %v4824 = vlaneseq
    %v4825 = vshrl.u32 %v4824, 7
    %v4826 = vsub.s32 %v4823, %v4825
    %v4827 = vrot.slane %v4200, %v4826
    %v4829 = vunpack.c.l.s4 1414812756
    %v4830 = vunpack.c.0.s8 %v4829
    %v4831 = vlaneseq
    %v4832 = vshrl.u32 %v4831, 7
    %v4833 = vsub.s32 %v4830, %v4832
    %v4834 = vrot.slane %v4200, %v4833
    %v4836 = vunpack.c.l.s4 1987475062
    %v4837 = vunpack.c.0.s8 %v4836
    %v4838 = vlaneseq
    %v4839 = vshrl.u32 %v4838, 7
    %v4840 = vsub.s32 %v4837, %v4839
    %v4841 = vrot.slane %v4200, %v4840
    %v4843 = vunpack.c.l.s4 269488144
    %v4844 = vunpack.c.0.s8 %v4843
    %v4845 = vlaneseq
    %v4846 = vshrl.u32 %v4845, 7
    %v4847 = vsub.s32 %v4844, %v4846
    %v4848 = vrot.slane %v4201, %v4847
    %v4850 = vunpack.c.l.s4 842150450
    %v4851 = vunpack.c.0.s8 %v4850
    %v4852 = vlaneseq
    %v4853 = vshrl.u32 %v4852, 7
    %v4854 = vsub.s32 %v4851, %v4853
    %v4855 = vrot.slane %v4201, %v4854
    %v4857 = vunpack.c.l.s4 1414812756
    %v4858 = vunpack.c.0.s8 %v4857
    %v4859 = vlaneseq
    %v4860 = vshrl.u32 %v4859, 7
    %v4861 = vsub.s32 %v4858, %v4860
    %v4862 = vrot.slane %v4201, %v4861
    %v4864 = vunpack.c.l.s4 1987475062
    %v4865 = vunpack.c.0.s8 %v4864
    %v4866 = vlaneseq
    %v4867 = vshrl.u32 %v4866, 7
    %v4868 = vsub.s32 %v4865, %v4867
    %v4869 = vrot.slane %v4201, %v4868
    %v4871 = vunpack.c.l.s4 269488144
    %v4872 = vunpack.c.0.s8 %v4871
    %v4873 = vlaneseq
    %v4874 = vshrl.u32 %v4873, 7
    %v4875 = vsub.s32 %v4872, %v4874
    %v4876 = vrot.slane %v4202, %v4875
    %v4878 = vunpack.c.l.s4 842150450
    %v4879 = vunpack.c.0.s8 %v4878
    %v4880 = vlaneseq
    %v4881 = vshrl.u32 %v4880, 7
    %v4882 = vsub.s32 %v4879, %v4881
    %v4883 = vrot.slane %v4202, %v4882
    %v4885 = vunpack.c.l.s4 1414812756
    %v4886 = vunpack.c.0.s8 %v4885
    %v4887 = vlaneseq
    %v4888 = vshrl.u32 %v4887, 7
    %v4889 = vsub.s32 %v4886, %v4888
    %v4890 = vrot.slane %v4202, %v4889
    %v4892 = vunpack.c.l.s4 1987475062
    %v4893 = vunpack.c.0.s8 %v4892
    %v4894 = vlaneseq
    %v4895 = vshrl.u32 %v4894, 7
    %v4896 = vsub.s32 %v4893, %v4895
    %v4897 = vrot.slane %v4202, %v4896
    %v4899 = vunpack.c.l.s4 269488144
    %v4900 = vunpack.c.0.s8 %v4899
    %v4901 = vlaneseq
    %v4902 = vshrl.u32 %v4901, 7
    %v4903 = vsub.s32 %v4900, %v4902
    %v4904 = vrot.slane %v4203, %v4903
    %v4906 = vunpack.c.l.s4 842150450
    %v4907 = vunpack.c.0.s8 %v4906
    %v4908 = vlaneseq
    %v4909 = vshrl.u32 %v4908, 7
    %v4910 = vsub.s32 %v4907, %v4909
    %v4911 = vrot.slane %v4203, %v4910
    %v4913 = vunpack.c.l.s4 1414812756
    %v4914 = vunpack.c.0.s8 %v4913
    %v4915 = vlaneseq
    %v4916 = vshrl.u32 %v4915, 7
    %v4917 = vsub.s32 %v4914, %v4916
    %v4918 = vrot.slane %v4203, %v4917
    %v4920 = vunpack.c.l.s4 1987475062
    %v4921 = vunpack.c.0.s8 %v4920
    %v4922 = vlaneseq
    %v4923 = vshrl.u32 %v4922, 7
    %v4924 = vsub.s32 %v4921, %v4923
    %v4925 = vrot.slane %v4203, %v4924
    %v4927 = vunpack.c.l.s4 269488144
    %v4928 = vunpack.c.0.s8 %v4927
    %v4929 = vlaneseq
    %v4930 = vshrl.u32 %v4929, 7
    %v4931 = vsub.s32 %v4928, %v4930
    %v4932 = vrot.slane %v4204, %v4931
    %v4934 = vunpack.c.l.s4 842150450
    %v4935 = vunpack.c.0.s8 %v4934
    %v4936 = vlaneseq
    %v4937 = vshrl.u32 %v4936, 7
    %v4938 = vsub.s32 %v4935, %v4937
    %v4939 = vrot.slane %v4204, %v4938
    %v4941 = vunpack.c.l.s4 1414812756
    %v4942 = vunpack.c.0.s8 %v4941
    %v4943 = vlaneseq
    %v4944 = vshrl.u32 %v4943, 7
    %v4945 = vsub.s32 %v4942, %v4944
    %v4946 = vrot.slane %v4204, %v4945
    %v4948 = vunpack.c.l.s4 1987475062
    %v4949 = vunpack.c.0.s8 %v4948
    %v4950 = vlaneseq
    %v4951 = vshrl.u32 %v4950, 7
    %v4952 = vsub.s32 %v4949, %v4951
    %v4953 = vrot.slane %v4204, %v4952
    %v4955 = vunpack.c.l.s4 269488144
    %v4956 = vunpack.c.0.s8 %v4955
    %v4957 = vlaneseq
    %v4958 = vshrl.u32 %v4957, 7
    %v4959 = vsub.s32 %v4956, %v4958
    %v4960 = vrot.slane %v4205, %v4959
    %v4962 = vunpack.c.l.s4 842150450
    %v4963 = vunpack.c.0.s8 %v4962
    %v4964 = vlaneseq
    %v4965 = vshrl.u32 %v4964, 7
    %v4966 = vsub.s32 %v4963, %v4965
    %v4967 = vrot.slane %v4205, %v4966
    %v4969 = vunpack.c.l.s4 1414812756
    %v4970 = vunpack.c.0.s8 %v4969
    %v4971 = vlaneseq
    %v4972 = vshrl.u32 %v4971, 7
    %v4973 = vsub.s32 %v4970, %v4972
    %v4974 = vrot.slane %v4205, %v4973
    %v4976 = vunpack.c.l.s4 1987475062
    %v4977 = vunpack.c.0.s8 %v4976
    %v4978 = vlaneseq
    %v4979 = vshrl.u32 %v4978, 7
    %v4980 = vsub.s32 %v4977, %v4979
    %v4981 = vrot.slane %v4205, %v4980
    %v4983 = vunpack.c.l.s4 269488144
    %v4984 = vunpack.c.0.s8 %v4983
    %v4985 = vlaneseq
    %v4986 = vshrl.u32 %v4985, 7
    %v4987 = vsub.s32 %v4984, %v4986
    %v4988 = vrot.slane %v4206, %v4987
    %v4990 = vunpack.c.l.s4 842150450
    %v4991 = vunpack.c.0.s8 %v4990
    %v4992 = vlaneseq
    %v4993 = vshrl.u32 %v4992, 7
    %v4994 = vsub.s32 %v4991, %v4993
    %v4995 = vrot.slane %v4206, %v4994
    %v4997 = vunpack.c.l.s4 1414812756
    %v4998 = vunpack.c.0.s8 %v4997
    %v4999 = vlaneseq
    %v5000 = vshrl.u32 %v4999, 7
    %v5001 = vsub.s32 %v4998, %v5000
    %v5002 = vrot.slane %v4206, %v5001
    %v5004 = vunpack.c.l.s4 1987475062
    %v5005 = vunpack.c.0.s8 %v5004
    %v5006 = vlaneseq
    %v5007 = vshrl.u32 %v5006, 7
    %v5008 = vsub.s32 %v5005, %v5007
    %v5009 = vrot.slane %v4206, %v5008
    %v5011 = vunpack.c.l.s4 269488144
    %v5012 = vunpack.c.0.s8 %v5011
    %v5013 = vlaneseq
    %v5014 = vshrl.u32 %v5013, 7
    %v5015 = vsub.s32 %v5012, %v5014
    %v5016 = vrot.slane %v4207, %v5015
    %v5018 = vunpack.c.l.s4 842150450
    %v5019 = vunpack.c.0.s8 %v5018
    %v5020 = vlaneseq
    %v5021 = vshrl.u32 %v5020, 7
    %v5022 = vsub.s32 %v5019, %v5021
    %v5023 = vrot.slane %v4207, %v5022
    %v5025 = vunpack.c.l.s4 1414812756
    %v5026 = vunpack.c.0.s8 %v5025
    %v5027 = vlaneseq
    %v5028 = vshrl.u32 %v5027, 7
    %v5029 = vsub.s32 %v5026, %v5028
    %v5030 = vrot.slane %v4207, %v5029
    %v5032 = vunpack.c.l.s4 1987475062
    %v5033 = vunpack.c.0.s8 %v5032
    %v5034 = vlaneseq
    %v5035 = vshrl.u32 %v5034, 7
    %v5036 = vsub.s32 %v5033, %v5035
    %v5037 = vrot.slane %v4207, %v5036
    %v5039 = vunpack.c.l.s4 269488144
    %v5040 = vunpack.c.0.s8 %v5039
    %v5041 = vlaneseq
    %v5042 = vshrl.u32 %v5041, 7
    %v5043 = vsub.s32 %v5040, %v5042
    %v5044 = vrot.slane %v4208, %v5043
    %v5046 = vunpack.c.l.s4 842150450
    %v5047 = vunpack.c.0.s8 %v5046
    %v5048 = vlaneseq
    %v5049 = vshrl.u32 %v5048, 7
    %v5050 = vsub.s32 %v5047, %v5049
    %v5051 = vrot.slane %v4208, %v5050
    %v5053 = vunpack.c.l.s4 1414812756
    %v5054 = vunpack.c.0.s8 %v5053
    %v5055 = vlaneseq
    %v5056 = vshrl.u32 %v5055, 7
    %v5057 = vsub.s32 %v5054, %v5056
    %v5058 = vrot.slane %v4208, %v5057
    %v5060 = vunpack.c.l.s4 1987475062
    %v5061 = vunpack.c.0.s8 %v5060
    %v5062 = vlaneseq
    %v5063 = vshrl.u32 %v5062, 7
    %v5064 = vsub.s32 %v5061, %v5063
    %v5065 = vrot.slane %v4208, %v5064
    %v5067 = vunpack.c.l.s4 269488144
    %v5068 = vunpack.c.0.s8 %v5067
    %v5069 = vlaneseq
    %v5070 = vshrl.u32 %v5069, 7
    %v5071 = vsub.s32 %v5068, %v5070
    %v5072 = vrot.slane %v4209, %v5071
    %v5074 = vunpack.c.l.s4 842150450
    %v5075 = vunpack.c.0.s8 %v5074
    %v5076 = vlaneseq
    %v5077 = vshrl.u32 %v5076, 7
    %v5078 = vsub.s32 %v5075, %v5077
    %v5079 = vrot.slane %v4209, %v5078
    %v5081 = vunpack.c.l.s4 1414812756
    %v5082 = vunpack.c.0.s8 %v5081
    %v5083 = vlaneseq
    %v5084 = vshrl.u32 %v5083, 7
    %v5085 = vsub.s32 %v5082, %v5084
    %v5086 = vrot.slane %v4209, %v5085
    %v5088 = vunpack.c.l.s4 1987475062
    %v5089 = vunpack.c.0.s8 %v5088
    %v5090 = vlaneseq
    %v5091 = vshrl.u32 %v5090, 7
    %v5092 = vsub.s32 %v5089, %v5091
    %v5093 = vrot.slane %v4209, %v5092
    %v5095 = vunpack.c.l.s4 269488144
    %v5096 = vunpack.c.0.s8 %v5095
    %v5097 = vlaneseq
    %v5098 = vshrl.u32 %v5097, 7
    %v5099 = vsub.s32 %v5096, %v5098
    %v5100 = vrot.slane %v4210, %v5099
    %v5102 = vunpack.c.l.s4 842150450
    %v5103 = vunpack.c.0.s8 %v5102
    %v5104 = vlaneseq
    %v5105 = vshrl.u32 %v5104, 7
    %v5106 = vsub.s32 %v5103, %v5105
    %v5107 = vrot.slane %v4210, %v5106
    %v5109 = vunpack.c.l.s4 1414812756
    %v5110 = vunpack.c.0.s8 %v5109
    %v5111 = vlaneseq
    %v5112 = vshrl.u32 %v5111, 7
    %v5113 = vsub.s32 %v5110, %v5112
    %v5114 = vrot.slane %v4210, %v5113
    %v5116 = vunpack.c.l.s4 1987475062
    %v5117 = vunpack.c.0.s8 %v5116
    %v5118 = vlaneseq
    %v5119 = vshrl.u32 %v5118, 7
    %v5120 = vsub.s32 %v5117, %v5119
    %v5121 = vrot.slane %v4210, %v5120
    %v5123 = vunpack.c.l.s4 269488144
    %v5124 = vunpack.c.0.s8 %v5123
    %v5125 = vlaneseq
    %v5126 = vshrl.u32 %v5125, 7
    %v5127 = vsub.s32 %v5124, %v5126
    %v5128 = vrot.slane %v4211, %v5127
    %v5130 = vunpack.c.l.s4 842150450
    %v5131 = vunpack.c.0.s8 %v5130
    %v5132 = vlaneseq
    %v5133 = vshrl.u32 %v5132, 7
    %v5134 = vsub.s32 %v5131, %v5133
    %v5135 = vrot.slane %v4211, %v5134
    %v5137 = vunpack.c.l.s4 1414812756
    %v5138 = vunpack.c.0.s8 %v5137
    %v5139 = vlaneseq
    %v5140 = vshrl.u32 %v5139, 7
    %v5141 = vsub.s32 %v5138, %v5140
    %v5142 = vrot.slane %v4211, %v5141
    %v5144 = vunpack.c.l.s4 1987475062
    %v5145 = vunpack.c.0.s8 %v5144
    %v5146 = vlaneseq
    %v5147 = vshrl.u32 %v5146, 7
    %v5148 = vsub.s32 %v5145, %v5147
    %v5149 = vrot.slane %v4211, %v5148
    %v5151 = vunpack.c.l.s4 269488144
    %v5152 = vunpack.c.0.s8 %v5151
    %v5153 = vlaneseq
    %v5154 = vshrl.u32 %v5153, 7
    %v5155 = vsub.s32 %v5152, %v5154
    %v5156 = vrot.slane %v4212, %v5155
    %v5158 = vunpack.c.l.s4 842150450
    %v5159 = vunpack.c.0.s8 %v5158
    %v5160 = vlaneseq
    %v5161 = vshrl.u32 %v5160, 7
    %v5162 = vsub.s32 %v5159, %v5161
    %v5163 = vrot.slane %v4212, %v5162
    %v5165 = vunpack.c.l.s4 1414812756
    %v5166 = vunpack.c.0.s8 %v5165
    %v5167 = vlaneseq
    %v5168 = vshrl.u32 %v5167, 7
    %v5169 = vsub.s32 %v5166, %v5168
    %v5170 = vrot.slane %v4212, %v5169
    %v5172 = vunpack.c.l.s4 1987475062
    %v5173 = vunpack.c.0.s8 %v5172
    %v5174 = vlaneseq
    %v5175 = vshrl.u32 %v5174, 7
    %v5176 = vsub.s32 %v5173, %v5175
    %v5177 = vrot.slane %v4212, %v5176
    %v5179 = vunpack.c.l.s4 269488144
    %v5180 = vunpack.c.0.s8 %v5179
    %v5181 = vlaneseq
    %v5182 = vshrl.u32 %v5181, 7
    %v5183 = vsub.s32 %v5180, %v5182
    %v5184 = vrot.slane %v4213, %v5183
    %v5186 = vunpack.c.l.s4 842150450
    %v5187 = vunpack.c.0.s8 %v5186
    %v5188 = vlaneseq
    %v5189 = vshrl.u32 %v5188, 7
    %v5190 = vsub.s32 %v5187, %v5189
    %v5191 = vrot.slane %v4213, %v5190
    %v5193 = vunpack.c.l.s4 1414812756
    %v5194 = vunpack.c.0.s8 %v5193
    %v5195 = vlaneseq
    %v5196 = vshrl.u32 %v5195, 7
    %v5197 = vsub.s32 %v5194, %v5196
    %v5198 = vrot.slane %v4213, %v5197
    %v5200 = vunpack.c.l.s4 1987475062
    %v5201 = vunpack.c.0.s8 %v5200
    %v5202 = vlaneseq
    %v5203 = vshrl.u32 %v5202, 7
    %v5204 = vsub.s32 %v5201, %v5203
    %v5205 = vrot.slane %v4213, %v5204
    %v5207 = vunpack.c.l.s4 269488144
    %v5208 = vunpack.c.0.s8 %v5207
    %v5209 = vlaneseq
    %v5210 = vshrl.u32 %v5209, 7
    %v5211 = vsub.s32 %v5208, %v5210
    %v5212 = vrot.slane %v4214, %v5211
    %v5214 = vunpack.c.l.s4 842150450
    %v5215 = vunpack.c.0.s8 %v5214
    %v5216 = vlaneseq
    %v5217 = vshrl.u32 %v5216, 7
    %v5218 = vsub.s32 %v5215, %v5217
    %v5219 = vrot.slane %v4214, %v5218
    %v5221 = vunpack.c.l.s4 1414812756
    %v5222 = vunpack.c.0.s8 %v5221
    %v5223 = vlaneseq
    %v5224 = vshrl.u32 %v5223, 7
    %v5225 = vsub.s32 %v5222, %v5224
    %v5226 = vrot.slane %v4214, %v5225
    %v5228 = vunpack.c.l.s4 1987475062
    %v5229 = vunpack.c.0.s8 %v5228
    %v5230 = vlaneseq
    %v5231 = vshrl.u32 %v5230, 7
    %v5232 = vsub.s32 %v5229, %v5231
    %v5233 = vrot.slane %v4214, %v5232
    %v5235 = vunpack.c.l.s4 269488144
    %v5236 = vunpack.c.0.s8 %v5235
    %v5237 = vlaneseq
    %v5238 = vshrl.u32 %v5237, 7
    %v5239 = vsub.s32 %v5236, %v5238
    %v5240 = vrot.slane %v4215, %v5239
    %v5242 = vunpack.c.l.s4 842150450
    %v5243 = vunpack.c.0.s8 %v5242
    %v5244 = vlaneseq
    %v5245 = vshrl.u32 %v5244, 7
    %v5246 = vsub.s32 %v5243, %v5245
    %v5247 = vrot.slane %v4215, %v5246
    %v5249 = vunpack.c.l.s4 1414812756
    %v5250 = vunpack.c.0.s8 %v5249
    %v5251 = vlaneseq
    %v5252 = vshrl.u32 %v5251, 7
    %v5253 = vsub.s32 %v5250, %v5252
    %v5254 = vrot.slane %v4215, %v5253
    %v5256 = vunpack.c.l.s4 1987475062
    %v5257 = vunpack.c.0.s8 %v5256
    %v5258 = vlaneseq
    %v5259 = vshrl.u32 %v5258, 7
    %v5260 = vsub.s32 %v5257, %v5259
    %v5261 = vrot.slane %v4215, %v5260
    %v5263 = vunpack.c.l.s4 269488144
    %v5264 = vunpack.c.0.s8 %v5263
    %v5265 = vlaneseq
    %v5266 = vshrl.u32 %v5265, 7
    %v5267 = vsub.s32 %v5264, %v5266
    %v5268 = vrot.slane %v4216, %v5267
    %v5270 = vunpack.c.l.s4 842150450
    %v5271 = vunpack.c.0.s8 %v5270
    %v5272 = vlaneseq
    %v5273 = vshrl.u32 %v5272, 7
    %v5274 = vsub.s32 %v5271, %v5273
    %v5275 = vrot.slane %v4216, %v5274
    %v5277 = vunpack.c.l.s4 1414812756
    %v5278 = vunpack.c.0.s8 %v5277
    %v5279 = vlaneseq
    %v5280 = vshrl.u32 %v5279, 7
    %v5281 = vsub.s32 %v5278, %v5280
    %v5282 = vrot.slane %v4216, %v5281
    %v5284 = vunpack.c.l.s4 1987475062
    %v5285 = vunpack.c.0.s8 %v5284
    %v5286 = vlaneseq
    %v5287 = vshrl.u32 %v5286, 7
    %v5288 = vsub.s32 %v5285, %v5287
    %v5289 = vrot.slane %v4216, %v5288
    %v5291 = vunpack.c.l.s4 269488144
    %v5292 = vunpack.c.0.s8 %v5291
    %v5293 = vlaneseq
    %v5294 = vshrl.u32 %v5293, 7
    %v5295 = vsub.s32 %v5292, %v5294
    %v5296 = vrot.slane %v4217, %v5295
    %v5298 = vunpack.c.l.s4 842150450
    %v5299 = vunpack.c.0.s8 %v5298
    %v5300 = vlaneseq
    %v5301 = vshrl.u32 %v5300, 7
    %v5302 = vsub.s32 %v5299, %v5301
    %v5303 = vrot.slane %v4217, %v5302
    %v5305 = vunpack.c.l.s4 1414812756
    %v5306 = vunpack.c.0.s8 %v5305
    %v5307 = vlaneseq
    %v5308 = vshrl.u32 %v5307, 7
    %v5309 = vsub.s32 %v5306, %v5308
    %v5310 = vrot.slane %v4217, %v5309
    %v5312 = vunpack.c.l.s4 1987475062
    %v5313 = vunpack.c.0.s8 %v5312
    %v5314 = vlaneseq
    %v5315 = vshrl.u32 %v5314, 7
    %v5316 = vsub.s32 %v5313, %v5315
    %v5317 = vrot.slane %v4217, %v5316
    %v5319 = vunpack.c.l.s4 269488144
    %v5320 = vunpack.c.0.s8 %v5319
    %v5321 = vlaneseq
    %v5322 = vshrl.u32 %v5321, 7
    %v5323 = vsub.s32 %v5320, %v5322
    %v5324 = vrot.slane %v4218, %v5323
    %v5326 = vunpack.c.l.s4 842150450
    %v5327 = vunpack.c.0.s8 %v5326
    %v5328 = vlaneseq
    %v5329 = vshrl.u32 %v5328, 7
    %v5330 = vsub.s32 %v5327, %v5329
    %v5331 = vrot.slane %v4218, %v5330
    %v5333 = vunpack.c.l.s4 1414812756
    %v5334 = vunpack.c.0.s8 %v5333
    %v5335 = vlaneseq
    %v5336 = vshrl.u32 %v5335, 7
    %v5337 = vsub.s32 %v5334, %v5336
    %v5338 = vrot.slane %v4218, %v5337
    %v5340 = vunpack.c.l.s4 1987475062
    %v5341 = vunpack.c.0.s8 %v5340
    %v5342 = vlaneseq
    %v5343 = vshrl.u32 %v5342, 7
    %v5344 = vsub.s32 %v5341, %v5343
    %v5345 = vrot.slane %v4218, %v5344
    %v5347 = vunpack.c.l.s4 269488144
    %v5348 = vunpack.c.0.s8 %v5347
    %v5349 = vlaneseq
    %v5350 = vshrl.u32 %v5349, 7
    %v5351 = vsub.s32 %v5348, %v5350
    %v5352 = vrot.slane %v4219, %v5351
    %v5354 = vunpack.c.l.s4 842150450
    %v5355 = vunpack.c.0.s8 %v5354
    %v5356 = vlaneseq
    %v5357 = vshrl.u32 %v5356, 7
    %v5358 = vsub.s32 %v5355, %v5357
    %v5359 = vrot.slane %v4219, %v5358
    %v5361 = vunpack.c.l.s4 1414812756
    %v5362 = vunpack.c.0.s8 %v5361
    %v5363 = vlaneseq
    %v5364 = vshrl.u32 %v5363, 7
    %v5365 = vsub.s32 %v5362, %v5364
    %v5366 = vrot.slane %v4219, %v5365
    %v5368 = vunpack.c.l.s4 1987475062
    %v5369 = vunpack.c.0.s8 %v5368
    %v5370 = vlaneseq
    %v5371 = vshrl.u32 %v5370, 7
    %v5372 = vsub.s32 %v5369, %v5371
    %v5373 = vrot.slane %v4219, %v5372
    %v5375 = vunpack.c.l.s4 269488144
    %v5376 = vunpack.c.0.s8 %v5375
    %v5377 = vlaneseq
    %v5378 = vshrl.u32 %v5377, 7
    %v5379 = vsub.s32 %v5376, %v5378
    %v5380 = vrot.slane %v4220, %v5379
    %v5382 = vunpack.c.l.s4 842150450
    %v5383 = vunpack.c.0.s8 %v5382
    %v5384 = vlaneseq
    %v5385 = vshrl.u32 %v5384, 7
    %v5386 = vsub.s32 %v5383, %v5385
    %v5387 = vrot.slane %v4220, %v5386
    %v5389 = vunpack.c.l.s4 1414812756
    %v5390 = vunpack.c.0.s8 %v5389
    %v5391 = vlaneseq
    %v5392 = vshrl.u32 %v5391, 7
    %v5393 = vsub.s32 %v5390, %v5392
    %v5394 = vrot.slane %v4220, %v5393
    %v5396 = vunpack.c.l.s4 1987475062
    %v5397 = vunpack.c.0.s8 %v5396
    %v5398 = vlaneseq
    %v5399 = vshrl.u32 %v5398, 7
    %v5400 = vsub.s32 %v5397, %v5399
    %v5401 = vrot.slane %v4220, %v5400
    %v5403 = vunpack.c.l.s4 269488144
    %v5404 = vunpack.c.0.s8 %v5403
    %v5405 = vlaneseq
    %v5406 = vshrl.u32 %v5405, 7
    %v5407 = vsub.s32 %v5404, %v5406
    %v5408 = vrot.slane %v4221, %v5407
    %v5410 = vunpack.c.l.s4 842150450
    %v5411 = vunpack.c.0.s8 %v5410
    %v5412 = vlaneseq
    %v5413 = vshrl.u32 %v5412, 7
    %v5414 = vsub.s32 %v5411, %v5413
    %v5415 = vrot.slane %v4221, %v5414
    %v5417 = vunpack.c.l.s4 1414812756
    %v5418 = vunpack.c.0.s8 %v5417
    %v5419 = vlaneseq
    %v5420 = vshrl.u32 %v5419, 7
    %v5421 = vsub.s32 %v5418, %v5420
    %v5422 = vrot.slane %v4221, %v5421
    %v5424 = vunpack.c.l.s4 1987475062
    %v5425 = vunpack.c.0.s8 %v5424
    %v5426 = vlaneseq
    %v5427 = vshrl.u32 %v5426, 7
    %v5428 = vsub.s32 %v5425, %v5427
    %v5429 = vrot.slane %v4221, %v5428
    %v5431 = vunpack.c.l.s4 269488144
    %v5432 = vunpack.c.0.s8 %v5431
    %v5433 = vlaneseq
    %v5434 = vshrl.u32 %v5433, 7
    %v5435 = vsub.s32 %v5432, %v5434
    %v5436 = vrot.slane %v4222, %v5435
    %v5438 = vunpack.c.l.s4 842150450
    %v5439 = vunpack.c.0.s8 %v5438
    %v5440 = vlaneseq
    %v5441 = vshrl.u32 %v5440, 7
    %v5442 = vsub.s32 %v5439, %v5441
    %v5443 = vrot.slane %v4222, %v5442
    %v5445 = vunpack.c.l.s4 1414812756
    %v5446 = vunpack.c.0.s8 %v5445
    %v5447 = vlaneseq
    %v5448 = vshrl.u32 %v5447, 7
    %v5449 = vsub.s32 %v5446, %v5448
    %v5450 = vrot.slane %v4222, %v5449
    %v5452 = vunpack.c.l.s4 1987475062
    %v5453 = vunpack.c.0.s8 %v5452
    %v5454 = vlaneseq
    %v5455 = vshrl.u32 %v5454, 7
    %v5456 = vsub.s32 %v5453, %v5455
    %v5457 = vrot.slane %v4222, %v5456
    %v5459 = vunpack.c.l.s4 269488144
    %v5460 = vunpack.c.0.s8 %v5459
    %v5461 = vlaneseq
    %v5462 = vshrl.u32 %v5461, 7
    %v5463 = vsub.s32 %v5460, %v5462
    %v5464 = vrot.slane %v4223, %v5463
    %v5466 = vunpack.c.l.s4 842150450
    %v5467 = vunpack.c.0.s8 %v5466
    %v5468 = vlaneseq
    %v5469 = vshrl.u32 %v5468, 7
    %v5470 = vsub.s32 %v5467, %v5469
    %v5471 = vrot.slane %v4223, %v5470
    %v5473 = vunpack.c.l.s4 1414812756
    %v5474 = vunpack.c.0.s8 %v5473
    %v5475 = vlaneseq
    %v5476 = vshrl.u32 %v5475, 7
    %v5477 = vsub.s32 %v5474, %v5476
    %v5478 = vrot.slane %v4223, %v5477
    %v5480 = vunpack.c.l.s4 1987475062
    %v5481 = vunpack.c.0.s8 %v5480
    %v5482 = vlaneseq
    %v5483 = vshrl.u32 %v5482, 7
    %v5484 = vsub.s32 %v5481, %v5483
    %v5485 = vrot.slane %v4223, %v5484
    %v5487 = vunpack.c.l.s4 269488144
    %v5488 = vunpack.c.0.s8 %v5487
    %v5489 = vlaneseq
    %v5490 = vshrl.u32 %v5489, 7
    %v5491 = vsub.s32 %v5488, %v5490
    %v5492 = vrot.slane %v4224, %v5491
    %v5494 = vunpack.c.l.s4 842150450
    %v5495 = vunpack.c.0.s8 %v5494
    %v5496 = vlaneseq
    %v5497 = vshrl.u32 %v5496, 7
    %v5498 = vsub.s32 %v5495, %v5497
    %v5499 = vrot.slane %v4224, %v5498
    %v5501 = vunpack.c.l.s4 1414812756
    %v5502 = vunpack.c.0.s8 %v5501
    %v5503 = vlaneseq
    %v5504 = vshrl.u32 %v5503, 7
    %v5505 = vsub.s32 %v5502, %v5504
    %v5506 = vrot.slane %v4224, %v5505
    %v5508 = vunpack.c.l.s4 1987475062
    %v5509 = vunpack.c.0.s8 %v5508
    %v5510 = vlaneseq
    %v5511 = vshrl.u32 %v5510, 7
    %v5512 = vsub.s32 %v5509, %v5511
    %v5513 = vrot.slane %v4224, %v5512
    %v5515 = vunpack.c.l.s4 269488144
    %v5516 = vunpack.c.0.s8 %v5515
    %v5517 = vlaneseq
    %v5518 = vshrl.u32 %v5517, 7
    %v5519 = vsub.s32 %v5516, %v5518
    %v5520 = vrot.slane %v4225, %v5519
    %v5522 = vunpack.c.l.s4 842150450
    %v5523 = vunpack.c.0.s8 %v5522
    %v5524 = vlaneseq
    %v5525 = vshrl.u32 %v5524, 7
    %v5526 = vsub.s32 %v5523, %v5525
    %v5527 = vrot.slane %v4225, %v5526
    %v5529 = vunpack.c.l.s4 1414812756
    %v5530 = vunpack.c.0.s8 %v5529
    %v5531 = vlaneseq
    %v5532 = vshrl.u32 %v5531, 7
    %v5533 = vsub.s32 %v5530, %v5532
    %v5534 = vrot.slane %v4225, %v5533
    %v5536 = vunpack.c.l.s4 1987475062
    %v5537 = vunpack.c.0.s8 %v5536
    %v5538 = vlaneseq
    %v5539 = vshrl.u32 %v5538, 7
    %v5540 = vsub.s32 %v5537, %v5539
    %v5541 = vrot.slane %v4225, %v5540
    %v5543 = vunpack.c.l.s4 269488144
    %v5544 = vunpack.c.0.s8 %v5543
    %v5545 = vlaneseq
    %v5546 = vshrl.u32 %v5545, 7
    %v5547 = vsub.s32 %v5544, %v5546
    %v5548 = vrot.slane %v4226, %v5547
    %v5550 = vunpack.c.l.s4 842150450
    %v5551 = vunpack.c.0.s8 %v5550
    %v5552 = vlaneseq
    %v5553 = vshrl.u32 %v5552, 7
    %v5554 = vsub.s32 %v5551, %v5553
    %v5555 = vrot.slane %v4226, %v5554
    %v5557 = vunpack.c.l.s4 1414812756
    %v5558 = vunpack.c.0.s8 %v5557
    %v5559 = vlaneseq
    %v5560 = vshrl.u32 %v5559, 7
    %v5561 = vsub.s32 %v5558, %v5560
    %v5562 = vrot.slane %v4226, %v5561
    %v5564 = vunpack.c.l.s4 1987475062
    %v5565 = vunpack.c.0.s8 %v5564
    %v5566 = vlaneseq
    %v5567 = vshrl.u32 %v5566, 7
    %v5568 = vsub.s32 %v5565, %v5567
    %v5569 = vrot.slane %v4226, %v5568
    %v5571 = vunpack.c.l.s4 269488144
    %v5572 = vunpack.c.0.s8 %v5571
    %v5573 = vlaneseq
    %v5574 = vshrl.u32 %v5573, 7
    %v5575 = vsub.s32 %v5572, %v5574
    %v5576 = vrot.slane %v4227, %v5575
    %v5578 = vunpack.c.l.s4 842150450
    %v5579 = vunpack.c.0.s8 %v5578
    %v5580 = vlaneseq
    %v5581 = vshrl.u32 %v5580, 7
    %v5582 = vsub.s32 %v5579, %v5581
    %v5583 = vrot.slane %v4227, %v5582
    %v5585 = vunpack.c.l.s4 1414812756
    %v5586 = vunpack.c.0.s8 %v5585
    %v5587 = vlaneseq
    %v5588 = vshrl.u32 %v5587, 7
    %v5589 = vsub.s32 %v5586, %v5588
    %v5590 = vrot.slane %v4227, %v5589
    %v5592 = vunpack.c.l.s4 1987475062
    %v5593 = vunpack.c.0.s8 %v5592
    %v5594 = vlaneseq
    %v5595 = vshrl.u32 %v5594, 7
    %v5596 = vsub.s32 %v5593, %v5595
    %v5597 = vrot.slane %v4227, %v5596
    %v5599 = vunpack.c.l.s4 269488144
    %v5600 = vunpack.c.0.s8 %v5599
    %v5601 = vlaneseq
    %v5602 = vshrl.u32 %v5601, 7
    %v5603 = vsub.s32 %v5600, %v5602
    %v5604 = vrot.slane %v4228, %v5603
    %v5606 = vunpack.c.l.s4 842150450
    %v5607 = vunpack.c.0.s8 %v5606
    %v5608 = vlaneseq
    %v5609 = vshrl.u32 %v5608, 7
    %v5610 = vsub.s32 %v5607, %v5609
    %v5611 = vrot.slane %v4228, %v5610
    %v5613 = vunpack.c.l.s4 1414812756
    %v5614 = vunpack.c.0.s8 %v5613
    %v5615 = vlaneseq
    %v5616 = vshrl.u32 %v5615, 7
    %v5617 = vsub.s32 %v5614, %v5616
    %v5618 = vrot.slane %v4228, %v5617
    %v5620 = vunpack.c.l.s4 1987475062
    %v5621 = vunpack.c.0.s8 %v5620
    %v5622 = vlaneseq
    %v5623 = vshrl.u32 %v5622, 7
    %v5624 = vsub.s32 %v5621, %v5623
    %v5625 = vrot.slane %v4228, %v5624
    %v5627 = vunpack.c.l.s4 269488144
    %v5628 = vunpack.c.0.s8 %v5627
    %v5629 = vlaneseq
    %v5630 = vshrl.u32 %v5629, 7
    %v5631 = vsub.s32 %v5628, %v5630
    %v5632 = vrot.slane %v4229, %v5631
    %v5634 = vunpack.c.l.s4 842150450
    %v5635 = vunpack.c.0.s8 %v5634
    %v5636 = vlaneseq
    %v5637 = vshrl.u32 %v5636, 7
    %v5638 = vsub.s32 %v5635, %v5637
    %v5639 = vrot.slane %v4229, %v5638
    %v5641 = vunpack.c.l.s4 1414812756
    %v5642 = vunpack.c.0.s8 %v5641
    %v5643 = vlaneseq
    %v5644 = vshrl.u32 %v5643, 7
    %v5645 = vsub.s32 %v5642, %v5644
    %v5646 = vrot.slane %v4229, %v5645
    %v5648 = vunpack.c.l.s4 1987475062
    %v5649 = vunpack.c.0.s8 %v5648
    %v5650 = vlaneseq
    %v5651 = vshrl.u32 %v5650, 7
    %v5652 = vsub.s32 %v5649, %v5651
    %v5653 = vrot.slane %v4229, %v5652
    %v5655 = vunpack.c.l.s4 269488144
    %v5656 = vunpack.c.0.s8 %v5655
    %v5657 = vlaneseq
    %v5658 = vshrl.u32 %v5657, 7
    %v5659 = vsub.s32 %v5656, %v5658
    %v5660 = vrot.slane %v4230, %v5659
    %v5662 = vunpack.c.l.s4 842150450
    %v5663 = vunpack.c.0.s8 %v5662
    %v5664 = vlaneseq
    %v5665 = vshrl.u32 %v5664, 7
    %v5666 = vsub.s32 %v5663, %v5665
    %v5667 = vrot.slane %v4230, %v5666
    %v5669 = vunpack.c.l.s4 1414812756
    %v5670 = vunpack.c.0.s8 %v5669
    %v5671 = vlaneseq
    %v5672 = vshrl.u32 %v5671, 7
    %v5673 = vsub.s32 %v5670, %v5672
    %v5674 = vrot.slane %v4230, %v5673
    %v5676 = vunpack.c.l.s4 1987475062
    %v5677 = vunpack.c.0.s8 %v5676
    %v5678 = vlaneseq
    %v5679 = vshrl.u32 %v5678, 7
    %v5680 = vsub.s32 %v5677, %v5679
    %v5681 = vrot.slane %v4230, %v5680
    %v5683 = vunpack.c.l.s4 269488144
    %v5684 = vunpack.c.0.s8 %v5683
    %v5685 = vlaneseq
    %v5686 = vshrl.u32 %v5685, 7
    %v5687 = vsub.s32 %v5684, %v5686
    %v5688 = vrot.slane %v4231, %v5687
    %v5690 = vunpack.c.l.s4 842150450
    %v5691 = vunpack.c.0.s8 %v5690
    %v5692 = vlaneseq
    %v5693 = vshrl.u32 %v5692, 7
    %v5694 = vsub.s32 %v5691, %v5693
    %v5695 = vrot.slane %v4231, %v5694
    %v5697 = vunpack.c.l.s4 1414812756
    %v5698 = vunpack.c.0.s8 %v5697
    %v5699 = vlaneseq
    %v5700 = vshrl.u32 %v5699, 7
    %v5701 = vsub.s32 %v5698, %v5700
    %v5702 = vrot.slane %v4231, %v5701
    %v5704 = vunpack.c.l.s4 1987475062
    %v5705 = vunpack.c.0.s8 %v5704
    %v5706 = vlaneseq
    %v5707 = vshrl.u32 %v5706, 7
    %v5708 = vsub.s32 %v5705, %v5707
    %v5709 = vrot.slane %v4231, %v5708
    %v5711 = vunpack.c.l.s4 269488144
    %v5712 = vunpack.c.0.s8 %v5711
    %v5713 = vlaneseq
    %v5714 = vshrl.u32 %v5713, 7
    %v5715 = vsub.s32 %v5712, %v5714
    %v5716 = vrot.slane %v4232, %v5715
    %v5718 = vunpack.c.l.s4 842150450
    %v5719 = vunpack.c.0.s8 %v5718
    %v5720 = vlaneseq
    %v5721 = vshrl.u32 %v5720, 7
    %v5722 = vsub.s32 %v5719, %v5721
    %v5723 = vrot.slane %v4232, %v5722
    %v5725 = vunpack.c.l.s4 1414812756
    %v5726 = vunpack.c.0.s8 %v5725
    %v5727 = vlaneseq
    %v5728 = vshrl.u32 %v5727, 7
    %v5729 = vsub.s32 %v5726, %v5728
    %v5730 = vrot.slane %v4232, %v5729
    %v5732 = vunpack.c.l.s4 1987475062
    %v5733 = vunpack.c.0.s8 %v5732
    %v5734 = vlaneseq
    %v5735 = vshrl.u32 %v5734, 7
    %v5736 = vsub.s32 %v5733, %v5735
    %v5737 = vrot.slane %v4232, %v5736
    %v5739 = vunpack.c.l.s4 269488144
    %v5740 = vunpack.c.0.s8 %v5739
    %v5741 = vlaneseq
    %v5742 = vshrl.u32 %v5741, 7
    %v5743 = vsub.s32 %v5740, %v5742
    %v5744 = vrot.slane %v4233, %v5743
    %v5746 = vunpack.c.l.s4 842150450
    %v5747 = vunpack.c.0.s8 %v5746
    %v5748 = vlaneseq
    %v5749 = vshrl.u32 %v5748, 7
    %v5750 = vsub.s32 %v5747, %v5749
    %v5751 = vrot.slane %v4233, %v5750
    %v5753 = vunpack.c.l.s4 1414812756
    %v5754 = vunpack.c.0.s8 %v5753
    %v5755 = vlaneseq
    %v5756 = vshrl.u32 %v5755, 7
    %v5757 = vsub.s32 %v5754, %v5756
    %v5758 = vrot.slane %v4233, %v5757
    %v5760 = vunpack.c.l.s4 1987475062
    %v5761 = vunpack.c.0.s8 %v5760
    %v5762 = vlaneseq
    %v5763 = vshrl.u32 %v5762, 7
    %v5764 = vsub.s32 %v5761, %v5763
    %v5765 = vrot.slane %v4233, %v5764
    %v5767 = vunpack.c.l.s4 269488144
    %v5768 = vunpack.c.0.s8 %v5767
    %v5769 = vlaneseq
    %v5770 = vshrl.u32 %v5769, 7
    %v5771 = vsub.s32 %v5768, %v5770
    %v5772 = vrot.slane %v4234, %v5771
    %v5774 = vunpack.c.l.s4 842150450
    %v5775 = vunpack.c.0.s8 %v5774
    %v5776 = vlaneseq
    %v5777 = vshrl.u32 %v5776, 7
    %v5778 = vsub.s32 %v5775, %v5777
    %v5779 = vrot.slane %v4234, %v5778
    %v5781 = vunpack.c.l.s4 1414812756
    %v5782 = vunpack.c.0.s8 %v5781
    %v5783 = vlaneseq
    %v5784 = vshrl.u32 %v5783, 7
    %v5785 = vsub.s32 %v5782, %v5784
    %v5786 = vrot.slane %v4234, %v5785
    %v5788 = vunpack.c.l.s4 1987475062
    %v5789 = vunpack.c.0.s8 %v5788
    %v5790 = vlaneseq
    %v5791 = vshrl.u32 %v5790, 7
    %v5792 = vsub.s32 %v5789, %v5791
    %v5793 = vrot.slane %v4234, %v5792
    %v5795 = vunpack.c.l.s4 269488144
    %v5796 = vunpack.c.0.s8 %v5795
    %v5797 = vlaneseq
    %v5798 = vshrl.u32 %v5797, 7
    %v5799 = vsub.s32 %v5796, %v5798
    %v5800 = vrot.slane %v4235, %v5799
    %v5802 = vunpack.c.l.s4 842150450
    %v5803 = vunpack.c.0.s8 %v5802
    %v5804 = vlaneseq
    %v5805 = vshrl.u32 %v5804, 7
    %v5806 = vsub.s32 %v5803, %v5805
    %v5807 = vrot.slane %v4235, %v5806
    %v5809 = vunpack.c.l.s4 1414812756
    %v5810 = vunpack.c.0.s8 %v5809
    %v5811 = vlaneseq
    %v5812 = vshrl.u32 %v5811, 7
    %v5813 = vsub.s32 %v5810, %v5812
    %v5814 = vrot.slane %v4235, %v5813
    %v5816 = vunpack.c.l.s4 1987475062
    %v5817 = vunpack.c.0.s8 %v5816
    %v5818 = vlaneseq
    %v5819 = vshrl.u32 %v5818, 7
    %v5820 = vsub.s32 %v5817, %v5819
    %v5821 = vrot.slane %v4235, %v5820
    %v5823 = vunpack.c.l.s4 269488144
    %v5824 = vunpack.c.0.s8 %v5823
    %v5825 = vlaneseq
    %v5826 = vshrl.u32 %v5825, 7
    %v5827 = vsub.s32 %v5824, %v5826
    %v5828 = vrot.slane %v4236, %v5827
    %v5830 = vunpack.c.l.s4 842150450
    %v5831 = vunpack.c.0.s8 %v5830
    %v5832 = vlaneseq
    %v5833 = vshrl.u32 %v5832, 7
    %v5834 = vsub.s32 %v5831, %v5833
    %v5835 = vrot.slane %v4236, %v5834
    %v5837 = vunpack.c.l.s4 1414812756
    %v5838 = vunpack.c.0.s8 %v5837
    %v5839 = vlaneseq
    %v5840 = vshrl.u32 %v5839, 7
    %v5841 = vsub.s32 %v5838, %v5840
    %v5842 = vrot.slane %v4236, %v5841
    %v5844 = vunpack.c.l.s4 1987475062
    %v5845 = vunpack.c.0.s8 %v5844
    %v5846 = vlaneseq
    %v5847 = vshrl.u32 %v5846, 7
    %v5848 = vsub.s32 %v5845, %v5847
    %v5849 = vrot.slane %v4236, %v5848
    %v5851 = vunpack.c.l.s4 269488144
    %v5852 = vunpack.c.0.s8 %v5851
    %v5853 = vlaneseq
    %v5854 = vshrl.u32 %v5853, 7
    %v5855 = vsub.s32 %v5852, %v5854
    %v5856 = vrot.slane %v4237, %v5855
    %v5858 = vunpack.c.l.s4 842150450
    %v5859 = vunpack.c.0.s8 %v5858
    %v5860 = vlaneseq
    %v5861 = vshrl.u32 %v5860, 7
    %v5862 = vsub.s32 %v5859, %v5861
    %v5863 = vrot.slane %v4237, %v5862
    %v5865 = vunpack.c.l.s4 1414812756
    %v5866 = vunpack.c.0.s8 %v5865
    %v5867 = vlaneseq
    %v5868 = vshrl.u32 %v5867, 7
    %v5869 = vsub.s32 %v5866, %v5868
    %v5870 = vrot.slane %v4237, %v5869
    %v5872 = vunpack.c.l.s4 1987475062
    %v5873 = vunpack.c.0.s8 %v5872
    %v5874 = vlaneseq
    %v5875 = vshrl.u32 %v5874, 7
    %v5876 = vsub.s32 %v5873, %v5875
    %v5877 = vrot.slane %v4237, %v5876
    %v5879 = vunpack.c.l.s4 269488144
    %v5880 = vunpack.c.0.s8 %v5879
    %v5881 = vlaneseq
    %v5882 = vshrl.u32 %v5881, 7
    %v5883 = vsub.s32 %v5880, %v5882
    %v5884 = vrot.slane %v4238, %v5883
    %v5886 = vunpack.c.l.s4 842150450
    %v5887 = vunpack.c.0.s8 %v5886
    %v5888 = vlaneseq
    %v5889 = vshrl.u32 %v5888, 7
    %v5890 = vsub.s32 %v5887, %v5889
    %v5891 = vrot.slane %v4238, %v5890
    %v5893 = vunpack.c.l.s4 1414812756
    %v5894 = vunpack.c.0.s8 %v5893
    %v5895 = vlaneseq
    %v5896 = vshrl.u32 %v5895, 7
    %v5897 = vsub.s32 %v5894, %v5896
    %v5898 = vrot.slane %v4238, %v5897
    %v5900 = vunpack.c.l.s4 1987475062
    %v5901 = vunpack.c.0.s8 %v5900
    %v5902 = vlaneseq
    %v5903 = vshrl.u32 %v5902, 7
    %v5904 = vsub.s32 %v5901, %v5903
    %v5905 = vrot.slane %v4238, %v5904
    %v5907 = vunpack.c.l.s4 269488144
    %v5908 = vunpack.c.0.s8 %v5907
    %v5909 = vlaneseq
    %v5910 = vshrl.u32 %v5909, 7
    %v5911 = vsub.s32 %v5908, %v5910
    %v5912 = vrot.slane %v4239, %v5911
    %v5914 = vunpack.c.l.s4 842150450
    %v5915 = vunpack.c.0.s8 %v5914
    %v5916 = vlaneseq
    %v5917 = vshrl.u32 %v5916, 7
    %v5918 = vsub.s32 %v5915, %v5917
    %v5919 = vrot.slane %v4239, %v5918
    %v5921 = vunpack.c.l.s4 1414812756
    %v5922 = vunpack.c.0.s8 %v5921
    %v5923 = vlaneseq
    %v5924 = vshrl.u32 %v5923, 7
    %v5925 = vsub.s32 %v5922, %v5924
    %v5926 = vrot.slane %v4239, %v5925
    %v5928 = vunpack.c.l.s4 1987475062
    %v5929 = vunpack.c.0.s8 %v5928
    %v5930 = vlaneseq
    %v5931 = vshrl.u32 %v5930, 7
    %v5932 = vsub.s32 %v5929, %v5931
    %v5933 = vrot.slane %v4239, %v5932
    %v5935 = vunpack.c.l.s4 269488144
    %v5936 = vunpack.c.0.s8 %v5935
    %v5937 = vlaneseq
    %v5938 = vshrl.u32 %v5937, 7
    %v5939 = vsub.s32 %v5936, %v5938
    %v5940 = vrot.slane %v4240, %v5939
    %v5942 = vunpack.c.l.s4 842150450
    %v5943 = vunpack.c.0.s8 %v5942
    %v5944 = vlaneseq
    %v5945 = vshrl.u32 %v5944, 7
    %v5946 = vsub.s32 %v5943, %v5945
    %v5947 = vrot.slane %v4240, %v5946
    %v5949 = vunpack.c.l.s4 1414812756
    %v5950 = vunpack.c.0.s8 %v5949
    %v5951 = vlaneseq
    %v5952 = vshrl.u32 %v5951, 7
    %v5953 = vsub.s32 %v5950, %v5952
    %v5954 = vrot.slane %v4240, %v5953
    %v5956 = vunpack.c.l.s4 1987475062
    %v5957 = vunpack.c.0.s8 %v5956
    %v5958 = vlaneseq
    %v5959 = vshrl.u32 %v5958, 7
    %v5960 = vsub.s32 %v5957, %v5959
    %v5961 = vrot.slane %v4240, %v5960
    %v5963 = vunpack.c.l.s4 269488144
    %v5964 = vunpack.c.0.s8 %v5963
    %v5965 = vlaneseq
    %v5966 = vshrl.u32 %v5965, 7
    %v5967 = vsub.s32 %v5964, %v5966
    %v5968 = vrot.slane %v4241, %v5967
    %v5970 = vunpack.c.l.s4 842150450
    %v5971 = vunpack.c.0.s8 %v5970
    %v5972 = vlaneseq
    %v5973 = vshrl.u32 %v5972, 7
    %v5974 = vsub.s32 %v5971, %v5973
    %v5975 = vrot.slane %v4241, %v5974
    %v5977 = vunpack.c.l.s4 1414812756
    %v5978 = vunpack.c.0.s8 %v5977
    %v5979 = vlaneseq
    %v5980 = vshrl.u32 %v5979, 7
    %v5981 = vsub.s32 %v5978, %v5980
    %v5982 = vrot.slane %v4241, %v5981
    %v5984 = vunpack.c.l.s4 1987475062
    %v5985 = vunpack.c.0.s8 %v5984
    %v5986 = vlaneseq
    %v5987 = vshrl.u32 %v5986, 7
    %v5988 = vsub.s32 %v5985, %v5987
    %v5989 = vrot.slane %v4241, %v5988
    %v5991 = vunpack.c.l.s4 269488144
    %v5992 = vunpack.c.0.s8 %v5991
    %v5993 = vlaneseq
    %v5994 = vshrl.u32 %v5993, 7
    %v5995 = vsub.s32 %v5992, %v5994
    %v5996 = vrot.slane %v4242, %v5995
    %v5998 = vunpack.c.l.s4 842150450
    %v5999 = vunpack.c.0.s8 %v5998
    %v6000 = vlaneseq
    %v6001 = vshrl.u32 %v6000, 7
    %v6002 = vsub.s32 %v5999, %v6001
    %v6003 = vrot.slane %v4242, %v6002
    %v6005 = vunpack.c.l.s4 1414812756
    %v6006 = vunpack.c.0.s8 %v6005
    %v6007 = vlaneseq
    %v6008 = vshrl.u32 %v6007, 7
    %v6009 = vsub.s32 %v6006, %v6008
    %v6010 = vrot.slane %v4242, %v6009
    %v6012 = vunpack.c.l.s4 1987475062
    %v6013 = vunpack.c.0.s8 %v6012
    %v6014 = vlaneseq
    %v6015 = vshrl.u32 %v6014, 7
    %v6016 = vsub.s32 %v6013, %v6015
    %v6017 = vrot.slane %v4242, %v6016
    %v6019 = vunpack.c.l.s4 269488144
    %v6020 = vunpack.c.0.s8 %v6019
    %v6021 = vlaneseq
    %v6022 = vshrl.u32 %v6021, 7
    %v6023 = vsub.s32 %v6020, %v6022
    %v6024 = vrot.slane %v4243, %v6023
    %v6026 = vunpack.c.l.s4 842150450
    %v6027 = vunpack.c.0.s8 %v6026
    %v6028 = vlaneseq
    %v6029 = vshrl.u32 %v6028, 7
    %v6030 = vsub.s32 %v6027, %v6029
    %v6031 = vrot.slane %v4243, %v6030
    %v6033 = vunpack.c.l.s4 1414812756
    %v6034 = vunpack.c.0.s8 %v6033
    %v6035 = vlaneseq
    %v6036 = vshrl.u32 %v6035, 7
    %v6037 = vsub.s32 %v6034, %v6036
    %v6038 = vrot.slane %v4243, %v6037
    %v6040 = vunpack.c.l.s4 1987475062
    %v6041 = vunpack.c.0.s8 %v6040
    %v6042 = vlaneseq
    %v6043 = vshrl.u32 %v6042, 7
    %v6044 = vsub.s32 %v6041, %v6043
    %v6045 = vrot.slane %v4243, %v6044
    %v6047 = vunpack.c.l.s4 269488144
    %v6048 = vunpack.c.0.s8 %v6047
    %v6049 = vlaneseq
    %v6050 = vshrl.u32 %v6049, 7
    %v6051 = vsub.s32 %v6048, %v6050
    %v6052 = vrot.slane %v4244, %v6051
    %v6054 = vunpack.c.l.s4 842150450
    %v6055 = vunpack.c.0.s8 %v6054
    %v6056 = vlaneseq
    %v6057 = vshrl.u32 %v6056, 7
    %v6058 = vsub.s32 %v6055, %v6057
    %v6059 = vrot.slane %v4244, %v6058
    %v6061 = vunpack.c.l.s4 1414812756
    %v6062 = vunpack.c.0.s8 %v6061
    %v6063 = vlaneseq
    %v6064 = vshrl.u32 %v6063, 7
    %v6065 = vsub.s32 %v6062, %v6064
    %v6066 = vrot.slane %v4244, %v6065
    %v6068 = vunpack.c.l.s4 1987475062
    %v6069 = vunpack.c.0.s8 %v6068
    %v6070 = vlaneseq
    %v6071 = vshrl.u32 %v6070, 7
    %v6072 = vsub.s32 %v6069, %v6071
    %v6073 = vrot.slane %v4244, %v6072
    %v6075 = vunpack.c.l.s4 269488144
    %v6076 = vunpack.c.0.s8 %v6075
    %v6077 = vlaneseq
    %v6078 = vshrl.u32 %v6077, 7
    %v6079 = vsub.s32 %v6076, %v6078
    %v6080 = vrot.slane %v4245, %v6079
    %v6082 = vunpack.c.l.s4 842150450
    %v6083 = vunpack.c.0.s8 %v6082
    %v6084 = vlaneseq
    %v6085 = vshrl.u32 %v6084, 7
    %v6086 = vsub.s32 %v6083, %v6085
    %v6087 = vrot.slane %v4245, %v6086
    %v6089 = vunpack.c.l.s4 1414812756
    %v6090 = vunpack.c.0.s8 %v6089
    %v6091 = vlaneseq
    %v6092 = vshrl.u32 %v6091, 7
    %v6093 = vsub.s32 %v6090, %v6092
    %v6094 = vrot.slane %v4245, %v6093
    %v6096 = vunpack.c.l.s4 1987475062
    %v6097 = vunpack.c.0.s8 %v6096
    %v6098 = vlaneseq
    %v6099 = vshrl.u32 %v6098, 7
    %v6100 = vsub.s32 %v6097, %v6099
    %v6101 = vrot.slane %v4245, %v6100
    %v6102 = vcombine.low %v4316, %v4323
    %v6103 = vcombine.low %v4330, %v4337
    %v6105 = vunpack.c.l.s4 1983009808
    %v6106 = vunpack.c.0.s8 %v6105
    %v6107 = vlaneseq
    %v6108 = vshrl.u32 %v6107, 7
    %v6109 = vsub.s32 %v6106, %v6108
    %v6110 = vrot.slane %v6102, %v6109
    %v6112 = vunpack.c.l.s4 1983009808
    %v6113 = vunpack.c.0.s8 %v6112
    %v6114 = vlaneseq
    %v6115 = vshrl.u32 %v6114, 7
    %v6116 = vsub.s32 %v6113, %v6115
    %v6117 = vrot.slane %v6103, %v6116
    %v6118 = vcombine.low %v6110, %v6117
    %v6119 = vcombine.low %v4344, %v4351
    %v6120 = vcombine.low %v4358, %v4365
    %v6122 = vunpack.c.l.s4 1983009808
    %v6123 = vunpack.c.0.s8 %v6122
    %v6124 = vlaneseq
    %v6125 = vshrl.u32 %v6124, 7
    %v6126 = vsub.s32 %v6123, %v6125
    %v6127 = vrot.slane %v6119, %v6126
    %v6129 = vunpack.c.l.s4 1983009808
    %v6130 = vunpack.c.0.s8 %v6129
    %v6131 = vlaneseq
    %v6132 = vshrl.u32 %v6131, 7
    %v6133 = vsub.s32 %v6130, %v6132
    %v6134 = vrot.slane %v6120, %v6133
    %v6135 = vcombine.low %v6127, %v6134
    %v6136 = vcombine.low %v4372, %v4379
    %v6137 = vcombine.low %v4386, %v4393
    %v6139 = vunpack.c.l.s4 1983009808
    %v6140 = vunpack.c.0.s8 %v6139
    %v6141 = vlaneseq
    %v6142 = vshrl.u32 %v6141, 7
    %v6143 = vsub.s32 %v6140, %v6142
    %v6144 = vrot.slane %v6136, %v6143
    %v6146 = vunpack.c.l.s4 1983009808
    %v6147 = vunpack.c.0.s8 %v6146
    %v6148 = vlaneseq
    %v6149 = vshrl.u32 %v6148, 7
    %v6150 = vsub.s32 %v6147, %v6149
    %v6151 = vrot.slane %v6137, %v6150
    %v6152 = vcombine.low %v6144, %v6151
    %v6153 = vcombine.low %v4400, %v4407
    %v6154 = vcombine.low %v4414, %v4421
    %v6156 = vunpack.c.l.s4 1983009808
    %v6157 = vunpack.c.0.s8 %v6156
    %v6158 = vlaneseq
    %v6159 = vshrl.u32 %v6158, 7
    %v6160 = vsub.s32 %v6157, %v6159
    %v6161 = vrot.slane %v6153, %v6160
    %v6163 = vunpack.c.l.s4 1983009808
    %v6164 = vunpack.c.0.s8 %v6163
    %v6165 = vlaneseq
    %v6166 = vshrl.u32 %v6165, 7
    %v6167 = vsub.s32 %v6164, %v6166
    %v6168 = vrot.slane %v6154, %v6167
    %v6169 = vcombine.low %v6161, %v6168
    %v6170 = vcombine.low %v4428, %v4435
    %v6171 = vcombine.low %v4442, %v4449
    %v6173 = vunpack.c.l.s4 1983009808
    %v6174 = vunpack.c.0.s8 %v6173
    %v6175 = vlaneseq
    %v6176 = vshrl.u32 %v6175, 7
    %v6177 = vsub.s32 %v6174, %v6176
    %v6178 = vrot.slane %v6170, %v6177
    %v6180 = vunpack.c.l.s4 1983009808
    %v6181 = vunpack.c.0.s8 %v6180
    %v6182 = vlaneseq
    %v6183 = vshrl.u32 %v6182, 7
    %v6184 = vsub.s32 %v6181, %v6183
    %v6185 = vrot.slane %v6171, %v6184
    %v6186 = vcombine.low %v6178, %v6185
    %v6187 = vcombine.low %v4456, %v4463
    %v6188 = vcombine.low %v4470, %v4477
    %v6190 = vunpack.c.l.s4 1983009808
    %v6191 = vunpack.c.0.s8 %v6190
    %v6192 = vlaneseq
    %v6193 = vshrl.u32 %v6192, 7
    %v6194 = vsub.s32 %v6191, %v6193
    %v6195 = vrot.slane %v6187, %v6194
    %v6197 = vunpack.c.l.s4 1983009808
    %v6198 = vunpack.c.0.s8 %v6197
    %v6199 = vlaneseq
    %v6200 = vshrl.u32 %v6199, 7
    %v6201 = vsub.s32 %v6198, %v6200
    %v6202 = vrot.slane %v6188, %v6201
    %v6203 = vcombine.low %v6195, %v6202
    %v6204 = vcombine.low %v4484, %v4491
    %v6205 = vcombine.low %v4498, %v4505
    %v6207 = vunpack.c.l.s4 1983009808
    %v6208 = vunpack.c.0.s8 %v6207
    %v6209 = vlaneseq
    %v6210 = vshrl.u32 %v6209, 7
    %v6211 = vsub.s32 %v6208, %v6210
    %v6212 = vrot.slane %v6204, %v6211
    %v6214 = vunpack.c.l.s4 1983009808
    %v6215 = vunpack.c.0.s8 %v6214
    %v6216 = vlaneseq
    %v6217 = vshrl.u32 %v6216, 7
    %v6218 = vsub.s32 %v6215, %v6217
    %v6219 = vrot.slane %v6205, %v6218
    %v6220 = vcombine.low %v6212, %v6219
    %v6221 = vcombine.low %v4512, %v4519
    %v6222 = vcombine.low %v4526, %v4533
    %v6224 = vunpack.c.l.s4 1983009808
    %v6225 = vunpack.c.0.s8 %v6224
    %v6226 = vlaneseq
    %v6227 = vshrl.u32 %v6226, 7
    %v6228 = vsub.s32 %v6225, %v6227
    %v6229 = vrot.slane %v6221, %v6228
    %v6231 = vunpack.c.l.s4 1983009808
    %v6232 = vunpack.c.0.s8 %v6231
    %v6233 = vlaneseq
    %v6234 = vshrl.u32 %v6233, 7
    %v6235 = vsub.s32 %v6232, %v6234
    %v6236 = vrot.slane %v6222, %v6235
    %v6237 = vcombine.low %v6229, %v6236
    %v6238 = vcombine.low %v4540, %v4547
    %v6239 = vcombine.low %v4554, %v4561
    %v6241 = vunpack.c.l.s4 1983009808
    %v6242 = vunpack.c.0.s8 %v6241
    %v6243 = vlaneseq
    %v6244 = vshrl.u32 %v6243, 7
    %v6245 = vsub.s32 %v6242, %v6244
    %v6246 = vrot.slane %v6238, %v6245
    %v6248 = vunpack.c.l.s4 1983009808
    %v6249 = vunpack.c.0.s8 %v6248
    %v6250 = vlaneseq
    %v6251 = vshrl.u32 %v6250, 7
    %v6252 = vsub.s32 %v6249, %v6251
    %v6253 = vrot.slane %v6239, %v6252
    %v6254 = vcombine.low %v6246, %v6253
    %v6255 = vcombine.low %v4568, %v4575
    %v6256 = vcombine.low %v4582, %v4589
    %v6258 = vunpack.c.l.s4 1983009808
    %v6259 = vunpack.c.0.s8 %v6258
    %v6260 = vlaneseq
    %v6261 = vshrl.u32 %v6260, 7
    %v6262 = vsub.s32 %v6259, %v6261
    %v6263 = vrot.slane %v6255, %v6262
    %v6265 = vunpack.c.l.s4 1983009808
    %v6266 = vunpack.c.0.s8 %v6265
    %v6267 = vlaneseq
    %v6268 = vshrl.u32 %v6267, 7
    %v6269 = vsub.s32 %v6266, %v6268
    %v6270 = vrot.slane %v6256, %v6269
    %v6271 = vcombine.low %v6263, %v6270
    %v6272 = vcombine.low %v4596, %v4603
    %v6273 = vcombine.low %v4610, %v4617
    %v6275 = vunpack.c.l.s4 1983009808
    %v6276 = vunpack.c.0.s8 %v6275
    %v6277 = vlaneseq
    %v6278 = vshrl.u32 %v6277, 7
    %v6279 = vsub.s32 %v6276, %v6278
    %v6280 = vrot.slane %v6272, %v6279
    %v6282 = vunpack.c.l.s4 1983009808
    %v6283 = vunpack.c.0.s8 %v6282
    %v6284 = vlaneseq
    %v6285 = vshrl.u32 %v6284, 7
    %v6286 = vsub.s32 %v6283, %v6285
    %v6287 = vrot.slane %v6273, %v6286
    %v6288 = vcombine.low %v6280, %v6287
    %v6289 = vcombine.low %v4624, %v4631
    %v6290 = vcombine.low %v4638, %v4645
    %v6292 = vunpack.c.l.s4 1983009808
    %v6293 = vunpack.c.0.s8 %v6292
    %v6294 = vlaneseq
    %v6295 = vshrl.u32 %v6294, 7
    %v6296 = vsub.s32 %v6293, %v6295
    %v6297 = vrot.slane %v6289, %v6296
    %v6299 = vunpack.c.l.s4 1983009808
    %v6300 = vunpack.c.0.s8 %v6299
    %v6301 = vlaneseq
    %v6302 = vshrl.u32 %v6301, 7
    %v6303 = vsub.s32 %v6300, %v6302
    %v6304 = vrot.slane %v6290, %v6303
    %v6305 = vcombine.low %v6297, %v6304
    %v6306 = vcombine.low %v4652, %v4659
    %v6307 = vcombine.low %v4666, %v4673
    %v6309 = vunpack.c.l.s4 1983009808
    %v6310 = vunpack.c.0.s8 %v6309
    %v6311 = vlaneseq
    %v6312 = vshrl.u32 %v6311, 7
    %v6313 = vsub.s32 %v6310, %v6312
    %v6314 = vrot.slane %v6306, %v6313
    %v6316 = vunpack.c.l.s4 1983009808
    %v6317 = vunpack.c.0.s8 %v6316
    %v6318 = vlaneseq
    %v6319 = vshrl.u32 %v6318, 7
    %v6320 = vsub.s32 %v6317, %v6319
    %v6321 = vrot.slane %v6307, %v6320
    %v6322 = vcombine.low %v6314, %v6321
    %v6323 = vcombine.low %v4680, %v4687
    %v6324 = vcombine.low %v4694, %v4701
    %v6326 = vunpack.c.l.s4 1983009808
    %v6327 = vunpack.c.0.s8 %v6326
    %v6328 = vlaneseq
    %v6329 = vshrl.u32 %v6328, 7
    %v6330 = vsub.s32 %v6327, %v6329
    %v6331 = vrot.slane %v6323, %v6330
    %v6333 = vunpack.c.l.s4 1983009808
    %v6334 = vunpack.c.0.s8 %v6333
    %v6335 = vlaneseq
    %v6336 = vshrl.u32 %v6335, 7
    %v6337 = vsub.s32 %v6334, %v6336
    %v6338 = vrot.slane %v6324, %v6337
    %v6339 = vcombine.low %v6331, %v6338
    %v6340 = vcombine.low %v4708, %v4715
    %v6341 = vcombine.low %v4722, %v4729
    %v6343 = vunpack.c.l.s4 1983009808
    %v6344 = vunpack.c.0.s8 %v6343
    %v6345 = vlaneseq
    %v6346 = vshrl.u32 %v6345, 7
    %v6347 = vsub.s32 %v6344, %v6346
    %v6348 = vrot.slane %v6340, %v6347
    %v6350 = vunpack.c.l.s4 1983009808
    %v6351 = vunpack.c.0.s8 %v6350
    %v6352 = vlaneseq
    %v6353 = vshrl.u32 %v6352, 7
    %v6354 = vsub.s32 %v6351, %v6353
    %v6355 = vrot.slane %v6341, %v6354
    %v6356 = vcombine.low %v6348, %v6355
    %v6357 = vcombine.low %v4736, %v4743
    %v6358 = vcombine.low %v4750, %v4757
    %v6360 = vunpack.c.l.s4 1983009808
    %v6361 = vunpack.c.0.s8 %v6360
    %v6362 = vlaneseq
    %v6363 = vshrl.u32 %v6362, 7
    %v6364 = vsub.s32 %v6361, %v6363
    %v6365 = vrot.slane %v6357, %v6364
    %v6367 = vunpack.c.l.s4 1983009808
    %v6368 = vunpack.c.0.s8 %v6367
    %v6369 = vlaneseq
    %v6370 = vshrl.u32 %v6369, 7
    %v6371 = vsub.s32 %v6368, %v6370
    %v6372 = vrot.slane %v6358, %v6371
    %v6373 = vcombine.low %v6365, %v6372
    %v6374 = vcombine.low %v4764, %v4771
    %v6375 = vcombine.low %v4778, %v4785
    %v6377 = vunpack.c.l.s4 1983009808
    %v6378 = vunpack.c.0.s8 %v6377
    %v6379 = vlaneseq
    %v6380 = vshrl.u32 %v6379, 7
    %v6381 = vsub.s32 %v6378, %v6380
    %v6382 = vrot.slane %v6374, %v6381
    %v6384 = vunpack.c.l.s4 1983009808
    %v6385 = vunpack.c.0.s8 %v6384
    %v6386 = vlaneseq
    %v6387 = vshrl.u32 %v6386, 7
    %v6388 = vsub.s32 %v6385, %v6387
    %v6389 = vrot.slane %v6375, %v6388
    %v6390 = vcombine.low %v6382, %v6389
    %v6391 = vcombine.low %v4792, %v4799
    %v6392 = vcombine.low %v4806, %v4813
    %v6394 = vunpack.c.l.s4 1983009808
    %v6395 = vunpack.c.0.s8 %v6394
    %v6396 = vlaneseq
    %v6397 = vshrl.u32 %v6396, 7
    %v6398 = vsub.s32 %v6395, %v6397
    %v6399 = vrot.slane %v6391, %v6398
    %v6401 = vunpack.c.l.s4 1983009808
    %v6402 = vunpack.c.0.s8 %v6401
    %v6403 = vlaneseq
    %v6404 = vshrl.u32 %v6403, 7
    %v6405 = vsub.s32 %v6402, %v6404
    %v6406 = vrot.slane %v6392, %v6405
    %v6407 = vcombine.low %v6399, %v6406
    %v6408 = vcombine.low %v4820, %v4827
    %v6409 = vcombine.low %v4834, %v4841
    %v6411 = vunpack.c.l.s4 1983009808
    %v6412 = vunpack.c.0.s8 %v6411
    %v6413 = vlaneseq
    %v6414 = vshrl.u32 %v6413, 7
    %v6415 = vsub.s32 %v6412, %v6414
    %v6416 = vrot.slane %v6408, %v6415
    %v6418 = vunpack.c.l.s4 1983009808
    %v6419 = vunpack.c.0.s8 %v6418
    %v6420 = vlaneseq
    %v6421 = vshrl.u32 %v6420, 7
    %v6422 = vsub.s32 %v6419, %v6421
    %v6423 = vrot.slane %v6409, %v6422
    %v6424 = vcombine.low %v6416, %v6423
    %v6425 = vcombine.low %v4848, %v4855
    %v6426 = vcombine.low %v4862, %v4869
    %v6428 = vunpack.c.l.s4 1983009808
    %v6429 = vunpack.c.0.s8 %v6428
    %v6430 = vlaneseq
    %v6431 = vshrl.u32 %v6430, 7
    %v6432 = vsub.s32 %v6429, %v6431
    %v6433 = vrot.slane %v6425, %v6432
    %v6435 = vunpack.c.l.s4 1983009808
    %v6436 = vunpack.c.0.s8 %v6435
    %v6437 = vlaneseq
    %v6438 = vshrl.u32 %v6437, 7
    %v6439 = vsub.s32 %v6436, %v6438
    %v6440 = vrot.slane %v6426, %v6439
    %v6441 = vcombine.low %v6433, %v6440
    %v6442 = vcombine.low %v4876, %v4883
    %v6443 = vcombine.low %v4890, %v4897
    %v6445 = vunpack.c.l.s4 1983009808
    %v6446 = vunpack.c.0.s8 %v6445
    %v6447 = vlaneseq
    %v6448 = vshrl.u32 %v6447, 7
    %v6449 = vsub.s32 %v6446, %v6448
    %v6450 = vrot.slane %v6442, %v6449
    %v6452 = vunpack.c.l.s4 1983009808
    %v6453 = vunpack.c.0.s8 %v6452
    %v6454 = vlaneseq
    %v6455 = vshrl.u32 %v6454, 7
    %v6456 = vsub.s32 %v6453, %v6455
    %v6457 = vrot.slane %v6443, %v6456
    %v6458 = vcombine.low %v6450, %v6457
    %v6459 = vcombine.low %v4904, %v4911
    %v6460 = vcombine.low %v4918, %v4925
    %v6462 = vunpack.c.l.s4 1983009808
    %v6463 = vunpack.c.0.s8 %v6462
    %v6464 = vlaneseq
    %v6465 = vshrl.u32 %v6464, 7
    %v6466 = vsub.s32 %v6463, %v6465
    %v6467 = vrot.slane %v6459, %v6466
    %v6469 = vunpack.c.l.s4 1983009808
    %v6470 = vunpack.c.0.s8 %v6469
    %v6471 = vlaneseq
    %v6472 = vshrl.u32 %v6471, 7
    %v6473 = vsub.s32 %v6470, %v6472
    %v6474 = vrot.slane %v6460, %v6473
    %v6475 = vcombine.low %v6467, %v6474
    %v6476 = vcombine.low %v4932, %v4939
    %v6477 = vcombine.low %v4946, %v4953
    %v6479 = vunpack.c.l.s4 1983009808
    %v6480 = vunpack.c.0.s8 %v6479
    %v6481 = vlaneseq
    %v6482 = vshrl.u32 %v6481, 7
    %v6483 = vsub.s32 %v6480, %v6482
    %v6484 = vrot.slane %v6476, %v6483
    %v6486 = vunpack.c.l.s4 1983009808
    %v6487 = vunpack.c.0.s8 %v6486
    %v6488 = vlaneseq
    %v6489 = vshrl.u32 %v6488, 7
    %v6490 = vsub.s32 %v6487, %v6489
    %v6491 = vrot.slane %v6477, %v6490
    %v6492 = vcombine.low %v6484, %v6491
    %v6493 = vcombine.low %v4960, %v4967
    %v6494 = vcombine.low %v4974, %v4981
    %v6496 = vunpack.c.l.s4 1983009808
    %v6497 = vunpack.c.0.s8 %v6496
    %v6498 = vlaneseq
    %v6499 = vshrl.u32 %v6498, 7
    %v6500 = vsub.s32 %v6497, %v6499
    %v6501 = vrot.slane %v6493, %v6500
    %v6503 = vunpack.c.l.s4 1983009808
    %v6504 = vunpack.c.0.s8 %v6503
    %v6505 = vlaneseq
    %v6506 = vshrl.u32 %v6505, 7
    %v6507 = vsub.s32 %v6504, %v6506
    %v6508 = vrot.slane %v6494, %v6507
    %v6509 = vcombine.low %v6501, %v6508
    %v6510 = vcombine.low %v4988, %v4995
    %v6511 = vcombine.low %v5002, %v5009
    %v6513 = vunpack.c.l.s4 1983009808
    %v6514 = vunpack.c.0.s8 %v6513
    %v6515 = vlaneseq
    %v6516 = vshrl.u32 %v6515, 7
    %v6517 = vsub.s32 %v6514, %v6516
    %v6518 = vrot.slane %v6510, %v6517
    %v6520 = vunpack.c.l.s4 1983009808
    %v6521 = vunpack.c.0.s8 %v6520
    %v6522 = vlaneseq
    %v6523 = vshrl.u32 %v6522, 7
    %v6524 = vsub.s32 %v6521, %v6523
    %v6525 = vrot.slane %v6511, %v6524
    %v6526 = vcombine.low %v6518, %v6525
    %v6527 = vcombine.low %v5016, %v5023
    %v6528 = vcombine.low %v5030, %v5037
    %v6530 = vunpack.c.l.s4 1983009808
    %v6531 = vunpack.c.0.s8 %v6530
    %v6532 = vlaneseq
    %v6533 = vshrl.u32 %v6532, 7
    %v6534 = vsub.s32 %v6531, %v6533
    %v6535 = vrot.slane %v6527, %v6534
    %v6537 = vunpack.c.l.s4 1983009808
    %v6538 = vunpack.c.0.s8 %v6537
    %v6539 = vlaneseq
    %v6540 = vshrl.u32 %v6539, 7
    %v6541 = vsub.s32 %v6538, %v6540
    %v6542 = vrot.slane %v6528, %v6541
    %v6543 = vcombine.low %v6535, %v6542
    %v6544 = vcombine.low %v5044, %v5051
    %v6545 = vcombine.low %v5058, %v5065
    %v6547 = vunpack.c.l.s4 1983009808
    %v6548 = vunpack.c.0.s8 %v6547
    %v6549 = vlaneseq
    %v6550 = vshrl.u32 %v6549, 7
    %v6551 = vsub.s32 %v6548, %v6550
    %v6552 = vrot.slane %v6544, %v6551
    %v6554 = vunpack.c.l.s4 1983009808
    %v6555 = vunpack.c.0.s8 %v6554
    %v6556 = vlaneseq
    %v6557 = vshrl.u32 %v6556, 7
    %v6558 = vsub.s32 %v6555, %v6557
    %v6559 = vrot.slane %v6545, %v6558
    %v6560 = vcombine.low %v6552, %v6559
    %v6561 = vcombine.low %v5072, %v5079
    %v6562 = vcombine.low %v5086, %v5093
    %v6564 = vunpack.c.l.s4 1983009808
    %v6565 = vunpack.c.0.s8 %v6564
    %v6566 = vlaneseq
    %v6567 = vshrl.u32 %v6566, 7
    %v6568 = vsub.s32 %v6565, %v6567
    %v6569 = vrot.slane %v6561, %v6568
    %v6571 = vunpack.c.l.s4 1983009808
    %v6572 = vunpack.c.0.s8 %v6571
    %v6573 = vlaneseq
    %v6574 = vshrl.u32 %v6573, 7
    %v6575 = vsub.s32 %v6572, %v6574
    %v6576 = vrot.slane %v6562, %v6575
    %v6577 = vcombine.low %v6569, %v6576
    %v6578 = vcombine.low %v5100, %v5107
    %v6579 = vcombine.low %v5114, %v5121
    %v6581 = vunpack.c.l.s4 1983009808
    %v6582 = vunpack.c.0.s8 %v6581
    %v6583 = vlaneseq
    %v6584 = vshrl.u32 %v6583, 7
    %v6585 = vsub.s32 %v6582, %v6584
    %v6586 = vrot.slane %v6578, %v6585
    %v6588 = vunpack.c.l.s4 1983009808
    %v6589 = vunpack.c.0.s8 %v6588
    %v6590 = vlaneseq
    %v6591 = vshrl.u32 %v6590, 7
    %v6592 = vsub.s32 %v6589, %v6591
    %v6593 = vrot.slane %v6579, %v6592
    %v6594 = vcombine.low %v6586, %v6593
    %v6595 = vcombine.low %v5128, %v5135
    %v6596 = vcombine.low %v5142, %v5149
    %v6598 = vunpack.c.l.s4 1983009808
    %v6599 = vunpack.c.0.s8 %v6598
    %v6600 = vlaneseq
    %v6601 = vshrl.u32 %v6600, 7
    %v6602 = vsub.s32 %v6599, %v6601
    %v6603 = vrot.slane %v6595, %v6602
    %v6605 = vunpack.c.l.s4 1983009808
    %v6606 = vunpack.c.0.s8 %v6605
    %v6607 = vlaneseq
    %v6608 = vshrl.u32 %v6607, 7
    %v6609 = vsub.s32 %v6606, %v6608
    %v6610 = vrot.slane %v6596, %v6609
    %v6611 = vcombine.low %v6603, %v6610
    %v6612 = vcombine.low %v5156, %v5163
    %v6613 = vcombine.low %v5170, %v5177
    %v6615 = vunpack.c.l.s4 1983009808
    %v6616 = vunpack.c.0.s8 %v6615
    %v6617 = vlaneseq
    %v6618 = vshrl.u32 %v6617, 7
    %v6619 = vsub.s32 %v6616, %v6618
    %v6620 = vrot.slane %v6612, %v6619
    %v6622 = vunpack.c.l.s4 1983009808
    %v6623 = vunpack.c.0.s8 %v6622
    %v6624 = vlaneseq
    %v6625 = vshrl.u32 %v6624, 7
    %v6626 = vsub.s32 %v6623, %v6625
    %v6627 = vrot.slane %v6613, %v6626
    %v6628 = vcombine.low %v6620, %v6627
    %v6629 = vcombine.low %v5184, %v5191
    %v6630 = vcombine.low %v5198, %v5205
    %v6632 = vunpack.c.l.s4 1983009808
    %v6633 = vunpack.c.0.s8 %v6632
    %v6634 = vlaneseq
    %v6635 = vshrl.u32 %v6634, 7
    %v6636 = vsub.s32 %v6633, %v6635
    %v6637 = vrot.slane %v6629, %v6636
    %v6639 = vunpack.c.l.s4 1983009808
    %v6640 = vunpack.c.0.s8 %v6639
    %v6641 = vlaneseq
    %v6642 = vshrl.u32 %v6641, 7
    %v6643 = vsub.s32 %v6640, %v6642
    %v6644 = vrot.slane %v6630, %v6643
    %v6645 = vcombine.low %v6637, %v6644
    %v6646 = vcombine.low %v5212, %v5219
    %v6647 = vcombine.low %v5226, %v5233
    %v6649 = vunpack.c.l.s4 1983009808
    %v6650 = vunpack.c.0.s8 %v6649
    %v6651 = vlaneseq
    %v6652 = vshrl.u32 %v6651, 7
    %v6653 = vsub.s32 %v6650, %v6652
    %v6654 = vrot.slane %v6646, %v6653
    %v6656 = vunpack.c.l.s4 1983009808
    %v6657 = vunpack.c.0.s8 %v6656
    %v6658 = vlaneseq
    %v6659 = vshrl.u32 %v6658, 7
    %v6660 = vsub.s32 %v6657, %v6659
    %v6661 = vrot.slane %v6647, %v6660
    %v6662 = vcombine.low %v6654, %v6661
    %v6663 = vcombine.low %v5240, %v5247
    %v6664 = vcombine.low %v5254, %v5261
    %v6666 = vunpack.c.l.s4 1983009808
    %v6667 = vunpack.c.0.s8 %v6666
    %v6668 = vlaneseq
    %v6669 = vshrl.u32 %v6668, 7
    %v6670 = vsub.s32 %v6667, %v6669
    %v6671 = vrot.slane %v6663, %v6670
    %v6673 = vunpack.c.l.s4 1983009808
    %v6674 = vunpack.c.0.s8 %v6673
    %v6675 = vlaneseq
    %v6676 = vshrl.u32 %v6675, 7
    %v6677 = vsub.s32 %v6674, %v6676
    %v6678 = vrot.slane %v6664, %v6677
    %v6679 = vcombine.low %v6671, %v6678
    %v6680 = vcombine.low %v5268, %v5275
    %v6681 = vcombine.low %v5282, %v5289
    %v6683 = vunpack.c.l.s4 1983009808
    %v6684 = vunpack.c.0.s8 %v6683
    %v6685 = vlaneseq
    %v6686 = vshrl.u32 %v6685, 7
    %v6687 = vsub.s32 %v6684, %v6686
    %v6688 = vrot.slane %v6680, %v6687
    %v6690 = vunpack.c.l.s4 1983009808
    %v6691 = vunpack.c.0.s8 %v6690
    %v6692 = vlaneseq
    %v6693 = vshrl.u32 %v6692, 7
    %v6694 = vsub.s32 %v6691, %v6693
    %v6695 = vrot.slane %v6681, %v6694
    %v6696 = vcombine.low %v6688, %v6695
    %v6697 = vcombine.low %v5296, %v5303
    %v6698 = vcombine.low %v5310, %v5317
    %v6700 = vunpack.c.l.s4 1983009808
    %v6701 = vunpack.c.0.s8 %v6700
    %v6702 = vlaneseq
    %v6703 = vshrl.u32 %v6702, 7
    %v6704 = vsub.s32 %v6701, %v6703
    %v6705 = vrot.slane %v6697, %v6704
    %v6707 = vunpack.c.l.s4 1983009808
    %v6708 = vunpack.c.0.s8 %v6707
    %v6709 = vlaneseq
    %v6710 = vshrl.u32 %v6709, 7
    %v6711 = vsub.s32 %v6708, %v6710
    %v6712 = vrot.slane %v6698, %v6711
    %v6713 = vcombine.low %v6705, %v6712
    %v6714 = vcombine.low %v5324, %v5331
    %v6715 = vcombine.low %v5338, %v5345
    %v6717 = vunpack.c.l.s4 1983009808
    %v6718 = vunpack.c.0.s8 %v6717
    %v6719 = vlaneseq
    %v6720 = vshrl.u32 %v6719, 7
    %v6721 = vsub.s32 %v6718, %v6720
    %v6722 = vrot.slane %v6714, %v6721
    %v6724 = vunpack.c.l.s4 1983009808
    %v6725 = vunpack.c.0.s8 %v6724
    %v6726 = vlaneseq
    %v6727 = vshrl.u32 %v6726, 7
    %v6728 = vsub.s32 %v6725, %v6727
    %v6729 = vrot.slane %v6715, %v6728
    %v6730 = vcombine.low %v6722, %v6729
    %v6731 = vcombine.low %v5352, %v5359
    %v6732 = vcombine.low %v5366, %v5373
    %v6734 = vunpack.c.l.s4 1983009808
    %v6735 = vunpack.c.0.s8 %v6734
    %v6736 = vlaneseq
    %v6737 = vshrl.u32 %v6736, 7
    %v6738 = vsub.s32 %v6735, %v6737
    %v6739 = vrot.slane %v6731, %v6738
    %v6741 = vunpack.c.l.s4 1983009808
    %v6742 = vunpack.c.0.s8 %v6741
    %v6743 = vlaneseq
    %v6744 = vshrl.u32 %v6743, 7
    %v6745 = vsub.s32 %v6742, %v6744
    %v6746 = vrot.slane %v6732, %v6745
    %v6747 = vcombine.low %v6739, %v6746
    %v6748 = vcombine.low %v5380, %v5387
    %v6749 = vcombine.low %v5394, %v5401
    %v6751 = vunpack.c.l.s4 1983009808
    %v6752 = vunpack.c.0.s8 %v6751
    %v6753 = vlaneseq
    %v6754 = vshrl.u32 %v6753, 7
    %v6755 = vsub.s32 %v6752, %v6754
    %v6756 = vrot.slane %v6748, %v6755
    %v6758 = vunpack.c.l.s4 1983009808
    %v6759 = vunpack.c.0.s8 %v6758
    %v6760 = vlaneseq
    %v6761 = vshrl.u32 %v6760, 7
    %v6762 = vsub.s32 %v6759, %v6761
    %v6763 = vrot.slane %v6749, %v6762
    %v6764 = vcombine.low %v6756, %v6763
    %v6765 = vcombine.low %v5408, %v5415
    %v6766 = vcombine.low %v5422, %v5429
    %v6768 = vunpack.c.l.s4 1983009808
    %v6769 = vunpack.c.0.s8 %v6768
    %v6770 = vlaneseq
    %v6771 = vshrl.u32 %v6770, 7
    %v6772 = vsub.s32 %v6769, %v6771
    %v6773 = vrot.slane %v6765, %v6772
    %v6775 = vunpack.c.l.s4 1983009808
    %v6776 = vunpack.c.0.s8 %v6775
    %v6777 = vlaneseq
    %v6778 = vshrl.u32 %v6777, 7
    %v6779 = vsub.s32 %v6776, %v6778
    %v6780 = vrot.slane %v6766, %v6779
    %v6781 = vcombine.low %v6773, %v6780
    %v6782 = vcombine.low %v5436, %v5443
    %v6783 = vcombine.low %v5450, %v5457
    %v6785 = vunpack.c.l.s4 1983009808
    %v6786 = vunpack.c.0.s8 %v6785
    %v6787 = vlaneseq
    %v6788 = vshrl.u32 %v6787, 7
    %v6789 = vsub.s32 %v6786, %v6788
    %v6790 = vrot.slane %v6782, %v6789
    %v6792 = vunpack.c.l.s4 1983009808
    %v6793 = vunpack.c.0.s8 %v6792
    %v6794 = vlaneseq
    %v6795 = vshrl.u32 %v6794, 7
    %v6796 = vsub.s32 %v6793, %v6795
    %v6797 = vrot.slane %v6783, %v6796
    %v6798 = vcombine.low %v6790, %v6797
    %v6799 = vcombine.low %v5464, %v5471
    %v6800 = vcombine.low %v5478, %v5485
    %v6802 = vunpack.c.l.s4 1983009808
    %v6803 = vunpack.c.0.s8 %v6802
    %v6804 = vlaneseq
    %v6805 = vshrl.u32 %v6804, 7
    %v6806 = vsub.s32 %v6803, %v6805
    %v6807 = vrot.slane %v6799, %v6806
    %v6809 = vunpack.c.l.s4 1983009808
    %v6810 = vunpack.c.0.s8 %v6809
    %v6811 = vlaneseq
    %v6812 = vshrl.u32 %v6811, 7
    %v6813 = vsub.s32 %v6810, %v6812
    %v6814 = vrot.slane %v6800, %v6813
    %v6815 = vcombine.low %v6807, %v6814
    %v6816 = vcombine.low %v5492, %v5499
    %v6817 = vcombine.low %v5506, %v5513
    %v6819 = vunpack.c.l.s4 1983009808
    %v6820 = vunpack.c.0.s8 %v6819
    %v6821 = vlaneseq
    %v6822 = vshrl.u32 %v6821, 7
    %v6823 = vsub.s32 %v6820, %v6822
    %v6824 = vrot.slane %v6816, %v6823
    %v6826 = vunpack.c.l.s4 1983009808
    %v6827 = vunpack.c.0.s8 %v6826
    %v6828 = vlaneseq
    %v6829 = vshrl.u32 %v6828, 7
    %v6830 = vsub.s32 %v6827, %v6829
    %v6831 = vrot.slane %v6817, %v6830
    %v6832 = vcombine.low %v6824, %v6831
    %v6833 = vcombine.low %v5520, %v5527
    %v6834 = vcombine.low %v5534, %v5541
    %v6836 = vunpack.c.l.s4 1983009808
    %v6837 = vunpack.c.0.s8 %v6836
    %v6838 = vlaneseq
    %v6839 = vshrl.u32 %v6838, 7
    %v6840 = vsub.s32 %v6837, %v6839
    %v6841 = vrot.slane %v6833, %v6840
    %v6843 = vunpack.c.l.s4 1983009808
    %v6844 = vunpack.c.0.s8 %v6843
    %v6845 = vlaneseq
    %v6846 = vshrl.u32 %v6845, 7
    %v6847 = vsub.s32 %v6844, %v6846
    %v6848 = vrot.slane %v6834, %v6847
    %v6849 = vcombine.low %v6841, %v6848
    %v6850 = vcombine.low %v5548, %v5555
    %v6851 = vcombine.low %v5562, %v5569
    %v6853 = vunpack.c.l.s4 1983009808
    %v6854 = vunpack.c.0.s8 %v6853
    %v6855 = vlaneseq
    %v6856 = vshrl.u32 %v6855, 7
    %v6857 = vsub.s32 %v6854, %v6856
    %v6858 = vrot.slane %v6850, %v6857
    %v6860 = vunpack.c.l.s4 1983009808
    %v6861 = vunpack.c.0.s8 %v6860
    %v6862 = vlaneseq
    %v6863 = vshrl.u32 %v6862, 7
    %v6864 = vsub.s32 %v6861, %v6863
    %v6865 = vrot.slane %v6851, %v6864
    %v6866 = vcombine.low %v6858, %v6865
    %v6867 = vcombine.low %v5576, %v5583
    %v6868 = vcombine.low %v5590, %v5597
    %v6870 = vunpack.c.l.s4 1983009808
    %v6871 = vunpack.c.0.s8 %v6870
    %v6872 = vlaneseq
    %v6873 = vshrl.u32 %v6872, 7
    %v6874 = vsub.s32 %v6871, %v6873
    %v6875 = vrot.slane %v6867, %v6874
    %v6877 = vunpack.c.l.s4 1983009808
    %v6878 = vunpack.c.0.s8 %v6877
    %v6879 = vlaneseq
    %v6880 = vshrl.u32 %v6879, 7
    %v6881 = vsub.s32 %v6878, %v6880
    %v6882 = vrot.slane %v6868, %v6881
    %v6883 = vcombine.low %v6875, %v6882
    %v6884 = vcombine.low %v5604, %v5611
    %v6885 = vcombine.low %v5618, %v5625
    %v6887 = vunpack.c.l.s4 1983009808
    %v6888 = vunpack.c.0.s8 %v6887
    %v6889 = vlaneseq
    %v6890 = vshrl.u32 %v6889, 7
    %v6891 = vsub.s32 %v6888, %v6890
    %v6892 = vrot.slane %v6884, %v6891
    %v6894 = vunpack.c.l.s4 1983009808
    %v6895 = vunpack.c.0.s8 %v6894
    %v6896 = vlaneseq
    %v6897 = vshrl.u32 %v6896, 7
    %v6898 = vsub.s32 %v6895, %v6897
    %v6899 = vrot.slane %v6885, %v6898
    %v6900 = vcombine.low %v6892, %v6899
    %v6901 = vcombine.low %v5632, %v5639
    %v6902 = vcombine.low %v5646, %v5653
    %v6904 = vunpack.c.l.s4 1983009808
    %v6905 = vunpack.c.0.s8 %v6904
    %v6906 = vlaneseq
    %v6907 = vshrl.u32 %v6906, 7
    %v6908 = vsub.s32 %v6905, %v6907
    %v6909 = vrot.slane %v6901, %v6908
    %v6911 = vunpack.c.l.s4 1983009808
    %v6912 = vunpack.c.0.s8 %v6911
    %v6913 = vlaneseq
    %v6914 = vshrl.u32 %v6913, 7
    %v6915 = vsub.s32 %v6912, %v6914
    %v6916 = vrot.slane %v6902, %v6915
    %v6917 = vcombine.low %v6909, %v6916
    %v6918 = vcombine.low %v5660, %v5667
    %v6919 = vcombine.low %v5674, %v5681
    %v6921 = vunpack.c.l.s4 1983009808
    %v6922 = vunpack.c.0.s8 %v6921
    %v6923 = vlaneseq
    %v6924 = vshrl.u32 %v6923, 7
    %v6925 = vsub.s32 %v6922, %v6924
    %v6926 = vrot.slane %v6918, %v6925
    %v6928 = vunpack.c.l.s4 1983009808
    %v6929 = vunpack.c.0.s8 %v6928
    %v6930 = vlaneseq
    %v6931 = vshrl.u32 %v6930, 7
    %v6932 = vsub.s32 %v6929, %v6931
    %v6933 = vrot.slane %v6919, %v6932
    %v6934 = vcombine.low %v6926, %v6933
    %v6935 = vcombine.low %v5688, %v5695
    %v6936 = vcombine.low %v5702, %v5709
    %v6938 = vunpack.c.l.s4 1983009808
    %v6939 = vunpack.c.0.s8 %v6938
    %v6940 = vlaneseq
    %v6941 = vshrl.u32 %v6940, 7
    %v6942 = vsub.s32 %v6939, %v6941
    %v6943 = vrot.slane %v6935, %v6942
    %v6945 = vunpack.c.l.s4 1983009808
    %v6946 = vunpack.c.0.s8 %v6945
    %v6947 = vlaneseq
    %v6948 = vshrl.u32 %v6947, 7
    %v6949 = vsub.s32 %v6946, %v6948
    %v6950 = vrot.slane %v6936, %v6949
    %v6951 = vcombine.low %v6943, %v6950
    %v6952 = vcombine.low %v5716, %v5723
    %v6953 = vcombine.low %v5730, %v5737
    %v6955 = vunpack.c.l.s4 1983009808
    %v6956 = vunpack.c.0.s8 %v6955
    %v6957 = vlaneseq
    %v6958 = vshrl.u32 %v6957, 7
    %v6959 = vsub.s32 %v6956, %v6958
    %v6960 = vrot.slane %v6952, %v6959
    %v6962 = vunpack.c.l.s4 1983009808
    %v6963 = vunpack.c.0.s8 %v6962
    %v6964 = vlaneseq
    %v6965 = vshrl.u32 %v6964, 7
    %v6966 = vsub.s32 %v6963, %v6965
    %v6967 = vrot.slane %v6953, %v6966
    %v6968 = vcombine.low %v6960, %v6967
    %v6969 = vcombine.low %v5744, %v5751
    %v6970 = vcombine.low %v5758, %v5765
    %v6972 = vunpack.c.l.s4 1983009808
    %v6973 = vunpack.c.0.s8 %v6972
    %v6974 = vlaneseq
    %v6975 = vshrl.u32 %v6974, 7
    %v6976 = vsub.s32 %v6973, %v6975
    %v6977 = vrot.slane %v6969, %v6976
    %v6979 = vunpack.c.l.s4 1983009808
    %v6980 = vunpack.c.0.s8 %v6979
    %v6981 = vlaneseq
    %v6982 = vshrl.u32 %v6981, 7
    %v6983 = vsub.s32 %v6980, %v6982
    %v6984 = vrot.slane %v6970, %v6983
    %v6985 = vcombine.low %v6977, %v6984
    %v6986 = vcombine.low %v5772, %v5779
    %v6987 = vcombine.low %v5786, %v5793
    %v6989 = vunpack.c.l.s4 1983009808
    %v6990 = vunpack.c.0.s8 %v6989
    %v6991 = vlaneseq
    %v6992 = vshrl.u32 %v6991, 7
    %v6993 = vsub.s32 %v6990, %v6992
    %v6994 = vrot.slane %v6986, %v6993
    %v6996 = vunpack.c.l.s4 1983009808
    %v6997 = vunpack.c.0.s8 %v6996
    %v6998 = vlaneseq
    %v6999 = vshrl.u32 %v6998, 7
    %v7000 = vsub.s32 %v6997, %v6999
    %v7001 = vrot.slane %v6987, %v7000
    %v7002 = vcombine.low %v6994, %v7001
    %v7003 = vcombine.low %v5800, %v5807
    %v7004 = vcombine.low %v5814, %v5821
    %v7006 = vunpack.c.l.s4 1983009808
    %v7007 = vunpack.c.0.s8 %v7006
    %v7008 = vlaneseq
    %v7009 = vshrl.u32 %v7008, 7
    %v7010 = vsub.s32 %v7007, %v7009
    %v7011 = vrot.slane %v7003, %v7010
    %v7013 = vunpack.c.l.s4 1983009808
    %v7014 = vunpack.c.0.s8 %v7013
    %v7015 = vlaneseq
    %v7016 = vshrl.u32 %v7015, 7
    %v7017 = vsub.s32 %v7014, %v7016
    %v7018 = vrot.slane %v7004, %v7017
    %v7019 = vcombine.low %v7011, %v7018
    %v7020 = vcombine.low %v5828, %v5835
    %v7021 = vcombine.low %v5842, %v5849
    %v7023 = vunpack.c.l.s4 1983009808
    %v7024 = vunpack.c.0.s8 %v7023
    %v7025 = vlaneseq
    %v7026 = vshrl.u32 %v7025, 7
    %v7027 = vsub.s32 %v7024, %v7026
    %v7028 = vrot.slane %v7020, %v7027
    %v7030 = vunpack.c.l.s4 1983009808
    %v7031 = vunpack.c.0.s8 %v7030
    %v7032 = vlaneseq
    %v7033 = vshrl.u32 %v7032, 7
    %v7034 = vsub.s32 %v7031, %v7033
    %v7035 = vrot.slane %v7021, %v7034
    %v7036 = vcombine.low %v7028, %v7035
    %v7037 = vcombine.low %v5856, %v5863
    %v7038 = vcombine.low %v5870, %v5877
    %v7040 = vunpack.c.l.s4 1983009808
    %v7041 = vunpack.c.0.s8 %v7040
    %v7042 = vlaneseq
    %v7043 = vshrl.u32 %v7042, 7
    %v7044 = vsub.s32 %v7041, %v7043
    %v7045 = vrot.slane %v7037, %v7044
    %v7047 = vunpack.c.l.s4 1983009808
    %v7048 = vunpack.c.0.s8 %v7047
    %v7049 = vlaneseq
    %v7050 = vshrl.u32 %v7049, 7
    %v7051 = vsub.s32 %v7048, %v7050
    %v7052 = vrot.slane %v7038, %v7051
    %v7053 = vcombine.low %v7045, %v7052
    %v7054 = vcombine.low %v5884, %v5891
    %v7055 = vcombine.low %v5898, %v5905
    %v7057 = vunpack.c.l.s4 1983009808
    %v7058 = vunpack.c.0.s8 %v7057
    %v7059 = vlaneseq
    %v7060 = vshrl.u32 %v7059, 7
    %v7061 = vsub.s32 %v7058, %v7060
    %v7062 = vrot.slane %v7054, %v7061
    %v7064 = vunpack.c.l.s4 1983009808
    %v7065 = vunpack.c.0.s8 %v7064
    %v7066 = vlaneseq
    %v7067 = vshrl.u32 %v7066, 7
    %v7068 = vsub.s32 %v7065, %v7067
    %v7069 = vrot.slane %v7055, %v7068
    %v7070 = vcombine.low %v7062, %v7069
    %v7071 = vcombine.low %v5912, %v5919
    %v7072 = vcombine.low %v5926, %v5933
    %v7074 = vunpack.c.l.s4 1983009808
    %v7075 = vunpack.c.0.s8 %v7074
    %v7076 = vlaneseq
    %v7077 = vshrl.u32 %v7076, 7
    %v7078 = vsub.s32 %v7075, %v7077
    %v7079 = vrot.slane %v7071, %v7078
    %v7081 = vunpack.c.l.s4 1983009808
    %v7082 = vunpack.c.0.s8 %v7081
    %v7083 = vlaneseq
    %v7084 = vshrl.u32 %v7083, 7
    %v7085 = vsub.s32 %v7082, %v7084
    %v7086 = vrot.slane %v7072, %v7085
    %v7087 = vcombine.low %v7079, %v7086
    %v7088 = vcombine.low %v5940, %v5947
    %v7089 = vcombine.low %v5954, %v5961
    %v7091 = vunpack.c.l.s4 1983009808
    %v7092 = vunpack.c.0.s8 %v7091
    %v7093 = vlaneseq
    %v7094 = vshrl.u32 %v7093, 7
    %v7095 = vsub.s32 %v7092, %v7094
    %v7096 = vrot.slane %v7088, %v7095
    %v7098 = vunpack.c.l.s4 1983009808
    %v7099 = vunpack.c.0.s8 %v7098
    %v7100 = vlaneseq
    %v7101 = vshrl.u32 %v7100, 7
    %v7102 = vsub.s32 %v7099, %v7101
    %v7103 = vrot.slane %v7089, %v7102
    %v7104 = vcombine.low %v7096, %v7103
    %v7105 = vcombine.low %v5968, %v5975
    %v7106 = vcombine.low %v5982, %v5989
    %v7108 = vunpack.c.l.s4 1983009808
    %v7109 = vunpack.c.0.s8 %v7108
    %v7110 = vlaneseq
    %v7111 = vshrl.u32 %v7110, 7
    %v7112 = vsub.s32 %v7109, %v7111
    %v7113 = vrot.slane %v7105, %v7112
    %v7115 = vunpack.c.l.s4 1983009808
    %v7116 = vunpack.c.0.s8 %v7115
    %v7117 = vlaneseq
    %v7118 = vshrl.u32 %v7117, 7
    %v7119 = vsub.s32 %v7116, %v7118
    %v7120 = vrot.slane %v7106, %v7119
    %v7121 = vcombine.low %v7113, %v7120
    %v7122 = vcombine.low %v5996, %v6003
    %v7123 = vcombine.low %v6010, %v6017
    %v7125 = vunpack.c.l.s4 1983009808
    %v7126 = vunpack.c.0.s8 %v7125
    %v7127 = vlaneseq
    %v7128 = vshrl.u32 %v7127, 7
    %v7129 = vsub.s32 %v7126, %v7128
    %v7130 = vrot.slane %v7122, %v7129
    %v7132 = vunpack.c.l.s4 1983009808
    %v7133 = vunpack.c.0.s8 %v7132
    %v7134 = vlaneseq
    %v7135 = vshrl.u32 %v7134, 7
    %v7136 = vsub.s32 %v7133, %v7135
    %v7137 = vrot.slane %v7123, %v7136
    %v7138 = vcombine.low %v7130, %v7137
    %v7139 = vcombine.low %v6024, %v6031
    %v7140 = vcombine.low %v6038, %v6045
    %v7142 = vunpack.c.l.s4 1983009808
    %v7143 = vunpack.c.0.s8 %v7142
    %v7144 = vlaneseq
    %v7145 = vshrl.u32 %v7144, 7
    %v7146 = vsub.s32 %v7143, %v7145
    %v7147 = vrot.slane %v7139, %v7146
    %v7149 = vunpack.c.l.s4 1983009808
    %v7150 = vunpack.c.0.s8 %v7149
    %v7151 = vlaneseq
    %v7152 = vshrl.u32 %v7151, 7
    %v7153 = vsub.s32 %v7150, %v7152
    %v7154 = vrot.slane %v7140, %v7153
    %v7155 = vcombine.low %v7147, %v7154
    %v7156 = vcombine.low %v6052, %v6059
    %v7157 = vcombine.low %v6066, %v6073
    %v7159 = vunpack.c.l.s4 1983009808
    %v7160 = vunpack.c.0.s8 %v7159
    %v7161 = vlaneseq
    %v7162 = vshrl.u32 %v7161, 7
    %v7163 = vsub.s32 %v7160, %v7162
    %v7164 = vrot.slane %v7156, %v7163
    %v7166 = vunpack.c.l.s4 1983009808
    %v7167 = vunpack.c.0.s8 %v7166
    %v7168 = vlaneseq
    %v7169 = vshrl.u32 %v7168, 7
    %v7170 = vsub.s32 %v7167, %v7169
    %v7171 = vrot.slane %v7157, %v7170
    %v7172 = vcombine.low %v7164, %v7171
    %v7173 = vcombine.low %v6080, %v6087
    %v7174 = vcombine.low %v6094, %v6101
    %v7176 = vunpack.c.l.s4 1983009808
    %v7177 = vunpack.c.0.s8 %v7176
    %v7178 = vlaneseq
    %v7179 = vshrl.u32 %v7178, 7
    %v7180 = vsub.s32 %v7177, %v7179
    %v7181 = vrot.slane %v7173, %v7180
    %v7183 = vunpack.c.l.s4 1983009808
    %v7184 = vunpack.c.0.s8 %v7183
    %v7185 = vlaneseq
    %v7186 = vshrl.u32 %v7185, 7
    %v7187 = vsub.s32 %v7184, %v7186
    %v7188 = vrot.slane %v7174, %v7187
    %v7189 = vcombine.low %v7181, %v7188
    %7190 = vset.pattern.permute.xlu0 0
    %7191 = vperm.xlu0 %7190, %v6118
    %v7192 = vpop.permute.xlu0 %7191
    %7193 = vset.pattern.permute.xlu0 0
    %7194 = vperm.xlu0 %7193, %v6135
    %v7195 = vpop.permute.xlu0 %7194
    %7196 = vset.pattern.permute.xlu0 0
    %7197 = vperm.xlu0 %7196, %v6152
    %v7198 = vpop.permute.xlu0 %7197
    %7199 = vset.pattern.permute.xlu0 0
    %7200 = vperm.xlu0 %7199, %v6169
    %v7201 = vpop.permute.xlu0 %7200
    %7202 = vset.pattern.permute.xlu0 0
    %7203 = vperm.xlu0 %7202, %v6186
    %v7204 = vpop.permute.xlu0 %7203
    %7205 = vset.pattern.permute.xlu0 0
    %7206 = vperm.xlu0 %7205, %v6203
    %v7207 = vpop.permute.xlu0 %7206
    %7208 = vset.pattern.permute.xlu0 0
    %7209 = vperm.xlu0 %7208, %v6220
    %v7210 = vpop.permute.xlu0 %7209
    %7211 = vset.pattern.permute.xlu0 0
    %7212 = vperm.xlu0 %7211, %v6237
    %v7213 = vpop.permute.xlu0 %7212
    %7214 = vset.pattern.permute.xlu0 0
    %7215 = vperm.xlu0 %7214, %v6254
    %v7216 = vpop.permute.xlu0 %7215
    %7217 = vset.pattern.permute.xlu0 0
    %7218 = vperm.xlu0 %7217, %v6271
    %v7219 = vpop.permute.xlu0 %7218
    %7220 = vset.pattern.permute.xlu0 0
    %7221 = vperm.xlu0 %7220, %v6288
    %v7222 = vpop.permute.xlu0 %7221
    %7223 = vset.pattern.permute.xlu0 0
    %7224 = vperm.xlu0 %7223, %v6305
    %v7225 = vpop.permute.xlu0 %7224
    %7226 = vset.pattern.permute.xlu0 0
    %7227 = vperm.xlu0 %7226, %v6322
    %v7228 = vpop.permute.xlu0 %7227
    %7229 = vset.pattern.permute.xlu0 0
    %7230 = vperm.xlu0 %7229, %v6339
    %v7231 = vpop.permute.xlu0 %7230
    %7232 = vset.pattern.permute.xlu0 0
    %7233 = vperm.xlu0 %7232, %v6356
    %v7234 = vpop.permute.xlu0 %7233
    %7235 = vset.pattern.permute.xlu0 0
    %7236 = vperm.xlu0 %7235, %v6373
    %v7237 = vpop.permute.xlu0 %7236
    %7238 = vset.pattern.permute.xlu0 0
    %7239 = vperm.xlu0 %7238, %v6390
    %v7240 = vpop.permute.xlu0 %7239
    %7241 = vset.pattern.permute.xlu0 0
    %7242 = vperm.xlu0 %7241, %v6407
    %v7243 = vpop.permute.xlu0 %7242
    %7244 = vset.pattern.permute.xlu0 0
    %7245 = vperm.xlu0 %7244, %v6424
    %v7246 = vpop.permute.xlu0 %7245
    %7247 = vset.pattern.permute.xlu0 0
    %7248 = vperm.xlu0 %7247, %v6441
    %v7249 = vpop.permute.xlu0 %7248
    %7250 = vset.pattern.permute.xlu0 0
    %7251 = vperm.xlu0 %7250, %v6458
    %v7252 = vpop.permute.xlu0 %7251
    %7253 = vset.pattern.permute.xlu0 0
    %7254 = vperm.xlu0 %7253, %v6475
    %v7255 = vpop.permute.xlu0 %7254
    %7256 = vset.pattern.permute.xlu0 0
    %7257 = vperm.xlu0 %7256, %v6492
    %v7258 = vpop.permute.xlu0 %7257
    %7259 = vset.pattern.permute.xlu0 0
    %7260 = vperm.xlu0 %7259, %v6509
    %v7261 = vpop.permute.xlu0 %7260
    %7262 = vset.pattern.permute.xlu0 0
    %7263 = vperm.xlu0 %7262, %v6526
    %v7264 = vpop.permute.xlu0 %7263
    %7265 = vset.pattern.permute.xlu0 0
    %7266 = vperm.xlu0 %7265, %v6543
    %v7267 = vpop.permute.xlu0 %7266
    %7268 = vset.pattern.permute.xlu0 0
    %7269 = vperm.xlu0 %7268, %v6560
    %v7270 = vpop.permute.xlu0 %7269
    %7271 = vset.pattern.permute.xlu0 0
    %7272 = vperm.xlu0 %7271, %v6577
    %v7273 = vpop.permute.xlu0 %7272
    %7274 = vset.pattern.permute.xlu0 0
    %7275 = vperm.xlu0 %7274, %v6594
    %v7276 = vpop.permute.xlu0 %7275
    %7277 = vset.pattern.permute.xlu0 0
    %7278 = vperm.xlu0 %7277, %v6611
    %v7279 = vpop.permute.xlu0 %7278
    %7280 = vset.pattern.permute.xlu0 0
    %7281 = vperm.xlu0 %7280, %v6628
    %v7282 = vpop.permute.xlu0 %7281
    %7283 = vset.pattern.permute.xlu0 0
    %7284 = vperm.xlu0 %7283, %v6645
    %v7285 = vpop.permute.xlu0 %7284
    %7286 = vset.pattern.permute.xlu0 0
    %7287 = vperm.xlu0 %7286, %v6662
    %v7288 = vpop.permute.xlu0 %7287
    %7289 = vset.pattern.permute.xlu0 0
    %7290 = vperm.xlu0 %7289, %v6679
    %v7291 = vpop.permute.xlu0 %7290
    %7292 = vset.pattern.permute.xlu0 0
    %7293 = vperm.xlu0 %7292, %v6696
    %v7294 = vpop.permute.xlu0 %7293
    %7295 = vset.pattern.permute.xlu0 0
    %7296 = vperm.xlu0 %7295, %v6713
    %v7297 = vpop.permute.xlu0 %7296
    %7298 = vset.pattern.permute.xlu0 0
    %7299 = vperm.xlu0 %7298, %v6730
    %v7300 = vpop.permute.xlu0 %7299
    %7301 = vset.pattern.permute.xlu0 0
    %7302 = vperm.xlu0 %7301, %v6747
    %v7303 = vpop.permute.xlu0 %7302
    %7304 = vset.pattern.permute.xlu0 0
    %7305 = vperm.xlu0 %7304, %v6764
    %v7306 = vpop.permute.xlu0 %7305
    %7307 = vset.pattern.permute.xlu0 0
    %7308 = vperm.xlu0 %7307, %v6781
    %v7309 = vpop.permute.xlu0 %7308
    %7310 = vset.pattern.permute.xlu0 0
    %7311 = vperm.xlu0 %7310, %v6798
    %v7312 = vpop.permute.xlu0 %7311
    %7313 = vset.pattern.permute.xlu0 0
    %7314 = vperm.xlu0 %7313, %v6815
    %v7315 = vpop.permute.xlu0 %7314
    %7316 = vset.pattern.permute.xlu0 0
    %7317 = vperm.xlu0 %7316, %v6832
    %v7318 = vpop.permute.xlu0 %7317
    %7319 = vset.pattern.permute.xlu0 0
    %7320 = vperm.xlu0 %7319, %v6849
    %v7321 = vpop.permute.xlu0 %7320
    %7322 = vset.pattern.permute.xlu0 0
    %7323 = vperm.xlu0 %7322, %v6866
    %v7324 = vpop.permute.xlu0 %7323
    %7325 = vset.pattern.permute.xlu0 0
    %7326 = vperm.xlu0 %7325, %v6883
    %v7327 = vpop.permute.xlu0 %7326
    %7328 = vset.pattern.permute.xlu0 0
    %7329 = vperm.xlu0 %7328, %v6900
    %v7330 = vpop.permute.xlu0 %7329
    %7331 = vset.pattern.permute.xlu0 0
    %7332 = vperm.xlu0 %7331, %v6917
    %v7333 = vpop.permute.xlu0 %7332
    %7334 = vset.pattern.permute.xlu0 0
    %7335 = vperm.xlu0 %7334, %v6934
    %v7336 = vpop.permute.xlu0 %7335
    %7337 = vset.pattern.permute.xlu0 0
    %7338 = vperm.xlu0 %7337, %v6951
    %v7339 = vpop.permute.xlu0 %7338
    %7340 = vset.pattern.permute.xlu0 0
    %7341 = vperm.xlu0 %7340, %v6968
    %v7342 = vpop.permute.xlu0 %7341
    %7343 = vset.pattern.permute.xlu0 0
    %7344 = vperm.xlu0 %7343, %v6985
    %v7345 = vpop.permute.xlu0 %7344
    %7346 = vset.pattern.permute.xlu0 0
    %7347 = vperm.xlu0 %7346, %v7002
    %v7348 = vpop.permute.xlu0 %7347
    %7349 = vset.pattern.permute.xlu0 0
    %7350 = vperm.xlu0 %7349, %v7019
    %v7351 = vpop.permute.xlu0 %7350
    %7352 = vset.pattern.permute.xlu0 0
    %7353 = vperm.xlu0 %7352, %v7036
    %v7354 = vpop.permute.xlu0 %7353
    %7355 = vset.pattern.permute.xlu0 0
    %7356 = vperm.xlu0 %7355, %v7053
    %v7357 = vpop.permute.xlu0 %7356
    %7358 = vset.pattern.permute.xlu0 0
    %7359 = vperm.xlu0 %7358, %v7070
    %v7360 = vpop.permute.xlu0 %7359
    %7361 = vset.pattern.permute.xlu0 0
    %7362 = vperm.xlu0 %7361, %v7087
    %v7363 = vpop.permute.xlu0 %7362
    %7364 = vset.pattern.permute.xlu0 0
    %7365 = vperm.xlu0 %7364, %v7104
    %v7366 = vpop.permute.xlu0 %7365
    %7367 = vset.pattern.permute.xlu0 0
    %7368 = vperm.xlu0 %7367, %v7121
    %v7369 = vpop.permute.xlu0 %7368
    %7370 = vset.pattern.permute.xlu0 0
    %7371 = vperm.xlu0 %7370, %v7138
    %v7372 = vpop.permute.xlu0 %7371
    %7373 = vset.pattern.permute.xlu0 0
    %7374 = vperm.xlu0 %7373, %v7155
    %v7375 = vpop.permute.xlu0 %7374
    %7376 = vset.pattern.permute.xlu0 0
    %7377 = vperm.xlu0 %7376, %v7172
    %v7378 = vpop.permute.xlu0 %7377
    %7379 = vset.pattern.permute.xlu0 0
    %7380 = vperm.xlu0 %7379, %v7189
    %v7381 = vpop.permute.xlu0 %7380
    %v7382 = vlaneseq
    %v7383 = vand.u32 %v7382, 127
    %v7384 = vlaneseq
    %v7385 = vshrl.u32 %v7384, 7
    %v7386 = vsub.s32 %v7383, %v7385
    %v7387 = vrot.slane %v7192, %v7386
    %v7388 = vadd.s32 %v7383, 4294967288
    %v7389 = vlaneseq
    %v7390 = vshrl.u32 %v7389, 7
    %v7391 = vsub.s32 %v7388, %v7390
    %v7392 = vrot.slane %v7195, %v7391
    %vm7393 = vcmask 130112
    %v7394 = vsel %vm7393, %v7392, %v7387
    %v7395 = vadd.s32 %v7383, 4294967280
    %v7396 = vlaneseq
    %v7397 = vshrl.u32 %v7396, 7
    %v7398 = vsub.s32 %v7395, %v7397
    %v7399 = vrot.slane %v7198, %v7398
    %vm7400 = vcmask 195712
    %v7401 = vsel %vm7400, %v7399, %v7394
    %v7402 = vadd.s32 %v7383, 4294967272
    %v7403 = vlaneseq
    %v7404 = vshrl.u32 %v7403, 7
    %v7405 = vsub.s32 %v7402, %v7404
    %v7406 = vrot.slane %v7201, %v7405
    %vm7407 = vcmask 261312
    %v7408 = vsel %vm7407, %v7406, %v7401
    %v7409 = vadd.s32 %v7383, 4294967264
    %v7410 = vlaneseq
    %v7411 = vshrl.u32 %v7410, 7
    %v7412 = vsub.s32 %v7409, %v7411
    %v7413 = vrot.slane %v7204, %v7412
    %vm7414 = vcmask 326912
    %v7415 = vsel %vm7414, %v7413, %v7408
    %v7416 = vadd.s32 %v7383, 4294967256
    %v7417 = vlaneseq
    %v7418 = vshrl.u32 %v7417, 7
    %v7419 = vsub.s32 %v7416, %v7418
    %v7420 = vrot.slane %v7207, %v7419
    %vm7421 = vcmask 392512
    %v7422 = vsel %vm7421, %v7420, %v7415
    %v7423 = vadd.s32 %v7383, 4294967248
    %v7424 = vlaneseq
    %v7425 = vshrl.u32 %v7424, 7
    %v7426 = vsub.s32 %v7423, %v7425
    %v7427 = vrot.slane %v7210, %v7426
    %vm7428 = vcmask 458112
    %v7429 = vsel %vm7428, %v7427, %v7422
    %v7430 = vadd.s32 %v7383, 4294967240
    %v7431 = vlaneseq
    %v7432 = vshrl.u32 %v7431, 7
    %v7433 = vsub.s32 %v7430, %v7432
    %v7434 = vrot.slane %v7213, %v7433
    %vm7435 = vcmask 523712
    %v7436 = vsel %vm7435, %v7434, %v7429
    %v7437 = vadd.s32 %v7383, 4294967232
    %v7438 = vlaneseq
    %v7439 = vshrl.u32 %v7438, 7
    %v7440 = vsub.s32 %v7437, %v7439
    %v7441 = vrot.slane %v7216, %v7440
    %vm7442 = vcmask 589312
    %v7443 = vsel %vm7442, %v7441, %v7436
    %v7444 = vadd.s32 %v7383, 4294967224
    %v7445 = vlaneseq
    %v7446 = vshrl.u32 %v7445, 7
    %v7447 = vsub.s32 %v7444, %v7446
    %v7448 = vrot.slane %v7219, %v7447
    %vm7449 = vcmask 654912
    %v7450 = vsel %vm7449, %v7448, %v7443
    %v7451 = vadd.s32 %v7383, 4294967216
    %v7452 = vlaneseq
    %v7453 = vshrl.u32 %v7452, 7
    %v7454 = vsub.s32 %v7451, %v7453
    %v7455 = vrot.slane %v7222, %v7454
    %vm7456 = vcmask 720512
    %v7457 = vsel %vm7456, %v7455, %v7450
    %v7458 = vadd.s32 %v7383, 4294967208
    %v7459 = vlaneseq
    %v7460 = vshrl.u32 %v7459, 7
    %v7461 = vsub.s32 %v7458, %v7460
    %v7462 = vrot.slane %v7225, %v7461
    %vm7463 = vcmask 786112
    %v7464 = vsel %vm7463, %v7462, %v7457
    %v7465 = vadd.s32 %v7383, 4294967200
    %v7466 = vlaneseq
    %v7467 = vshrl.u32 %v7466, 7
    %v7468 = vsub.s32 %v7465, %v7467
    %v7469 = vrot.slane %v7228, %v7468
    %vm7470 = vcmask 851712
    %v7471 = vsel %vm7470, %v7469, %v7464
    %v7472 = vadd.s32 %v7383, 4294967192
    %v7473 = vlaneseq
    %v7474 = vshrl.u32 %v7473, 7
    %v7475 = vsub.s32 %v7472, %v7474
    %v7476 = vrot.slane %v7231, %v7475
    %vm7477 = vcmask 917312
    %v7478 = vsel %vm7477, %v7476, %v7471
    %v7479 = vadd.s32 %v7383, 4294967184
    %v7480 = vlaneseq
    %v7481 = vshrl.u32 %v7480, 7
    %v7482 = vsub.s32 %v7479, %v7481
    %v7483 = vrot.slane %v7234, %v7482
    %vm7484 = vcmask 982912
    %v7485 = vsel %vm7484, %v7483, %v7478
    %v7486 = vadd.s32 %v7383, 4294967176
    %v7487 = vlaneseq
    %v7488 = vshrl.u32 %v7487, 7
    %v7489 = vsub.s32 %v7486, %v7488
    %v7490 = vrot.slane %v7237, %v7489
    %vm7491 = vcmask 1048512
    %v7492 = vsel %vm7491, %v7490, %v7485
    %v7493 = vlaneseq
    %v7494 = vshrl.u32 %v7493, 7
    %v7495 = vsub.s32 %v7383, %v7494
    %v7496 = vrot.slane %v7240, %v7495
    %v7497 = vlaneseq
    %v7498 = vshrl.u32 %v7497, 7
    %v7499 = vsub.s32 %v7388, %v7498
    %v7500 = vrot.slane %v7243, %v7499
    %v7501 = vsel %vm7393, %v7500, %v7496
    %v7502 = vlaneseq
    %v7503 = vshrl.u32 %v7502, 7
    %v7504 = vsub.s32 %v7395, %v7503
    %v7505 = vrot.slane %v7246, %v7504
    %v7506 = vsel %vm7400, %v7505, %v7501
    %v7507 = vlaneseq
    %v7508 = vshrl.u32 %v7507, 7
    %v7509 = vsub.s32 %v7402, %v7508
    %v7510 = vrot.slane %v7249, %v7509
    %v7511 = vsel %vm7407, %v7510, %v7506
    %v7512 = vlaneseq
    %v7513 = vshrl.u32 %v7512, 7
    %v7514 = vsub.s32 %v7409, %v7513
    %v7515 = vrot.slane %v7252, %v7514
    %v7516 = vsel %vm7414, %v7515, %v7511
    %v7517 = vlaneseq
    %v7518 = vshrl.u32 %v7517, 7
    %v7519 = vsub.s32 %v7416, %v7518
    %v7520 = vrot.slane %v7255, %v7519
    %v7521 = vsel %vm7421, %v7520, %v7516
    %v7522 = vlaneseq
    %v7523 = vshrl.u32 %v7522, 7
    %v7524 = vsub.s32 %v7423, %v7523
    %v7525 = vrot.slane %v7258, %v7524
    %v7526 = vsel %vm7428, %v7525, %v7521
    %v7527 = vlaneseq
    %v7528 = vshrl.u32 %v7527, 7
    %v7529 = vsub.s32 %v7430, %v7528
    %v7530 = vrot.slane %v7261, %v7529
    %v7531 = vsel %vm7435, %v7530, %v7526
    %v7532 = vlaneseq
    %v7533 = vshrl.u32 %v7532, 7
    %v7534 = vsub.s32 %v7437, %v7533
    %v7535 = vrot.slane %v7264, %v7534
    %v7536 = vsel %vm7442, %v7535, %v7531
    %v7537 = vlaneseq
    %v7538 = vshrl.u32 %v7537, 7
    %v7539 = vsub.s32 %v7444, %v7538
    %v7540 = vrot.slane %v7267, %v7539
    %v7541 = vsel %vm7449, %v7540, %v7536
    %v7542 = vlaneseq
    %v7543 = vshrl.u32 %v7542, 7
    %v7544 = vsub.s32 %v7451, %v7543
    %v7545 = vrot.slane %v7270, %v7544
    %v7546 = vsel %vm7456, %v7545, %v7541
    %v7547 = vlaneseq
    %v7548 = vshrl.u32 %v7547, 7
    %v7549 = vsub.s32 %v7458, %v7548
    %v7550 = vrot.slane %v7273, %v7549
    %v7551 = vsel %vm7463, %v7550, %v7546
    %v7552 = vlaneseq
    %v7553 = vshrl.u32 %v7552, 7
    %v7554 = vsub.s32 %v7465, %v7553
    %v7555 = vrot.slane %v7276, %v7554
    %v7556 = vsel %vm7470, %v7555, %v7551
    %v7557 = vlaneseq
    %v7558 = vshrl.u32 %v7557, 7
    %v7559 = vsub.s32 %v7472, %v7558
    %v7560 = vrot.slane %v7279, %v7559
    %v7561 = vsel %vm7477, %v7560, %v7556
    %v7562 = vlaneseq
    %v7563 = vshrl.u32 %v7562, 7
    %v7564 = vsub.s32 %v7479, %v7563
    %v7565 = vrot.slane %v7282, %v7564
    %v7566 = vsel %vm7484, %v7565, %v7561
    %v7567 = vlaneseq
    %v7568 = vshrl.u32 %v7567, 7
    %v7569 = vsub.s32 %v7486, %v7568
    %v7570 = vrot.slane %v7285, %v7569
    %v7571 = vsel %vm7491, %v7570, %v7566
    %v7572 = vlaneseq
    %v7573 = vshrl.u32 %v7572, 7
    %v7574 = vsub.s32 %v7383, %v7573
    %v7575 = vrot.slane %v7288, %v7574
    %v7576 = vlaneseq
    %v7577 = vshrl.u32 %v7576, 7
    %v7578 = vsub.s32 %v7388, %v7577
    %v7579 = vrot.slane %v7291, %v7578
    %v7580 = vsel %vm7393, %v7579, %v7575
    %v7581 = vlaneseq
    %v7582 = vshrl.u32 %v7581, 7
    %v7583 = vsub.s32 %v7395, %v7582
    %v7584 = vrot.slane %v7294, %v7583
    %v7585 = vsel %vm7400, %v7584, %v7580
    %v7586 = vlaneseq
    %v7587 = vshrl.u32 %v7586, 7
    %v7588 = vsub.s32 %v7402, %v7587
    %v7589 = vrot.slane %v7297, %v7588
    %v7590 = vsel %vm7407, %v7589, %v7585
    %v7591 = vlaneseq
    %v7592 = vshrl.u32 %v7591, 7
    %v7593 = vsub.s32 %v7409, %v7592
    %v7594 = vrot.slane %v7300, %v7593
    %v7595 = vsel %vm7414, %v7594, %v7590
    %v7596 = vlaneseq
    %v7597 = vshrl.u32 %v7596, 7
    %v7598 = vsub.s32 %v7416, %v7597
    %v7599 = vrot.slane %v7303, %v7598
    %v7600 = vsel %vm7421, %v7599, %v7595
    %v7601 = vlaneseq
    %v7602 = vshrl.u32 %v7601, 7
    %v7603 = vsub.s32 %v7423, %v7602
    %v7604 = vrot.slane %v7306, %v7603
    %v7605 = vsel %vm7428, %v7604, %v7600
    %v7606 = vlaneseq
    %v7607 = vshrl.u32 %v7606, 7
    %v7608 = vsub.s32 %v7430, %v7607
    %v7609 = vrot.slane %v7309, %v7608
    %v7610 = vsel %vm7435, %v7609, %v7605
    %v7611 = vlaneseq
    %v7612 = vshrl.u32 %v7611, 7
    %v7613 = vsub.s32 %v7437, %v7612
    %v7614 = vrot.slane %v7312, %v7613
    %v7615 = vsel %vm7442, %v7614, %v7610
    %v7616 = vlaneseq
    %v7617 = vshrl.u32 %v7616, 7
    %v7618 = vsub.s32 %v7444, %v7617
    %v7619 = vrot.slane %v7315, %v7618
    %v7620 = vsel %vm7449, %v7619, %v7615
    %v7621 = vlaneseq
    %v7622 = vshrl.u32 %v7621, 7
    %v7623 = vsub.s32 %v7451, %v7622
    %v7624 = vrot.slane %v7318, %v7623
    %v7625 = vsel %vm7456, %v7624, %v7620
    %v7626 = vlaneseq
    %v7627 = vshrl.u32 %v7626, 7
    %v7628 = vsub.s32 %v7458, %v7627
    %v7629 = vrot.slane %v7321, %v7628
    %v7630 = vsel %vm7463, %v7629, %v7625
    %v7631 = vlaneseq
    %v7632 = vshrl.u32 %v7631, 7
    %v7633 = vsub.s32 %v7465, %v7632
    %v7634 = vrot.slane %v7324, %v7633
    %v7635 = vsel %vm7470, %v7634, %v7630
    %v7636 = vlaneseq
    %v7637 = vshrl.u32 %v7636, 7
    %v7638 = vsub.s32 %v7472, %v7637
    %v7639 = vrot.slane %v7327, %v7638
    %v7640 = vsel %vm7477, %v7639, %v7635
    %v7641 = vlaneseq
    %v7642 = vshrl.u32 %v7641, 7
    %v7643 = vsub.s32 %v7479, %v7642
    %v7644 = vrot.slane %v7330, %v7643
    %v7645 = vsel %vm7484, %v7644, %v7640
    %v7646 = vlaneseq
    %v7647 = vshrl.u32 %v7646, 7
    %v7648 = vsub.s32 %v7486, %v7647
    %v7649 = vrot.slane %v7333, %v7648
    %v7650 = vsel %vm7491, %v7649, %v7645
    %v7651 = vlaneseq
    %v7652 = vshrl.u32 %v7651, 7
    %v7653 = vsub.s32 %v7383, %v7652
    %v7654 = vrot.slane %v7336, %v7653
    %v7655 = vlaneseq
    %v7656 = vshrl.u32 %v7655, 7
    %v7657 = vsub.s32 %v7388, %v7656
    %v7658 = vrot.slane %v7339, %v7657
    %v7659 = vsel %vm7393, %v7658, %v7654
    %v7660 = vlaneseq
    %v7661 = vshrl.u32 %v7660, 7
    %v7662 = vsub.s32 %v7395, %v7661
    %v7663 = vrot.slane %v7342, %v7662
    %v7664 = vsel %vm7400, %v7663, %v7659
    %v7665 = vlaneseq
    %v7666 = vshrl.u32 %v7665, 7
    %v7667 = vsub.s32 %v7402, %v7666
    %v7668 = vrot.slane %v7345, %v7667
    %v7669 = vsel %vm7407, %v7668, %v7664
    %v7670 = vlaneseq
    %v7671 = vshrl.u32 %v7670, 7
    %v7672 = vsub.s32 %v7409, %v7671
    %v7673 = vrot.slane %v7348, %v7672
    %v7674 = vsel %vm7414, %v7673, %v7669
    %v7675 = vlaneseq
    %v7676 = vshrl.u32 %v7675, 7
    %v7677 = vsub.s32 %v7416, %v7676
    %v7678 = vrot.slane %v7351, %v7677
    %v7679 = vsel %vm7421, %v7678, %v7674
    %v7680 = vlaneseq
    %v7681 = vshrl.u32 %v7680, 7
    %v7682 = vsub.s32 %v7423, %v7681
    %v7683 = vrot.slane %v7354, %v7682
    %v7684 = vsel %vm7428, %v7683, %v7679
    %v7685 = vlaneseq
    %v7686 = vshrl.u32 %v7685, 7
    %v7687 = vsub.s32 %v7430, %v7686
    %v7688 = vrot.slane %v7357, %v7687
    %v7689 = vsel %vm7435, %v7688, %v7684
    %v7690 = vlaneseq
    %v7691 = vshrl.u32 %v7690, 7
    %v7692 = vsub.s32 %v7437, %v7691
    %v7693 = vrot.slane %v7360, %v7692
    %v7694 = vsel %vm7442, %v7693, %v7689
    %v7695 = vlaneseq
    %v7696 = vshrl.u32 %v7695, 7
    %v7697 = vsub.s32 %v7444, %v7696
    %v7698 = vrot.slane %v7363, %v7697
    %v7699 = vsel %vm7449, %v7698, %v7694
    %v7700 = vlaneseq
    %v7701 = vshrl.u32 %v7700, 7
    %v7702 = vsub.s32 %v7451, %v7701
    %v7703 = vrot.slane %v7366, %v7702
    %v7704 = vsel %vm7456, %v7703, %v7699
    %v7705 = vlaneseq
    %v7706 = vshrl.u32 %v7705, 7
    %v7707 = vsub.s32 %v7458, %v7706
    %v7708 = vrot.slane %v7369, %v7707
    %v7709 = vsel %vm7463, %v7708, %v7704
    %v7710 = vlaneseq
    %v7711 = vshrl.u32 %v7710, 7
    %v7712 = vsub.s32 %v7465, %v7711
    %v7713 = vrot.slane %v7372, %v7712
    %v7714 = vsel %vm7470, %v7713, %v7709
    %v7715 = vlaneseq
    %v7716 = vshrl.u32 %v7715, 7
    %v7717 = vsub.s32 %v7472, %v7716
    %v7718 = vrot.slane %v7375, %v7717
    %v7719 = vsel %vm7477, %v7718, %v7714
    %v7720 = vlaneseq
    %v7721 = vshrl.u32 %v7720, 7
    %v7722 = vsub.s32 %v7479, %v7721
    %v7723 = vrot.slane %v7378, %v7722
    %v7724 = vsel %vm7484, %v7723, %v7719
    %v7725 = vlaneseq
    %v7726 = vshrl.u32 %v7725, 7
    %v7727 = vsub.s32 %v7486, %v7726
    %v7728 = vrot.slane %v7381, %v7727
    %v7729 = vsel %vm7491, %v7728, %v7724
    %v7730 = vsel %vm3841, %v7650, %v7492
    %v7731 = vsel %vm3841, %v7729, %v7571
    %v7732 = vcombine.low %v7730, %v7731
    %v7734 = vunpack.c.l.s4 1983009808
    %v7735 = vunpack.c.0.s8 %v7734
    %v7736 = vlaneseq
    %v7737 = vshrl.u32 %v7736, 7
    %v7738 = vsub.s32 %v7735, %v7737
    %v7739 = vrot.slane %v7732, %v7738
    %7741 = vst [vmem:[%s8] sm:$0xf] %v7739
    // Predicated region
    $region30: #{outputhead_forward.1} parent=1 // pred_check
      _
    $region31: #{outputhead_forward.1} parent=1 // pred_check_branch
      %7743 = sbr.rel (0) target = $region33
    $region32: #{outputhead_forward.1} parent=1 // pred_region
      %s7745 = ssub.s32 32, 32
      %7746 = vsyncadd [#allocation6], %s7745
      %s7748 = sshll.u32 [#allocation5], 4
      %s7749 = int_to_ptr.vmem [resolvable:$true] %s7748
      %7751 = dma.vmem_to_hbm [thread:$0]  %s7749, 32, %s7, [#allocation6]
    $region33: #{outputhead_forward.1} parent=1 // pred_fallthru
      _
    // Predicated region
    $region34: #{outputhead_forward.1} parent=1 // pred_check
      _
    $region35: #{outputhead_forward.1} parent=1 // pred_check_branch
      %7753 = sbr.rel (0) target = $region37
    $region36: #{outputhead_forward.1} parent=1 // pred_region
      _
    $region37: #{outputhead_forward.1} parent=1 // pred_fallthru
      _
    // Predicated region
    $region38: #{outputhead_forward.1} parent=1 // pred_check
      _
    $region39: #{outputhead_forward.1} parent=1 // pred_check_branch
      %7755 = sbr.rel (0) target = $region41
    $region40: #{outputhead_forward.1} parent=1 // pred_region
      %7756 = dma.done [#allocation6], 32
    $region41: #{outputhead_forward.1} parent=1 // pred_fallthru
      _
    // Predicated region
    $region42: #{outputhead_forward.1} parent=1 // pred_check
      _
    $region43: #{outputhead_forward.1} parent=1 // pred_check_branch
      %7758 = sbr.rel (0) target = $region45
    $region44: #{outputhead_forward.1} parent=1 // pred_region
      _
    $region45: #{outputhead_forward.1} parent=1 // pred_fallthru
      _
    %7759 = vsyncpa [#allocation6], 1

</llo_original>
